<compile_context>
chip_gen: v7x
topology: tpu7x:2x2x1
jax: 0.10.0
libtpu: 0.0.40
codegen_flags: <defaults>
</compile_context>

<pallas_src>
import math
from functools import partial

import numpy as np
import jax
import jax.numpy as jnp
from jax import lax
from jax.experimental import pallas as pl
from jax.experimental.pallas import tpu as pltpu

NUM_UPS = 4
KSIZE = 7
PAD = 3
COUNT_FEAT_DIM = 2 ** NUM_UPS  # 16


# --------------------------- trace-time constants ----------------------------

def _bilinear_matrix(n_in, n_out):
    """1D interpolation matrix matching nn.UpsamplingBilinear2d (align_corners=True)."""
    m = np.zeros((n_out, n_in), np.float32)
    scale = (n_in - 1) / (n_out - 1)
    for o in range(n_out):
        pos = o * scale
        i0 = min(int(math.floor(pos)), n_in - 1)
        i1 = min(i0 + 1, n_in - 1)
        frac = pos - i0
        m[o, i0] += 1.0 - frac
        m[o, i1] += frac
    return m


def _shift_eyes(H):
    """(KSIZE, H, H+6) selection matrices: E[ky, h, h+ky] = 1."""
    Hp = H + 2 * PAD
    return np.stack([np.eye(H, Hp, k=ky, dtype=np.float32) for ky in range(KSIZE)])


def _expand_conv_operator(w, H):
    """w: (Cout, Cin, 7, 7) -> G: (7, Cout*H, Cin*(H+6)).

    With the row-stacked zero-padded buffer P[ci*(H+6)+r, q] = xpad[ci, r, q],
      out_rowstacked = sum_kx G[kx] @ P[:, kx:kx+W]
    reproduces Conv2d(7x7, padding=3, zeros) (cross-correlation, PyTorch layout).
    """
    Cout, Cin = w.shape[0], w.shape[1]
    Hp = H + 2 * PAD
    eyes = jnp.asarray(_shift_eyes(H))                      # (7, H, Hp)
    # G[kx, co, h, ci, r] = sum_ky w[co, ci, ky, kx] * eyes[ky, h, r]  (= w[co,ci,r-h,kx])
    g = jnp.einsum('oiyx,yhr->xohir', w, eyes)
    return g.reshape(KSIZE, Cout * H, Cin * Hp)


# ------------------------------ Pallas kernels -------------------------------

def _linear_kernel(x_ref, w_ref, b_ref, o_ref):
    # x: (1, F, HW); w: (O, F); b: (O, 1) -> o: (1, O, HW)   (lane axis = H*W, lane-dense)
    o_ref[0] = (jnp.dot(w_ref[...], x_ref[0], preferred_element_type=jnp.float32)
                + b_ref[...])


def _linear_cm(x_flat, w, b):
    B, F, HW = x_flat.shape
    O = w.shape[0]
    return pl.pallas_call(
        _linear_kernel,
        out_shape=jax.ShapeDtypeStruct((B, O, HW), jnp.float32),
        grid=(B,),
        in_specs=[pl.BlockSpec((1, F, HW), lambda b: (b, 0, 0)),
                  pl.BlockSpec((O, F), lambda b: (0, 0)),
                  pl.BlockSpec((O, 1), lambda b: (0, 0))],
        out_specs=pl.BlockSpec((1, O, HW), lambda b: (b, 0, 0)),
        compiler_params=pltpu.CompilerParams(dimension_semantics=("parallel",)),
    )(x_flat, w, b)


def _make_head_kernel(H, W):
    Hs = [H * 2 ** i for i in range(NUM_UPS)]
    Ws = [W * 2 ** i for i in range(NUM_UPS)]
    Cins = [COUNT_FEAT_DIM // 2 ** i for i in range(NUM_UPS)]         # 16, 8, 4, 2
    Couts = [COUNT_FEAT_DIM // 2 ** (i + 1) for i in range(NUM_UPS)]  # 8, 4, 2, 1

    def kernel(feat_ref,
               g0, g1, g2, g3,
               b0, b1, b2, b3,
               mw0, mw1, mw2,
               mh0, mh1, mh2,
               img_ref, cnt_ref,
               p0, p1, p2, p3):
        g_refs = (g0, g1, g2, g3)
        bias_refs = (b0, b1, b2, b3)
        mw_refs = (mw0, mw1, mw2)
        mh_refs = (mh0, mh1, mh2)
        pads = (p0, p1, p2, p3)

        # --- stage-0 padded buffer (row-stacked, zero halo) from the linear features
        Hp0 = Hs[0] + 2 * PAD
        p0[...] = jnp.zeros(p0.shape, jnp.float32)
        feat = feat_ref[0, 0]                                   # (16*H, W)
        for c in range(Cins[0]):
            p0[c * Hp0 + PAD: c * Hp0 + PAD + Hs[0], PAD: PAD + Ws[0]] = (
                feat[c * Hs[0]:(c + 1) * Hs[0], :])

        for i in range(NUM_UPS):
            Hi, Wi = Hs[i], Ws[i]
            Cout = Couts[i]
            pv = pads[i][...]                                   # (Cin*(Hi+6), Wi+6)

            # 7x7 conv as 7 banded matmuls (K = Cin*(Hi+6), lane axis = Wi)
            acc = jnp.zeros((Cout * Hi, Wi), jnp.float32)
            for kx in range(KSIZE):
                acc = acc + jnp.dot(g_refs[i][kx], pv[:, kx: kx + Wi],
                                    preferred_element_type=jnp.float32)
            acc = acc + bias_refs[i][...]                       # (Cout*Hi, 1) broadcast

            if i != NUM_UPS - 1:
                acc = jnp.maximum(acc, 0.0)                     # ReLU
                # bilinear x2 (align_corners=True), separable:
                #   width  : one matmul over the whole channel block
                #   height : block-diagonal across channels -> per-channel matmuls,
                #            written straight into the next stage's padded scratch.
                tmp = jnp.dot(acc, mw_refs[i][...],
                              preferred_element_type=jnp.float32)   # (Cout*Hi, 2Wi)
                Hn, Wn = 2 * Hi, 2 * Wi
                Hpn = Hn + 2 * PAD
                pads[i + 1][...] = jnp.zeros(pads[i + 1].shape, jnp.float32)
                mh = mh_refs[i][...]                                 # (2Hi, Hi)
                for c in range(Cout):
                    upc = jnp.dot(mh, tmp[c * Hi:(c + 1) * Hi, :],
                                  preferred_element_type=jnp.float32)  # (2Hi, 2Wi)
                    pads[i + 1][c * Hpn + PAD: c * Hpn + PAD + Hn, PAD: PAD + Wn] = upc
            else:
                # final stage: Cout == 1 -> (8H, 8W); fuse the spatial sum here so the
                # largest activation is never re-read from HBM.
                img_ref[0, 0] = acc
                rowsum = jnp.sum(acc, axis=1, keepdims=True)     # (8H, 1)
                cnt_ref[0, 0] = jnp.sum(rowsum, axis=0, keepdims=True)

    return kernel


# -------------------------------- forward pass --------------------------------

@partial(jax.jit, static_argnames=("num_counts",))
def counting_head_forward(params, x, num_counts=1):
    B, F, H, W = x.shape
    HW = H * W

    # 1) pixel-wise linear, channel-major with H*W on the lane axis.
    x_flat = x.reshape(B, F, HW)
    y = _linear_cm(x_flat, params["lin_w"], params["lin_b"])    # (B, n*16, H*W)
    # '(b h w) (n c) -> (b n) c h w' realized as a free reshape into the
    # row-stacked (c*H + h, w) layout consumed by the fused kernel.
    feat = y.reshape(B, num_counts, COUNT_FEAT_DIM * H, W)

    # 2) shape-static operators (built at trace time, folded by jit).
    Hs = [H * 2 ** i for i in range(NUM_UPS)]
    Ws = [W * 2 ** i for i in range(NUM_UPS)]
    Cins = [COUNT_FEAT_DIM // 2 ** i for i in range(NUM_UPS)]

    g_ops, b_ops = [], []
    for i, (w_conv, b_conv) in enumerate(params["convs"]):
        g_ops.append(_expand_conv_operator(w_conv, Hs[i]))      # (7, Cout*H, Cin*(H+6))
        b_ops.append(jnp.repeat(b_conv, Hs[i])[:, None])        # (Cout*H, 1)

    mw_ops, mh_ops = [], []
    for i in range(NUM_UPS - 1):
        mw_ops.append(jnp.asarray(_bilinear_matrix(Ws[i], 2 * Ws[i]).T))  # (Wi, 2Wi)
        mh_ops.append(jnp.asarray(_bilinear_matrix(Hs[i], 2 * Hs[i])))    # (2Hi, Hi)

    Hf, Wf = Hs[-1], Ws[-1]                                      # 8H, 8W

    in_specs = [pl.BlockSpec((1, 1, COUNT_FEAT_DIM * H, W), lambda b, n: (b, n, 0, 0))]
    inputs = [feat]
    for g in g_ops:
        in_specs.append(pl.BlockSpec(g.shape, lambda b, n: (0, 0, 0)))
        inputs.append(g)
    for bb in b_ops:
        in_specs.append(pl.BlockSpec(bb.shape, lambda b, n: (0, 0)))
        inputs.append(bb)
    for m in mw_ops:
        in_specs.append(pl.BlockSpec(m.shape, lambda b, n: (0, 0)))
        inputs.append(m)
    for m in mh_ops:
        in_specs.append(pl.BlockSpec(m.shape, lambda b, n: (0, 0)))
        inputs.append(m)

    scratch = [pltpu.VMEM((Cins[i] * (Hs[i] + 2 * PAD), Ws[i] + 2 * PAD), jnp.float32)
               for i in range(NUM_UPS)]

    img, cnt = pl.pallas_call(
        _make_head_kernel(H, W),
        out_shape=(jax.ShapeDtypeStruct((B, num_counts, Hf, Wf), jnp.float32),
                   jax.ShapeDtypeStruct((B, num_counts, 1, 1), jnp.float32)),
        grid=(B, num_counts),
        in_specs=in_specs,
        out_specs=(pl.BlockSpec((1, 1, Hf, Wf), lambda b, n: (b, n, 0, 0)),
                   pl.BlockSpec((1, 1, 1, 1), lambda b, n: (b, n, 0, 0))),
        scratch_shapes=scratch,
        compiler_params=pltpu.CompilerParams(
            dimension_semantics=("parallel", "parallel"),
            vmem_limit_bytes=32 * 1024 * 1024),
    )(*inputs)

    counts = cnt.reshape(B, num_counts)
    # TODO(synk): linear_project_then_sum=True branch (extra pixelwise Linear over H*W)
    # and non-'zeros' padding modes are not implemented; this reproduces the default
    # configuration's forward path.
    return counts, img


# ------------------------------- pure-JAX reference ---------------------------

def _reference_forward(params, x, num_counts):
    B, F, H, W = x.shape
    xf = x.transpose(0, 2, 3, 1).reshape(B * H * W, F)                 # (b h w) c
    y = xf @ params["lin_w"].T + params["lin_b"][:, 0]                 # (bhw, n*16)
    y = y.reshape(B, H, W, num_counts, COUNT_FEAT_DIM)
    a = y.transpose(0, 3, 4, 1, 2).reshape(B * num_counts, COUNT_FEAT_DIM, H, W)
    for i, (w_conv, b_conv) in enumerate(params["convs"]):
        a = lax.conv_general_dilated(a, w_conv, (1, 1), [(PAD, PAD), (PAD, PAD)],
                                     dimension_numbers=("NCHW", "OIHW", "NCHW"),
                                     precision=lax.Precision.HIGHEST)
        a = a + b_conv[None, :, None, None]
        if i != NUM_UPS - 1:
            a = jnp.maximum(a, 0.0)
            hi, wi = a.shape[2], a.shape[3]
            mh = jnp.asarray(_bilinear_matrix(hi, 2 * hi))
            mw = jnp.asarray(_bilinear_matrix(wi, 2 * wi))
            a = jnp.einsum('Hh,bchw,Ww->bcHW', mh, a, mw,
                           precision=lax.Precision.HIGHEST)
    img = a.reshape(B, num_counts, a.shape[2], a.shape[3])
    counts = img.sum(axis=(2, 3))
    return counts, img


# ----------------------------------- params -----------------------------------

def init_params(key, feature_dim, num_counts):
    params = {}
    key, kw, kb = jax.random.split(key, 3)
    out_dim = num_counts * COUNT_FEAT_DIM
    bound = 1.0 / math.sqrt(feature_dim)
    # nn.Linear layout: weight (out, in), bias (out,) -> stored (out, 1)
    params["lin_w"] = jax.random.uniform(kw, (out_dim, feature_dim), jnp.float32, -bound, bound)
    params["lin_b"] = jax.random.uniform(kb, (out_dim, 1), jnp.float32, -bound, bound)
    cins = [COUNT_FEAT_DIM // 2 ** i for i in range(NUM_UPS)]
    couts = [COUNT_FEAT_DIM // 2 ** (i + 1) for i in range(NUM_UPS)]
    convs = []
    for i in range(NUM_UPS):
        key, kw, kb = jax.random.split(key, 3)
        bound = 1.0 / math.sqrt(cins[i] * KSIZE * KSIZE)
        # nn.Conv2d layout: (Cout, Cin, kH, kW)
        w = jax.random.uniform(kw, (couts[i], cins[i], KSIZE, KSIZE), jnp.float32, -bound, bound)
        bb = jax.random.uniform(kb, (couts[i],), jnp.float32, -bound, bound)
        convs.append((w, bb))
    params["convs"] = convs
    return params


if __name__ == "__main__":
    B, FEAT, H, W = 2, 32, 8, 8
    num_counts = 1  # channels=[1]
    key = jax.random.PRNGKey(0)
    kx_, kp = jax.random.split(key)
    x = jax.random.normal(kx_, (B, FEAT, H, W), jnp.float32)
    params = init_params(kp, FEAT, num_counts)

    counts, inter = counting_head_forward(params, x, num_counts=num_counts)
    jax.block_until_ready((counts, inter))

    Hf = H * 2 ** (NUM_UPS - 1)
    Wf = W * 2 ** (NUM_UPS - 1)
    assert counts.shape == (B, num_counts)
    assert inter.shape == (B, num_counts, Hf, Wf)
    assert bool(jnp.all(jnp.isfinite(counts))) and bool(jnp.all(jnp.isfinite(inter)))

    # Cross-check against a pure-JAX/XLA reference of the same forward pass.
    counts_ref, inter_ref = _reference_forward(params, x, num_counts)
    np.testing.assert_allclose(np.asarray(inter), np.asarray(inter_ref),
                               rtol=5e-3, atol=5e-3)
    np.testing.assert_allclose(np.asarray(counts), np.asarray(counts_ref),
                               rtol=5e-3, atol=5e-2)

    print("KERNEL_OK")
</pallas_src>

<mosaic_0001>
module attributes {stable_mosaic.version = 11 : i64} {
  func.func @_linear_kernel(%arg0: i32, %arg1: memref<1x32x64xf32, #tpu.memory_space<vmem>>, %arg2: memref<16x32xf32, #tpu.memory_space<vmem>>, %arg3: memref<16x1xf32, #tpu.memory_space<vmem>>, %arg4: memref<1x16x64xf32, #tpu.memory_space<vmem>>) attributes {dimension_semantics = [#tpu.dimension_semantics<parallel>], iteration_bounds = array<i64: 2>, scalar_prefetch = 0 : i64, scratch_operands = 0 : i64, tpu.core_type = #tpu.core_type<tc>, window_params = [{transform_indices = @transform_0, window_bounds = array<i64: 1, 32, 64>}, {pipeline_mode = #tpu.pipeline_mode<synchronous>, transform_indices = @transform_1, window_bounds = array<i64: 16, 32>}, {pipeline_mode = #tpu.pipeline_mode<synchronous>, transform_indices = @transform_2, window_bounds = array<i64: 16, 1>}, {transform_indices = @transform_3, window_bounds = array<i64: 1, 16, 64>}]} {
    %c0 = arith.constant 0 : index
    %c0_0 = arith.constant 0 : index
    %0 = vector.load %arg2[%c0, %c0_0] : memref<16x32xf32, #tpu.memory_space<vmem>>, vector<16x32xf32>
    %c0_1 = arith.constant 0 : index
    %c0_2 = arith.constant 0 : index
    %c0_3 = arith.constant 0 : index
    %1 = vector.load %arg1[%c0_1, %c0_2, %c0_3] : memref<1x32x64xf32, #tpu.memory_space<vmem>>, vector<1x32x64xf32>
    %2 = vector.shape_cast %1 : vector<1x32x64xf32> to vector<32x64xf32>
    %cst = arith.constant dense<0.000000e+00> : vector<16x64xf32>
    %3 = tpu.matmul %0, %2, %cst {dimension_numbers = #tpu.dot_dimension_numbers<[1], [0], [0], [1], [0, 0, 1, 1], [], []>} : vector<16x32xf32>, vector<32x64xf32>, vector<16x64xf32> -> vector<16x64xf32>
    %c0_4 = arith.constant 0 : index
    %c0_5 = arith.constant 0 : index
    %4 = vector.load %arg3[%c0_4, %c0_5] : memref<16x1xf32, #tpu.memory_space<vmem>>, vector<16x1xf32>
    %5 = vector.broadcast %4 : vector<16x1xf32> to vector<16x64xf32>
    %6 = arith.addf %3, %5 : vector<16x64xf32>
    %c0_6 = arith.constant 0 : index
    %c0_7 = arith.constant 0 : index
    %c0_8 = arith.constant 0 : index
    %7 = vector.load %arg4[%c0_6, %c0_7, %c0_8] : memref<1x16x64xf32, #tpu.memory_space<vmem>>, vector<1x16x64xf32>
    %8 = vector.shape_cast %7 : vector<1x16x64xf32> to vector<16x64xf32>
    %9 = vector.shape_cast %6 : vector<16x64xf32> to vector<1x16x64xf32>
    tpu.vector_store %arg4[%c0_6, %c0_7, %c0_8], %9 {strides = array<i32>} : memref<1x16x64xf32, #tpu.memory_space<vmem>>, vector<1x16x64xf32>,
    return
  }
  func.func @transform_0(%arg0: i32) -> (i32, i32, i32) {
    %c0_i32 = arith.constant 0 : i32
    %c0_i32_0 = arith.constant 0 : i32
    %c0_i32_1 = arith.constant 0 : i32
    return %arg0, %c0_i32, %c0_i32_0 : i32, i32, i32
  }
  func.func @transform_1(%arg0: i32) -> (i32, i32) {
    %c0_i32 = arith.constant 0 : i32
    %c0_i32_0 = arith.constant 0 : i32
    %c0_i32_1 = arith.constant 0 : i32
    return %c0_i32, %c0_i32_0 : i32, i32
  }
  func.func @transform_2(%arg0: i32) -> (i32, i32) {
    %c0_i32 = arith.constant 0 : i32
    %c0_i32_0 = arith.constant 0 : i32
    %c0_i32_1 = arith.constant 0 : i32
    return %c0_i32, %c0_i32_0 : i32, i32
  }
  func.func @transform_3(%arg0: i32) -> (i32, i32, i32) {
    %c0_i32 = arith.constant 0 : i32
    %c0_i32_0 = arith.constant 0 : i32
    %c0_i32_1 = arith.constant 0 : i32
    return %arg0, %c0_i32, %c0_i32_0 : i32, i32, i32
  }
}

module attributes {stable_mosaic.version = 11 : i64} {
  func.func @kernel(%arg0: i32, %arg1: i32, %arg2: memref<1x1x128x8xf32, #tpu.memory_space<vmem>>, %arg3: memref<7x64x224xf32, #tpu.memory_space<vmem>>, %arg4: memref<7x64x176xf32, #tpu.memory_space<vmem>>, %arg5: memref<7x64x152xf32, #tpu.memory_space<vmem>>, %arg6: memref<7x64x140xf32, #tpu.memory_space<vmem>>, %arg7: memref<64x1xf32, #tpu.memory_space<vmem>>, %arg8: memref<64x1xf32, #tpu.memory_space<vmem>>, %arg9: memref<64x1xf32, #tpu.memory_space<vmem>>, %arg10: memref<64x1xf32, #tpu.memory_space<vmem>>, %arg11: memref<8x16xf32, #tpu.memory_space<vmem>>, %arg12: memref<16x32xf32, #tpu.memory_space<vmem>>, %arg13: memref<32x64xf32, #tpu.memory_space<vmem>>, %arg14: memref<16x8xf32, #tpu.memory_space<vmem>>, %arg15: memref<32x16xf32, #tpu.memory_space<vmem>>, %arg16: memref<64x32xf32, #tpu.memory_space<vmem>>, %arg17: memref<1x1x64x64xf32, #tpu.memory_space<vmem>>, %arg18: memref<1x1x1x1xf32, #tpu.memory_space<vmem>>, %arg19: memref<224x14xf32, #tpu.memory_space<vmem>>, %arg20: memref<176x22xf32, #tpu.memory_space<vmem>>, %arg21: memref<152x38xf32, #tpu.memory_space<vmem>>, %arg22: memref<140x70xf32, #tpu.memory_space<vmem>>) attributes {dimension_semantics = [#tpu.dimension_semantics<parallel>, #tpu.dimension_semantics<parallel>], iteration_bounds = array<i64: 2, 1>, scalar_prefetch = 0 : i64, scratch_operands = 4 : i64, tpu.core_type = #tpu.core_type<tc>, window_params = [{transform_indices = @transform_0, window_bounds = array<i64: 1, 1, 128, 8>}, {pipeline_mode = #tpu.pipeline_mode<synchronous>, transform_indices = @transform_1, window_bounds = array<i64: 7, 64, 224>}, {pipeline_mode = #tpu.pipeline_mode<synchronous>, transform_indices = @transform_2, window_bounds = array<i64: 7, 64, 176>}, {pipeline_mode = #tpu.pipeline_mode<synchronous>, transform_indices = @transform_3, window_bounds = array<i64: 7, 64, 152>}, {pipeline_mode = #tpu.pipeline_mode<synchronous>, transform_indices = @transform_4, window_bounds = array<i64: 7, 64, 140>}, {pipeline_mode = #tpu.pipeline_mode<synchronous>, transform_indices = @transform_5, window_bounds = array<i64: 64, 1>}, {pipeline_mode = #tpu.pipeline_mode<synchronous>, transform_indices = @transform_6, window_bounds = array<i64: 64, 1>}, {pipeline_mode = #tpu.pipeline_mode<synchronous>, transform_indices = @transform_7, window_bounds = array<i64: 64, 1>}, {pipeline_mode = #tpu.pipeline_mode<synchronous>, transform_indices = @transform_8, window_bounds = array<i64: 64, 1>}, {pipeline_mode = #tpu.pipeline_mode<synchronous>, transform_indices = @transform_9, window_bounds = array<i64: 8, 16>}, {pipeline_mode = #tpu.pipeline_mode<synchronous>, transform_indices = @transform_10, window_bounds = array<i64: 16, 32>}, {pipeline_mode = #tpu.pipeline_mode<synchronous>, transform_indices = @transform_11, window_bounds = array<i64: 32, 64>}, {pipeline_mode = #tpu.pipeline_mode<synchronous>, transform_indices = @transform_12, window_bounds = array<i64: 16, 8>}, {pipeline_mode = #tpu.pipeline_mode<synchronous>, transform_indices = @transform_13, window_bounds = array<i64: 32, 16>}, {pipeline_mode = #tpu.pipeline_mode<synchronous>, transform_indices = @transform_14, window_bounds = array<i64: 64, 32>}, {transform_indices = @transform_15, window_bounds = array<i64: 1, 1, 64, 64>}, {transform_indices = @transform_16, window_bounds = array<i64: 1, 1, 1, 1>}]} {
    %cst = arith.constant 0.000000e+00 : f32
    %0 = vector.broadcast %cst : f32 to vector<224x14xf32>
    %c0 = arith.constant 0 : index
    %c0_0 = arith.constant 0 : index
    %1 = vector.load %arg19[%c0, %c0_0] : memref<224x14xf32, #tpu.memory_space<vmem>>, vector<224x14xf32>
    tpu.vector_store %arg19[%c0, %c0_0], %0 {strides = array<i32>} : memref<224x14xf32, #tpu.memory_space<vmem>>, vector<224x14xf32>,
    %c0_1 = arith.constant 0 : index
    %c0_2 = arith.constant 0 : index
    %c0_3 = arith.constant 0 : index
    %c0_4 = arith.constant 0 : index
    %2 = vector.load %arg2[%c0_1, %c0_2, %c0_3, %c0_4] : memref<1x1x128x8xf32, #tpu.memory_space<vmem>>, vector<1x1x128x8xf32>
    %3 = vector.shape_cast %2 : vector<1x1x128x8xf32> to vector<128x8xf32>
    %4 = vector.extract_strided_slice %3 {offsets = [0, 0], sizes = [8, 8], strides = [1, 1]} : vector<128x8xf32> to vector<8x8xf32>
    %c3 = arith.constant 3 : index
    %c3_5 = arith.constant 3 : index
    %5 = vector.load %arg19[%c3, %c3_5] : memref<224x14xf32, #tpu.memory_space<vmem>>, vector<8x8xf32>
    tpu.vector_store %arg19[%c3, %c3_5], %4 {strides = array<i32>} : memref<224x14xf32, #tpu.memory_space<vmem>>, vector<8x8xf32>,
    %6 = vector.extract_strided_slice %3 {offsets = [8, 0], sizes = [8, 8], strides = [1, 1]} : vector<128x8xf32> to vector<8x8xf32>
    %c17 = arith.constant 17 : index
    %c3_6 = arith.constant 3 : index
    %7 = vector.load %arg19[%c17, %c3_6] : memref<224x14xf32, #tpu.memory_space<vmem>>, vector<8x8xf32>
    tpu.vector_store %arg19[%c17, %c3_6], %6 {strides = array<i32>} : memref<224x14xf32, #tpu.memory_space<vmem>>, vector<8x8xf32>,
    %8 = vector.extract_strided_slice %3 {offsets = [16, 0], sizes = [8, 8], strides = [1, 1]} : vector<128x8xf32> to vector<8x8xf32>
    %c31 = arith.constant 31 : index
    %c3_7 = arith.constant 3 : index
    %9 = vector.load %arg19[%c31, %c3_7] : memref<224x14xf32, #tpu.memory_space<vmem>>, vector<8x8xf32>
    tpu.vector_store %arg19[%c31, %c3_7], %8 {strides = array<i32>} : memref<224x14xf32, #tpu.memory_space<vmem>>, vector<8x8xf32>,
    %10 = vector.extract_strided_slice %3 {offsets = [24, 0], sizes = [8, 8], strides = [1, 1]} : vector<128x8xf32> to vector<8x8xf32>
    %c45 = arith.constant 45 : index
    %c3_8 = arith.constant 3 : index
    %11 = vector.load %arg19[%c45, %c3_8] : memref<224x14xf32, #tpu.memory_space<vmem>>, vector<8x8xf32>
    tpu.vector_store %arg19[%c45, %c3_8], %10 {strides = array<i32>} : memref<224x14xf32, #tpu.memory_space<vmem>>, vector<8x8xf32>,
    %12 = vector.extract_strided_slice %3 {offsets = [32, 0], sizes = [8, 8], strides = [1, 1]} : vector<128x8xf32> to vector<8x8xf32>
    %c59 = arith.constant 59 : index
    %c3_9 = arith.constant 3 : index
    %13 = vector.load %arg19[%c59, %c3_9] : memref<224x14xf32, #tpu.memory_space<vmem>>, vector<8x8xf32>
    tpu.vector_store %arg19[%c59, %c3_9], %12 {strides = array<i32>} : memref<224x14xf32, #tpu.memory_space<vmem>>, vector<8x8xf32>,
    %14 = vector.extract_strided_slice %3 {offsets = [40, 0], sizes = [8, 8], strides = [1, 1]} : vector<128x8xf32> to vector<8x8xf32>
    %c73 = arith.constant 73 : index
    %c3_10 = arith.constant 3 : index
    %15 = vector.load %arg19[%c73, %c3_10] : memref<224x14xf32, #tpu.memory_space<vmem>>, vector<8x8xf32>
    tpu.vector_store %arg19[%c73, %c3_10], %14 {strides = array<i32>} : memref<224x14xf32, #tpu.memory_space<vmem>>, vector<8x8xf32>,
    %16 = vector.extract_strided_slice %3 {offsets = [48, 0], sizes = [8, 8], strides = [1, 1]} : vector<128x8xf32> to vector<8x8xf32>
    %c87 = arith.constant 87 : index
    %c3_11 = arith.constant 3 : index
    %17 = vector.load %arg19[%c87, %c3_11] : memref<224x14xf32, #tpu.memory_space<vmem>>, vector<8x8xf32>
    tpu.vector_store %arg19[%c87, %c3_11], %16 {strides = array<i32>} : memref<224x14xf32, #tpu.memory_space<vmem>>, vector<8x8xf32>,
    %18 = vector.extract_strided_slice %3 {offsets = [56, 0], sizes = [8, 8], strides = [1, 1]} : vector<128x8xf32> to vector<8x8xf32>
    %c101 = arith.constant 101 : index
    %c3_12 = arith.constant 3 : index
    %19 = vector.load %arg19[%c101, %c3_12] : memref<224x14xf32, #tpu.memory_space<vmem>>, vector<8x8xf32>
    tpu.vector_store %arg19[%c101, %c3_12], %18 {strides = array<i32>} : memref<224x14xf32, #tpu.memory_space<vmem>>, vector<8x8xf32>,
    %20 = vector.extract_strided_slice %3 {offsets = [64, 0], sizes = [8, 8], strides = [1, 1]} : vector<128x8xf32> to vector<8x8xf32>
    %c115 = arith.constant 115 : index
    %c3_13 = arith.constant 3 : index
    %21 = vector.load %arg19[%c115, %c3_13] : memref<224x14xf32, #tpu.memory_space<vmem>>, vector<8x8xf32>
    tpu.vector_store %arg19[%c115, %c3_13], %20 {strides = array<i32>} : memref<224x14xf32, #tpu.memory_space<vmem>>, vector<8x8xf32>,
    %22 = vector.extract_strided_slice %3 {offsets = [72, 0], sizes = [8, 8], strides = [1, 1]} : vector<128x8xf32> to vector<8x8xf32>
    %c129 = arith.constant 129 : index
    %c3_14 = arith.constant 3 : index
    %23 = vector.load %arg19[%c129, %c3_14] : memref<224x14xf32, #tpu.memory_space<vmem>>, vector<8x8xf32>
    tpu.vector_store %arg19[%c129, %c3_14], %22 {strides = array<i32>} : memref<224x14xf32, #tpu.memory_space<vmem>>, vector<8x8xf32>,
    %24 = vector.extract_strided_slice %3 {offsets = [80, 0], sizes = [8, 8], strides = [1, 1]} : vector<128x8xf32> to vector<8x8xf32>
    %c143 = arith.constant 143 : index
    %c3_15 = arith.constant 3 : index
    %25 = vector.load %arg19[%c143, %c3_15] : memref<224x14xf32, #tpu.memory_space<vmem>>, vector<8x8xf32>
    tpu.vector_store %arg19[%c143, %c3_15], %24 {strides = array<i32>} : memref<224x14xf32, #tpu.memory_space<vmem>>, vector<8x8xf32>,
    %26 = vector.extract_strided_slice %3 {offsets = [88, 0], sizes = [8, 8], strides = [1, 1]} : vector<128x8xf32> to vector<8x8xf32>
    %c157 = arith.constant 157 : index
    %c3_16 = arith.constant 3 : index
    %27 = vector.load %arg19[%c157, %c3_16] : memref<224x14xf32, #tpu.memory_space<vmem>>, vector<8x8xf32>
    tpu.vector_store %arg19[%c157, %c3_16], %26 {strides = array<i32>} : memref<224x14xf32, #tpu.memory_space<vmem>>, vector<8x8xf32>,
    %28 = vector.extract_strided_slice %3 {offsets = [96, 0], sizes = [8, 8], strides = [1, 1]} : vector<128x8xf32> to vector<8x8xf32>
    %c171 = arith.constant 171 : index
    %c3_17 = arith.constant 3 : index
    %29 = vector.load %arg19[%c171, %c3_17] : memref<224x14xf32, #tpu.memory_space<vmem>>, vector<8x8xf32>
    tpu.vector_store %arg19[%c171, %c3_17], %28 {strides = array<i32>} : memref<224x14xf32, #tpu.memory_space<vmem>>, vector<8x8xf32>,
    %30 = vector.extract_strided_slice %3 {offsets = [104, 0], sizes = [8, 8], strides = [1, 1]} : vector<128x8xf32> to vector<8x8xf32>
    %c185 = arith.constant 185 : index
    %c3_18 = arith.constant 3 : index
    %31 = vector.load %arg19[%c185, %c3_18] : memref<224x14xf32, #tpu.memory_space<vmem>>, vector<8x8xf32>
    tpu.vector_store %arg19[%c185, %c3_18], %30 {strides = array<i32>} : memref<224x14xf32, #tpu.memory_space<vmem>>, vector<8x8xf32>,
    %32 = vector.extract_strided_slice %3 {offsets = [112, 0], sizes = [8, 8], strides = [1, 1]} : vector<128x8xf32> to vector<8x8xf32>
    %c199 = arith.constant 199 : index
    %c3_19 = arith.constant 3 : index
    %33 = vector.load %arg19[%c199, %c3_19] : memref<224x14xf32, #tpu.memory_space<vmem>>, vector<8x8xf32>
    tpu.vector_store %arg19[%c199, %c3_19], %32 {strides = array<i32>} : memref<224x14xf32, #tpu.memory_space<vmem>>, vector<8x8xf32>,
    %34 = vector.extract_strided_slice %3 {offsets = [120, 0], sizes = [8, 8], strides = [1, 1]} : vector<128x8xf32> to vector<8x8xf32>
    %c213 = arith.constant 213 : index
    %c3_20 = arith.constant 3 : index
    %35 = vector.load %arg19[%c213, %c3_20] : memref<224x14xf32, #tpu.memory_space<vmem>>, vector<8x8xf32>
    tpu.vector_store %arg19[%c213, %c3_20], %34 {strides = array<i32>} : memref<224x14xf32, #tpu.memory_space<vmem>>, vector<8x8xf32>,
    %c0_21 = arith.constant 0 : index
    %c0_22 = arith.constant 0 : index
    %36 = vector.load %arg19[%c0_21, %c0_22] : memref<224x14xf32, #tpu.memory_space<vmem>>, vector<224x14xf32>
    %cst_23 = arith.constant 0.000000e+00 : f32
    %37 = vector.broadcast %cst_23 : f32 to vector<64x8xf32>
    %c0_24 = arith.constant 0 : index
    %c0_25 = arith.constant 0 : index
    %c0_26 = arith.constant 0 : index
    %38 = vector.load %arg3[%c0_24, %c0_25, %c0_26] : memref<7x64x224xf32, #tpu.memory_space<vmem>>, vector<1x64x224xf32>
    %39 = vector.shape_cast %38 : vector<1x64x224xf32> to vector<64x224xf32>
    %40 = vector.extract_strided_slice %36 {offsets = [0, 0], sizes = [224, 8], strides = [1, 1]} : vector<224x14xf32> to vector<224x8xf32>
    %cst_27 = arith.constant dense<0.000000e+00> : vector<64x8xf32>
    %41 = tpu.matmul %39, %40, %cst_27 {dimension_numbers = #tpu.dot_dimension_numbers<[1], [0], [0], [1], [0, 0, 1, 1], [], []>} : vector<64x224xf32>, vector<224x8xf32>, vector<64x8xf32> -> vector<64x8xf32>
    %42 = arith.addf %37, %41 : vector<64x8xf32>
    %c1 = arith.constant 1 : index
    %c0_28 = arith.constant 0 : index
    %c0_29 = arith.constant 0 : index
    %43 = vector.load %arg3[%c1, %c0_28, %c0_29] : memref<7x64x224xf32, #tpu.memory_space<vmem>>, vector<1x64x224xf32>
    %44 = vector.shape_cast %43 : vector<1x64x224xf32> to vector<64x224xf32>
    %45 = vector.extract_strided_slice %36 {offsets = [0, 1], sizes = [224, 8], strides = [1, 1]} : vector<224x14xf32> to vector<224x8xf32>
    %cst_30 = arith.constant dense<0.000000e+00> : vector<64x8xf32>
    %46 = tpu.matmul %44, %45, %cst_30 {dimension_numbers = #tpu.dot_dimension_numbers<[1], [0], [0], [1], [0, 0, 1, 1], [], []>} : vector<64x224xf32>, vector<224x8xf32>, vector<64x8xf32> -> vector<64x8xf32>
    %47 = arith.addf %42, %46 : vector<64x8xf32>
    %c2 = arith.constant 2 : index
    %c0_31 = arith.constant 0 : index
    %c0_32 = arith.constant 0 : index
    %48 = vector.load %arg3[%c2, %c0_31, %c0_32] : memref<7x64x224xf32, #tpu.memory_space<vmem>>, vector<1x64x224xf32>
    %49 = vector.shape_cast %48 : vector<1x64x224xf32> to vector<64x224xf32>
    %50 = vector.extract_strided_slice %36 {offsets = [0, 2], sizes = [224, 8], strides = [1, 1]} : vector<224x14xf32> to vector<224x8xf32>
    %cst_33 = arith.constant dense<0.000000e+00> : vector<64x8xf32>
    %51 = tpu.matmul %49, %50, %cst_33 {dimension_numbers = #tpu.dot_dimension_numbers<[1], [0], [0], [1], [0, 0, 1, 1], [], []>} : vector<64x224xf32>, vector<224x8xf32>, vector<64x8xf32> -> vector<64x8xf32>
    %52 = arith.addf %47, %51 : vector<64x8xf32>
    %c3_34 = arith.constant 3 : index
    %c0_35 = arith.constant 0 : index
    %c0_36 = arith.constant 0 : index
    %53 = vector.load %arg3[%c3_34, %c0_35, %c0_36] : memref<7x64x224xf32, #tpu.memory_space<vmem>>, vector<1x64x224xf32>
    %54 = vector.shape_cast %53 : vector<1x64x224xf32> to vector<64x224xf32>
    %55 = vector.extract_strided_slice %36 {offsets = [0, 3], sizes = [224, 8], strides = [1, 1]} : vector<224x14xf32> to vector<224x8xf32>
    %cst_37 = arith.constant dense<0.000000e+00> : vector<64x8xf32>
    %56 = tpu.matmul %54, %55, %cst_37 {dimension_numbers = #tpu.dot_dimension_numbers<[1], [0], [0], [1], [0, 0, 1, 1], [], []>} : vector<64x224xf32>, vector<224x8xf32>, vector<64x8xf32> -> vector<64x8xf32>
    %57 = arith.addf %52, %56 : vector<64x8xf32>
    %c4 = arith.constant 4 : index
    %c0_38 = arith.constant 0 : index
    %c0_39 = arith.constant 0 : index
    %58 = vector.load %arg3[%c4, %c0_38, %c0_39] : memref<7x64x224xf32, #tpu.memory_space<vmem>>, vector<1x64x224xf32>
    %59 = vector.shape_cast %58 : vector<1x64x224xf32> to vector<64x224xf32>
    %60 = vector.extract_strided_slice %36 {offsets = [0, 4], sizes = [224, 8], strides = [1, 1]} : vector<224x14xf32> to vector<224x8xf32>
    %cst_40 = arith.constant dense<0.000000e+00> : vector<64x8xf32>
    %61 = tpu.matmul %59, %60, %cst_40 {dimension_numbers = #tpu.dot_dimension_numbers<[1], [0], [0], [1], [0, 0, 1, 1], [], []>} : vector<64x224xf32>, vector<224x8xf32>, vector<64x8xf32> -> vector<64x8xf32>
    %62 = arith.addf %57, %61 : vector<64x8xf32>
    %c5 = arith.constant 5 : index
    %c0_41 = arith.constant 0 : index
    %c0_42 = arith.constant 0 : index
    %63 = vector.load %arg3[%c5, %c0_41, %c0_42] : memref<7x64x224xf32, #tpu.memory_space<vmem>>, vector<1x64x224xf32>
    %64 = vector.shape_cast %63 : vector<1x64x224xf32> to vector<64x224xf32>
    %65 = vector.extract_strided_slice %36 {offsets = [0, 5], sizes = [224, 8], strides = [1, 1]} : vector<224x14xf32> to vector<224x8xf32>
    %cst_43 = arith.constant dense<0.000000e+00> : vector<64x8xf32>
    %66 = tpu.matmul %64, %65, %cst_43 {dimension_numbers = #tpu.dot_dimension_numbers<[1], [0], [0], [1], [0, 0, 1, 1], [], []>} : vector<64x224xf32>, vector<224x8xf32>, vector<64x8xf32> -> vector<64x8xf32>
    %67 = arith.addf %62, %66 : vector<64x8xf32>
    %c6 = arith.constant 6 : index
    %c0_44 = arith.constant 0 : index
    %c0_45 = arith.constant 0 : index
    %68 = vector.load %arg3[%c6, %c0_44, %c0_45] : memref<7x64x224xf32, #tpu.memory_space<vmem>>, vector<1x64x224xf32>
    %69 = vector.shape_cast %68 : vector<1x64x224xf32> to vector<64x224xf32>
    %70 = vector.extract_strided_slice %36 {offsets = [0, 6], sizes = [224, 8], strides = [1, 1]} : vector<224x14xf32> to vector<224x8xf32>
    %cst_46 = arith.constant dense<0.000000e+00> : vector<64x8xf32>
    %71 = tpu.matmul %69, %70, %cst_46 {dimension_numbers = #tpu.dot_dimension_numbers<[1], [0], [0], [1], [0, 0, 1, 1], [], []>} : vector<64x224xf32>, vector<224x8xf32>, vector<64x8xf32> -> vector<64x8xf32>
    %72 = arith.addf %67, %71 : vector<64x8xf32>
    %c0_47 = arith.constant 0 : index
    %c0_48 = arith.constant 0 : index
    %73 = vector.load %arg7[%c0_47, %c0_48] : memref<64x1xf32, #tpu.memory_space<vmem>>, vector<64x1xf32>
    %74 = vector.broadcast %73 : vector<64x1xf32> to vector<64x8xf32>
    %75 = arith.addf %72, %74 : vector<64x8xf32>
    %cst_49 = arith.constant 0.000000e+00 : f32
    %76 = vector.broadcast %cst_49 : f32 to vector<64x8xf32>
    %77 = arith.maximumf %75, %76 : vector<64x8xf32>
    %c0_50 = arith.constant 0 : index
    %c0_51 = arith.constant 0 : index
    %78 = vector.load %arg11[%c0_50, %c0_51] : memref<8x16xf32, #tpu.memory_space<vmem>>, vector<8x16xf32>
    %cst_52 = arith.constant dense<0.000000e+00> : vector<64x16xf32>
    %79 = tpu.matmul %77, %78, %cst_52 {dimension_numbers = #tpu.dot_dimension_numbers<[1], [0], [0], [1], [0, 0, 1, 1], [], []>} : vector<64x8xf32>, vector<8x16xf32>, vector<64x16xf32> -> vector<64x16xf32>
    %cst_53 = arith.constant 0.000000e+00 : f32
    %80 = vector.broadcast %cst_53 : f32 to vector<176x22xf32>
    %c0_54 = arith.constant 0 : index
    %c0_55 = arith.constant 0 : index
    %81 = vector.load %arg20[%c0_54, %c0_55] : memref<176x22xf32, #tpu.memory_space<vmem>>, vector<176x22xf32>
    tpu.vector_store %arg20[%c0_54, %c0_55], %80 {strides = array<i32>} : memref<176x22xf32, #tpu.memory_space<vmem>>, vector<176x22xf32>,
    %c0_56 = arith.constant 0 : index
    %c0_57 = arith.constant 0 : index
    %82 = vector.load %arg14[%c0_56, %c0_57] : memref<16x8xf32, #tpu.memory_space<vmem>>, vector<16x8xf32>
    %83 = vector.extract_strided_slice %79 {offsets = [0, 0], sizes = [8, 16], strides = [1, 1]} : vector<64x16xf32> to vector<8x16xf32>
    %cst_58 = arith.constant dense<0.000000e+00> : vector<16x16xf32>
    %84 = tpu.matmul %82, %83, %cst_58 {dimension_numbers = #tpu.dot_dimension_numbers<[1], [0], [0], [1], [0, 0, 1, 1], [], []>} : vector<16x8xf32>, vector<8x16xf32>, vector<16x16xf32> -> vector<16x16xf32>
    %c3_59 = arith.constant 3 : index
    %c3_60 = arith.constant 3 : index
    %85 = vector.load %arg20[%c3_59, %c3_60] : memref<176x22xf32, #tpu.memory_space<vmem>>, vector<16x16xf32>
    tpu.vector_store %arg20[%c3_59, %c3_60], %84 {strides = array<i32>} : memref<176x22xf32, #tpu.memory_space<vmem>>, vector<16x16xf32>,
    %86 = vector.extract_strided_slice %79 {offsets = [8, 0], sizes = [8, 16], strides = [1, 1]} : vector<64x16xf32> to vector<8x16xf32>
    %cst_61 = arith.constant dense<0.000000e+00> : vector<16x16xf32>
    %87 = tpu.matmul %82, %86, %cst_61 {dimension_numbers = #tpu.dot_dimension_numbers<[1], [0], [0], [1], [0, 0, 1, 1], [], []>} : vector<16x8xf32>, vector<8x16xf32>, vector<16x16xf32> -> vector<16x16xf32>
    %c25 = arith.constant 25 : index
    %c3_62 = arith.constant 3 : index
    %88 = vector.load %arg20[%c25, %c3_62] : memref<176x22xf32, #tpu.memory_space<vmem>>, vector<16x16xf32>
    tpu.vector_store %arg20[%c25, %c3_62], %87 {strides = array<i32>} : memref<176x22xf32, #tpu.memory_space<vmem>>, vector<16x16xf32>,
    %89 = vector.extract_strided_slice %79 {offsets = [16, 0], sizes = [8, 16], strides = [1, 1]} : vector<64x16xf32> to vector<8x16xf32>
    %cst_63 = arith.constant dense<0.000000e+00> : vector<16x16xf32>
    %90 = tpu.matmul %82, %89, %cst_63 {dimension_numbers = #tpu.dot_dimension_numbers<[1], [0], [0], [1], [0, 0, 1, 1], [], []>} : vector<16x8xf32>, vector<8x16xf32>, vector<16x16xf32> -> vector<16x16xf32>
    %c47 = arith.constant 47 : index
    %c3_64 = arith.constant 3 : index
    %91 = vector.load %arg20[%c47, %c3_64] : memref<176x22xf32, #tpu.memory_space<vmem>>, vector<16x16xf32>
    tpu.vector_store %arg20[%c47, %c3_64], %90 {strides = array<i32>} : memref<176x22xf32, #tpu.memory_space<vmem>>, vector<16x16xf32>,
    %92 = vector.extract_strided_slice %79 {offsets = [24, 0], sizes = [8, 16], strides = [1, 1]} : vector<64x16xf32> to vector<8x16xf32>
    %cst_65 = arith.constant dense<0.000000e+00> : vector<16x16xf32>
    %93 = tpu.matmul %82, %92, %cst_65 {dimension_numbers = #tpu.dot_dimension_numbers<[1], [0], [0], [1], [0, 0, 1, 1], [], []>} : vector<16x8xf32>, vector<8x16xf32>, vector<16x16xf32> -> vector<16x16xf32>
    %c69 = arith.constant 69 : index
    %c3_66 = arith.constant 3 : index
    %94 = vector.load %arg20[%c69, %c3_66] : memref<176x22xf32, #tpu.memory_space<vmem>>, vector<16x16xf32>
    tpu.vector_store %arg20[%c69, %c3_66], %93 {strides = array<i32>} : memref<176x22xf32, #tpu.memory_space<vmem>>, vector<16x16xf32>,
    %95 = vector.extract_strided_slice %79 {offsets = [32, 0], sizes = [8, 16], strides = [1, 1]} : vector<64x16xf32> to vector<8x16xf32>
    %cst_67 = arith.constant dense<0.000000e+00> : vector<16x16xf32>
    %96 = tpu.matmul %82, %95, %cst_67 {dimension_numbers = #tpu.dot_dimension_numbers<[1], [0], [0], [1], [0, 0, 1, 1], [], []>} : vector<16x8xf32>, vector<8x16xf32>, vector<16x16xf32> -> vector<16x16xf32>
    %c91 = arith.constant 91 : index
    %c3_68 = arith.constant 3 : index
    %97 = vector.load %arg20[%c91, %c3_68] : memref<176x22xf32, #tpu.memory_space<vmem>>, vector<16x16xf32>
    tpu.vector_store %arg20[%c91, %c3_68], %96 {strides = array<i32>} : memref<176x22xf32, #tpu.memory_space<vmem>>, vector<16x16xf32>,
    %98 = vector.extract_strided_slice %79 {offsets = [40, 0], sizes = [8, 16], strides = [1, 1]} : vector<64x16xf32> to vector<8x16xf32>
    %cst_69 = arith.constant dense<0.000000e+00> : vector<16x16xf32>
    %99 = tpu.matmul %82, %98, %cst_69 {dimension_numbers = #tpu.dot_dimension_numbers<[1], [0], [0], [1], [0, 0, 1, 1], [], []>} : vector<16x8xf32>, vector<8x16xf32>, vector<16x16xf32> -> vector<16x16xf32>
    %c113 = arith.constant 113 : index
    %c3_70 = arith.constant 3 : index
    %100 = vector.load %arg20[%c113, %c3_70] : memref<176x22xf32, #tpu.memory_space<vmem>>, vector<16x16xf32>
    tpu.vector_store %arg20[%c113, %c3_70], %99 {strides = array<i32>} : memref<176x22xf32, #tpu.memory_space<vmem>>, vector<16x16xf32>,
    %101 = vector.extract_strided_slice %79 {offsets = [48, 0], sizes = [8, 16], strides = [1, 1]} : vector<64x16xf32> to vector<8x16xf32>
    %cst_71 = arith.constant dense<0.000000e+00> : vector<16x16xf32>
    %102 = tpu.matmul %82, %101, %cst_71 {dimension_numbers = #tpu.dot_dimension_numbers<[1], [0], [0], [1], [0, 0, 1, 1], [], []>} : vector<16x8xf32>, vector<8x16xf32>, vector<16x16xf32> -> vector<16x16xf32>
    %c135 = arith.constant 135 : index
    %c3_72 = arith.constant 3 : index
    %103 = vector.load %arg20[%c135, %c3_72] : memref<176x22xf32, #tpu.memory_space<vmem>>, vector<16x16xf32>
    tpu.vector_store %arg20[%c135, %c3_72], %102 {strides = array<i32>} : memref<176x22xf32, #tpu.memory_space<vmem>>, vector<16x16xf32>,
    %104 = vector.extract_strided_slice %79 {offsets = [56, 0], sizes = [8, 16], strides = [1, 1]} : vector<64x16xf32> to vector<8x16xf32>
    %cst_73 = arith.constant dense<0.000000e+00> : vector<16x16xf32>
    %105 = tpu.matmul %82, %104, %cst_73 {dimension_numbers = #tpu.dot_dimension_numbers<[1], [0], [0], [1], [0, 0, 1, 1], [], []>} : vector<16x8xf32>, vector<8x16xf32>, vector<16x16xf32> -> vector<16x16xf32>
    %c157_74 = arith.constant 157 : index
    %c3_75 = arith.constant 3 : index
    %106 = vector.load %arg20[%c157_74, %c3_75] : memref<176x22xf32, #tpu.memory_space<vmem>>, vector<16x16xf32>
    tpu.vector_store %arg20[%c157_74, %c3_75], %105 {strides = array<i32>} : memref<176x22xf32, #tpu.memory_space<vmem>>, vector<16x16xf32>,
    %c0_76 = arith.constant 0 : index
    %c0_77 = arith.constant 0 : index
    %107 = vector.load %arg20[%c0_76, %c0_77] : memref<176x22xf32, #tpu.memory_space<vmem>>, vector<176x22xf32>
    %cst_78 = arith.constant 0.000000e+00 : f32
    %108 = vector.broadcast %cst_78 : f32 to vector<64x16xf32>
    %c0_79 = arith.constant 0 : index
    %c0_80 = arith.constant 0 : index
    %c0_81 = arith.constant 0 : index
    %109 = vector.load %arg4[%c0_79, %c0_80, %c0_81] : memref<7x64x176xf32, #tpu.memory_space<vmem>>, vector<1x64x176xf32>
    %110 = vector.shape_cast %109 : vector<1x64x176xf32> to vector<64x176xf32>
    %111 = vector.extract_strided_slice %107 {offsets = [0, 0], sizes = [176, 16], strides = [1, 1]} : vector<176x22xf32> to vector<176x16xf32>
    %cst_82 = arith.constant dense<0.000000e+00> : vector<64x16xf32>
    %112 = tpu.matmul %110, %111, %cst_82 {dimension_numbers = #tpu.dot_dimension_numbers<[1], [0], [0], [1], [0, 0, 1, 1], [], []>} : vector<64x176xf32>, vector<176x16xf32>, vector<64x16xf32> -> vector<64x16xf32>
    %113 = arith.addf %108, %112 : vector<64x16xf32>
    %c1_83 = arith.constant 1 : index
    %c0_84 = arith.constant 0 : index
    %c0_85 = arith.constant 0 : index
    %114 = vector.load %arg4[%c1_83, %c0_84, %c0_85] : memref<7x64x176xf32, #tpu.memory_space<vmem>>, vector<1x64x176xf32>
    %115 = vector.shape_cast %114 : vector<1x64x176xf32> to vector<64x176xf32>
    %116 = vector.extract_strided_slice %107 {offsets = [0, 1], sizes = [176, 16], strides = [1, 1]} : vector<176x22xf32> to vector<176x16xf32>
    %cst_86 = arith.constant dense<0.000000e+00> : vector<64x16xf32>
    %117 = tpu.matmul %115, %116, %cst_86 {dimension_numbers = #tpu.dot_dimension_numbers<[1], [0], [0], [1], [0, 0, 1, 1], [], []>} : vector<64x176xf32>, vector<176x16xf32>, vector<64x16xf32> -> vector<64x16xf32>
    %118 = arith.addf %113, %117 : vector<64x16xf32>
    %c2_87 = arith.constant 2 : index
    %c0_88 = arith.constant 0 : index
    %c0_89 = arith.constant 0 : index
    %119 = vector.load %arg4[%c2_87, %c0_88, %c0_89] : memref<7x64x176xf32, #tpu.memory_space<vmem>>, vector<1x64x176xf32>
    %120 = vector.shape_cast %119 : vector<1x64x176xf32> to vector<64x176xf32>
    %121 = vector.extract_strided_slice %107 {offsets = [0, 2], sizes = [176, 16], strides = [1, 1]} : vector<176x22xf32> to vector<176x16xf32>
    %cst_90 = arith.constant dense<0.000000e+00> : vector<64x16xf32>
    %122 = tpu.matmul %120, %121, %cst_90 {dimension_numbers = #tpu.dot_dimension_numbers<[1], [0], [0], [1], [0, 0, 1, 1], [], []>} : vector<64x176xf32>, vector<176x16xf32>, vector<64x16xf32> -> vector<64x16xf32>
    %123 = arith.addf %118, %122 : vector<64x16xf32>
    %c3_91 = arith.constant 3 : index
    %c0_92 = arith.constant 0 : index
    %c0_93 = arith.constant 0 : index
    %124 = vector.load %arg4[%c3_91, %c0_92, %c0_93] : memref<7x64x176xf32, #tpu.memory_space<vmem>>, vector<1x64x176xf32>
    %125 = vector.shape_cast %124 : vector<1x64x176xf32> to vector<64x176xf32>
    %126 = vector.extract_strided_slice %107 {offsets = [0, 3], sizes = [176, 16], strides = [1, 1]} : vector<176x22xf32> to vector<176x16xf32>
    %cst_94 = arith.constant dense<0.000000e+00> : vector<64x16xf32>
    %127 = tpu.matmul %125, %126, %cst_94 {dimension_numbers = #tpu.dot_dimension_numbers<[1], [0], [0], [1], [0, 0, 1, 1], [], []>} : vector<64x176xf32>, vector<176x16xf32>, vector<64x16xf32> -> vector<64x16xf32>
    %128 = arith.addf %123, %127 : vector<64x16xf32>
    %c4_95 = arith.constant 4 : index
    %c0_96 = arith.constant 0 : index
    %c0_97 = arith.constant 0 : index
    %129 = vector.load %arg4[%c4_95, %c0_96, %c0_97] : memref<7x64x176xf32, #tpu.memory_space<vmem>>, vector<1x64x176xf32>
    %130 = vector.shape_cast %129 : vector<1x64x176xf32> to vector<64x176xf32>
    %131 = vector.extract_strided_slice %107 {offsets = [0, 4], sizes = [176, 16], strides = [1, 1]} : vector<176x22xf32> to vector<176x16xf32>
    %cst_98 = arith.constant dense<0.000000e+00> : vector<64x16xf32>
    %132 = tpu.matmul %130, %131, %cst_98 {dimension_numbers = #tpu.dot_dimension_numbers<[1], [0], [0], [1], [0, 0, 1, 1], [], []>} : vector<64x176xf32>, vector<176x16xf32>, vector<64x16xf32> -> vector<64x16xf32>
    %133 = arith.addf %128, %132 : vector<64x16xf32>
    %c5_99 = arith.constant 5 : index
    %c0_100 = arith.constant 0 : index
    %c0_101 = arith.constant 0 : index
    %134 = vector.load %arg4[%c5_99, %c0_100, %c0_101] : memref<7x64x176xf32, #tpu.memory_space<vmem>>, vector<1x64x176xf32>
    %135 = vector.shape_cast %134 : vector<1x64x176xf32> to vector<64x176xf32>
    %136 = vector.extract_strided_slice %107 {offsets = [0, 5], sizes = [176, 16], strides = [1, 1]} : vector<176x22xf32> to vector<176x16xf32>
    %cst_102 = arith.constant dense<0.000000e+00> : vector<64x16xf32>
    %137 = tpu.matmul %135, %136, %cst_102 {dimension_numbers = #tpu.dot_dimension_numbers<[1], [0], [0], [1], [0, 0, 1, 1], [], []>} : vector<64x176xf32>, vector<176x16xf32>, vector<64x16xf32> -> vector<64x16xf32>
    %138 = arith.addf %133, %137 : vector<64x16xf32>
    %c6_103 = arith.constant 6 : index
    %c0_104 = arith.constant 0 : index
    %c0_105 = arith.constant 0 : index
    %139 = vector.load %arg4[%c6_103, %c0_104, %c0_105] : memref<7x64x176xf32, #tpu.memory_space<vmem>>, vector<1x64x176xf32>
    %140 = vector.shape_cast %139 : vector<1x64x176xf32> to vector<64x176xf32>
    %141 = vector.extract_strided_slice %107 {offsets = [0, 6], sizes = [176, 16], strides = [1, 1]} : vector<176x22xf32> to vector<176x16xf32>
    %cst_106 = arith.constant dense<0.000000e+00> : vector<64x16xf32>
    %142 = tpu.matmul %140, %141, %cst_106 {dimension_numbers = #tpu.dot_dimension_numbers<[1], [0], [0], [1], [0, 0, 1, 1], [], []>} : vector<64x176xf32>, vector<176x16xf32>, vector<64x16xf32> -> vector<64x16xf32>
    %143 = arith.addf %138, %142 : vector<64x16xf32>
    %c0_107 = arith.constant 0 : index
    %c0_108 = arith.constant 0 : index
    %144 = vector.load %arg8[%c0_107, %c0_108] : memref<64x1xf32, #tpu.memory_space<vmem>>, vector<64x1xf32>
    %145 = vector.broadcast %144 : vector<64x1xf32> to vector<64x16xf32>
    %146 = arith.addf %143, %145 : vector<64x16xf32>
    %cst_109 = arith.constant 0.000000e+00 : f32
    %147 = vector.broadcast %cst_109 : f32 to vector<64x16xf32>
    %148 = arith.maximumf %146, %147 : vector<64x16xf32>
    %c0_110 = arith.constant 0 : index
    %c0_111 = arith.constant 0 : index
    %149 = vector.load %arg12[%c0_110, %c0_111] : memref<16x32xf32, #tpu.memory_space<vmem>>, vector<16x32xf32>
    %cst_112 = arith.constant dense<0.000000e+00> : vector<64x32xf32>
    %150 = tpu.matmul %148, %149, %cst_112 {dimension_numbers = #tpu.dot_dimension_numbers<[1], [0], [0], [1], [0, 0, 1, 1], [], []>} : vector<64x16xf32>, vector<16x32xf32>, vector<64x32xf32> -> vector<64x32xf32>
    %cst_113 = arith.constant 0.000000e+00 : f32
    %151 = vector.broadcast %cst_113 : f32 to vector<152x38xf32>
    %c0_114 = arith.constant 0 : index
    %c0_115 = arith.constant 0 : index
    %152 = vector.load %arg21[%c0_114, %c0_115] : memref<152x38xf32, #tpu.memory_space<vmem>>, vector<152x38xf32>
    tpu.vector_store %arg21[%c0_114, %c0_115], %151 {strides = array<i32>} : memref<152x38xf32, #tpu.memory_space<vmem>>, vector<152x38xf32>,
    %c0_116 = arith.constant 0 : index
    %c0_117 = arith.constant 0 : index
    %153 = vector.load %arg15[%c0_116, %c0_117] : memref<32x16xf32, #tpu.memory_space<vmem>>, vector<32x16xf32>
    %154 = vector.extract_strided_slice %150 {offsets = [0, 0], sizes = [16, 32], strides = [1, 1]} : vector<64x32xf32> to vector<16x32xf32>
    %cst_118 = arith.constant dense<0.000000e+00> : vector<32x32xf32>
    %155 = tpu.matmul %153, %154, %cst_118 {dimension_numbers = #tpu.dot_dimension_numbers<[1], [0], [0], [1], [0, 0, 1, 1], [], []>} : vector<32x16xf32>, vector<16x32xf32>, vector<32x32xf32> -> vector<32x32xf32>
    %c3_119 = arith.constant 3 : index
    %c3_120 = arith.constant 3 : index
    %156 = vector.load %arg21[%c3_119, %c3_120] : memref<152x38xf32, #tpu.memory_space<vmem>>, vector<32x32xf32>
    tpu.vector_store %arg21[%c3_119, %c3_120], %155 {strides = array<i32>} : memref<152x38xf32, #tpu.memory_space<vmem>>, vector<32x32xf32>,
    %157 = vector.extract_strided_slice %150 {offsets = [16, 0], sizes = [16, 32], strides = [1, 1]} : vector<64x32xf32> to vector<16x32xf32>
    %cst_121 = arith.constant dense<0.000000e+00> : vector<32x32xf32>
    %158 = tpu.matmul %153, %157, %cst_121 {dimension_numbers = #tpu.dot_dimension_numbers<[1], [0], [0], [1], [0, 0, 1, 1], [], []>} : vector<32x16xf32>, vector<16x32xf32>, vector<32x32xf32> -> vector<32x32xf32>
    %c41 = arith.constant 41 : index
    %c3_122 = arith.constant 3 : index
    %159 = vector.load %arg21[%c41, %c3_122] : memref<152x38xf32, #tpu.memory_space<vmem>>, vector<32x32xf32>
    tpu.vector_store %arg21[%c41, %c3_122], %158 {strides = array<i32>} : memref<152x38xf32, #tpu.memory_space<vmem>>, vector<32x32xf32>,
    %160 = vector.extract_strided_slice %150 {offsets = [32, 0], sizes = [16, 32], strides = [1, 1]} : vector<64x32xf32> to vector<16x32xf32>
    %cst_123 = arith.constant dense<0.000000e+00> : vector<32x32xf32>
    %161 = tpu.matmul %153, %160, %cst_123 {dimension_numbers = #tpu.dot_dimension_numbers<[1], [0], [0], [1], [0, 0, 1, 1], [], []>} : vector<32x16xf32>, vector<16x32xf32>, vector<32x32xf32> -> vector<32x32xf32>
    %c79 = arith.constant 79 : index
    %c3_124 = arith.constant 3 : index
    %162 = vector.load %arg21[%c79, %c3_124] : memref<152x38xf32, #tpu.memory_space<vmem>>, vector<32x32xf32>
    tpu.vector_store %arg21[%c79, %c3_124], %161 {strides = array<i32>} : memref<152x38xf32, #tpu.memory_space<vmem>>, vector<32x32xf32>,
    %163 = vector.extract_strided_slice %150 {offsets = [48, 0], sizes = [16, 32], strides = [1, 1]} : vector<64x32xf32> to vector<16x32xf32>
    %cst_125 = arith.constant dense<0.000000e+00> : vector<32x32xf32>
    %164 = tpu.matmul %153, %163, %cst_125 {dimension_numbers = #tpu.dot_dimension_numbers<[1], [0], [0], [1], [0, 0, 1, 1], [], []>} : vector<32x16xf32>, vector<16x32xf32>, vector<32x32xf32> -> vector<32x32xf32>
    %c117 = arith.constant 117 : index
    %c3_126 = arith.constant 3 : index
    %165 = vector.load %arg21[%c117, %c3_126] : memref<152x38xf32, #tpu.memory_space<vmem>>, vector<32x32xf32>
    tpu.vector_store %arg21[%c117, %c3_126], %164 {strides = array<i32>} : memref<152x38xf32, #tpu.memory_space<vmem>>, vector<32x32xf32>,
    %c0_127 = arith.constant 0 : index
    %c0_128 = arith.constant 0 : index
    %166 = vector.load %arg21[%c0_127, %c0_128] : memref<152x38xf32, #tpu.memory_space<vmem>>, vector<152x38xf32>
    %cst_129 = arith.constant 0.000000e+00 : f32
    %167 = vector.broadcast %cst_129 : f32 to vector<64x32xf32>
    %c0_130 = arith.constant 0 : index
    %c0_131 = arith.constant 0 : index
    %c0_132 = arith.constant 0 : index
    %168 = vector.load %arg5[%c0_130, %c0_131, %c0_132] : memref<7x64x152xf32, #tpu.memory_space<vmem>>, vector<1x64x152xf32>
    %169 = vector.shape_cast %168 : vector<1x64x152xf32> to vector<64x152xf32>
    %170 = vector.extract_strided_slice %166 {offsets = [0, 0], sizes = [152, 32], strides = [1, 1]} : vector<152x38xf32> to vector<152x32xf32>
    %cst_133 = arith.constant dense<0.000000e+00> : vector<64x32xf32>
    %171 = tpu.matmul %169, %170, %cst_133 {dimension_numbers = #tpu.dot_dimension_numbers<[1], [0], [0], [1], [0, 0, 1, 1], [], []>} : vector<64x152xf32>, vector<152x32xf32>, vector<64x32xf32> -> vector<64x32xf32>
    %172 = arith.addf %167, %171 : vector<64x32xf32>
    %c1_134 = arith.constant 1 : index
    %c0_135 = arith.constant 0 : index
    %c0_136 = arith.constant 0 : index
    %173 = vector.load %arg5[%c1_134, %c0_135, %c0_136] : memref<7x64x152xf32, #tpu.memory_space<vmem>>, vector<1x64x152xf32>
    %174 = vector.shape_cast %173 : vector<1x64x152xf32> to vector<64x152xf32>
    %175 = vector.extract_strided_slice %166 {offsets = [0, 1], sizes = [152, 32], strides = [1, 1]} : vector<152x38xf32> to vector<152x32xf32>
    %cst_137 = arith.constant dense<0.000000e+00> : vector<64x32xf32>
    %176 = tpu.matmul %174, %175, %cst_137 {dimension_numbers = #tpu.dot_dimension_numbers<[1], [0], [0], [1], [0, 0, 1, 1], [], []>} : vector<64x152xf32>, vector<152x32xf32>, vector<64x32xf32> -> vector<64x32xf32>
    %177 = arith.addf %172, %176 : vector<64x32xf32>
    %c2_138 = arith.constant 2 : index
    %c0_139 = arith.constant 0 : index
    %c0_140 = arith.constant 0 : index
    %178 = vector.load %arg5[%c2_138, %c0_139, %c0_140] : memref<7x64x152xf32, #tpu.memory_space<vmem>>, vector<1x64x152xf32>
    %179 = vector.shape_cast %178 : vector<1x64x152xf32> to vector<64x152xf32>
    %180 = vector.extract_strided_slice %166 {offsets = [0, 2], sizes = [152, 32], strides = [1, 1]} : vector<152x38xf32> to vector<152x32xf32>
    %cst_141 = arith.constant dense<0.000000e+00> : vector<64x32xf32>
    %181 = tpu.matmul %179, %180, %cst_141 {dimension_numbers = #tpu.dot_dimension_numbers<[1], [0], [0], [1], [0, 0, 1, 1], [], []>} : vector<64x152xf32>, vector<152x32xf32>, vector<64x32xf32> -> vector<64x32xf32>
    %182 = arith.addf %177, %181 : vector<64x32xf32>
    %c3_142 = arith.constant 3 : index
    %c0_143 = arith.constant 0 : index
    %c0_144 = arith.constant 0 : index
    %183 = vector.load %arg5[%c3_142, %c0_143, %c0_144] : memref<7x64x152xf32, #tpu.memory_space<vmem>>, vector<1x64x152xf32>
    %184 = vector.shape_cast %183 : vector<1x64x152xf32> to vector<64x152xf32>
    %185 = vector.extract_strided_slice %166 {offsets = [0, 3], sizes = [152, 32], strides = [1, 1]} : vector<152x38xf32> to vector<152x32xf32>
    %cst_145 = arith.constant dense<0.000000e+00> : vector<64x32xf32>
    %186 = tpu.matmul %184, %185, %cst_145 {dimension_numbers = #tpu.dot_dimension_numbers<[1], [0], [0], [1], [0, 0, 1, 1], [], []>} : vector<64x152xf32>, vector<152x32xf32>, vector<64x32xf32> -> vector<64x32xf32>
    %187 = arith.addf %182, %186 : vector<64x32xf32>
    %c4_146 = arith.constant 4 : index
    %c0_147 = arith.constant 0 : index
    %c0_148 = arith.constant 0 : index
    %188 = vector.load %arg5[%c4_146, %c0_147, %c0_148] : memref<7x64x152xf32, #tpu.memory_space<vmem>>, vector<1x64x152xf32>
    %189 = vector.shape_cast %188 : vector<1x64x152xf32> to vector<64x152xf32>
    %190 = vector.extract_strided_slice %166 {offsets = [0, 4], sizes = [152, 32], strides = [1, 1]} : vector<152x38xf32> to vector<152x32xf32>
    %cst_149 = arith.constant dense<0.000000e+00> : vector<64x32xf32>
    %191 = tpu.matmul %189, %190, %cst_149 {dimension_numbers = #tpu.dot_dimension_numbers<[1], [0], [0], [1], [0, 0, 1, 1], [], []>} : vector<64x152xf32>, vector<152x32xf32>, vector<64x32xf32> -> vector<64x32xf32>
    %192 = arith.addf %187, %191 : vector<64x32xf32>
    %c5_150 = arith.constant 5 : index
    %c0_151 = arith.constant 0 : index
    %c0_152 = arith.constant 0 : index
    %193 = vector.load %arg5[%c5_150, %c0_151, %c0_152] : memref<7x64x152xf32, #tpu.memory_space<vmem>>, vector<1x64x152xf32>
    %194 = vector.shape_cast %193 : vector<1x64x152xf32> to vector<64x152xf32>
    %195 = vector.extract_strided_slice %166 {offsets = [0, 5], sizes = [152, 32], strides = [1, 1]} : vector<152x38xf32> to vector<152x32xf32>
    %cst_153 = arith.constant dense<0.000000e+00> : vector<64x32xf32>
    %196 = tpu.matmul %194, %195, %cst_153 {dimension_numbers = #tpu.dot_dimension_numbers<[1], [0], [0], [1], [0, 0, 1, 1], [], []>} : vector<64x152xf32>, vector<152x32xf32>, vector<64x32xf32> -> vector<64x32xf32>
    %197 = arith.addf %192, %196 : vector<64x32xf32>
    %c6_154 = arith.constant 6 : index
    %c0_155 = arith.constant 0 : index
    %c0_156 = arith.constant 0 : index
    %198 = vector.load %arg5[%c6_154, %c0_155, %c0_156] : memref<7x64x152xf32, #tpu.memory_space<vmem>>, vector<1x64x152xf32>
    %199 = vector.shape_cast %198 : vector<1x64x152xf32> to vector<64x152xf32>
    %200 = vector.extract_strided_slice %166 {offsets = [0, 6], sizes = [152, 32], strides = [1, 1]} : vector<152x38xf32> to vector<152x32xf32>
    %cst_157 = arith.constant dense<0.000000e+00> : vector<64x32xf32>
    %201 = tpu.matmul %199, %200, %cst_157 {dimension_numbers = #tpu.dot_dimension_numbers<[1], [0], [0], [1], [0, 0, 1, 1], [], []>} : vector<64x152xf32>, vector<152x32xf32>, vector<64x32xf32> -> vector<64x32xf32>
    %202 = arith.addf %197, %201 : vector<64x32xf32>
    %c0_158 = arith.constant 0 : index
    %c0_159 = arith.constant 0 : index
    %203 = vector.load %arg9[%c0_158, %c0_159] : memref<64x1xf32, #tpu.memory_space<vmem>>, vector<64x1xf32>
    %204 = vector.broadcast %203 : vector<64x1xf32> to vector<64x32xf32>
    %205 = arith.addf %202, %204 : vector<64x32xf32>
    %cst_160 = arith.constant 0.000000e+00 : f32
    %206 = vector.broadcast %cst_160 : f32 to vector<64x32xf32>
    %207 = arith.maximumf %205, %206 : vector<64x32xf32>
    %c0_161 = arith.constant 0 : index
    %c0_162 = arith.constant 0 : index
    %208 = vector.load %arg13[%c0_161, %c0_162] : memref<32x64xf32, #tpu.memory_space<vmem>>, vector<32x64xf32>
    %cst_163 = arith.constant dense<0.000000e+00> : vector<64x64xf32>
    %209 = tpu.matmul %207, %208, %cst_163 {dimension_numbers = #tpu.dot_dimension_numbers<[1], [0], [0], [1], [0, 0, 1, 1], [], []>} : vector<64x32xf32>, vector<32x64xf32>, vector<64x64xf32> -> vector<64x64xf32>
    %cst_164 = arith.constant 0.000000e+00 : f32
    %210 = vector.broadcast %cst_164 : f32 to vector<140x70xf32>
    %c0_165 = arith.constant 0 : index
    %c0_166 = arith.constant 0 : index
    %211 = vector.load %arg22[%c0_165, %c0_166] : memref<140x70xf32, #tpu.memory_space<vmem>>, vector<140x70xf32>
    tpu.vector_store %arg22[%c0_165, %c0_166], %210 {strides = array<i32>} : memref<140x70xf32, #tpu.memory_space<vmem>>, vector<140x70xf32>,
    %c0_167 = arith.constant 0 : index
    %c0_168 = arith.constant 0 : index
    %212 = vector.load %arg16[%c0_167, %c0_168] : memref<64x32xf32, #tpu.memory_space<vmem>>, vector<64x32xf32>
    %213 = vector.extract_strided_slice %209 {offsets = [0, 0], sizes = [32, 64], strides = [1, 1]} : vector<64x64xf32> to vector<32x64xf32>
    %cst_169 = arith.constant dense<0.000000e+00> : vector<64x64xf32>
    %214 = tpu.matmul %212, %213, %cst_169 {dimension_numbers = #tpu.dot_dimension_numbers<[1], [0], [0], [1], [0, 0, 1, 1], [], []>} : vector<64x32xf32>, vector<32x64xf32>, vector<64x64xf32> -> vector<64x64xf32>
    %c3_170 = arith.constant 3 : index
    %c3_171 = arith.constant 3 : index
    %215 = vector.load %arg22[%c3_170, %c3_171] : memref<140x70xf32, #tpu.memory_space<vmem>>, vector<64x64xf32>
    tpu.vector_store %arg22[%c3_170, %c3_171], %214 {strides = array<i32>} : memref<140x70xf32, #tpu.memory_space<vmem>>, vector<64x64xf32>,
    %216 = vector.extract_strided_slice %209 {offsets = [32, 0], sizes = [32, 64], strides = [1, 1]} : vector<64x64xf32> to vector<32x64xf32>
    %cst_172 = arith.constant dense<0.000000e+00> : vector<64x64xf32>
    %217 = tpu.matmul %212, %216, %cst_172 {dimension_numbers = #tpu.dot_dimension_numbers<[1], [0], [0], [1], [0, 0, 1, 1], [], []>} : vector<64x32xf32>, vector<32x64xf32>, vector<64x64xf32> -> vector<64x64xf32>
    %c73_173 = arith.constant 73 : index
    %c3_174 = arith.constant 3 : index
    %218 = vector.load %arg22[%c73_173, %c3_174] : memref<140x70xf32, #tpu.memory_space<vmem>>, vector<64x64xf32>
    tpu.vector_store %arg22[%c73_173, %c3_174], %217 {strides = array<i32>} : memref<140x70xf32, #tpu.memory_space<vmem>>, vector<64x64xf32>,
    %c0_175 = arith.constant 0 : index
    %c0_176 = arith.constant 0 : index
    %219 = vector.load %arg22[%c0_175, %c0_176] : memref<140x70xf32, #tpu.memory_space<vmem>>, vector<140x70xf32>
    %cst_177 = arith.constant 0.000000e+00 : f32
    %220 = vector.broadcast %cst_177 : f32 to vector<64x64xf32>
    %c0_178 = arith.constant 0 : index
    %c0_179 = arith.constant 0 : index
    %c0_180 = arith.constant 0 : index
    %221 = vector.load %arg6[%c0_178, %c0_179, %c0_180] : memref<7x64x140xf32, #tpu.memory_space<vmem>>, vector<1x64x140xf32>
    %222 = vector.shape_cast %221 : vector<1x64x140xf32> to vector<64x140xf32>
    %223 = vector.extract_strided_slice %219 {offsets = [0, 0], sizes = [140, 64], strides = [1, 1]} : vector<140x70xf32> to vector<140x64xf32>
    %cst_181 = arith.constant dense<0.000000e+00> : vector<64x64xf32>
    %224 = tpu.matmul %222, %223, %cst_181 {dimension_numbers = #tpu.dot_dimension_numbers<[1], [0], [0], [1], [0, 0, 1, 1], [], []>} : vector<64x140xf32>, vector<140x64xf32>, vector<64x64xf32> -> vector<64x64xf32>
    %225 = arith.addf %220, %224 : vector<64x64xf32>
    %c1_182 = arith.constant 1 : index
    %c0_183 = arith.constant 0 : index
    %c0_184 = arith.constant 0 : index
    %226 = vector.load %arg6[%c1_182, %c0_183, %c0_184] : memref<7x64x140xf32, #tpu.memory_space<vmem>>, vector<1x64x140xf32>
    %227 = vector.shape_cast %226 : vector<1x64x140xf32> to vector<64x140xf32>
    %228 = vector.extract_strided_slice %219 {offsets = [0, 1], sizes = [140, 64], strides = [1, 1]} : vector<140x70xf32> to vector<140x64xf32>
    %cst_185 = arith.constant dense<0.000000e+00> : vector<64x64xf32>
    %229 = tpu.matmul %227, %228, %cst_185 {dimension_numbers = #tpu.dot_dimension_numbers<[1], [0], [0], [1], [0, 0, 1, 1], [], []>} : vector<64x140xf32>, vector<140x64xf32>, vector<64x64xf32> -> vector<64x64xf32>
    %230 = arith.addf %225, %229 : vector<64x64xf32>
    %c2_186 = arith.constant 2 : index
    %c0_187 = arith.constant 0 : index
    %c0_188 = arith.constant 0 : index
    %231 = vector.load %arg6[%c2_186, %c0_187, %c0_188] : memref<7x64x140xf32, #tpu.memory_space<vmem>>, vector<1x64x140xf32>
    %232 = vector.shape_cast %231 : vector<1x64x140xf32> to vector<64x140xf32>
    %233 = vector.extract_strided_slice %219 {offsets = [0, 2], sizes = [140, 64], strides = [1, 1]} : vector<140x70xf32> to vector<140x64xf32>
    %cst_189 = arith.constant dense<0.000000e+00> : vector<64x64xf32>
    %234 = tpu.matmul %232, %233, %cst_189 {dimension_numbers = #tpu.dot_dimension_numbers<[1], [0], [0], [1], [0, 0, 1, 1], [], []>} : vector<64x140xf32>, vector<140x64xf32>, vector<64x64xf32> -> vector<64x64xf32>
    %235 = arith.addf %230, %234 : vector<64x64xf32>
    %c3_190 = arith.constant 3 : index
    %c0_191 = arith.constant 0 : index
    %c0_192 = arith.constant 0 : index
    %236 = vector.load %arg6[%c3_190, %c0_191, %c0_192] : memref<7x64x140xf32, #tpu.memory_space<vmem>>, vector<1x64x140xf32>
    %237 = vector.shape_cast %236 : vector<1x64x140xf32> to vector<64x140xf32>
    %238 = vector.extract_strided_slice %219 {offsets = [0, 3], sizes = [140, 64], strides = [1, 1]} : vector<140x70xf32> to vector<140x64xf32>
    %cst_193 = arith.constant dense<0.000000e+00> : vector<64x64xf32>
    %239 = tpu.matmul %237, %238, %cst_193 {dimension_numbers = #tpu.dot_dimension_numbers<[1], [0], [0], [1], [0, 0, 1, 1], [], []>} : vector<64x140xf32>, vector<140x64xf32>, vector<64x64xf32> -> vector<64x64xf32>
    %240 = arith.addf %235, %239 : vector<64x64xf32>
    %c4_194 = arith.constant 4 : index
    %c0_195 = arith.constant 0 : index
    %c0_196 = arith.constant 0 : index
    %241 = vector.load %arg6[%c4_194, %c0_195, %c0_196] : memref<7x64x140xf32, #tpu.memory_space<vmem>>, vector<1x64x140xf32>
    %242 = vector.shape_cast %241 : vector<1x64x140xf32> to vector<64x140xf32>
    %243 = vector.extract_strided_slice %219 {offsets = [0, 4], sizes = [140, 64], strides = [1, 1]} : vector<140x70xf32> to vector<140x64xf32>
    %cst_197 = arith.constant dense<0.000000e+00> : vector<64x64xf32>
    %244 = tpu.matmul %242, %243, %cst_197 {dimension_numbers = #tpu.dot_dimension_numbers<[1], [0], [0], [1], [0, 0, 1, 1], [], []>} : vector<64x140xf32>, vector<140x64xf32>, vector<64x64xf32> -> vector<64x64xf32>
    %245 = arith.addf %240, %244 : vector<64x64xf32>
    %c5_198 = arith.constant 5 : index
    %c0_199 = arith.constant 0 : index
    %c0_200 = arith.constant 0 : index
    %246 = vector.load %arg6[%c5_198, %c0_199, %c0_200] : memref<7x64x140xf32, #tpu.memory_space<vmem>>, vector<1x64x140xf32>
    %247 = vector.shape_cast %246 : vector<1x64x140xf32> to vector<64x140xf32>
    %248 = vector.extract_strided_slice %219 {offsets = [0, 5], sizes = [140, 64], strides = [1, 1]} : vector<140x70xf32> to vector<140x64xf32>
    %cst_201 = arith.constant dense<0.000000e+00> : vector<64x64xf32>
    %249 = tpu.matmul %247, %248, %cst_201 {dimension_numbers = #tpu.dot_dimension_numbers<[1], [0], [0], [1], [0, 0, 1, 1], [], []>} : vector<64x140xf32>, vector<140x64xf32>, vector<64x64xf32> -> vector<64x64xf32>
    %250 = arith.addf %245, %249 : vector<64x64xf32>
    %c6_202 = arith.constant 6 : index
    %c0_203 = arith.constant 0 : index
    %c0_204 = arith.constant 0 : index
    %251 = vector.load %arg6[%c6_202, %c0_203, %c0_204] : memref<7x64x140xf32, #tpu.memory_space<vmem>>, vector<1x64x140xf32>
    %252 = vector.shape_cast %251 : vector<1x64x140xf32> to vector<64x140xf32>
    %253 = vector.extract_strided_slice %219 {offsets = [0, 6], sizes = [140, 64], strides = [1, 1]} : vector<140x70xf32> to vector<140x64xf32>
    %cst_205 = arith.constant dense<0.000000e+00> : vector<64x64xf32>
    %254 = tpu.matmul %252, %253, %cst_205 {dimension_numbers = #tpu.dot_dimension_numbers<[1], [0], [0], [1], [0, 0, 1, 1], [], []>} : vector<64x140xf32>, vector<140x64xf32>, vector<64x64xf32> -> vector<64x64xf32>
    %255 = arith.addf %250, %254 : vector<64x64xf32>
    %c0_206 = arith.constant 0 : index
    %c0_207 = arith.constant 0 : index
    %256 = vector.load %arg10[%c0_206, %c0_207] : memref<64x1xf32, #tpu.memory_space<vmem>>, vector<64x1xf32>
    %257 = vector.broadcast %256 : vector<64x1xf32> to vector<64x64xf32>
    %258 = arith.addf %255, %257 : vector<64x64xf32>
    %c0_208 = arith.constant 0 : index
    %c0_209 = arith.constant 0 : index
    %c0_210 = arith.constant 0 : index
    %c0_211 = arith.constant 0 : index
    %259 = vector.load %arg17[%c0_208, %c0_209, %c0_210, %c0_211] : memref<1x1x64x64xf32, #tpu.memory_space<vmem>>, vector<1x1x64x64xf32>
    %260 = vector.shape_cast %259 : vector<1x1x64x64xf32> to vector<64x64xf32>
    %261 = vector.shape_cast %258 : vector<64x64xf32> to vector<1x1x64x64xf32>
    tpu.vector_store %arg17[%c0_208, %c0_209, %c0_210, %c0_211], %261 {strides = array<i32>} : memref<1x1x64x64xf32, #tpu.memory_space<vmem>>, vector<1x1x64x64xf32>,
    %cst_212 = arith.constant dense<0.000000e+00> : vector<64xf32>
    %262 = vector.multi_reduction <add>, %258, %cst_212 [1] : vector<64x64xf32> to vector<64xf32>
    %263 = vector.shape_cast %262 : vector<64xf32> to vector<64x1xf32>
    %cst_213 = arith.constant dense<0.000000e+00> : vector<1xf32>
    %264 = vector.multi_reduction <add>, %263, %cst_213 [0] : vector<64x1xf32> to vector<1xf32>
    %265 = vector.shape_cast %264 : vector<1xf32> to vector<1x1xf32>
    %c0_214 = arith.constant 0 : index
    %c0_215 = arith.constant 0 : index
    %c0_216 = arith.constant 0 : index
    %c0_217 = arith.constant 0 : index
    %266 = vector.load %arg18[%c0_214, %c0_215, %c0_216, %c0_217] : memref<1x1x1x1xf32, #tpu.memory_space<vmem>>, vector<1x1x1x1xf32>
    %267 = vector.shape_cast %266 : vector<1x1x1x1xf32> to vector<1x1xf32>
    %268 = vector.shape_cast %265 : vector<1x1xf32> to vector<1x1x1x1xf32>
    tpu.vector_store %arg18[%c0_214, %c0_215, %c0_216, %c0_217], %268 {strides = array<i32>} : memref<1x1x1x1xf32, #tpu.memory_space<vmem>>, vector<1x1x1x1xf32>,
    return
  }
  func.func @transform_0(%arg0: i32, %arg1: i32) -> (i32, i32, i32, i32) {
    %c0_i32 = arith.constant 0 : i32
    %c0_i32_0 = arith.constant 0 : i32
    %c0_i32_1 = arith.constant 0 : i32
    return %arg0, %arg1, %c0_i32, %c0_i32_0 : i32, i32, i32, i32
  }
  func.func @transform_1(%arg0: i32, %arg1: i32) -> (i32, i32, i32) {
    %c0_i32 = arith.constant 0 : i32
    %c0_i32_0 = arith.constant 0 : i32
    %c0_i32_1 = arith.constant 0 : i32
    %c0_i32_2 = arith.constant 0 : i32
    return %c0_i32, %c0_i32_0, %c0_i32_1 : i32, i32, i32
  }
  func.func @transform_2(%arg0: i32, %arg1: i32) -> (i32, i32, i32) {
    %c0_i32 = arith.constant 0 : i32
    %c0_i32_0 = arith.constant 0 : i32
    %c0_i32_1 = arith.constant 0 : i32
    %c0_i32_2 = arith.constant 0 : i32
    return %c0_i32, %c0_i32_0, %c0_i32_1 : i32, i32, i32
  }
  func.func @transform_3(%arg0: i32, %arg1: i32) -> (i32, i32, i32) {
    %c0_i32 = arith.constant 0 : i32
    %c0_i32_0 = arith.constant 0 : i32
    %c0_i32_1 = arith.constant 0 : i32
    %c0_i32_2 = arith.constant 0 : i32
    return %c0_i32, %c0_i32_0, %c0_i32_1 : i32, i32, i32
  }
  func.func @transform_4(%arg0: i32, %arg1: i32) -> (i32, i32, i32) {
    %c0_i32 = arith.constant 0 : i32
    %c0_i32_0 = arith.constant 0 : i32
    %c0_i32_1 = arith.constant 0 : i32
    %c0_i32_2 = arith.constant 0 : i32
    return %c0_i32, %c0_i32_0, %c0_i32_1 : i32, i32, i32
  }
  func.func @transform_5(%arg0: i32, %arg1: i32) -> (i32, i32) {
    %c0_i32 = arith.constant 0 : i32
    %c0_i32_0 = arith.constant 0 : i32
    %c0_i32_1 = arith.constant 0 : i32
    return %c0_i32, %c0_i32_0 : i32, i32
  }
  func.func @transform_6(%arg0: i32, %arg1: i32) -> (i32, i32) {
    %c0_i32 = arith.constant 0 : i32
    %c0_i32_0 = arith.constant 0 : i32
    %c0_i32_1 = arith.constant 0 : i32
    return %c0_i32, %c0_i32_0 : i32, i32
  }
  func.func @transform_7(%arg0: i32, %arg1: i32) -> (i32, i32) {
    %c0_i32 = arith.constant 0 : i32
    %c0_i32_0 = arith.constant 0 : i32
    %c0_i32_1 = arith.constant 0 : i32
    return %c0_i32, %c0_i32_0 : i32, i32
  }
  func.func @transform_8(%arg0: i32, %arg1: i32) -> (i32, i32) {
    %c0_i32 = arith.constant 0 : i32
    %c0_i32_0 = arith.constant 0 : i32
    %c0_i32_1 = arith.constant 0 : i32
    return %c0_i32, %c0_i32_0 : i32, i32
  }
  func.func @transform_9(%arg0: i32, %arg1: i32) -> (i32, i32) {
    %c0_i32 = arith.constant 0 : i32
    %c0_i32_0 = arith.constant 0 : i32
    %c0_i32_1 = arith.constant 0 : i32
    return %c0_i32, %c0_i32_0 : i32, i32
  }
  func.func @transform_10(%arg0: i32, %arg1: i32) -> (i32, i32) {
    %c0_i32 = arith.constant 0 : i32
    %c0_i32_0 = arith.constant 0 : i32
    %c0_i32_1 = arith.constant 0 : i32
    return %c0_i32, %c0_i32_0 : i32, i32
  }
  func.func @transform_11(%arg0: i32, %arg1: i32) -> (i32, i32) {
    %c0_i32 = arith.constant 0 : i32
    %c0_i32_0 = arith.constant 0 : i32
    %c0_i32_1 = arith.constant 0 : i32
    return %c0_i32, %c0_i32_0 : i32, i32
  }
  func.func @transform_12(%arg0: i32, %arg1: i32) -> (i32, i32) {
    %c0_i32 = arith.constant 0 : i32
    %c0_i32_0 = arith.constant 0 : i32
    %c0_i32_1 = arith.constant 0 : i32
    return %c0_i32, %c0_i32_0 : i32, i32
  }
  func.func @transform_13(%arg0: i32, %arg1: i32) -> (i32, i32) {
    %c0_i32 = arith.constant 0 : i32
    %c0_i32_0 = arith.constant 0 : i32
    %c0_i32_1 = arith.constant 0 : i32
    return %c0_i32, %c0_i32_0 : i32, i32
  }
  func.func @transform_14(%arg0: i32, %arg1: i32) -> (i32, i32) {
    %c0_i32 = arith.constant 0 : i32
    %c0_i32_0 = arith.constant 0 : i32
    %c0_i32_1 = arith.constant 0 : i32
    return %c0_i32, %c0_i32_0 : i32, i32
  }
  func.func @transform_15(%arg0: i32, %arg1: i32) -> (i32, i32, i32, i32) {
    %c0_i32 = arith.constant 0 : i32
    %c0_i32_0 = arith.constant 0 : i32
    %c0_i32_1 = arith.constant 0 : i32
    return %arg0, %arg1, %c0_i32, %c0_i32_0 : i32, i32, i32, i32
  }
  func.func @transform_16(%arg0: i32, %arg1: i32) -> (i32, i32, i32, i32) {
    %c0_i32 = arith.constant 0 : i32
    %c0_i32_0 = arith.constant 0 : i32
    %c0_i32_1 = arith.constant 0 : i32
    return %arg0, %arg1, %c0_i32, %c0_i32_0 : i32, i32, i32, i32
  }
}

</mosaic_0001>

<llo_original>
// kernel: counting_head_forward.2
$region0: #{counting_head_forward.2}
  #allocation0 [shape = 'u32[]', space=smem, size = 0x4, offset = 0x4, fixed_abs, tag = 'smem constant byte address 0x4 - core index']
  #allocation1 [shape = 'u32[144,128]{1,0:T(1,128)}', space=vmem, size = 0x12000, scoped, tag = 'internal scratch']
  %s0 = inlined_call_operand.vmem [shape: f32[2,32,64], index: 0, kind: input, shape index: {}]
  %s1 = inlined_call_operand.vmem [shape: f32[16,32], index: 1, kind: input, shape index: {}]
  %s2 = inlined_call_operand.vmem [shape: f32[16,1], index: 2, kind: input, shape index: {}]
  %s3 = inlined_call_operand.vmem [shape: f32[2,16,64], index: 3, kind: output, shape index: {}]
  %s4 = sld [smem:[#allocation0]]
  $region45: #{counting_head_forward.2} parent=0
    _
  %s6 = ssub.s32 1, %s4
  %s7 = scalar_select 0, %s6, %s4
  loop: start=0, step=1, limit=4
  $region2: #{counting_head_forward.2} parent=0 // loop_pre_header
    _
  $region3: #{counting_head_forward.2} parent=0 // loop_header
    %s9 = sphi 0, %s13
    %p10 = scmp.ge.s32.totalorder %s9, 4
    %s19 = sphi 0, %s21
    %s22 = sphi 0, %s19
    %s23 = sphi 0, %s22
    %s39 = sphi 0, %s23
    %s43 = sphi 0, %s43
    %s45 = sphi 0, %s43
    %s46 = sphi 0, %s45
    %s60 = sphi 0, %s46
    %s64 = sphi 0, %s64
    %s66 = sphi 0, %s64
    %s67 = sphi 0, %s66
    %s81 = sphi 0, %s67
    %s87 = sphi 0, %s89
    %s90 = sphi 0, %s87
    %s91 = sphi 0, %s90
    %s107 = sphi 0, %s91
  $region4: #{counting_head_forward.2} parent=0 // loop_header_branch
    %12 = sbr.rel (%p10) target = $region8
  $region5: #{counting_head_forward.2} parent=0 // loop_body
    %s14 = ssub.s32 %s9, 1
    %s15 = ssub.s32 %s9, 2
    %s16 = sadd.s32 %s9, 1
    %s17 = ssub.s32 %s9, %s16
    %p18 = scmp.eq.s32.totalorder %s17, 0
    %s20 = sadd.s32 %s19, 1
    %s21 = scalar_select %p18, %s19, %s20
    %p24 = pneg %p18
    %p25 = scmp.eq.s32.totalorder %s9, 1
    %p26 = por %p24, %p25
    %p27 = scmp.ne.s32.totalorder %s19, %s22
    %p28 = scmp.eq.s32.totalorder %s9, 0
    %p29 = por %p27, %p28
    %p30 = scmp.ne.s32.totalorder %s19, %s22
    %p31 = scmp.eq.s32.totalorder %s14, 1
    %p32 = por %p30, %p31
    %p33 = scmp.ne.s32.totalorder %s22, %s23
    %p34 = scmp.eq.s32.totalorder %s14, 0
    %p35 = por %p33, %p34
    %p36 = scmp.ne.s32.totalorder %s22, %s23
    %p37 = scmp.eq.s32.totalorder %s15, 1
    %p38 = por %p36, %p37
    %p40 = scmp.ne.s32.totalorder %s23, %s39
    %p41 = scmp.eq.s32.totalorder %s15, 0
    %p42 = por %p40, %p41
    %s44 = sadd.s32 %s43, 1
    %p47 = scmp.eq.s32.totalorder %s9, 1
    %p48 = scmp.ne.s32.totalorder %s43, %s45
    %p49 = scmp.eq.s32.totalorder %s9, 0
    %p50 = por %p48, %p49
    %p51 = scmp.ne.s32.totalorder %s43, %s45
    %p52 = scmp.eq.s32.totalorder %s14, 1
    %p53 = por %p51, %p52
    %p54 = scmp.ne.s32.totalorder %s45, %s46
    %p55 = scmp.eq.s32.totalorder %s14, 0
    %p56 = por %p54, %p55
    %p57 = scmp.ne.s32.totalorder %s45, %s46
    %p58 = scmp.eq.s32.totalorder %s15, 1
    %p59 = por %p57, %p58
    %p61 = scmp.ne.s32.totalorder %s46, %s60
    %p62 = scmp.eq.s32.totalorder %s15, 0
    %p63 = por %p61, %p62
    %s65 = sadd.s32 %s64, 1
    %p68 = scmp.eq.s32.totalorder %s9, 1
    %p69 = scmp.ne.s32.totalorder %s64, %s66
    %p70 = scmp.eq.s32.totalorder %s9, 0
    %p71 = por %p69, %p70
    %p72 = scmp.ne.s32.totalorder %s64, %s66
    %p73 = scmp.eq.s32.totalorder %s14, 1
    %p74 = por %p72, %p73
    %p75 = scmp.ne.s32.totalorder %s66, %s67
    %p76 = scmp.eq.s32.totalorder %s14, 0
    %p77 = por %p75, %p76
    %p78 = scmp.ne.s32.totalorder %s66, %s67
    %p79 = scmp.eq.s32.totalorder %s15, 1
    %p80 = por %p78, %p79
    %p82 = scmp.ne.s32.totalorder %s67, %s81
    %p83 = scmp.eq.s32.totalorder %s15, 0
    %p84 = por %p82, %p83
    %s85 = ssub.s32 %s9, %s16
    %p86 = scmp.eq.s32.totalorder %s85, 0
    %s88 = sadd.s32 %s87, 1
    %s89 = scalar_select %p86, %s87, %s88
    %p92 = pneg %p86
    %p93 = scmp.eq.s32.totalorder %s9, 1
    %p94 = por %p92, %p93
    %p95 = scmp.ne.s32.totalorder %s87, %s90
    %p96 = scmp.eq.s32.totalorder %s9, 0
    %p97 = por %p95, %p96
    %p98 = scmp.ne.s32.totalorder %s87, %s90
    %p99 = scmp.eq.s32.totalorder %s14, 1
    %p100 = por %p98, %p99
    %p101 = scmp.ne.s32.totalorder %s90, %s91
    %p102 = scmp.eq.s32.totalorder %s14, 0
    %p103 = por %p101, %p102
    %p104 = scmp.ne.s32.totalorder %s90, %s91
    %p105 = scmp.eq.s32.totalorder %s15, 1
    %p106 = por %p104, %p105
    %p108 = scmp.ne.s32.totalorder %s91, %s107
    %p109 = scmp.eq.s32.totalorder %s15, 0
    %p110 = por %p108, %p109
    %p111 = scmp.le.s32.totalorder 1, %s9
    %p112 = scmp.lt.s32.totalorder %s9, 3
    %p113 = pnand %p111, %p112
    %p114 = pneg %p113
    // Predicated region
    $region9: #{counting_head_forward.2} parent=5 // pred_check
      _
    $region10: #{counting_head_forward.2} parent=5 // pred_check_branch
      %116 = sbr.rel (%p113) target = $region12
    $region11: #{counting_head_forward.2} parent=5 // pred_region
      %s117 = ssub.s32 %s9, 1
      // Predicated region
      $region13: #{counting_head_forward.2} parent=11 // pred_check
        %p118 = pneg %p56
      $region14: #{counting_head_forward.2} parent=11 // pred_check_branch
        %120 = sbr.rel (%p118) target = $region16
      $region15: #{counting_head_forward.2} parent=11 // pred_region
        _
      $region16: #{counting_head_forward.2} parent=11 // pred_fallthru
        _
      // Predicated region
      $region17: #{counting_head_forward.2} parent=11 // pred_check
        %p121 = pneg %p77
      $region18: #{counting_head_forward.2} parent=11 // pred_check_branch
        %123 = sbr.rel (%p121) target = $region20
      $region19: #{counting_head_forward.2} parent=11 // pred_region
        _
      $region20: #{counting_head_forward.2} parent=11 // pred_fallthru
        _
    $region12: #{counting_head_forward.2} parent=5 // pred_fallthru
      _
    %p124 = scmp.lt.s32.totalorder %s9, 2
    // Predicated region
    $region21: #{counting_head_forward.2} parent=5 // pred_check
      %p125 = pneg %p124
    $region22: #{counting_head_forward.2} parent=5 // pred_check_branch
      %127 = sbr.rel (%p125) target = $region24
    $region23: #{counting_head_forward.2} parent=5 // pred_region
      // Predicated region
      $region25: #{counting_head_forward.2} parent=23 // pred_check
        %p128 = pneg %p29
      $region26: #{counting_head_forward.2} parent=23 // pred_check_branch
        %130 = sbr.rel (%p128) target = $region28
      $region27: #{counting_head_forward.2} parent=23 // pred_region
        %p131 = scmp.lt.s32.totalorder %s9, 1
        %s132 = scalar_select %p131, %s9, 1
        %s133 = smul.addr %s132, 4
        %s134 = smul.addr %s133, 8
        %s135 = scalar_lea.vmem %s0, %s134
      $region28: #{counting_head_forward.2} parent=23 // pred_fallthru
        _
    $region24: #{counting_head_forward.2} parent=5 // pred_fallthru
      _
    %p136 = scmp.le.s32.totalorder 1, %s9
    %p137 = scmp.lt.s32.totalorder %s9, 3
    %p138 = pnand %p136, %p137
    %p139 = pneg %p138
    // Predicated region
    $region29: #{counting_head_forward.2} parent=5 // pred_check
      _
    $region30: #{counting_head_forward.2} parent=5 // pred_check_branch
      %141 = sbr.rel (%p138) target = $region32
    $region31: #{counting_head_forward.2} parent=5 // pred_region
      %s142 = ssub.s32 %s9, 1
      %p143 = scmp.lt.s32.totalorder %s14, 1
      %s144 = scalar_select %p143, %s14, 1
      %s145 = smul.addr %s144, 4
      %s146 = smul.addr %s145, 8
      %s147 = scalar_lea.vmem %s0, %s146
      %p148 = pneg %p35
      %p149 = pneg %p32
      %p150 = pneg %p56
      %p151 = pneg %p53
      %p152 = pneg %p77
      %p153 = pneg %p74
      %p154 = pneg %p103
      %p155 = pneg %p100
      %p156 = scmp.lt.s32.totalorder %s14, 1
      %s157 = scalar_select %p156, %s14, 1
      %s158 = smul.addr %s157, 2
      %s159 = smul.addr %s158, 8
      %s160 = scalar_lea.vmem %s3, %s159
      %p161 = scmp.lt.s32.totalorder %s14, 1
      %s162 = scalar_select %p161, %s14, 1
      %s163 = smul.addr %s162, 4
      %s164 = smul.addr %s163, 8
      %s165 = scalar_lea.vmem %s0, %s164
      %p166 = scmp.lt.s32.totalorder %s14, 1
      %s167 = scalar_select %p166, %s14, 1
      %s168 = smul.addr %s167, 2
      %s169 = smul.addr %s168, 8
      %s170 = scalar_lea.vmem %s3, %s169
      %v171 = vld [vmem:[%s1] sm:$0xff]
      %v172 = vld [vmem:[%s1 + $0x8] sm:$0xff]
      %v173 = vld [vmem:[%s165] sm:$0xff]
      %v174 = vld [vmem:[%s165 + $0x8] sm:$0xff]
      %v175 = vld [vmem:[%s165 + $0x10] sm:$0xff]
      %v176 = vld [vmem:[%s165 + $0x18] sm:$0xff]
      %v177 = vld [vmem:[%s2] sm:$0xff]
      %v178 = vld [vmem:[%s2 + $0x8] sm:$0xff]
      %180 = vset.pattern.permute.xlu0 0
      %181 = vperm.xlu0 %180, %v177
      %v182 = vpop.permute.xlu0 %181
      %185 = vset.pattern.permute.xlu0 0
      %186 = vperm.xlu0 %185, %v178
      %v187 = vpop.permute.xlu0 %186
      %vm189 = vcmask 261120
      %v191 = vsel %vm189, %v171, 0
      %v194 = vsel %vm189, %v172, 0
      %196 = vmatprep.subr.mxu0 0.0
      %197 = vmatpush1.msra.mxu0 %v173
      %198 = vmatprep.subr.mxu0 0.0
      %199 = vmatpush1.msra.mxu0 %v174
      %200 = vmatprep.subr.mxu0 0.0
      %201 = vmatpush1.msra.mxu0 %v175
      %202 = vmatprep.subr.mxu0 0.0
      %203 = vmatpush1.msra.mxu0 %v176
      %204 = vmatprep.subr.mxu0 0.0
      %205 = vmatpush1.msra.mxu0 0.0
      %206 = vmatprep.subr.mxu0 0.0
      %207 = vmatpush1.msra.mxu0 0.0
      %208 = vmatprep.subr.mxu0 0.0
      %209 = vmatpush1.msra.mxu0 0.0
      %210 = vmatprep.subr.mxu0 0.0
      %211 = vmatpush1.msra.mxu0 0.0
      %212 = vmatprep.subr.mxu0 0.0
      %213 = vmatpush1.msra.mxu0 0.0
      %214 = vmatprep.subr.mxu0 0.0
      %215 = vmatpush1.msra.mxu0 0.0
      %216 = vmatprep.subr.mxu0 0.0
      %217 = vmatpush1.msra.mxu0 0.0
      %218 = vmatprep.subr.mxu0 0.0
      %219 = vmatpush1.msra.mxu0 0.0
      %220 = vmatprep.subr.mxu0 0.0
      %221 = vmatpush1.msra.mxu0 0.0
      %222 = vmatprep.subr.mxu0 0.0
      %223 = vmatpush1.msra.mxu0 0.0
      %224 = vmatprep.subr.mxu0 0.0
      %225 = vmatpush1.msra.mxu0 0.0
      %226 = vmatprep.subr.mxu0 0.0
      %227 = vmatpush1.msra.mxu0 0.0
      %228 = vmatprep.subr.mxu0 0.0
      %229 = vmatpush1.msra.mxu0 0.0
      %230 = vmatprep.subr.mxu0 0.0
      %231 = vmatpush1.msra.mxu0 0.0
      %232 = vmatprep.subr.mxu0 0.0
      %233 = vmatpush1.msra.mxu0 0.0
      %234 = vmatprep.subr.mxu0 0.0
      %235 = vmatpush1.msra.mxu0 0.0
      %236 = vmatprep.subr.mxu0 0.0
      %237 = vmatpush1.msra.mxu0 0.0
      %238 = vmatprep.subr.mxu0 0.0
      %239 = vmatpush1.msra.mxu0 0.0
      %240 = vmatprep.subr.mxu0 0.0
      %241 = vmatpush1.msra.mxu0 0.0
      %242 = vmatprep.subr.mxu0 0.0
      %243 = vmatpush1.msra.mxu0 0.0
      %244 = vmatprep.subr.mxu0 0.0
      %245 = vmatpush1.msra.mxu0 0.0
      %246 = vmatprep.subr.mxu0 0.0
      %247 = vmatpush1.msra.mxu0 0.0
      %248 = vmatprep.subr.mxu0 0.0
      %249 = vmatpush1.msra.mxu0 0.0
      %250 = vmatprep.subr.mxu0 0.0
      %251 = vmatpush1.msra.mxu0 0.0
      %252 = vmatprep.subr.mxu0 0.0
      %253 = vmatpush1.msra.mxu0 0.0
      %254 = vmatprep.subr.mxu0 0.0
      %255 = vmatpush1.msra.mxu0 0.0
      %256 = vmatprep.subr.mxu0 0.0
      %257 = vmatpush1.msra.mxu0 0.0
      %258 = vmatprep.subr.mxu0 0.0
      %259 = vmatpush1.msra.mxu0 0.0
      %260 = vmatprep.mubr.f32.mxu0 0.0
      %261 = vmatmul.mubr.f32.gmra.mrb[0].mxu0 %v191
      %v262 = vpop.f32.mrb[0].mxu0
      %v263 = vadd.f32 %v182, %v262
      %v264 = vpop.f32.mrb[0].mxu0
      %265 = vmatprep.mubr.f32.mxu0 0.0
      %266 = vmatmul.mubr.f32.gmra.mrb[0].mxu0 %v194
      %v267 = vpop.f32.mrb[0].mxu0
      %v268 = vadd.f32 %v187, %v267
      %v269 = vpop.f32.mrb[0].mxu0
      %270 = vdwg.mxu0
      %vm271 = vcmask 523264
      %272 = vst.msk [vmem:[%s170] sm:$0xff] %vm271, %v263
      %273 = vst.msk [vmem:[%s170 + $0x8] sm:$0xff] %vm271, %v268
      %p274 = scmp.lt.s32.totalorder %s14, 1
      %s275 = scalar_select %p274, %s14, 1
      %s276 = smul.addr %s275, 2
      %s277 = smul.addr %s276, 8
      %s278 = scalar_lea.vmem %s3, %s277
      // Predicated region
      $region33: #{counting_head_forward.2} parent=31 // pred_check
        %p279 = pneg %p100
      $region34: #{counting_head_forward.2} parent=31 // pred_check_branch
        %281 = sbr.rel (%p279) target = $region36
      $region35: #{counting_head_forward.2} parent=31 // pred_region
        _
      $region36: #{counting_head_forward.2} parent=31 // pred_fallthru
        _
    $region32: #{counting_head_forward.2} parent=5 // pred_fallthru
      _
    %p282 = scmp.le.s32.totalorder 2, %s9
    // Predicated region
    $region37: #{counting_head_forward.2} parent=5 // pred_check
      %p283 = pneg %p282
    $region38: #{counting_head_forward.2} parent=5 // pred_check_branch
      %285 = sbr.rel (%p283) target = $region40
    $region39: #{counting_head_forward.2} parent=5 // pred_region
      %s286 = ssub.s32 %s9, 2
      // Predicated region
      $region41: #{counting_head_forward.2} parent=39 // pred_check
        %p287 = pneg %p106
      $region42: #{counting_head_forward.2} parent=39 // pred_check_branch
        %289 = sbr.rel (%p287) target = $region44
      $region43: #{counting_head_forward.2} parent=39 // pred_region
        %p290 = scmp.lt.s32.totalorder %s15, 1
        %s291 = scalar_select %p290, %s15, 1
        %s292 = smul.addr %s291, 2
        %s293 = smul.addr %s292, 8
        %s294 = scalar_lea.vmem %s3, %s293
      $region44: #{counting_head_forward.2} parent=39 // pred_fallthru
        _
    $region40: #{counting_head_forward.2} parent=5 // pred_fallthru
      _
  $region6: #{counting_head_forward.2} parent=0 // loop_footer
    %s13 = sadd.s32 1, %s9
  $region7: #{counting_head_forward.2} parent=0 // loop_footer_branch
    %8 = sbr.rel target = $region3
  $region8: #{counting_head_forward.2} parent=0 // loop_exit
    _

// kernel: counting_head_forward.3
$region0: #{counting_head_forward.3}
  #allocation0 [shape = 'u32[]', space=smem, size = 0x4, offset = 0x4, fixed_abs, tag = 'smem constant byte address 0x4 - core index']
  #allocation1 [shape = 'u32[144,128]{1,0:T(1,128)}', space=vmem, size = 0x12000, scoped, tag = 'internal scratch']
  #allocation2 [shape = 'f32[224,14]{1,0:T(8,128)}', space=vmem, size = 0x1c000, scoped, tag = 'scratch operand']
  #allocation3 [shape = 'f32[176,22]{1,0:T(8,128)}', space=vmem, size = 0x16000, scoped, tag = 'scratch operand']
  #allocation4 [shape = 'f32[152,38]{1,0:T(8,128)}', space=vmem, size = 0x13000, scoped, tag = 'scratch operand']
  #allocation5 [shape = 'f32[140,70]{1,0:T(8,128)}', space=vmem, size = 0x12000, scoped, tag = 'scratch operand']
  %s0 = inlined_call_operand.vmem [shape: f32[2,1,128,8], index: 0, kind: input, shape index: {}]
  %s1 = inlined_call_operand.vmem [shape: f32[7,64,224], index: 1, kind: input, shape index: {}]
  %s2 = inlined_call_operand.vmem [shape: f32[7,64,176], index: 2, kind: input, shape index: {}]
  %s3 = inlined_call_operand.vmem [shape: f32[7,64,152], index: 3, kind: input, shape index: {}]
  %s4 = inlined_call_operand.vmem [shape: f32[7,64,140], index: 4, kind: input, shape index: {}]
  %s5 = inlined_call_operand.vmem [shape: f32[64,1], index: 5, kind: input, shape index: {}]
  %s6 = inlined_call_operand.vmem [shape: f32[64,1], index: 6, kind: input, shape index: {}]
  %s7 = inlined_call_operand.vmem [shape: f32[64,1], index: 7, kind: input, shape index: {}]
  %s8 = inlined_call_operand.vmem [shape: f32[64,1], index: 8, kind: input, shape index: {}]
  %s9 = inlined_call_operand.vmem [shape: f32[8,16], index: 9, kind: input, shape index: {}]
  %s10 = inlined_call_operand.vmem [shape: f32[16,32], index: 10, kind: input, shape index: {}]
  %s11 = inlined_call_operand.vmem [shape: f32[32,64], index: 11, kind: input, shape index: {}]
  %s12 = inlined_call_operand.vmem [shape: f32[16,8], index: 12, kind: input, shape index: {}]
  %s13 = inlined_call_operand.vmem [shape: f32[32,16], index: 13, kind: input, shape index: {}]
  %s14 = inlined_call_operand.vmem [shape: f32[64,32], index: 14, kind: input, shape index: {}]
  %s15 = inlined_call_operand.hbm [shape: f32[2,1,64,64], index: 15, kind: output, shape index: {0}]
  %s16 = inlined_call_operand.vmem [shape: f32[2,1,1,1], index: 16, kind: output, shape index: {1}]
  %17 = xla_tuple %s15, %s16
  %s18 = sld [smem:[#allocation0]]
  $region101: #{counting_head_forward.3} parent=0
    _
  %s20 = ssub.s32 1, %s18
  %s21 = scalar_select 0, %s20, %s18
  $region1: #{counting_head_forward.3} parent=0
    #allocation6 [shape = 'u8[65536]{0}', space=vmem, size = 0x10000, scoped, tag = 'output window, operand 0']
    #allocation7 [shape = 's32[2]{0}', space=sflag, size = 0x8, scoped, tag = 'scoped memory for counting_head_forward.3']
    %22 = vsyncpa [#allocation7], 0
    %s23 = scalar_lea.sflag [#allocation7], 1
    %24 = vsyncpa %s23, 0
    loop: start=0, step=1, limit=4
    $region2: #{counting_head_forward.3} parent=1 // loop_pre_header
      _
    $region3: #{counting_head_forward.3} parent=1 // loop_header
      %s26 = sphi 0, %s30
      %p27 = scmp.ge.s32.totalorder %s26, 4
      %s33 = sphi 0, %s45
      %s34 = sphi 0, %s41
      %s35 = sphi 0, %s33
      %s36 = sphi 0, %s34
      %s37 = sphi 0, %s35
      %s38 = sphi 0, %s36
      %s50 = sphi 0, %s52
      %s53 = sphi 0, %s50
      %s54 = sphi 0, %s53
      %s70 = sphi 0, %s54
      %s74 = sphi 0, %s74
      %s76 = sphi 0, %s74
      %s77 = sphi 0, %s76
      %s91 = sphi 0, %s77
      %s95 = sphi 0, %s95
      %s97 = sphi 0, %s95
      %s98 = sphi 0, %s97
      %s112 = sphi 0, %s98
      %s116 = sphi 0, %s116
      %s118 = sphi 0, %s116
      %s119 = sphi 0, %s118
      %s133 = sphi 0, %s119
      %s137 = sphi 0, %s137
      %s139 = sphi 0, %s137
      %s140 = sphi 0, %s139
      %s154 = sphi 0, %s140
      %s158 = sphi 0, %s158
      %s160 = sphi 0, %s158
      %s161 = sphi 0, %s160
      %s175 = sphi 0, %s161
      %s179 = sphi 0, %s179
      %s181 = sphi 0, %s179
      %s182 = sphi 0, %s181
      %s196 = sphi 0, %s182
      %s200 = sphi 0, %s200
      %s202 = sphi 0, %s200
      %s203 = sphi 0, %s202
      %s217 = sphi 0, %s203
      %s221 = sphi 0, %s221
      %s223 = sphi 0, %s221
      %s224 = sphi 0, %s223
      %s238 = sphi 0, %s224
      %s242 = sphi 0, %s242
      %s244 = sphi 0, %s242
      %s245 = sphi 0, %s244
      %s259 = sphi 0, %s245
      %s263 = sphi 0, %s263
      %s265 = sphi 0, %s263
      %s266 = sphi 0, %s265
      %s280 = sphi 0, %s266
      %s284 = sphi 0, %s284
      %s286 = sphi 0, %s284
      %s287 = sphi 0, %s286
      %s301 = sphi 0, %s287
      %s305 = sphi 0, %s305
      %s307 = sphi 0, %s305
      %s308 = sphi 0, %s307
      %s322 = sphi 0, %s308
      %s326 = sphi 0, %s326
      %s328 = sphi 0, %s326
      %s329 = sphi 0, %s328
      %s343 = sphi 0, %s329
      %s347 = sphi 0, %s347
      %s349 = sphi 0, %s347
      %s350 = sphi 0, %s349
      %s364 = sphi 0, %s350
      %s372 = sphi 0, %s374
      %s375 = sphi 0, %s372
      %s376 = sphi 0, %s375
      %s392 = sphi 0, %s376
      %s400 = sphi 0, %s402
      %s403 = sphi 0, %s400
      %s404 = sphi 0, %s403
      %s420 = sphi 0, %s404
    $region4: #{counting_head_forward.3} parent=1 // loop_header_branch
      %29 = sbr.rel (%p27) target = $region8
    $region5: #{counting_head_forward.3} parent=1 // loop_body
      %s31 = ssub.s32 %s26, 1
      %s32 = ssub.s32 %s26, 2
      %s39 = sadd.s32 1, %s34
      %p40 = scmp.ge.s32.totalorder %s39, 1
      %s41 = scalar_select %p40, 0, %s39
      %s42 = sadd.s32 1, %s33
      %s43 = scalar_select %p40, %s42, %s33
      %p44 = scmp.ge.s32.totalorder %s43, 2
      %s45 = scalar_select %p44, 0, %s43
      %s46 = ssub.s32 %s33, %s45
      %s47 = ssub.s32 %s34, %s41
      %s48 = sor.u32 %s46, %s47
      %p49 = scmp.eq.s32.totalorder %s48, 0
      %s51 = sadd.s32 %s50, 1
      %s52 = scalar_select %p49, %s50, %s51
      %p55 = pneg %p49
      %p56 = scmp.eq.s32.totalorder %s26, 1
      %p57 = por %p55, %p56
      %p58 = scmp.ne.s32.totalorder %s50, %s53
      %p59 = scmp.eq.s32.totalorder %s26, 0
      %p60 = por %p58, %p59
      %p61 = scmp.ne.s32.totalorder %s50, %s53
      %p62 = scmp.eq.s32.totalorder %s31, 1
      %p63 = por %p61, %p62
      %p64 = scmp.ne.s32.totalorder %s53, %s54
      %p65 = scmp.eq.s32.totalorder %s31, 0
      %p66 = por %p64, %p65
      %p67 = scmp.ne.s32.totalorder %s53, %s54
      %p68 = scmp.eq.s32.totalorder %s32, 1
      %p69 = por %p67, %p68
      %p71 = scmp.ne.s32.totalorder %s54, %s70
      %p72 = scmp.eq.s32.totalorder %s32, 0
      %p73 = por %p71, %p72
      %s75 = sadd.s32 %s74, 1
      %p78 = scmp.eq.s32.totalorder %s26, 1
      %p79 = scmp.ne.s32.totalorder %s74, %s76
      %p80 = scmp.eq.s32.totalorder %s26, 0
      %p81 = por %p79, %p80
      %p82 = scmp.ne.s32.totalorder %s74, %s76
      %p83 = scmp.eq.s32.totalorder %s31, 1
      %p84 = por %p82, %p83
      %p85 = scmp.ne.s32.totalorder %s76, %s77
      %p86 = scmp.eq.s32.totalorder %s31, 0
      %p87 = por %p85, %p86
      %p88 = scmp.ne.s32.totalorder %s76, %s77
      %p89 = scmp.eq.s32.totalorder %s32, 1
      %p90 = por %p88, %p89
      %p92 = scmp.ne.s32.totalorder %s77, %s91
      %p93 = scmp.eq.s32.totalorder %s32, 0
      %p94 = por %p92, %p93
      %s96 = sadd.s32 %s95, 1
      %p99 = scmp.eq.s32.totalorder %s26, 1
      %p100 = scmp.ne.s32.totalorder %s95, %s97
      %p101 = scmp.eq.s32.totalorder %s26, 0
      %p102 = por %p100, %p101
      %p103 = scmp.ne.s32.totalorder %s95, %s97
      %p104 = scmp.eq.s32.totalorder %s31, 1
      %p105 = por %p103, %p104
      %p106 = scmp.ne.s32.totalorder %s97, %s98
      %p107 = scmp.eq.s32.totalorder %s31, 0
      %p108 = por %p106, %p107
      %p109 = scmp.ne.s32.totalorder %s97, %s98
      %p110 = scmp.eq.s32.totalorder %s32, 1
      %p111 = por %p109, %p110
      %p113 = scmp.ne.s32.totalorder %s98, %s112
      %p114 = scmp.eq.s32.totalorder %s32, 0
      %p115 = por %p113, %p114
      %s117 = sadd.s32 %s116, 1
      %p120 = scmp.eq.s32.totalorder %s26, 1
      %p121 = scmp.ne.s32.totalorder %s116, %s118
      %p122 = scmp.eq.s32.totalorder %s26, 0
      %p123 = por %p121, %p122
      %p124 = scmp.ne.s32.totalorder %s116, %s118
      %p125 = scmp.eq.s32.totalorder %s31, 1
      %p126 = por %p124, %p125
      %p127 = scmp.ne.s32.totalorder %s118, %s119
      %p128 = scmp.eq.s32.totalorder %s31, 0
      %p129 = por %p127, %p128
      %p130 = scmp.ne.s32.totalorder %s118, %s119
      %p131 = scmp.eq.s32.totalorder %s32, 1
      %p132 = por %p130, %p131
      %p134 = scmp.ne.s32.totalorder %s119, %s133
      %p135 = scmp.eq.s32.totalorder %s32, 0
      %p136 = por %p134, %p135
      %s138 = sadd.s32 %s137, 1
      %p141 = scmp.eq.s32.totalorder %s26, 1
      %p142 = scmp.ne.s32.totalorder %s137, %s139
      %p143 = scmp.eq.s32.totalorder %s26, 0
      %p144 = por %p142, %p143
      %p145 = scmp.ne.s32.totalorder %s137, %s139
      %p146 = scmp.eq.s32.totalorder %s31, 1
      %p147 = por %p145, %p146
      %p148 = scmp.ne.s32.totalorder %s139, %s140
      %p149 = scmp.eq.s32.totalorder %s31, 0
      %p150 = por %p148, %p149
      %p151 = scmp.ne.s32.totalorder %s139, %s140
      %p152 = scmp.eq.s32.totalorder %s32, 1
      %p153 = por %p151, %p152
      %p155 = scmp.ne.s32.totalorder %s140, %s154
      %p156 = scmp.eq.s32.totalorder %s32, 0
      %p157 = por %p155, %p156
      %s159 = sadd.s32 %s158, 1
      %p162 = scmp.eq.s32.totalorder %s26, 1
      %p163 = scmp.ne.s32.totalorder %s158, %s160
      %p164 = scmp.eq.s32.totalorder %s26, 0
      %p165 = por %p163, %p164
      %p166 = scmp.ne.s32.totalorder %s158, %s160
      %p167 = scmp.eq.s32.totalorder %s31, 1
      %p168 = por %p166, %p167
      %p169 = scmp.ne.s32.totalorder %s160, %s161
      %p170 = scmp.eq.s32.totalorder %s31, 0
      %p171 = por %p169, %p170
      %p172 = scmp.ne.s32.totalorder %s160, %s161
      %p173 = scmp.eq.s32.totalorder %s32, 1
      %p174 = por %p172, %p173
      %p176 = scmp.ne.s32.totalorder %s161, %s175
      %p177 = scmp.eq.s32.totalorder %s32, 0
      %p178 = por %p176, %p177
      %s180 = sadd.s32 %s179, 1
      %p183 = scmp.eq.s32.totalorder %s26, 1
      %p184 = scmp.ne.s32.totalorder %s179, %s181
      %p185 = scmp.eq.s32.totalorder %s26, 0
      %p186 = por %p184, %p185
      %p187 = scmp.ne.s32.totalorder %s179, %s181
      %p188 = scmp.eq.s32.totalorder %s31, 1
      %p189 = por %p187, %p188
      %p190 = scmp.ne.s32.totalorder %s181, %s182
      %p191 = scmp.eq.s32.totalorder %s31, 0
      %p192 = por %p190, %p191
      %p193 = scmp.ne.s32.totalorder %s181, %s182
      %p194 = scmp.eq.s32.totalorder %s32, 1
      %p195 = por %p193, %p194
      %p197 = scmp.ne.s32.totalorder %s182, %s196
      %p198 = scmp.eq.s32.totalorder %s32, 0
      %p199 = por %p197, %p198
      %s201 = sadd.s32 %s200, 1
      %p204 = scmp.eq.s32.totalorder %s26, 1
      %p205 = scmp.ne.s32.totalorder %s200, %s202
      %p206 = scmp.eq.s32.totalorder %s26, 0
      %p207 = por %p205, %p206
      %p208 = scmp.ne.s32.totalorder %s200, %s202
      %p209 = scmp.eq.s32.totalorder %s31, 1
      %p210 = por %p208, %p209
      %p211 = scmp.ne.s32.totalorder %s202, %s203
      %p212 = scmp.eq.s32.totalorder %s31, 0
      %p213 = por %p211, %p212
      %p214 = scmp.ne.s32.totalorder %s202, %s203
      %p215 = scmp.eq.s32.totalorder %s32, 1
      %p216 = por %p214, %p215
      %p218 = scmp.ne.s32.totalorder %s203, %s217
      %p219 = scmp.eq.s32.totalorder %s32, 0
      %p220 = por %p218, %p219
      %s222 = sadd.s32 %s221, 1
      %p225 = scmp.eq.s32.totalorder %s26, 1
      %p226 = scmp.ne.s32.totalorder %s221, %s223
      %p227 = scmp.eq.s32.totalorder %s26, 0
      %p228 = por %p226, %p227
      %p229 = scmp.ne.s32.totalorder %s221, %s223
      %p230 = scmp.eq.s32.totalorder %s31, 1
      %p231 = por %p229, %p230
      %p232 = scmp.ne.s32.totalorder %s223, %s224
      %p233 = scmp.eq.s32.totalorder %s31, 0
      %p234 = por %p232, %p233
      %p235 = scmp.ne.s32.totalorder %s223, %s224
      %p236 = scmp.eq.s32.totalorder %s32, 1
      %p237 = por %p235, %p236
      %p239 = scmp.ne.s32.totalorder %s224, %s238
      %p240 = scmp.eq.s32.totalorder %s32, 0
      %p241 = por %p239, %p240
      %s243 = sadd.s32 %s242, 1
      %p246 = scmp.eq.s32.totalorder %s26, 1
      %p247 = scmp.ne.s32.totalorder %s242, %s244
      %p248 = scmp.eq.s32.totalorder %s26, 0
      %p249 = por %p247, %p248
      %p250 = scmp.ne.s32.totalorder %s242, %s244
      %p251 = scmp.eq.s32.totalorder %s31, 1
      %p252 = por %p250, %p251
      %p253 = scmp.ne.s32.totalorder %s244, %s245
      %p254 = scmp.eq.s32.totalorder %s31, 0
      %p255 = por %p253, %p254
      %p256 = scmp.ne.s32.totalorder %s244, %s245
      %p257 = scmp.eq.s32.totalorder %s32, 1
      %p258 = por %p256, %p257
      %p260 = scmp.ne.s32.totalorder %s245, %s259
      %p261 = scmp.eq.s32.totalorder %s32, 0
      %p262 = por %p260, %p261
      %s264 = sadd.s32 %s263, 1
      %p267 = scmp.eq.s32.totalorder %s26, 1
      %p268 = scmp.ne.s32.totalorder %s263, %s265
      %p269 = scmp.eq.s32.totalorder %s26, 0
      %p270 = por %p268, %p269
      %p271 = scmp.ne.s32.totalorder %s263, %s265
      %p272 = scmp.eq.s32.totalorder %s31, 1
      %p273 = por %p271, %p272
      %p274 = scmp.ne.s32.totalorder %s265, %s266
      %p275 = scmp.eq.s32.totalorder %s31, 0
      %p276 = por %p274, %p275
      %p277 = scmp.ne.s32.totalorder %s265, %s266
      %p278 = scmp.eq.s32.totalorder %s32, 1
      %p279 = por %p277, %p278
      %p281 = scmp.ne.s32.totalorder %s266, %s280
      %p282 = scmp.eq.s32.totalorder %s32, 0
      %p283 = por %p281, %p282
      %s285 = sadd.s32 %s284, 1
      %p288 = scmp.eq.s32.totalorder %s26, 1
      %p289 = scmp.ne.s32.totalorder %s284, %s286
      %p290 = scmp.eq.s32.totalorder %s26, 0
      %p291 = por %p289, %p290
      %p292 = scmp.ne.s32.totalorder %s284, %s286
      %p293 = scmp.eq.s32.totalorder %s31, 1
      %p294 = por %p292, %p293
      %p295 = scmp.ne.s32.totalorder %s286, %s287
      %p296 = scmp.eq.s32.totalorder %s31, 0
      %p297 = por %p295, %p296
      %p298 = scmp.ne.s32.totalorder %s286, %s287
      %p299 = scmp.eq.s32.totalorder %s32, 1
      %p300 = por %p298, %p299
      %p302 = scmp.ne.s32.totalorder %s287, %s301
      %p303 = scmp.eq.s32.totalorder %s32, 0
      %p304 = por %p302, %p303
      %s306 = sadd.s32 %s305, 1
      %p309 = scmp.eq.s32.totalorder %s26, 1
      %p310 = scmp.ne.s32.totalorder %s305, %s307
      %p311 = scmp.eq.s32.totalorder %s26, 0
      %p312 = por %p310, %p311
      %p313 = scmp.ne.s32.totalorder %s305, %s307
      %p314 = scmp.eq.s32.totalorder %s31, 1
      %p315 = por %p313, %p314
      %p316 = scmp.ne.s32.totalorder %s307, %s308
      %p317 = scmp.eq.s32.totalorder %s31, 0
      %p318 = por %p316, %p317
      %p319 = scmp.ne.s32.totalorder %s307, %s308
      %p320 = scmp.eq.s32.totalorder %s32, 1
      %p321 = por %p319, %p320
      %p323 = scmp.ne.s32.totalorder %s308, %s322
      %p324 = scmp.eq.s32.totalorder %s32, 0
      %p325 = por %p323, %p324
      %s327 = sadd.s32 %s326, 1
      %p330 = scmp.eq.s32.totalorder %s26, 1
      %p331 = scmp.ne.s32.totalorder %s326, %s328
      %p332 = scmp.eq.s32.totalorder %s26, 0
      %p333 = por %p331, %p332
      %p334 = scmp.ne.s32.totalorder %s326, %s328
      %p335 = scmp.eq.s32.totalorder %s31, 1
      %p336 = por %p334, %p335
      %p337 = scmp.ne.s32.totalorder %s328, %s329
      %p338 = scmp.eq.s32.totalorder %s31, 0
      %p339 = por %p337, %p338
      %p340 = scmp.ne.s32.totalorder %s328, %s329
      %p341 = scmp.eq.s32.totalorder %s32, 1
      %p342 = por %p340, %p341
      %p344 = scmp.ne.s32.totalorder %s329, %s343
      %p345 = scmp.eq.s32.totalorder %s32, 0
      %p346 = por %p344, %p345
      %s348 = sadd.s32 %s347, 1
      %p351 = scmp.eq.s32.totalorder %s26, 1
      %p352 = scmp.ne.s32.totalorder %s347, %s349
      %p353 = scmp.eq.s32.totalorder %s26, 0
      %p354 = por %p352, %p353
      %p355 = scmp.ne.s32.totalorder %s347, %s349
      %p356 = scmp.eq.s32.totalorder %s31, 1
      %p357 = por %p355, %p356
      %p358 = scmp.ne.s32.totalorder %s349, %s350
      %p359 = scmp.eq.s32.totalorder %s31, 0
      %p360 = por %p358, %p359
      %p361 = scmp.ne.s32.totalorder %s349, %s350
      %p362 = scmp.eq.s32.totalorder %s32, 1
      %p363 = por %p361, %p362
      %p365 = scmp.ne.s32.totalorder %s350, %s364
      %p366 = scmp.eq.s32.totalorder %s32, 0
      %p367 = por %p365, %p366
      %s368 = ssub.s32 %s33, %s45
      %s369 = ssub.s32 %s34, %s41
      %s370 = sor.u32 %s368, %s369
      %p371 = scmp.eq.s32.totalorder %s370, 0
      %s373 = sadd.s32 %s372, 1
      %s374 = scalar_select %p371, %s372, %s373
      %p377 = pneg %p371
      %p378 = scmp.eq.s32.totalorder %s26, 1
      %p379 = por %p377, %p378
      %p380 = scmp.ne.s32.totalorder %s372, %s375
      %p381 = scmp.eq.s32.totalorder %s26, 0
      %p382 = por %p380, %p381
      %p383 = scmp.ne.s32.totalorder %s372, %s375
      %p384 = scmp.eq.s32.totalorder %s31, 1
      %p385 = por %p383, %p384
      %p386 = scmp.ne.s32.totalorder %s375, %s376
      %p387 = scmp.eq.s32.totalorder %s31, 0
      %p388 = por %p386, %p387
      %p389 = scmp.ne.s32.totalorder %s375, %s376
      %p390 = scmp.eq.s32.totalorder %s32, 1
      %p391 = por %p389, %p390
      %p393 = scmp.ne.s32.totalorder %s376, %s392
      %p394 = scmp.eq.s32.totalorder %s32, 0
      %p395 = por %p393, %p394
      %s396 = ssub.s32 %s33, %s45
      %s397 = ssub.s32 %s34, %s41
      %s398 = sor.u32 %s396, %s397
      %p399 = scmp.eq.s32.totalorder %s398, 0
      %s401 = sadd.s32 %s400, 1
      %s402 = scalar_select %p399, %s400, %s401
      %p405 = pneg %p399
      %p406 = scmp.eq.s32.totalorder %s26, 1
      %p407 = por %p405, %p406
      %p408 = scmp.ne.s32.totalorder %s400, %s403
      %p409 = scmp.eq.s32.totalorder %s26, 0
      %p410 = por %p408, %p409
      %p411 = scmp.ne.s32.totalorder %s400, %s403
      %p412 = scmp.eq.s32.totalorder %s31, 1
      %p413 = por %p411, %p412
      %p414 = scmp.ne.s32.totalorder %s403, %s404
      %p415 = scmp.eq.s32.totalorder %s31, 0
      %p416 = por %p414, %p415
      %p417 = scmp.ne.s32.totalorder %s403, %s404
      %p418 = scmp.eq.s32.totalorder %s32, 1
      %p419 = por %p417, %p418
      %p421 = scmp.ne.s32.totalorder %s404, %s420
      %p422 = scmp.eq.s32.totalorder %s32, 0
      %p423 = por %p421, %p422
      %p424 = scmp.le.s32.totalorder 1, %s26
      %p425 = scmp.lt.s32.totalorder %s26, 3
      %p426 = pnand %p424, %p425
      %p427 = pneg %p426
      // Predicated region
      $region9: #{counting_head_forward.3} parent=5 // pred_check
        _
      $region10: #{counting_head_forward.3} parent=5 // pred_check_branch
        %429 = sbr.rel (%p426) target = $region12
      $region11: #{counting_head_forward.3} parent=5 // pred_region
        %s430 = ssub.s32 %s26, 1
        // Predicated region
        $region13: #{counting_head_forward.3} parent=11 // pred_check
          %p431 = pneg %p87
        $region14: #{counting_head_forward.3} parent=11 // pred_check_branch
          %433 = sbr.rel (%p431) target = $region16
        $region15: #{counting_head_forward.3} parent=11 // pred_region
          _
        $region16: #{counting_head_forward.3} parent=11 // pred_fallthru
          _
        // Predicated region
        $region17: #{counting_head_forward.3} parent=11 // pred_check
          %p434 = pneg %p108
        $region18: #{counting_head_forward.3} parent=11 // pred_check_branch
          %436 = sbr.rel (%p434) target = $region20
        $region19: #{counting_head_forward.3} parent=11 // pred_region
          _
        $region20: #{counting_head_forward.3} parent=11 // pred_fallthru
          _
        // Predicated region
        $region21: #{counting_head_forward.3} parent=11 // pred_check
          %p437 = pneg %p129
        $region22: #{counting_head_forward.3} parent=11 // pred_check_branch
          %439 = sbr.rel (%p437) target = $region24
        $region23: #{counting_head_forward.3} parent=11 // pred_region
          _
        $region24: #{counting_head_forward.3} parent=11 // pred_fallthru
          _
        // Predicated region
        $region25: #{counting_head_forward.3} parent=11 // pred_check
          %p440 = pneg %p150
        $region26: #{counting_head_forward.3} parent=11 // pred_check_branch
          %442 = sbr.rel (%p440) target = $region28
        $region27: #{counting_head_forward.3} parent=11 // pred_region
          _
        $region28: #{counting_head_forward.3} parent=11 // pred_fallthru
          _
        // Predicated region
        $region29: #{counting_head_forward.3} parent=11 // pred_check
          %p443 = pneg %p171
        $region30: #{counting_head_forward.3} parent=11 // pred_check_branch
          %445 = sbr.rel (%p443) target = $region32
        $region31: #{counting_head_forward.3} parent=11 // pred_region
          _
        $region32: #{counting_head_forward.3} parent=11 // pred_fallthru
          _
        // Predicated region
        $region33: #{counting_head_forward.3} parent=11 // pred_check
          %p446 = pneg %p192
        $region34: #{counting_head_forward.3} parent=11 // pred_check_branch
          %448 = sbr.rel (%p446) target = $region36
        $region35: #{counting_head_forward.3} parent=11 // pred_region
          _
        $region36: #{counting_head_forward.3} parent=11 // pred_fallthru
          _
        // Predicated region
        $region37: #{counting_head_forward.3} parent=11 // pred_check
          %p449 = pneg %p213
        $region38: #{counting_head_forward.3} parent=11 // pred_check_branch
          %451 = sbr.rel (%p449) target = $region40
        $region39: #{counting_head_forward.3} parent=11 // pred_region
          _
        $region40: #{counting_head_forward.3} parent=11 // pred_fallthru
          _
        // Predicated region
        $region41: #{counting_head_forward.3} parent=11 // pred_check
          %p452 = pneg %p234
        $region42: #{counting_head_forward.3} parent=11 // pred_check_branch
          %454 = sbr.rel (%p452) target = $region44
        $region43: #{counting_head_forward.3} parent=11 // pred_region
          _
        $region44: #{counting_head_forward.3} parent=11 // pred_fallthru
          _
        // Predicated region
        $region45: #{counting_head_forward.3} parent=11 // pred_check
          %p455 = pneg %p255
        $region46: #{counting_head_forward.3} parent=11 // pred_check_branch
          %457 = sbr.rel (%p455) target = $region48
        $region47: #{counting_head_forward.3} parent=11 // pred_region
          _
        $region48: #{counting_head_forward.3} parent=11 // pred_fallthru
          _
        // Predicated region
        $region49: #{counting_head_forward.3} parent=11 // pred_check
          %p458 = pneg %p276
        $region50: #{counting_head_forward.3} parent=11 // pred_check_branch
          %460 = sbr.rel (%p458) target = $region52
        $region51: #{counting_head_forward.3} parent=11 // pred_region
          _
        $region52: #{counting_head_forward.3} parent=11 // pred_fallthru
          _
        // Predicated region
        $region53: #{counting_head_forward.3} parent=11 // pred_check
          %p461 = pneg %p297
        $region54: #{counting_head_forward.3} parent=11 // pred_check_branch
          %463 = sbr.rel (%p461) target = $region56
        $region55: #{counting_head_forward.3} parent=11 // pred_region
          _
        $region56: #{counting_head_forward.3} parent=11 // pred_fallthru
          _
        // Predicated region
        $region57: #{counting_head_forward.3} parent=11 // pred_check
          %p464 = pneg %p318
        $region58: #{counting_head_forward.3} parent=11 // pred_check_branch
          %466 = sbr.rel (%p464) target = $region60
        $region59: #{counting_head_forward.3} parent=11 // pred_region
          _
        $region60: #{counting_head_forward.3} parent=11 // pred_fallthru
          _
        // Predicated region
        $region61: #{counting_head_forward.3} parent=11 // pred_check
          %p467 = pneg %p339
        $region62: #{counting_head_forward.3} parent=11 // pred_check_branch
          %469 = sbr.rel (%p467) target = $region64
        $region63: #{counting_head_forward.3} parent=11 // pred_region
          _
        $region64: #{counting_head_forward.3} parent=11 // pred_fallthru
          _
        // Predicated region
        $region65: #{counting_head_forward.3} parent=11 // pred_check
          %p470 = pneg %p360
        $region66: #{counting_head_forward.3} parent=11 // pred_check_branch
          %472 = sbr.rel (%p470) target = $region68
        $region67: #{counting_head_forward.3} parent=11 // pred_region
          _
        $region68: #{counting_head_forward.3} parent=11 // pred_fallthru
          _
      $region12: #{counting_head_forward.3} parent=5 // pred_fallthru
        _
      %p473 = scmp.lt.s32.totalorder %s26, 2
      // Predicated region
      $region69: #{counting_head_forward.3} parent=5 // pred_check
        %p474 = pneg %p473
      $region70: #{counting_head_forward.3} parent=5 // pred_check_branch
        %476 = sbr.rel (%p474) target = $region72
      $region71: #{counting_head_forward.3} parent=5 // pred_region
        // Predicated region
        $region73: #{counting_head_forward.3} parent=71 // pred_check
          %p477 = pneg %p60
        $region74: #{counting_head_forward.3} parent=71 // pred_check_branch
          %479 = sbr.rel (%p477) target = $region76
        $region75: #{counting_head_forward.3} parent=71 // pred_region
          %p480 = scmp.lt.s32.totalorder %s33, 1
          %s481 = scalar_select %p480, %s33, 1
          %p482 = scmp.lt.s32.totalorder %s34, 0
          %s483 = scalar_select %p482, %s34, 0
          %s484 = smul.addr %s483, 16
          %s485 = smul.addr %s481, 16
          %s486 = sadd.s32 %s484, %s485
          %s487 = smul.addr %s486, 8
          %s488 = scalar_lea.vmem %s0, %s487
        $region76: #{counting_head_forward.3} parent=71 // pred_fallthru
          _
      $region72: #{counting_head_forward.3} parent=5 // pred_fallthru
        _
      %p489 = scmp.le.s32.totalorder 1, %s26
      %p490 = scmp.lt.s32.totalorder %s26, 3
      %p491 = pnand %p489, %p490
      %p492 = pneg %p491
      // Predicated region
      $region77: #{counting_head_forward.3} parent=5 // pred_check
        _
      $region78: #{counting_head_forward.3} parent=5 // pred_check_branch
        %494 = sbr.rel (%p491) target = $region80
      $region79: #{counting_head_forward.3} parent=5 // pred_region
        %s495 = ssub.s32 %s26, 1
        %p496 = scmp.lt.s32.totalorder %s35, 1
        %s497 = scalar_select %p496, %s35, 1
        %p498 = scmp.lt.s32.totalorder %s36, 0
        %s499 = scalar_select %p498, %s36, 0
        %s500 = smul.addr %s499, 16
        %s501 = smul.addr %s497, 16
        %s502 = sadd.s32 %s500, %s501
        %s503 = smul.addr %s502, 8
        %s504 = scalar_lea.vmem %s0, %s503
        %p505 = pneg %p66
        %p506 = pneg %p63
        %p507 = pneg %p87
        %p508 = pneg %p84
        %p509 = pneg %p108
        %p510 = pneg %p105
        %p511 = pneg %p129
        %p512 = pneg %p126
        %p513 = pneg %p150
        %p514 = pneg %p147
        %p515 = pneg %p171
        %p516 = pneg %p168
        %p517 = pneg %p192
        %p518 = pneg %p189
        %p519 = pneg %p213
        %p520 = pneg %p210
        %p521 = pneg %p234
        %p522 = pneg %p231
        %p523 = pneg %p255
        %p524 = pneg %p252
        %p525 = pneg %p276
        %p526 = pneg %p273
        %p527 = pneg %p297
        %p528 = pneg %p294
        %p529 = pneg %p318
        %p530 = pneg %p315
        %p531 = pneg %p339
        %p532 = pneg %p336
        %p533 = pneg %p360
        %p534 = pneg %p357
        %p535 = pneg %p388
        %p536 = pneg %p385
        %s537 = sand.u32 %s375, 1
        %s538 = scalar_lea.sflag [#allocation7], %s537
        %s539 = sand.u32 %s375, 1
        %s540 = smul.addr %s539, 64
        %s541 = scalar_lea.vmem [#allocation6], %s540
        %p542 = pneg %p416
        %p543 = pneg %p413
        %p544 = scmp.lt.s32.totalorder %s35, 1
        %s545 = scalar_select %p544, %s35, 1
        %p546 = scmp.lt.s32.totalorder %s36, 0
        %s547 = scalar_select %p546, %s36, 0
        %s548 = sadd.s32 %s547, %s545
        %s549 = scalar_lea.vmem %s16, %s548
        %p550 = scmp.lt.s32.totalorder %s35, 1
        %s551 = scalar_select %p550, %s35, 1
        %p552 = scmp.lt.s32.totalorder %s36, 0
        %s553 = scalar_select %p552, %s36, 0
        %s554 = smul.addr %s553, 16
        %s555 = smul.addr %s551, 16
        %s556 = sadd.s32 %s554, %s555
        %s557 = smul.addr %s556, 8
        %s558 = scalar_lea.vmem %s0, %s557
        %p559 = scmp.lt.s32.totalorder %s35, 1
        %s560 = scalar_select %p559, %s35, 1
        %p561 = scmp.lt.s32.totalorder %s36, 0
        %s562 = scalar_select %p561, %s36, 0
        %s563 = sadd.s32 %s562, %s560
        %s564 = scalar_lea.vmem %s16, %s563
        %vm565 = vcmask 113664
        %566 = vst.msk [vmem:[#allocation2] sm:$0xff] %vm565, 0.0
        %567 = vst.msk [vmem:[#allocation2 + $0x8] sm:$0xff] %vm565, 0.0
        %568 = vst.msk [vmem:[#allocation2 + $0x10] sm:$0xff] %vm565, 0.0
        %569 = vst.msk [vmem:[#allocation2 + $0x18] sm:$0xff] %vm565, 0.0
        %570 = vst.msk [vmem:[#allocation2 + $0x20] sm:$0xff] %vm565, 0.0
        %571 = vst.msk [vmem:[#allocation2 + $0x28] sm:$0xff] %vm565, 0.0
        %572 = vst.msk [vmem:[#allocation2 + $0x30] sm:$0xff] %vm565, 0.0
        %573 = vst.msk [vmem:[#allocation2 + $0x38] sm:$0xff] %vm565, 0.0
        %574 = vst.msk [vmem:[#allocation2 + $0x40] sm:$0xff] %vm565, 0.0
        %575 = vst.msk [vmem:[#allocation2 + $0x48] sm:$0xff] %vm565, 0.0
        %576 = vst.msk [vmem:[#allocation2 + $0x50] sm:$0xff] %vm565, 0.0
        %577 = vst.msk [vmem:[#allocation2 + $0x58] sm:$0xff] %vm565, 0.0
        %578 = vst.msk [vmem:[#allocation2 + $0x60] sm:$0xff] %vm565, 0.0
        %579 = vst.msk [vmem:[#allocation2 + $0x68] sm:$0xff] %vm565, 0.0
        %580 = vst.msk [vmem:[#allocation2 + $0x70] sm:$0xff] %vm565, 0.0
        %581 = vst.msk [vmem:[#allocation2 + $0x78] sm:$0xff] %vm565, 0.0
        %582 = vst.msk [vmem:[#allocation2 + $0x80] sm:$0xff] %vm565, 0.0
        %583 = vst.msk [vmem:[#allocation2 + $0x88] sm:$0xff] %vm565, 0.0
        %584 = vst.msk [vmem:[#allocation2 + $0x90] sm:$0xff] %vm565, 0.0
        %585 = vst.msk [vmem:[#allocation2 + $0x98] sm:$0xff] %vm565, 0.0
        %586 = vst.msk [vmem:[#allocation2 + $0xa0] sm:$0xff] %vm565, 0.0
        %587 = vst.msk [vmem:[#allocation2 + $0xa8] sm:$0xff] %vm565, 0.0
        %588 = vst.msk [vmem:[#allocation2 + $0xb0] sm:$0xff] %vm565, 0.0
        %589 = vst.msk [vmem:[#allocation2 + $0xb8] sm:$0xff] %vm565, 0.0
        %590 = vst.msk [vmem:[#allocation2 + $0xc0] sm:$0xff] %vm565, 0.0
        %591 = vst.msk [vmem:[#allocation2 + $0xc8] sm:$0xff] %vm565, 0.0
        %592 = vst.msk [vmem:[#allocation2 + $0xd0] sm:$0xff] %vm565, 0.0
        %593 = vst.msk [vmem:[#allocation2 + $0xd8] sm:$0xff] %vm565, 0.0
        %v594 = vld [vmem:[%s558] sm:$0xff]
        %v595 = vld [vmem:[%s558 + $0x8] sm:$0xff]
        %v596 = vld [vmem:[%s558 + $0x10] sm:$0xff]
        %v597 = vld [vmem:[%s558 + $0x18] sm:$0xff]
        %v598 = vld [vmem:[%s558 + $0x20] sm:$0xff]
        %v599 = vld [vmem:[%s558 + $0x28] sm:$0xff]
        %v600 = vld [vmem:[%s558 + $0x30] sm:$0xff]
        %v601 = vld [vmem:[%s558 + $0x38] sm:$0xff]
        %v602 = vld [vmem:[%s558 + $0x40] sm:$0xff]
        %v603 = vld [vmem:[%s558 + $0x48] sm:$0xff]
        %v604 = vld [vmem:[%s558 + $0x50] sm:$0xff]
        %v605 = vld [vmem:[%s558 + $0x58] sm:$0xff]
        %v606 = vld [vmem:[%s558 + $0x60] sm:$0xff]
        %v607 = vld [vmem:[%s558 + $0x68] sm:$0xff]
        %v608 = vld [vmem:[%s558 + $0x70] sm:$0xff]
        %v609 = vld [vmem:[%s558 + $0x78] sm:$0xff]
        %611 = vrot.lane.b32.xlu0 %v594, 3
        %v612 = vpop.permute.xlu0 %611
        %vm614 = vcmask 89112
        %615 = vst.msk [vmem:[#allocation2 + $0x3] sm:$0xff] %vm614, %v612
        %617 = vrot.lane.b32.xlu0 %v595, 3
        %v618 = vpop.permute.xlu0 %617
        %620 = vst.msk [vmem:[#allocation2 + $0x11] sm:$0xff] %vm614, %v618
        %622 = vrot.lane.b32.xlu0 %v596, 3
        %v623 = vpop.permute.xlu0 %622
        %625 = vst.msk [vmem:[#allocation2 + $0x1f] sm:$0xff] %vm614, %v623
        %627 = vrot.lane.b32.xlu0 %v597, 3
        %v628 = vpop.permute.xlu0 %627
        %630 = vst.msk [vmem:[#allocation2 + $0x2d] sm:$0xff] %vm614, %v628
        %632 = vrot.lane.b32.xlu0 %v598, 3
        %v633 = vpop.permute.xlu0 %632
        %635 = vst.msk [vmem:[#allocation2 + $0x3b] sm:$0xff] %vm614, %v633
        %637 = vrot.lane.b32.xlu0 %v599, 3
        %v638 = vpop.permute.xlu0 %637
        %640 = vst.msk [vmem:[#allocation2 + $0x49] sm:$0xff] %vm614, %v638
        %642 = vrot.lane.b32.xlu0 %v600, 3
        %v643 = vpop.permute.xlu0 %642
        %645 = vst.msk [vmem:[#allocation2 + $0x57] sm:$0xff] %vm614, %v643
        %647 = vrot.lane.b32.xlu0 %v601, 3
        %v648 = vpop.permute.xlu0 %647
        %650 = vst.msk [vmem:[#allocation2 + $0x65] sm:$0xff] %vm614, %v648
        %652 = vrot.lane.b32.xlu0 %v602, 3
        %v653 = vpop.permute.xlu0 %652
        %655 = vst.msk [vmem:[#allocation2 + $0x73] sm:$0xff] %vm614, %v653
        %657 = vrot.lane.b32.xlu0 %v603, 3
        %v658 = vpop.permute.xlu0 %657
        %660 = vst.msk [vmem:[#allocation2 + $0x81] sm:$0xff] %vm614, %v658
        %662 = vrot.lane.b32.xlu0 %v604, 3
        %v663 = vpop.permute.xlu0 %662
        %665 = vst.msk [vmem:[#allocation2 + $0x8f] sm:$0xff] %vm614, %v663
        %667 = vrot.lane.b32.xlu0 %v605, 3
        %v668 = vpop.permute.xlu0 %667
        %670 = vst.msk [vmem:[#allocation2 + $0x9d] sm:$0xff] %vm614, %v668
        %672 = vrot.lane.b32.xlu0 %v606, 3
        %v673 = vpop.permute.xlu0 %672
        %675 = vst.msk [vmem:[#allocation2 + $0xab] sm:$0xff] %vm614, %v673
        %677 = vrot.lane.b32.xlu0 %v607, 3
        %v678 = vpop.permute.xlu0 %677
        %680 = vst.msk [vmem:[#allocation2 + $0xb9] sm:$0xff] %vm614, %v678
        %682 = vrot.lane.b32.xlu0 %v608, 3
        %v683 = vpop.permute.xlu0 %682
        %685 = vst.msk [vmem:[#allocation2 + $0xc7] sm:$0xff] %vm614, %v683
        %687 = vrot.lane.b32.xlu0 %v609, 3
        %v688 = vpop.permute.xlu0 %687
        %690 = vst.msk [vmem:[#allocation2 + $0xd5] sm:$0xff] %vm614, %v688
        %v691 = vld [vmem:[#allocation2] sm:$0xff]
        %v692 = vld [vmem:[#allocation2 + $0x8] sm:$0xff]
        %v693 = vld [vmem:[#allocation2 + $0x10] sm:$0xff]
        %v694 = vld [vmem:[#allocation2 + $0x18] sm:$0xff]
        %v695 = vld [vmem:[#allocation2 + $0x20] sm:$0xff]
        %v696 = vld [vmem:[#allocation2 + $0x28] sm:$0xff]
        %v697 = vld [vmem:[#allocation2 + $0x30] sm:$0xff]
        %v698 = vld [vmem:[#allocation2 + $0x38] sm:$0xff]
        %v699 = vld [vmem:[#allocation2 + $0x40] sm:$0xff]
        %v700 = vld [vmem:[#allocation2 + $0x48] sm:$0xff]
        %v701 = vld [vmem:[#allocation2 + $0x50] sm:$0xff]
        %v702 = vld [vmem:[#allocation2 + $0x58] sm:$0xff]
        %v703 = vld [vmem:[#allocation2 + $0x60] sm:$0xff]
        %v704 = vld [vmem:[#allocation2 + $0x68] sm:$0xff]
        %v705 = vld [vmem:[#allocation2 + $0x70] sm:$0xff]
        %v706 = vld [vmem:[#allocation2 + $0x78] sm:$0xff]
        %v707 = vld [vmem:[#allocation2 + $0x80] sm:$0xff]
        %v708 = vld [vmem:[#allocation2 + $0x88] sm:$0xff]
        %v709 = vld [vmem:[#allocation2 + $0x90] sm:$0xff]
        %v710 = vld [vmem:[#allocation2 + $0x98] sm:$0xff]
        %v711 = vld [vmem:[#allocation2 + $0xa0] sm:$0xff]
        %v712 = vld [vmem:[#allocation2 + $0xa8] sm:$0xff]
        %v713 = vld [vmem:[#allocation2 + $0xb0] sm:$0xff]
        %v714 = vld [vmem:[#allocation2 + $0xb8] sm:$0xff]
        %v715 = vld [vmem:[#allocation2 + $0xc0] sm:$0xff]
        %v716 = vld [vmem:[#allocation2 + $0xc8] sm:$0xff]
        %v717 = vld [vmem:[#allocation2 + $0xd0] sm:$0xff]
        %v718 = vld [vmem:[#allocation2 + $0xd8] sm:$0xff]
        %v719 = vld [vmem:[%s1] sm:$0xff]
        %v720 = vld [vmem:[%s1 + $0x8] sm:$0xff]
        %v721 = vld [vmem:[%s1 + $0x10] sm:$0xff]
        %v722 = vld [vmem:[%s1 + $0x18] sm:$0xff]
        %v723 = vld [vmem:[%s1 + $0x20] sm:$0xff]
        %v724 = vld [vmem:[%s1 + $0x28] sm:$0xff]
        %v725 = vld [vmem:[%s1 + $0x30] sm:$0xff]
        %v726 = vld [vmem:[%s1 + $0x38] sm:$0xff]
        %v727 = vld [vmem:[%s1 + $0x40] sm:$0xff]
        %v728 = vld [vmem:[%s1 + $0x48] sm:$0xff]
        %v729 = vld [vmem:[%s1 + $0x50] sm:$0xff]
        %v730 = vld [vmem:[%s1 + $0x58] sm:$0xff]
        %v731 = vld [vmem:[%s1 + $0x60] sm:$0xff]
        %v732 = vld [vmem:[%s1 + $0x68] sm:$0xff]
        %v733 = vld [vmem:[%s1 + $0x70] sm:$0xff]
        %v734 = vld [vmem:[%s1 + $0x78] sm:$0xff]
        %s735 = scalar_lea.vmem %s1, 128
        %v736 = vld [vmem:[%s735] sm:$0xff]
        %v737 = vld [vmem:[%s735 + $0x8] sm:$0xff]
        %v738 = vld [vmem:[%s735 + $0x10] sm:$0xff]
        %v739 = vld [vmem:[%s735 + $0x18] sm:$0xff]
        %v740 = vld [vmem:[%s735 + $0x20] sm:$0xff]
        %v741 = vld [vmem:[%s735 + $0x28] sm:$0xff]
        %v742 = vld [vmem:[%s735 + $0x30] sm:$0xff]
        %v743 = vld [vmem:[%s735 + $0x38] sm:$0xff]
        %v744 = vld [vmem:[%s735 + $0x40] sm:$0xff]
        %v745 = vld [vmem:[%s735 + $0x48] sm:$0xff]
        %v746 = vld [vmem:[%s735 + $0x50] sm:$0xff]
        %v747 = vld [vmem:[%s735 + $0x58] sm:$0xff]
        %v748 = vld [vmem:[%s735 + $0x60] sm:$0xff]
        %v749 = vld [vmem:[%s735 + $0x68] sm:$0xff]
        %v750 = vld [vmem:[%s735 + $0x70] sm:$0xff]
        %v751 = vld [vmem:[%s735 + $0x78] sm:$0xff]
        %780 = vrot.lane.b32.xlu0 %v691, 127
        %v781 = vpop.permute.xlu0 %780
        %782 = vrot.lane.b32.xlu0 %v692, 127
        %v783 = vpop.permute.xlu0 %782
        %784 = vrot.lane.b32.xlu0 %v693, 127
        %v785 = vpop.permute.xlu0 %784
        %786 = vrot.lane.b32.xlu0 %v694, 127
        %v787 = vpop.permute.xlu0 %786
        %788 = vrot.lane.b32.xlu0 %v695, 127
        %v789 = vpop.permute.xlu0 %788
        %790 = vrot.lane.b32.xlu0 %v696, 127
        %v791 = vpop.permute.xlu0 %790
        %792 = vrot.lane.b32.xlu0 %v697, 127
        %v793 = vpop.permute.xlu0 %792
        %794 = vrot.lane.b32.xlu0 %v698, 127
        %v795 = vpop.permute.xlu0 %794
        %796 = vrot.lane.b32.xlu0 %v699, 127
        %v797 = vpop.permute.xlu0 %796
        %798 = vrot.lane.b32.xlu0 %v700, 127
        %v799 = vpop.permute.xlu0 %798
        %800 = vrot.lane.b32.xlu0 %v701, 127
        %v801 = vpop.permute.xlu0 %800
        %802 = vrot.lane.b32.xlu0 %v702, 127
        %v803 = vpop.permute.xlu0 %802
        %804 = vrot.lane.b32.xlu0 %v703, 127
        %v805 = vpop.permute.xlu0 %804
        %806 = vrot.lane.b32.xlu0 %v704, 127
        %v807 = vpop.permute.xlu0 %806
        %808 = vrot.lane.b32.xlu0 %v705, 127
        %v809 = vpop.permute.xlu0 %808
        %810 = vrot.lane.b32.xlu0 %v706, 127
        %v811 = vpop.permute.xlu0 %810
        %812 = vrot.lane.b32.xlu0 %v707, 127
        %v813 = vpop.permute.xlu0 %812
        %814 = vrot.lane.b32.xlu0 %v708, 127
        %v815 = vpop.permute.xlu0 %814
        %816 = vrot.lane.b32.xlu0 %v709, 127
        %v817 = vpop.permute.xlu0 %816
        %818 = vrot.lane.b32.xlu0 %v710, 127
        %v819 = vpop.permute.xlu0 %818
        %820 = vrot.lane.b32.xlu0 %v711, 127
        %v821 = vpop.permute.xlu0 %820
        %822 = vrot.lane.b32.xlu0 %v712, 127
        %v823 = vpop.permute.xlu0 %822
        %824 = vrot.lane.b32.xlu0 %v713, 127
        %v825 = vpop.permute.xlu0 %824
        %826 = vrot.lane.b32.xlu0 %v714, 127
        %v827 = vpop.permute.xlu0 %826
        %828 = vrot.lane.b32.xlu0 %v715, 127
        %v829 = vpop.permute.xlu0 %828
        %830 = vrot.lane.b32.xlu0 %v716, 127
        %v831 = vpop.permute.xlu0 %830
        %832 = vrot.lane.b32.xlu0 %v717, 127
        %v833 = vpop.permute.xlu0 %832
        %834 = vrot.lane.b32.xlu0 %v718, 127
        %v835 = vpop.permute.xlu0 %834
        %vm864 = vcmask 785408
        %v866 = vsel %vm864, %v737, 0
        %v869 = vsel %vm864, %v739, 0
        %v872 = vsel %vm864, %v741, 0
        %v875 = vsel %vm864, %v743, 0
        %v878 = vsel %vm864, %v745, 0
        %v881 = vsel %vm864, %v747, 0
        %v884 = vsel %vm864, %v749, 0
        %v887 = vsel %vm864, %v751, 0
        %889 = vmatprep.subr.mxu0 0.0
        %890 = vmatpush1.msra.mxu0 %v781
        %891 = vmatprep.subr.mxu0 0.0
        %892 = vmatpush1.msra.mxu0 %v783
        %893 = vmatprep.subr.mxu0 0.0
        %894 = vmatpush1.msra.mxu0 %v785
        %895 = vmatprep.subr.mxu0 0.0
        %896 = vmatpush1.msra.mxu0 %v787
        %897 = vmatprep.subr.mxu0 0.0
        %898 = vmatpush1.msra.mxu0 %v789
        %899 = vmatprep.subr.mxu0 0.0
        %900 = vmatpush1.msra.mxu0 %v791
        %901 = vmatprep.subr.mxu0 0.0
        %902 = vmatpush1.msra.mxu0 %v793
        %903 = vmatprep.subr.mxu0 0.0
        %904 = vmatpush1.msra.mxu0 %v795
        %905 = vmatprep.subr.mxu0 0.0
        %906 = vmatpush1.msra.mxu0 %v797
        %907 = vmatprep.subr.mxu0 0.0
        %908 = vmatpush1.msra.mxu0 %v799
        %909 = vmatprep.subr.mxu0 0.0
        %910 = vmatpush1.msra.mxu0 %v801
        %911 = vmatprep.subr.mxu0 0.0
        %912 = vmatpush1.msra.mxu0 %v803
        %913 = vmatprep.subr.mxu0 0.0
        %914 = vmatpush1.msra.mxu0 %v805
        %915 = vmatprep.subr.mxu0 0.0
        %916 = vmatpush1.msra.mxu0 %v807
        %917 = vmatprep.subr.mxu0 0.0
        %918 = vmatpush1.msra.mxu0 %v809
        %919 = vmatprep.subr.mxu0 0.0
        %920 = vmatpush1.msra.mxu0 %v811
        %921 = vmatprep.subr.mxu0 0.0
        %922 = vmatpush1.msra.mxu0 %v813
        %923 = vmatprep.subr.mxu0 0.0
        %924 = vmatpush1.msra.mxu0 %v815
        %925 = vmatprep.subr.mxu0 0.0
        %926 = vmatpush1.msra.mxu0 %v817
        %927 = vmatprep.subr.mxu0 0.0
        %928 = vmatpush1.msra.mxu0 %v819
        %929 = vmatprep.subr.mxu0 0.0
        %930 = vmatpush1.msra.mxu0 %v821
        %931 = vmatprep.subr.mxu0 0.0
        %932 = vmatpush1.msra.mxu0 %v823
        %933 = vmatprep.subr.mxu0 0.0
        %934 = vmatpush1.msra.mxu0 %v825
        %935 = vmatprep.subr.mxu0 0.0
        %936 = vmatpush1.msra.mxu0 %v827
        %937 = vmatprep.subr.mxu0 0.0
        %938 = vmatpush1.msra.mxu0 %v829
        %939 = vmatprep.subr.mxu0 0.0
        %940 = vmatpush1.msra.mxu0 %v831
        %941 = vmatprep.subr.mxu0 0.0
        %942 = vmatpush1.msra.mxu0 %v833
        %943 = vmatprep.subr.mxu0 0.0
        %944 = vmatpush1.msra.mxu0 %v835
        %945 = vmatprep.subr.mxu0 0.0
        %946 = vmatpush1.msra.mxu0 0.0
        %947 = vmatprep.subr.mxu0 0.0
        %948 = vmatpush1.msra.mxu0 0.0
        %949 = vmatprep.subr.mxu0 0.0
        %950 = vmatpush1.msra.mxu0 0.0
        %951 = vmatprep.subr.mxu0 0.0
        %952 = vmatpush1.msra.mxu0 0.0
        %953 = vmatprep.mubr.f32.mxu0 %v866
        %954 = vmatmul.mubr.f32.gmra.mrb[0].mxu0 %v736
        %v955 = vpop.f32.mrb[0].mxu0
        %v956 = vadd.f32 0.0, %v955
        %v957 = vpop.f32.mrb[0].mxu0
        %958 = vmatprep.mubr.f32.mxu0 %v869
        %959 = vmatmul.mubr.f32.gmra.mrb[0].mxu0 %v738
        %v960 = vpop.f32.mrb[0].mxu0
        %v961 = vadd.f32 0.0, %v960
        %v962 = vpop.f32.mrb[0].mxu0
        %963 = vmatprep.mubr.f32.mxu0 %v872
        %964 = vmatmul.mubr.f32.gmra.mrb[0].mxu0 %v740
        %v965 = vpop.f32.mrb[0].mxu0
        %v966 = vadd.f32 0.0, %v965
        %v967 = vpop.f32.mrb[0].mxu0
        %968 = vmatprep.mubr.f32.mxu0 %v875
        %969 = vmatmul.mubr.f32.gmra.mrb[0].mxu0 %v742
        %v970 = vpop.f32.mrb[0].mxu0
        %v971 = vadd.f32 0.0, %v970
        %v972 = vpop.f32.mrb[0].mxu0
        %973 = vmatprep.mubr.f32.mxu0 %v878
        %974 = vmatmul.mubr.f32.gmra.mrb[0].mxu0 %v744
        %v975 = vpop.f32.mrb[0].mxu0
        %v976 = vadd.f32 0.0, %v975
        %v977 = vpop.f32.mrb[0].mxu0
        %978 = vmatprep.mubr.f32.mxu0 %v881
        %979 = vmatmul.mubr.f32.gmra.mrb[0].mxu0 %v746
        %v980 = vpop.f32.mrb[0].mxu0
        %v981 = vadd.f32 0.0, %v980
        %v982 = vpop.f32.mrb[0].mxu0
        %983 = vmatprep.mubr.f32.mxu0 %v884
        %984 = vmatmul.mubr.f32.gmra.mrb[0].mxu0 %v748
        %v985 = vpop.f32.mrb[0].mxu0
        %v986 = vadd.f32 0.0, %v985
        %v987 = vpop.f32.mrb[0].mxu0
        %988 = vmatprep.mubr.f32.mxu0 %v887
        %989 = vmatmul.mubr.f32.gmra.mrb[0].mxu0 %v750
        %v990 = vpop.f32.mrb[0].mxu0
        %v991 = vadd.f32 0.0, %v990
        %v992 = vpop.f32.mrb[0].mxu0
        %993 = vdwg.mxu0
        %v995 = vsel %vm864, %v720, 0
        %v998 = vsel %vm864, %v722, 0
        %v1001 = vsel %vm864, %v724, 0
        %v1004 = vsel %vm864, %v726, 0
        %v1007 = vsel %vm864, %v728, 0
        %v1010 = vsel %vm864, %v730, 0
        %v1013 = vsel %vm864, %v732, 0
        %v1016 = vsel %vm864, %v734, 0
        %1018 = vmatprep.subr.mxu0 0.0
        %1019 = vmatpush1.msra.mxu0 %v691
        %1020 = vmatprep.subr.mxu0 0.0
        %1021 = vmatpush1.msra.mxu0 %v692
        %1022 = vmatprep.subr.mxu0 0.0
        %1023 = vmatpush1.msra.mxu0 %v693
        %1024 = vmatprep.subr.mxu0 0.0
        %1025 = vmatpush1.msra.mxu0 %v694
        %1026 = vmatprep.subr.mxu0 0.0
        %1027 = vmatpush1.msra.mxu0 %v695
        %1028 = vmatprep.subr.mxu0 0.0
        %1029 = vmatpush1.msra.mxu0 %v696
        %1030 = vmatprep.subr.mxu0 0.0
        %1031 = vmatpush1.msra.mxu0 %v697
        %1032 = vmatprep.subr.mxu0 0.0
        %1033 = vmatpush1.msra.mxu0 %v698
        %1034 = vmatprep.subr.mxu0 0.0
        %1035 = vmatpush1.msra.mxu0 %v699
        %1036 = vmatprep.subr.mxu0 0.0
        %1037 = vmatpush1.msra.mxu0 %v700
        %1038 = vmatprep.subr.mxu0 0.0
        %1039 = vmatpush1.msra.mxu0 %v701
        %1040 = vmatprep.subr.mxu0 0.0
        %1041 = vmatpush1.msra.mxu0 %v702
        %1042 = vmatprep.subr.mxu0 0.0
        %1043 = vmatpush1.msra.mxu0 %v703
        %1044 = vmatprep.subr.mxu0 0.0
        %1045 = vmatpush1.msra.mxu0 %v704
        %1046 = vmatprep.subr.mxu0 0.0
        %1047 = vmatpush1.msra.mxu0 %v705
        %1048 = vmatprep.subr.mxu0 0.0
        %1049 = vmatpush1.msra.mxu0 %v706
        %1050 = vmatprep.subr.mxu0 0.0
        %1051 = vmatpush1.msra.mxu0 %v707
        %1052 = vmatprep.subr.mxu0 0.0
        %1053 = vmatpush1.msra.mxu0 %v708
        %1054 = vmatprep.subr.mxu0 0.0
        %1055 = vmatpush1.msra.mxu0 %v709
        %1056 = vmatprep.subr.mxu0 0.0
        %1057 = vmatpush1.msra.mxu0 %v710
        %1058 = vmatprep.subr.mxu0 0.0
        %1059 = vmatpush1.msra.mxu0 %v711
        %1060 = vmatprep.subr.mxu0 0.0
        %1061 = vmatpush1.msra.mxu0 %v712
        %1062 = vmatprep.subr.mxu0 0.0
        %1063 = vmatpush1.msra.mxu0 %v713
        %1064 = vmatprep.subr.mxu0 0.0
        %1065 = vmatpush1.msra.mxu0 %v714
        %1066 = vmatprep.subr.mxu0 0.0
        %1067 = vmatpush1.msra.mxu0 %v715
        %1068 = vmatprep.subr.mxu0 0.0
        %1069 = vmatpush1.msra.mxu0 %v716
        %1070 = vmatprep.subr.mxu0 0.0
        %1071 = vmatpush1.msra.mxu0 %v717
        %1072 = vmatprep.subr.mxu0 0.0
        %1073 = vmatpush1.msra.mxu0 %v718
        %1074 = vmatprep.subr.mxu0 0.0
        %1075 = vmatpush1.msra.mxu0 0.0
        %1076 = vmatprep.subr.mxu0 0.0
        %1077 = vmatpush1.msra.mxu0 0.0
        %1078 = vmatprep.subr.mxu0 0.0
        %1079 = vmatpush1.msra.mxu0 0.0
        %1080 = vmatprep.subr.mxu0 0.0
        %1081 = vmatpush1.msra.mxu0 0.0
        %1082 = vmatprep.mubr.f32.mxu0 %v995
        %1083 = vmatmul.mubr.f32.gmra.mrb[0].mxu0 %v719
        %v1084 = vpop.f32.mrb[0].mxu0
        %v1085 = vadd.f32 %v956, %v1084
        %v1086 = vpop.f32.mrb[0].mxu0
        %1087 = vmatprep.mubr.f32.mxu0 %v998
        %1088 = vmatmul.mubr.f32.gmra.mrb[0].mxu0 %v721
        %v1089 = vpop.f32.mrb[0].mxu0
        %v1090 = vadd.f32 %v961, %v1089
        %v1091 = vpop.f32.mrb[0].mxu0
        %1092 = vmatprep.mubr.f32.mxu0 %v1001
        %1093 = vmatmul.mubr.f32.gmra.mrb[0].mxu0 %v723
        %v1094 = vpop.f32.mrb[0].mxu0
        %v1095 = vadd.f32 %v966, %v1094
        %v1096 = vpop.f32.mrb[0].mxu0
        %1097 = vmatprep.mubr.f32.mxu0 %v1004
        %1098 = vmatmul.mubr.f32.gmra.mrb[0].mxu0 %v725
        %v1099 = vpop.f32.mrb[0].mxu0
        %v1100 = vadd.f32 %v971, %v1099
        %v1101 = vpop.f32.mrb[0].mxu0
        %1102 = vmatprep.mubr.f32.mxu0 %v1007
        %1103 = vmatmul.mubr.f32.gmra.mrb[0].mxu0 %v727
        %v1104 = vpop.f32.mrb[0].mxu0
        %v1105 = vadd.f32 %v976, %v1104
        %v1106 = vpop.f32.mrb[0].mxu0
        %1107 = vmatprep.mubr.f32.mxu0 %v1010
        %1108 = vmatmul.mubr.f32.gmra.mrb[0].mxu0 %v729
        %v1109 = vpop.f32.mrb[0].mxu0
        %v1110 = vadd.f32 %v981, %v1109
        %v1111 = vpop.f32.mrb[0].mxu0
        %1112 = vmatprep.mubr.f32.mxu0 %v1013
        %1113 = vmatmul.mubr.f32.gmra.mrb[0].mxu0 %v731
        %v1114 = vpop.f32.mrb[0].mxu0
        %v1115 = vadd.f32 %v986, %v1114
        %v1116 = vpop.f32.mrb[0].mxu0
        %1117 = vmatprep.mubr.f32.mxu0 %v1016
        %1118 = vmatmul.mubr.f32.gmra.mrb[0].mxu0 %v733
        %v1119 = vpop.f32.mrb[0].mxu0
        %v1120 = vadd.f32 %v991, %v1119
        %v1121 = vpop.f32.mrb[0].mxu0
        %1122 = vdwg.mxu0
        %s1123 = scalar_lea.vmem %s1, 256
        %v1124 = vld [vmem:[%s1123] sm:$0xff]
        %v1125 = vld [vmem:[%s1123 + $0x8] sm:$0xff]
        %v1126 = vld [vmem:[%s1123 + $0x10] sm:$0xff]
        %v1127 = vld [vmem:[%s1123 + $0x18] sm:$0xff]
        %v1128 = vld [vmem:[%s1123 + $0x20] sm:$0xff]
        %v1129 = vld [vmem:[%s1123 + $0x28] sm:$0xff]
        %v1130 = vld [vmem:[%s1123 + $0x30] sm:$0xff]
        %v1131 = vld [vmem:[%s1123 + $0x38] sm:$0xff]
        %v1132 = vld [vmem:[%s1123 + $0x40] sm:$0xff]
        %v1133 = vld [vmem:[%s1123 + $0x48] sm:$0xff]
        %v1134 = vld [vmem:[%s1123 + $0x50] sm:$0xff]
        %v1135 = vld [vmem:[%s1123 + $0x58] sm:$0xff]
        %v1136 = vld [vmem:[%s1123 + $0x60] sm:$0xff]
        %v1137 = vld [vmem:[%s1123 + $0x68] sm:$0xff]
        %v1138 = vld [vmem:[%s1123 + $0x70] sm:$0xff]
        %v1139 = vld [vmem:[%s1123 + $0x78] sm:$0xff]
        %1140 = vrot.lane.b32.xlu0 %v691, 126
        %v1141 = vpop.permute.xlu0 %1140
        %1142 = vrot.lane.b32.xlu0 %v692, 126
        %v1143 = vpop.permute.xlu0 %1142
        %1144 = vrot.lane.b32.xlu0 %v693, 126
        %v1145 = vpop.permute.xlu0 %1144
        %1146 = vrot.lane.b32.xlu0 %v694, 126
        %v1147 = vpop.permute.xlu0 %1146
        %1148 = vrot.lane.b32.xlu0 %v695, 126
        %v1149 = vpop.permute.xlu0 %1148
        %1150 = vrot.lane.b32.xlu0 %v696, 126
        %v1151 = vpop.permute.xlu0 %1150
        %1152 = vrot.lane.b32.xlu0 %v697, 126
        %v1153 = vpop.permute.xlu0 %1152
        %1154 = vrot.lane.b32.xlu0 %v698, 126
        %v1155 = vpop.permute.xlu0 %1154
        %1156 = vrot.lane.b32.xlu0 %v699, 126
        %v1157 = vpop.permute.xlu0 %1156
        %1158 = vrot.lane.b32.xlu0 %v700, 126
        %v1159 = vpop.permute.xlu0 %1158
        %1160 = vrot.lane.b32.xlu0 %v701, 126
        %v1161 = vpop.permute.xlu0 %1160
        %1162 = vrot.lane.b32.xlu0 %v702, 126
        %v1163 = vpop.permute.xlu0 %1162
        %1164 = vrot.lane.b32.xlu0 %v703, 126
        %v1165 = vpop.permute.xlu0 %1164
        %1166 = vrot.lane.b32.xlu0 %v704, 126
        %v1167 = vpop.permute.xlu0 %1166
        %1168 = vrot.lane.b32.xlu0 %v705, 126
        %v1169 = vpop.permute.xlu0 %1168
        %1170 = vrot.lane.b32.xlu0 %v706, 126
        %v1171 = vpop.permute.xlu0 %1170
        %1172 = vrot.lane.b32.xlu0 %v707, 126
        %v1173 = vpop.permute.xlu0 %1172
        %1174 = vrot.lane.b32.xlu0 %v708, 126
        %v1175 = vpop.permute.xlu0 %1174
        %1176 = vrot.lane.b32.xlu0 %v709, 126
        %v1177 = vpop.permute.xlu0 %1176
        %1178 = vrot.lane.b32.xlu0 %v710, 126
        %v1179 = vpop.permute.xlu0 %1178
        %1180 = vrot.lane.b32.xlu0 %v711, 126
        %v1181 = vpop.permute.xlu0 %1180
        %1182 = vrot.lane.b32.xlu0 %v712, 126
        %v1183 = vpop.permute.xlu0 %1182
        %1184 = vrot.lane.b32.xlu0 %v713, 126
        %v1185 = vpop.permute.xlu0 %1184
        %1186 = vrot.lane.b32.xlu0 %v714, 126
        %v1187 = vpop.permute.xlu0 %1186
        %1188 = vrot.lane.b32.xlu0 %v715, 126
        %v1189 = vpop.permute.xlu0 %1188
        %1190 = vrot.lane.b32.xlu0 %v716, 126
        %v1191 = vpop.permute.xlu0 %1190
        %1192 = vrot.lane.b32.xlu0 %v717, 126
        %v1193 = vpop.permute.xlu0 %1192
        %1194 = vrot.lane.b32.xlu0 %v718, 126
        %v1195 = vpop.permute.xlu0 %1194
        %v1225 = vsel %vm864, %v1125, 0
        %v1228 = vsel %vm864, %v1127, 0
        %v1231 = vsel %vm864, %v1129, 0
        %v1234 = vsel %vm864, %v1131, 0
        %v1237 = vsel %vm864, %v1133, 0
        %v1240 = vsel %vm864, %v1135, 0
        %v1243 = vsel %vm864, %v1137, 0
        %v1246 = vsel %vm864, %v1139, 0
        %1248 = vmatprep.subr.mxu0 0.0
        %1249 = vmatpush1.msra.mxu0 %v1141
        %1250 = vmatprep.subr.mxu0 0.0
        %1251 = vmatpush1.msra.mxu0 %v1143
        %1252 = vmatprep.subr.mxu0 0.0
        %1253 = vmatpush1.msra.mxu0 %v1145
        %1254 = vmatprep.subr.mxu0 0.0
        %1255 = vmatpush1.msra.mxu0 %v1147
        %1256 = vmatprep.subr.mxu0 0.0
        %1257 = vmatpush1.msra.mxu0 %v1149
        %1258 = vmatprep.subr.mxu0 0.0
        %1259 = vmatpush1.msra.mxu0 %v1151
        %1260 = vmatprep.subr.mxu0 0.0
        %1261 = vmatpush1.msra.mxu0 %v1153
        %1262 = vmatprep.subr.mxu0 0.0
        %1263 = vmatpush1.msra.mxu0 %v1155
        %1264 = vmatprep.subr.mxu0 0.0
        %1265 = vmatpush1.msra.mxu0 %v1157
        %1266 = vmatprep.subr.mxu0 0.0
        %1267 = vmatpush1.msra.mxu0 %v1159
        %1268 = vmatprep.subr.mxu0 0.0
        %1269 = vmatpush1.msra.mxu0 %v1161
        %1270 = vmatprep.subr.mxu0 0.0
        %1271 = vmatpush1.msra.mxu0 %v1163
        %1272 = vmatprep.subr.mxu0 0.0
        %1273 = vmatpush1.msra.mxu0 %v1165
        %1274 = vmatprep.subr.mxu0 0.0
        %1275 = vmatpush1.msra.mxu0 %v1167
        %1276 = vmatprep.subr.mxu0 0.0
        %1277 = vmatpush1.msra.mxu0 %v1169
        %1278 = vmatprep.subr.mxu0 0.0
        %1279 = vmatpush1.msra.mxu0 %v1171
        %1280 = vmatprep.subr.mxu0 0.0
        %1281 = vmatpush1.msra.mxu0 %v1173
        %1282 = vmatprep.subr.mxu0 0.0
        %1283 = vmatpush1.msra.mxu0 %v1175
        %1284 = vmatprep.subr.mxu0 0.0
        %1285 = vmatpush1.msra.mxu0 %v1177
        %1286 = vmatprep.subr.mxu0 0.0
        %1287 = vmatpush1.msra.mxu0 %v1179
        %1288 = vmatprep.subr.mxu0 0.0
        %1289 = vmatpush1.msra.mxu0 %v1181
        %1290 = vmatprep.subr.mxu0 0.0
        %1291 = vmatpush1.msra.mxu0 %v1183
        %1292 = vmatprep.subr.mxu0 0.0
        %1293 = vmatpush1.msra.mxu0 %v1185
        %1294 = vmatprep.subr.mxu0 0.0
        %1295 = vmatpush1.msra.mxu0 %v1187
        %1296 = vmatprep.subr.mxu0 0.0
        %1297 = vmatpush1.msra.mxu0 %v1189
        %1298 = vmatprep.subr.mxu0 0.0
        %1299 = vmatpush1.msra.mxu0 %v1191
        %1300 = vmatprep.subr.mxu0 0.0
        %1301 = vmatpush1.msra.mxu0 %v1193
        %1302 = vmatprep.subr.mxu0 0.0
        %1303 = vmatpush1.msra.mxu0 %v1195
        %1304 = vmatprep.subr.mxu0 0.0
        %1305 = vmatpush1.msra.mxu0 0.0
        %1306 = vmatprep.subr.mxu0 0.0
        %1307 = vmatpush1.msra.mxu0 0.0
        %1308 = vmatprep.subr.mxu0 0.0
        %1309 = vmatpush1.msra.mxu0 0.0
        %1310 = vmatprep.subr.mxu0 0.0
        %1311 = vmatpush1.msra.mxu0 0.0
        %1312 = vmatprep.mubr.f32.mxu0 %v1225
        %1313 = vmatmul.mubr.f32.gmra.mrb[0].mxu0 %v1124
        %v1314 = vpop.f32.mrb[0].mxu0
        %v1315 = vadd.f32 0.0, %v1314
        %v1316 = vpop.f32.mrb[0].mxu0
        %1317 = vmatprep.mubr.f32.mxu0 %v1228
        %1318 = vmatmul.mubr.f32.gmra.mrb[0].mxu0 %v1126
        %v1319 = vpop.f32.mrb[0].mxu0
        %v1320 = vadd.f32 0.0, %v1319
        %v1321 = vpop.f32.mrb[0].mxu0
        %1322 = vmatprep.mubr.f32.mxu0 %v1231
        %1323 = vmatmul.mubr.f32.gmra.mrb[0].mxu0 %v1128
        %v1324 = vpop.f32.mrb[0].mxu0
        %v1325 = vadd.f32 0.0, %v1324
        %v1326 = vpop.f32.mrb[0].mxu0
        %1327 = vmatprep.mubr.f32.mxu0 %v1234
        %1328 = vmatmul.mubr.f32.gmra.mrb[0].mxu0 %v1130
        %v1329 = vpop.f32.mrb[0].mxu0
        %v1330 = vadd.f32 0.0, %v1329
        %v1331 = vpop.f32.mrb[0].mxu0
        %1332 = vmatprep.mubr.f32.mxu0 %v1237
        %1333 = vmatmul.mubr.f32.gmra.mrb[0].mxu0 %v1132
        %v1334 = vpop.f32.mrb[0].mxu0
        %v1335 = vadd.f32 0.0, %v1334
        %v1336 = vpop.f32.mrb[0].mxu0
        %1337 = vmatprep.mubr.f32.mxu0 %v1240
        %1338 = vmatmul.mubr.f32.gmra.mrb[0].mxu0 %v1134
        %v1339 = vpop.f32.mrb[0].mxu0
        %v1340 = vadd.f32 0.0, %v1339
        %v1341 = vpop.f32.mrb[0].mxu0
        %1342 = vmatprep.mubr.f32.mxu0 %v1243
        %1343 = vmatmul.mubr.f32.gmra.mrb[0].mxu0 %v1136
        %v1344 = vpop.f32.mrb[0].mxu0
        %v1345 = vadd.f32 0.0, %v1344
        %v1346 = vpop.f32.mrb[0].mxu0
        %1347 = vmatprep.mubr.f32.mxu0 %v1246
        %1348 = vmatmul.mubr.f32.gmra.mrb[0].mxu0 %v1138
        %v1349 = vpop.f32.mrb[0].mxu0
        %v1350 = vadd.f32 0.0, %v1349
        %v1351 = vpop.f32.mrb[0].mxu0
        %1352 = vdwg.mxu0
        %v1353 = vadd.f32 %v1085, %v1315
        %v1354 = vadd.f32 %v1090, %v1320
        %v1355 = vadd.f32 %v1095, %v1325
        %v1356 = vadd.f32 %v1100, %v1330
        %v1357 = vadd.f32 %v1105, %v1335
        %v1358 = vadd.f32 %v1110, %v1340
        %v1359 = vadd.f32 %v1115, %v1345
        %v1360 = vadd.f32 %v1120, %v1350
        %s1361 = scalar_lea.vmem %s1, 384
        %v1362 = vld [vmem:[%s1361] sm:$0xff]
        %v1363 = vld [vmem:[%s1361 + $0x8] sm:$0xff]
        %v1364 = vld [vmem:[%s1361 + $0x10] sm:$0xff]
        %v1365 = vld [vmem:[%s1361 + $0x18] sm:$0xff]
        %v1366 = vld [vmem:[%s1361 + $0x20] sm:$0xff]
        %v1367 = vld [vmem:[%s1361 + $0x28] sm:$0xff]
        %v1368 = vld [vmem:[%s1361 + $0x30] sm:$0xff]
        %v1369 = vld [vmem:[%s1361 + $0x38] sm:$0xff]
        %v1370 = vld [vmem:[%s1361 + $0x40] sm:$0xff]
        %v1371 = vld [vmem:[%s1361 + $0x48] sm:$0xff]
        %v1372 = vld [vmem:[%s1361 + $0x50] sm:$0xff]
        %v1373 = vld [vmem:[%s1361 + $0x58] sm:$0xff]
        %v1374 = vld [vmem:[%s1361 + $0x60] sm:$0xff]
        %v1375 = vld [vmem:[%s1361 + $0x68] sm:$0xff]
        %v1376 = vld [vmem:[%s1361 + $0x70] sm:$0xff]
        %v1377 = vld [vmem:[%s1361 + $0x78] sm:$0xff]
        %1378 = vrot.lane.b32.xlu0 %v691, 125
        %v1379 = vpop.permute.xlu0 %1378
        %1380 = vrot.lane.b32.xlu0 %v692, 125
        %v1381 = vpop.permute.xlu0 %1380
        %1382 = vrot.lane.b32.xlu0 %v693, 125
        %v1383 = vpop.permute.xlu0 %1382
        %1384 = vrot.lane.b32.xlu0 %v694, 125
        %v1385 = vpop.permute.xlu0 %1384
        %1386 = vrot.lane.b32.xlu0 %v695, 125
        %v1387 = vpop.permute.xlu0 %1386
        %1388 = vrot.lane.b32.xlu0 %v696, 125
        %v1389 = vpop.permute.xlu0 %1388
        %1390 = vrot.lane.b32.xlu0 %v697, 125
        %v1391 = vpop.permute.xlu0 %1390
        %1392 = vrot.lane.b32.xlu0 %v698, 125
        %v1393 = vpop.permute.xlu0 %1392
        %1394 = vrot.lane.b32.xlu0 %v699, 125
        %v1395 = vpop.permute.xlu0 %1394
        %1396 = vrot.lane.b32.xlu0 %v700, 125
        %v1397 = vpop.permute.xlu0 %1396
        %1398 = vrot.lane.b32.xlu0 %v701, 125
        %v1399 = vpop.permute.xlu0 %1398
        %1400 = vrot.lane.b32.xlu0 %v702, 125
        %v1401 = vpop.permute.xlu0 %1400
        %1402 = vrot.lane.b32.xlu0 %v703, 125
        %v1403 = vpop.permute.xlu0 %1402
        %1404 = vrot.lane.b32.xlu0 %v704, 125
        %v1405 = vpop.permute.xlu0 %1404
        %1406 = vrot.lane.b32.xlu0 %v705, 125
        %v1407 = vpop.permute.xlu0 %1406
        %1408 = vrot.lane.b32.xlu0 %v706, 125
        %v1409 = vpop.permute.xlu0 %1408
        %1410 = vrot.lane.b32.xlu0 %v707, 125
        %v1411 = vpop.permute.xlu0 %1410
        %1412 = vrot.lane.b32.xlu0 %v708, 125
        %v1413 = vpop.permute.xlu0 %1412
        %1414 = vrot.lane.b32.xlu0 %v709, 125
        %v1415 = vpop.permute.xlu0 %1414
        %1416 = vrot.lane.b32.xlu0 %v710, 125
        %v1417 = vpop.permute.xlu0 %1416
        %1418 = vrot.lane.b32.xlu0 %v711, 125
        %v1419 = vpop.permute.xlu0 %1418
        %1420 = vrot.lane.b32.xlu0 %v712, 125
        %v1421 = vpop.permute.xlu0 %1420
        %1422 = vrot.lane.b32.xlu0 %v713, 125
        %v1423 = vpop.permute.xlu0 %1422
        %1424 = vrot.lane.b32.xlu0 %v714, 125
        %v1425 = vpop.permute.xlu0 %1424
        %1426 = vrot.lane.b32.xlu0 %v715, 125
        %v1427 = vpop.permute.xlu0 %1426
        %1428 = vrot.lane.b32.xlu0 %v716, 125
        %v1429 = vpop.permute.xlu0 %1428
        %1430 = vrot.lane.b32.xlu0 %v717, 125
        %v1431 = vpop.permute.xlu0 %1430
        %1432 = vrot.lane.b32.xlu0 %v718, 125
        %v1433 = vpop.permute.xlu0 %1432
        %v1463 = vsel %vm864, %v1363, 0
        %v1466 = vsel %vm864, %v1365, 0
        %v1469 = vsel %vm864, %v1367, 0
        %v1472 = vsel %vm864, %v1369, 0
        %v1475 = vsel %vm864, %v1371, 0
        %v1478 = vsel %vm864, %v1373, 0
        %v1481 = vsel %vm864, %v1375, 0
        %v1484 = vsel %vm864, %v1377, 0
        %1486 = vmatprep.subr.mxu0 0.0
        %1487 = vmatpush1.msra.mxu0 %v1379
        %1488 = vmatprep.subr.mxu0 0.0
        %1489 = vmatpush1.msra.mxu0 %v1381
        %1490 = vmatprep.subr.mxu0 0.0
        %1491 = vmatpush1.msra.mxu0 %v1383
        %1492 = vmatprep.subr.mxu0 0.0
        %1493 = vmatpush1.msra.mxu0 %v1385
        %1494 = vmatprep.subr.mxu0 0.0
        %1495 = vmatpush1.msra.mxu0 %v1387
        %1496 = vmatprep.subr.mxu0 0.0
        %1497 = vmatpush1.msra.mxu0 %v1389
        %1498 = vmatprep.subr.mxu0 0.0
        %1499 = vmatpush1.msra.mxu0 %v1391
        %1500 = vmatprep.subr.mxu0 0.0
        %1501 = vmatpush1.msra.mxu0 %v1393
        %1502 = vmatprep.subr.mxu0 0.0
        %1503 = vmatpush1.msra.mxu0 %v1395
        %1504 = vmatprep.subr.mxu0 0.0
        %1505 = vmatpush1.msra.mxu0 %v1397
        %1506 = vmatprep.subr.mxu0 0.0
        %1507 = vmatpush1.msra.mxu0 %v1399
        %1508 = vmatprep.subr.mxu0 0.0
        %1509 = vmatpush1.msra.mxu0 %v1401
        %1510 = vmatprep.subr.mxu0 0.0
        %1511 = vmatpush1.msra.mxu0 %v1403
        %1512 = vmatprep.subr.mxu0 0.0
        %1513 = vmatpush1.msra.mxu0 %v1405
        %1514 = vmatprep.subr.mxu0 0.0
        %1515 = vmatpush1.msra.mxu0 %v1407
        %1516 = vmatprep.subr.mxu0 0.0
        %1517 = vmatpush1.msra.mxu0 %v1409
        %1518 = vmatprep.subr.mxu0 0.0
        %1519 = vmatpush1.msra.mxu0 %v1411
        %1520 = vmatprep.subr.mxu0 0.0
        %1521 = vmatpush1.msra.mxu0 %v1413
        %1522 = vmatprep.subr.mxu0 0.0
        %1523 = vmatpush1.msra.mxu0 %v1415
        %1524 = vmatprep.subr.mxu0 0.0
        %1525 = vmatpush1.msra.mxu0 %v1417
        %1526 = vmatprep.subr.mxu0 0.0
        %1527 = vmatpush1.msra.mxu0 %v1419
        %1528 = vmatprep.subr.mxu0 0.0
        %1529 = vmatpush1.msra.mxu0 %v1421
        %1530 = vmatprep.subr.mxu0 0.0
        %1531 = vmatpush1.msra.mxu0 %v1423
        %1532 = vmatprep.subr.mxu0 0.0
        %1533 = vmatpush1.msra.mxu0 %v1425
        %1534 = vmatprep.subr.mxu0 0.0
        %1535 = vmatpush1.msra.mxu0 %v1427
        %1536 = vmatprep.subr.mxu0 0.0
        %1537 = vmatpush1.msra.mxu0 %v1429
        %1538 = vmatprep.subr.mxu0 0.0
        %1539 = vmatpush1.msra.mxu0 %v1431
        %1540 = vmatprep.subr.mxu0 0.0
        %1541 = vmatpush1.msra.mxu0 %v1433
        %1542 = vmatprep.subr.mxu0 0.0
        %1543 = vmatpush1.msra.mxu0 0.0
        %1544 = vmatprep.subr.mxu0 0.0
        %1545 = vmatpush1.msra.mxu0 0.0
        %1546 = vmatprep.subr.mxu0 0.0
        %1547 = vmatpush1.msra.mxu0 0.0
        %1548 = vmatprep.subr.mxu0 0.0
        %1549 = vmatpush1.msra.mxu0 0.0
        %1550 = vmatprep.mubr.f32.mxu0 %v1463
        %1551 = vmatmul.mubr.f32.gmra.mrb[0].mxu0 %v1362
        %v1552 = vpop.f32.mrb[0].mxu0
        %v1553 = vadd.f32 0.0, %v1552
        %v1554 = vpop.f32.mrb[0].mxu0
        %1555 = vmatprep.mubr.f32.mxu0 %v1466
        %1556 = vmatmul.mubr.f32.gmra.mrb[0].mxu0 %v1364
        %v1557 = vpop.f32.mrb[0].mxu0
        %v1558 = vadd.f32 0.0, %v1557
        %v1559 = vpop.f32.mrb[0].mxu0
        %1560 = vmatprep.mubr.f32.mxu0 %v1469
        %1561 = vmatmul.mubr.f32.gmra.mrb[0].mxu0 %v1366
        %v1562 = vpop.f32.mrb[0].mxu0
        %v1563 = vadd.f32 0.0, %v1562
        %v1564 = vpop.f32.mrb[0].mxu0
        %1565 = vmatprep.mubr.f32.mxu0 %v1472
        %1566 = vmatmul.mubr.f32.gmra.mrb[0].mxu0 %v1368
        %v1567 = vpop.f32.mrb[0].mxu0
        %v1568 = vadd.f32 0.0, %v1567
        %v1569 = vpop.f32.mrb[0].mxu0
        %1570 = vmatprep.mubr.f32.mxu0 %v1475
        %1571 = vmatmul.mubr.f32.gmra.mrb[0].mxu0 %v1370
        %v1572 = vpop.f32.mrb[0].mxu0
        %v1573 = vadd.f32 0.0, %v1572
        %v1574 = vpop.f32.mrb[0].mxu0
        %1575 = vmatprep.mubr.f32.mxu0 %v1478
        %1576 = vmatmul.mubr.f32.gmra.mrb[0].mxu0 %v1372
        %v1577 = vpop.f32.mrb[0].mxu0
        %v1578 = vadd.f32 0.0, %v1577
        %v1579 = vpop.f32.mrb[0].mxu0
        %1580 = vmatprep.mubr.f32.mxu0 %v1481
        %1581 = vmatmul.mubr.f32.gmra.mrb[0].mxu0 %v1374
        %v1582 = vpop.f32.mrb[0].mxu0
        %v1583 = vadd.f32 0.0, %v1582
        %v1584 = vpop.f32.mrb[0].mxu0
        %1585 = vmatprep.mubr.f32.mxu0 %v1484
        %1586 = vmatmul.mubr.f32.gmra.mrb[0].mxu0 %v1376
        %v1587 = vpop.f32.mrb[0].mxu0
        %v1588 = vadd.f32 0.0, %v1587
        %v1589 = vpop.f32.mrb[0].mxu0
        %1590 = vdwg.mxu0
        %v1591 = vadd.f32 %v1353, %v1553
        %v1592 = vadd.f32 %v1354, %v1558
        %v1593 = vadd.f32 %v1355, %v1563
        %v1594 = vadd.f32 %v1356, %v1568
        %v1595 = vadd.f32 %v1357, %v1573
        %v1596 = vadd.f32 %v1358, %v1578
        %v1597 = vadd.f32 %v1359, %v1583
        %v1598 = vadd.f32 %v1360, %v1588
        %s1599 = scalar_lea.vmem %s1, 512
        %v1600 = vld [vmem:[%s1599] sm:$0xff]
        %v1601 = vld [vmem:[%s1599 + $0x8] sm:$0xff]
        %v1602 = vld [vmem:[%s1599 + $0x10] sm:$0xff]
        %v1603 = vld [vmem:[%s1599 + $0x18] sm:$0xff]
        %v1604 = vld [vmem:[%s1599 + $0x20] sm:$0xff]
        %v1605 = vld [vmem:[%s1599 + $0x28] sm:$0xff]
        %v1606 = vld [vmem:[%s1599 + $0x30] sm:$0xff]
        %v1607 = vld [vmem:[%s1599 + $0x38] sm:$0xff]
        %v1608 = vld [vmem:[%s1599 + $0x40] sm:$0xff]
        %v1609 = vld [vmem:[%s1599 + $0x48] sm:$0xff]
        %v1610 = vld [vmem:[%s1599 + $0x50] sm:$0xff]
        %v1611 = vld [vmem:[%s1599 + $0x58] sm:$0xff]
        %v1612 = vld [vmem:[%s1599 + $0x60] sm:$0xff]
        %v1613 = vld [vmem:[%s1599 + $0x68] sm:$0xff]
        %v1614 = vld [vmem:[%s1599 + $0x70] sm:$0xff]
        %v1615 = vld [vmem:[%s1599 + $0x78] sm:$0xff]
        %1616 = vrot.lane.b32.xlu0 %v691, 124
        %v1617 = vpop.permute.xlu0 %1616
        %1618 = vrot.lane.b32.xlu0 %v692, 124
        %v1619 = vpop.permute.xlu0 %1618
        %1620 = vrot.lane.b32.xlu0 %v693, 124
        %v1621 = vpop.permute.xlu0 %1620
        %1622 = vrot.lane.b32.xlu0 %v694, 124
        %v1623 = vpop.permute.xlu0 %1622
        %1624 = vrot.lane.b32.xlu0 %v695, 124
        %v1625 = vpop.permute.xlu0 %1624
        %1626 = vrot.lane.b32.xlu0 %v696, 124
        %v1627 = vpop.permute.xlu0 %1626
        %1628 = vrot.lane.b32.xlu0 %v697, 124
        %v1629 = vpop.permute.xlu0 %1628
        %1630 = vrot.lane.b32.xlu0 %v698, 124
        %v1631 = vpop.permute.xlu0 %1630
        %1632 = vrot.lane.b32.xlu0 %v699, 124
        %v1633 = vpop.permute.xlu0 %1632
        %1634 = vrot.lane.b32.xlu0 %v700, 124
        %v1635 = vpop.permute.xlu0 %1634
        %1636 = vrot.lane.b32.xlu0 %v701, 124
        %v1637 = vpop.permute.xlu0 %1636
        %1638 = vrot.lane.b32.xlu0 %v702, 124
        %v1639 = vpop.permute.xlu0 %1638
        %1640 = vrot.lane.b32.xlu0 %v703, 124
        %v1641 = vpop.permute.xlu0 %1640
        %1642 = vrot.lane.b32.xlu0 %v704, 124
        %v1643 = vpop.permute.xlu0 %1642
        %1644 = vrot.lane.b32.xlu0 %v705, 124
        %v1645 = vpop.permute.xlu0 %1644
        %1646 = vrot.lane.b32.xlu0 %v706, 124
        %v1647 = vpop.permute.xlu0 %1646
        %1648 = vrot.lane.b32.xlu0 %v707, 124
        %v1649 = vpop.permute.xlu0 %1648
        %1650 = vrot.lane.b32.xlu0 %v708, 124
        %v1651 = vpop.permute.xlu0 %1650
        %1652 = vrot.lane.b32.xlu0 %v709, 124
        %v1653 = vpop.permute.xlu0 %1652
        %1654 = vrot.lane.b32.xlu0 %v710, 124
        %v1655 = vpop.permute.xlu0 %1654
        %1656 = vrot.lane.b32.xlu0 %v711, 124
        %v1657 = vpop.permute.xlu0 %1656
        %1658 = vrot.lane.b32.xlu0 %v712, 124
        %v1659 = vpop.permute.xlu0 %1658
        %1660 = vrot.lane.b32.xlu0 %v713, 124
        %v1661 = vpop.permute.xlu0 %1660
        %1662 = vrot.lane.b32.xlu0 %v714, 124
        %v1663 = vpop.permute.xlu0 %1662
        %1664 = vrot.lane.b32.xlu0 %v715, 124
        %v1665 = vpop.permute.xlu0 %1664
        %1666 = vrot.lane.b32.xlu0 %v716, 124
        %v1667 = vpop.permute.xlu0 %1666
        %1668 = vrot.lane.b32.xlu0 %v717, 124
        %v1669 = vpop.permute.xlu0 %1668
        %1670 = vrot.lane.b32.xlu0 %v718, 124
        %v1671 = vpop.permute.xlu0 %1670
        %v1701 = vsel %vm864, %v1601, 0
        %v1704 = vsel %vm864, %v1603, 0
        %v1707 = vsel %vm864, %v1605, 0
        %v1710 = vsel %vm864, %v1607, 0
        %v1713 = vsel %vm864, %v1609, 0
        %v1716 = vsel %vm864, %v1611, 0
        %v1719 = vsel %vm864, %v1613, 0
        %v1722 = vsel %vm864, %v1615, 0
        %1724 = vmatprep.subr.mxu0 0.0
        %1725 = vmatpush1.msra.mxu0 %v1617
        %1726 = vmatprep.subr.mxu0 0.0
        %1727 = vmatpush1.msra.mxu0 %v1619
        %1728 = vmatprep.subr.mxu0 0.0
        %1729 = vmatpush1.msra.mxu0 %v1621
        %1730 = vmatprep.subr.mxu0 0.0
        %1731 = vmatpush1.msra.mxu0 %v1623
        %1732 = vmatprep.subr.mxu0 0.0
        %1733 = vmatpush1.msra.mxu0 %v1625
        %1734 = vmatprep.subr.mxu0 0.0
        %1735 = vmatpush1.msra.mxu0 %v1627
        %1736 = vmatprep.subr.mxu0 0.0
        %1737 = vmatpush1.msra.mxu0 %v1629
        %1738 = vmatprep.subr.mxu0 0.0
        %1739 = vmatpush1.msra.mxu0 %v1631
        %1740 = vmatprep.subr.mxu0 0.0
        %1741 = vmatpush1.msra.mxu0 %v1633
        %1742 = vmatprep.subr.mxu0 0.0
        %1743 = vmatpush1.msra.mxu0 %v1635
        %1744 = vmatprep.subr.mxu0 0.0
        %1745 = vmatpush1.msra.mxu0 %v1637
        %1746 = vmatprep.subr.mxu0 0.0
        %1747 = vmatpush1.msra.mxu0 %v1639
        %1748 = vmatprep.subr.mxu0 0.0
        %1749 = vmatpush1.msra.mxu0 %v1641
        %1750 = vmatprep.subr.mxu0 0.0
        %1751 = vmatpush1.msra.mxu0 %v1643
        %1752 = vmatprep.subr.mxu0 0.0
        %1753 = vmatpush1.msra.mxu0 %v1645
        %1754 = vmatprep.subr.mxu0 0.0
        %1755 = vmatpush1.msra.mxu0 %v1647
        %1756 = vmatprep.subr.mxu0 0.0
        %1757 = vmatpush1.msra.mxu0 %v1649
        %1758 = vmatprep.subr.mxu0 0.0
        %1759 = vmatpush1.msra.mxu0 %v1651
        %1760 = vmatprep.subr.mxu0 0.0
        %1761 = vmatpush1.msra.mxu0 %v1653
        %1762 = vmatprep.subr.mxu0 0.0
        %1763 = vmatpush1.msra.mxu0 %v1655
        %1764 = vmatprep.subr.mxu0 0.0
        %1765 = vmatpush1.msra.mxu0 %v1657
        %1766 = vmatprep.subr.mxu0 0.0
        %1767 = vmatpush1.msra.mxu0 %v1659
        %1768 = vmatprep.subr.mxu0 0.0
        %1769 = vmatpush1.msra.mxu0 %v1661
        %1770 = vmatprep.subr.mxu0 0.0
        %1771 = vmatpush1.msra.mxu0 %v1663
        %1772 = vmatprep.subr.mxu0 0.0
        %1773 = vmatpush1.msra.mxu0 %v1665
        %1774 = vmatprep.subr.mxu0 0.0
        %1775 = vmatpush1.msra.mxu0 %v1667
        %1776 = vmatprep.subr.mxu0 0.0
        %1777 = vmatpush1.msra.mxu0 %v1669
        %1778 = vmatprep.subr.mxu0 0.0
        %1779 = vmatpush1.msra.mxu0 %v1671
        %1780 = vmatprep.subr.mxu0 0.0
        %1781 = vmatpush1.msra.mxu0 0.0
        %1782 = vmatprep.subr.mxu0 0.0
        %1783 = vmatpush1.msra.mxu0 0.0
        %1784 = vmatprep.subr.mxu0 0.0
        %1785 = vmatpush1.msra.mxu0 0.0
        %1786 = vmatprep.subr.mxu0 0.0
        %1787 = vmatpush1.msra.mxu0 0.0
        %1788 = vmatprep.mubr.f32.mxu0 %v1701
        %1789 = vmatmul.mubr.f32.gmra.mrb[0].mxu0 %v1600
        %v1790 = vpop.f32.mrb[0].mxu0
        %v1791 = vadd.f32 0.0, %v1790
        %v1792 = vpop.f32.mrb[0].mxu0
        %1793 = vmatprep.mubr.f32.mxu0 %v1704
        %1794 = vmatmul.mubr.f32.gmra.mrb[0].mxu0 %v1602
        %v1795 = vpop.f32.mrb[0].mxu0
        %v1796 = vadd.f32 0.0, %v1795
        %v1797 = vpop.f32.mrb[0].mxu0
        %1798 = vmatprep.mubr.f32.mxu0 %v1707
        %1799 = vmatmul.mubr.f32.gmra.mrb[0].mxu0 %v1604
        %v1800 = vpop.f32.mrb[0].mxu0
        %v1801 = vadd.f32 0.0, %v1800
        %v1802 = vpop.f32.mrb[0].mxu0
        %1803 = vmatprep.mubr.f32.mxu0 %v1710
        %1804 = vmatmul.mubr.f32.gmra.mrb[0].mxu0 %v1606
        %v1805 = vpop.f32.mrb[0].mxu0
        %v1806 = vadd.f32 0.0, %v1805
        %v1807 = vpop.f32.mrb[0].mxu0
        %1808 = vmatprep.mubr.f32.mxu0 %v1713
        %1809 = vmatmul.mubr.f32.gmra.mrb[0].mxu0 %v1608
        %v1810 = vpop.f32.mrb[0].mxu0
        %v1811 = vadd.f32 0.0, %v1810
        %v1812 = vpop.f32.mrb[0].mxu0
        %1813 = vmatprep.mubr.f32.mxu0 %v1716
        %1814 = vmatmul.mubr.f32.gmra.mrb[0].mxu0 %v1610
        %v1815 = vpop.f32.mrb[0].mxu0
        %v1816 = vadd.f32 0.0, %v1815
        %v1817 = vpop.f32.mrb[0].mxu0
        %1818 = vmatprep.mubr.f32.mxu0 %v1719
        %1819 = vmatmul.mubr.f32.gmra.mrb[0].mxu0 %v1612
        %v1820 = vpop.f32.mrb[0].mxu0
        %v1821 = vadd.f32 0.0, %v1820
        %v1822 = vpop.f32.mrb[0].mxu0
        %1823 = vmatprep.mubr.f32.mxu0 %v1722
        %1824 = vmatmul.mubr.f32.gmra.mrb[0].mxu0 %v1614
        %v1825 = vpop.f32.mrb[0].mxu0
        %v1826 = vadd.f32 0.0, %v1825
        %v1827 = vpop.f32.mrb[0].mxu0
        %1828 = vdwg.mxu0
        %v1829 = vadd.f32 %v1591, %v1791
        %v1830 = vadd.f32 %v1592, %v1796
        %v1831 = vadd.f32 %v1593, %v1801
        %v1832 = vadd.f32 %v1594, %v1806
        %v1833 = vadd.f32 %v1595, %v1811
        %v1834 = vadd.f32 %v1596, %v1816
        %v1835 = vadd.f32 %v1597, %v1821
        %v1836 = vadd.f32 %v1598, %v1826
        %s1837 = scalar_lea.vmem %s1, 640
        %v1838 = vld [vmem:[%s1837] sm:$0xff]
        %v1839 = vld [vmem:[%s1837 + $0x8] sm:$0xff]
        %v1840 = vld [vmem:[%s1837 + $0x10] sm:$0xff]
        %v1841 = vld [vmem:[%s1837 + $0x18] sm:$0xff]
        %v1842 = vld [vmem:[%s1837 + $0x20] sm:$0xff]
        %v1843 = vld [vmem:[%s1837 + $0x28] sm:$0xff]
        %v1844 = vld [vmem:[%s1837 + $0x30] sm:$0xff]
        %v1845 = vld [vmem:[%s1837 + $0x38] sm:$0xff]
        %v1846 = vld [vmem:[%s1837 + $0x40] sm:$0xff]
        %v1847 = vld [vmem:[%s1837 + $0x48] sm:$0xff]
        %v1848 = vld [vmem:[%s1837 + $0x50] sm:$0xff]
        %v1849 = vld [vmem:[%s1837 + $0x58] sm:$0xff]
        %v1850 = vld [vmem:[%s1837 + $0x60] sm:$0xff]
        %v1851 = vld [vmem:[%s1837 + $0x68] sm:$0xff]
        %v1852 = vld [vmem:[%s1837 + $0x70] sm:$0xff]
        %v1853 = vld [vmem:[%s1837 + $0x78] sm:$0xff]
        %1854 = vrot.lane.b32.xlu0 %v691, 123
        %v1855 = vpop.permute.xlu0 %1854
        %1856 = vrot.lane.b32.xlu0 %v692, 123
        %v1857 = vpop.permute.xlu0 %1856
        %1858 = vrot.lane.b32.xlu0 %v693, 123
        %v1859 = vpop.permute.xlu0 %1858
        %1860 = vrot.lane.b32.xlu0 %v694, 123
        %v1861 = vpop.permute.xlu0 %1860
        %1862 = vrot.lane.b32.xlu0 %v695, 123
        %v1863 = vpop.permute.xlu0 %1862
        %1864 = vrot.lane.b32.xlu0 %v696, 123
        %v1865 = vpop.permute.xlu0 %1864
        %1866 = vrot.lane.b32.xlu0 %v697, 123
        %v1867 = vpop.permute.xlu0 %1866
        %1868 = vrot.lane.b32.xlu0 %v698, 123
        %v1869 = vpop.permute.xlu0 %1868
        %1870 = vrot.lane.b32.xlu0 %v699, 123
        %v1871 = vpop.permute.xlu0 %1870
        %1872 = vrot.lane.b32.xlu0 %v700, 123
        %v1873 = vpop.permute.xlu0 %1872
        %1874 = vrot.lane.b32.xlu0 %v701, 123
        %v1875 = vpop.permute.xlu0 %1874
        %1876 = vrot.lane.b32.xlu0 %v702, 123
        %v1877 = vpop.permute.xlu0 %1876
        %1878 = vrot.lane.b32.xlu0 %v703, 123
        %v1879 = vpop.permute.xlu0 %1878
        %1880 = vrot.lane.b32.xlu0 %v704, 123
        %v1881 = vpop.permute.xlu0 %1880
        %1882 = vrot.lane.b32.xlu0 %v705, 123
        %v1883 = vpop.permute.xlu0 %1882
        %1884 = vrot.lane.b32.xlu0 %v706, 123
        %v1885 = vpop.permute.xlu0 %1884
        %1886 = vrot.lane.b32.xlu0 %v707, 123
        %v1887 = vpop.permute.xlu0 %1886
        %1888 = vrot.lane.b32.xlu0 %v708, 123
        %v1889 = vpop.permute.xlu0 %1888
        %1890 = vrot.lane.b32.xlu0 %v709, 123
        %v1891 = vpop.permute.xlu0 %1890
        %1892 = vrot.lane.b32.xlu0 %v710, 123
        %v1893 = vpop.permute.xlu0 %1892
        %1894 = vrot.lane.b32.xlu0 %v711, 123
        %v1895 = vpop.permute.xlu0 %1894
        %1896 = vrot.lane.b32.xlu0 %v712, 123
        %v1897 = vpop.permute.xlu0 %1896
        %1898 = vrot.lane.b32.xlu0 %v713, 123
        %v1899 = vpop.permute.xlu0 %1898
        %1900 = vrot.lane.b32.xlu0 %v714, 123
        %v1901 = vpop.permute.xlu0 %1900
        %1902 = vrot.lane.b32.xlu0 %v715, 123
        %v1903 = vpop.permute.xlu0 %1902
        %1904 = vrot.lane.b32.xlu0 %v716, 123
        %v1905 = vpop.permute.xlu0 %1904
        %1906 = vrot.lane.b32.xlu0 %v717, 123
        %v1907 = vpop.permute.xlu0 %1906
        %1908 = vrot.lane.b32.xlu0 %v718, 123
        %v1909 = vpop.permute.xlu0 %1908
        %v1939 = vsel %vm864, %v1839, 0
        %v1942 = vsel %vm864, %v1841, 0
        %v1945 = vsel %vm864, %v1843, 0
        %v1948 = vsel %vm864, %v1845, 0
        %v1951 = vsel %vm864, %v1847, 0
        %v1954 = vsel %vm864, %v1849, 0
        %v1957 = vsel %vm864, %v1851, 0
        %v1960 = vsel %vm864, %v1853, 0
        %1962 = vmatprep.subr.mxu0 0.0
        %1963 = vmatpush1.msra.mxu0 %v1855
        %1964 = vmatprep.subr.mxu0 0.0
        %1965 = vmatpush1.msra.mxu0 %v1857
        %1966 = vmatprep.subr.mxu0 0.0
        %1967 = vmatpush1.msra.mxu0 %v1859
        %1968 = vmatprep.subr.mxu0 0.0
        %1969 = vmatpush1.msra.mxu0 %v1861
        %1970 = vmatprep.subr.mxu0 0.0
        %1971 = vmatpush1.msra.mxu0 %v1863
        %1972 = vmatprep.subr.mxu0 0.0
        %1973 = vmatpush1.msra.mxu0 %v1865
        %1974 = vmatprep.subr.mxu0 0.0
        %1975 = vmatpush1.msra.mxu0 %v1867
        %1976 = vmatprep.subr.mxu0 0.0
        %1977 = vmatpush1.msra.mxu0 %v1869
        %1978 = vmatprep.subr.mxu0 0.0
        %1979 = vmatpush1.msra.mxu0 %v1871
        %1980 = vmatprep.subr.mxu0 0.0
        %1981 = vmatpush1.msra.mxu0 %v1873
        %1982 = vmatprep.subr.mxu0 0.0
        %1983 = vmatpush1.msra.mxu0 %v1875
        %1984 = vmatprep.subr.mxu0 0.0
        %1985 = vmatpush1.msra.mxu0 %v1877
        %1986 = vmatprep.subr.mxu0 0.0
        %1987 = vmatpush1.msra.mxu0 %v1879
        %1988 = vmatprep.subr.mxu0 0.0
        %1989 = vmatpush1.msra.mxu0 %v1881
        %1990 = vmatprep.subr.mxu0 0.0
        %1991 = vmatpush1.msra.mxu0 %v1883
        %1992 = vmatprep.subr.mxu0 0.0
        %1993 = vmatpush1.msra.mxu0 %v1885
        %1994 = vmatprep.subr.mxu0 0.0
        %1995 = vmatpush1.msra.mxu0 %v1887
        %1996 = vmatprep.subr.mxu0 0.0
        %1997 = vmatpush1.msra.mxu0 %v1889
        %1998 = vmatprep.subr.mxu0 0.0
        %1999 = vmatpush1.msra.mxu0 %v1891
        %2000 = vmatprep.subr.mxu0 0.0
        %2001 = vmatpush1.msra.mxu0 %v1893
        %2002 = vmatprep.subr.mxu0 0.0
        %2003 = vmatpush1.msra.mxu0 %v1895
        %2004 = vmatprep.subr.mxu0 0.0
        %2005 = vmatpush1.msra.mxu0 %v1897
        %2006 = vmatprep.subr.mxu0 0.0
        %2007 = vmatpush1.msra.mxu0 %v1899
        %2008 = vmatprep.subr.mxu0 0.0
        %2009 = vmatpush1.msra.mxu0 %v1901
        %2010 = vmatprep.subr.mxu0 0.0
        %2011 = vmatpush1.msra.mxu0 %v1903
        %2012 = vmatprep.subr.mxu0 0.0
        %2013 = vmatpush1.msra.mxu0 %v1905
        %2014 = vmatprep.subr.mxu0 0.0
        %2015 = vmatpush1.msra.mxu0 %v1907
        %2016 = vmatprep.subr.mxu0 0.0
        %2017 = vmatpush1.msra.mxu0 %v1909
        %2018 = vmatprep.subr.mxu0 0.0
        %2019 = vmatpush1.msra.mxu0 0.0
        %2020 = vmatprep.subr.mxu0 0.0
        %2021 = vmatpush1.msra.mxu0 0.0
        %2022 = vmatprep.subr.mxu0 0.0
        %2023 = vmatpush1.msra.mxu0 0.0
        %2024 = vmatprep.subr.mxu0 0.0
        %2025 = vmatpush1.msra.mxu0 0.0
        %2026 = vmatprep.mubr.f32.mxu0 %v1939
        %2027 = vmatmul.mubr.f32.gmra.mrb[0].mxu0 %v1838
        %v2028 = vpop.f32.mrb[0].mxu0
        %v2029 = vadd.f32 0.0, %v2028
        %v2030 = vpop.f32.mrb[0].mxu0
        %2031 = vmatprep.mubr.f32.mxu0 %v1942
        %2032 = vmatmul.mubr.f32.gmra.mrb[0].mxu0 %v1840
        %v2033 = vpop.f32.mrb[0].mxu0
        %v2034 = vadd.f32 0.0, %v2033
        %v2035 = vpop.f32.mrb[0].mxu0
        %2036 = vmatprep.mubr.f32.mxu0 %v1945
        %2037 = vmatmul.mubr.f32.gmra.mrb[0].mxu0 %v1842
        %v2038 = vpop.f32.mrb[0].mxu0
        %v2039 = vadd.f32 0.0, %v2038
        %v2040 = vpop.f32.mrb[0].mxu0
        %2041 = vmatprep.mubr.f32.mxu0 %v1948
        %2042 = vmatmul.mubr.f32.gmra.mrb[0].mxu0 %v1844
        %v2043 = vpop.f32.mrb[0].mxu0
        %v2044 = vadd.f32 0.0, %v2043
        %v2045 = vpop.f32.mrb[0].mxu0
        %2046 = vmatprep.mubr.f32.mxu0 %v1951
        %2047 = vmatmul.mubr.f32.gmra.mrb[0].mxu0 %v1846
        %v2048 = vpop.f32.mrb[0].mxu0
        %v2049 = vadd.f32 0.0, %v2048
        %v2050 = vpop.f32.mrb[0].mxu0
        %2051 = vmatprep.mubr.f32.mxu0 %v1954
        %2052 = vmatmul.mubr.f32.gmra.mrb[0].mxu0 %v1848
        %v2053 = vpop.f32.mrb[0].mxu0
        %v2054 = vadd.f32 0.0, %v2053
        %v2055 = vpop.f32.mrb[0].mxu0
        %2056 = vmatprep.mubr.f32.mxu0 %v1957
        %2057 = vmatmul.mubr.f32.gmra.mrb[0].mxu0 %v1850
        %v2058 = vpop.f32.mrb[0].mxu0
        %v2059 = vadd.f32 0.0, %v2058
        %v2060 = vpop.f32.mrb[0].mxu0
        %2061 = vmatprep.mubr.f32.mxu0 %v1960
        %2062 = vmatmul.mubr.f32.gmra.mrb[0].mxu0 %v1852
        %v2063 = vpop.f32.mrb[0].mxu0
        %v2064 = vadd.f32 0.0, %v2063
        %v2065 = vpop.f32.mrb[0].mxu0
        %2066 = vdwg.mxu0
        %v2067 = vadd.f32 %v1829, %v2029
        %v2068 = vadd.f32 %v1830, %v2034
        %v2069 = vadd.f32 %v1831, %v2039
        %v2070 = vadd.f32 %v1832, %v2044
        %v2071 = vadd.f32 %v1833, %v2049
        %v2072 = vadd.f32 %v1834, %v2054
        %v2073 = vadd.f32 %v1835, %v2059
        %v2074 = vadd.f32 %v1836, %v2064
        %s2075 = scalar_lea.vmem %s1, 768
        %v2076 = vld [vmem:[%s2075] sm:$0xff]
        %v2077 = vld [vmem:[%s2075 + $0x8] sm:$0xff]
        %v2078 = vld [vmem:[%s2075 + $0x10] sm:$0xff]
        %v2079 = vld [vmem:[%s2075 + $0x18] sm:$0xff]
        %v2080 = vld [vmem:[%s2075 + $0x20] sm:$0xff]
        %v2081 = vld [vmem:[%s2075 + $0x28] sm:$0xff]
        %v2082 = vld [vmem:[%s2075 + $0x30] sm:$0xff]
        %v2083 = vld [vmem:[%s2075 + $0x38] sm:$0xff]
        %v2084 = vld [vmem:[%s2075 + $0x40] sm:$0xff]
        %v2085 = vld [vmem:[%s2075 + $0x48] sm:$0xff]
        %v2086 = vld [vmem:[%s2075 + $0x50] sm:$0xff]
        %v2087 = vld [vmem:[%s2075 + $0x58] sm:$0xff]
        %v2088 = vld [vmem:[%s2075 + $0x60] sm:$0xff]
        %v2089 = vld [vmem:[%s2075 + $0x68] sm:$0xff]
        %v2090 = vld [vmem:[%s2075 + $0x70] sm:$0xff]
        %v2091 = vld [vmem:[%s2075 + $0x78] sm:$0xff]
        %2092 = vrot.lane.b32.xlu0 %v691, 122
        %v2093 = vpop.permute.xlu0 %2092
        %2094 = vrot.lane.b32.xlu0 %v692, 122
        %v2095 = vpop.permute.xlu0 %2094
        %2096 = vrot.lane.b32.xlu0 %v693, 122
        %v2097 = vpop.permute.xlu0 %2096
        %2098 = vrot.lane.b32.xlu0 %v694, 122
        %v2099 = vpop.permute.xlu0 %2098
        %2100 = vrot.lane.b32.xlu0 %v695, 122
        %v2101 = vpop.permute.xlu0 %2100
        %2102 = vrot.lane.b32.xlu0 %v696, 122
        %v2103 = vpop.permute.xlu0 %2102
        %2104 = vrot.lane.b32.xlu0 %v697, 122
        %v2105 = vpop.permute.xlu0 %2104
        %2106 = vrot.lane.b32.xlu0 %v698, 122
        %v2107 = vpop.permute.xlu0 %2106
        %2108 = vrot.lane.b32.xlu0 %v699, 122
        %v2109 = vpop.permute.xlu0 %2108
        %2110 = vrot.lane.b32.xlu0 %v700, 122
        %v2111 = vpop.permute.xlu0 %2110
        %2112 = vrot.lane.b32.xlu0 %v701, 122
        %v2113 = vpop.permute.xlu0 %2112
        %2114 = vrot.lane.b32.xlu0 %v702, 122
        %v2115 = vpop.permute.xlu0 %2114
        %2116 = vrot.lane.b32.xlu0 %v703, 122
        %v2117 = vpop.permute.xlu0 %2116
        %2118 = vrot.lane.b32.xlu0 %v704, 122
        %v2119 = vpop.permute.xlu0 %2118
        %2120 = vrot.lane.b32.xlu0 %v705, 122
        %v2121 = vpop.permute.xlu0 %2120
        %2122 = vrot.lane.b32.xlu0 %v706, 122
        %v2123 = vpop.permute.xlu0 %2122
        %2124 = vrot.lane.b32.xlu0 %v707, 122
        %v2125 = vpop.permute.xlu0 %2124
        %2126 = vrot.lane.b32.xlu0 %v708, 122
        %v2127 = vpop.permute.xlu0 %2126
        %2128 = vrot.lane.b32.xlu0 %v709, 122
        %v2129 = vpop.permute.xlu0 %2128
        %2130 = vrot.lane.b32.xlu0 %v710, 122
        %v2131 = vpop.permute.xlu0 %2130
        %2132 = vrot.lane.b32.xlu0 %v711, 122
        %v2133 = vpop.permute.xlu0 %2132
        %2134 = vrot.lane.b32.xlu0 %v712, 122
        %v2135 = vpop.permute.xlu0 %2134
        %2136 = vrot.lane.b32.xlu0 %v713, 122
        %v2137 = vpop.permute.xlu0 %2136
        %2138 = vrot.lane.b32.xlu0 %v714, 122
        %v2139 = vpop.permute.xlu0 %2138
        %2140 = vrot.lane.b32.xlu0 %v715, 122
        %v2141 = vpop.permute.xlu0 %2140
        %2142 = vrot.lane.b32.xlu0 %v716, 122
        %v2143 = vpop.permute.xlu0 %2142
        %2144 = vrot.lane.b32.xlu0 %v717, 122
        %v2145 = vpop.permute.xlu0 %2144
        %2146 = vrot.lane.b32.xlu0 %v718, 122
        %v2147 = vpop.permute.xlu0 %2146
        %v2177 = vsel %vm864, %v2077, 0
        %v2180 = vsel %vm864, %v2079, 0
        %v2183 = vsel %vm864, %v2081, 0
        %v2186 = vsel %vm864, %v2083, 0
        %v2189 = vsel %vm864, %v2085, 0
        %v2192 = vsel %vm864, %v2087, 0
        %v2195 = vsel %vm864, %v2089, 0
        %v2198 = vsel %vm864, %v2091, 0
        %2200 = vmatprep.subr.mxu0 0.0
        %2201 = vmatpush1.msra.mxu0 %v2093
        %2202 = vmatprep.subr.mxu0 0.0
        %2203 = vmatpush1.msra.mxu0 %v2095
        %2204 = vmatprep.subr.mxu0 0.0
        %2205 = vmatpush1.msra.mxu0 %v2097
        %2206 = vmatprep.subr.mxu0 0.0
        %2207 = vmatpush1.msra.mxu0 %v2099
        %2208 = vmatprep.subr.mxu0 0.0
        %2209 = vmatpush1.msra.mxu0 %v2101
        %2210 = vmatprep.subr.mxu0 0.0
        %2211 = vmatpush1.msra.mxu0 %v2103
        %2212 = vmatprep.subr.mxu0 0.0
        %2213 = vmatpush1.msra.mxu0 %v2105
        %2214 = vmatprep.subr.mxu0 0.0
        %2215 = vmatpush1.msra.mxu0 %v2107
        %2216 = vmatprep.subr.mxu0 0.0
        %2217 = vmatpush1.msra.mxu0 %v2109
        %2218 = vmatprep.subr.mxu0 0.0
        %2219 = vmatpush1.msra.mxu0 %v2111
        %2220 = vmatprep.subr.mxu0 0.0
        %2221 = vmatpush1.msra.mxu0 %v2113
        %2222 = vmatprep.subr.mxu0 0.0
        %2223 = vmatpush1.msra.mxu0 %v2115
        %2224 = vmatprep.subr.mxu0 0.0
        %2225 = vmatpush1.msra.mxu0 %v2117
        %2226 = vmatprep.subr.mxu0 0.0
        %2227 = vmatpush1.msra.mxu0 %v2119
        %2228 = vmatprep.subr.mxu0 0.0
        %2229 = vmatpush1.msra.mxu0 %v2121
        %2230 = vmatprep.subr.mxu0 0.0
        %2231 = vmatpush1.msra.mxu0 %v2123
        %2232 = vmatprep.subr.mxu0 0.0
        %2233 = vmatpush1.msra.mxu0 %v2125
        %2234 = vmatprep.subr.mxu0 0.0
        %2235 = vmatpush1.msra.mxu0 %v2127
        %2236 = vmatprep.subr.mxu0 0.0
        %2237 = vmatpush1.msra.mxu0 %v2129
        %2238 = vmatprep.subr.mxu0 0.0
        %2239 = vmatpush1.msra.mxu0 %v2131
        %2240 = vmatprep.subr.mxu0 0.0
        %2241 = vmatpush1.msra.mxu0 %v2133
        %2242 = vmatprep.subr.mxu0 0.0
        %2243 = vmatpush1.msra.mxu0 %v2135
        %2244 = vmatprep.subr.mxu0 0.0
        %2245 = vmatpush1.msra.mxu0 %v2137
        %2246 = vmatprep.subr.mxu0 0.0
        %2247 = vmatpush1.msra.mxu0 %v2139
        %2248 = vmatprep.subr.mxu0 0.0
        %2249 = vmatpush1.msra.mxu0 %v2141
        %2250 = vmatprep.subr.mxu0 0.0
        %2251 = vmatpush1.msra.mxu0 %v2143
        %2252 = vmatprep.subr.mxu0 0.0
        %2253 = vmatpush1.msra.mxu0 %v2145
        %2254 = vmatprep.subr.mxu0 0.0
        %2255 = vmatpush1.msra.mxu0 %v2147
        %2256 = vmatprep.subr.mxu0 0.0
        %2257 = vmatpush1.msra.mxu0 0.0
        %2258 = vmatprep.subr.mxu0 0.0
        %2259 = vmatpush1.msra.mxu0 0.0
        %2260 = vmatprep.subr.mxu0 0.0
        %2261 = vmatpush1.msra.mxu0 0.0
        %2262 = vmatprep.subr.mxu0 0.0
        %2263 = vmatpush1.msra.mxu0 0.0
        %2264 = vmatprep.mubr.f32.mxu0 %v2177
        %2265 = vmatmul.mubr.f32.gmra.mrb[0].mxu0 %v2076
        %v2266 = vpop.f32.mrb[0].mxu0
        %v2267 = vadd.f32 0.0, %v2266
        %v2268 = vpop.f32.mrb[0].mxu0
        %2269 = vmatprep.mubr.f32.mxu0 %v2180
        %2270 = vmatmul.mubr.f32.gmra.mrb[0].mxu0 %v2078
        %v2271 = vpop.f32.mrb[0].mxu0
        %v2272 = vadd.f32 0.0, %v2271
        %v2273 = vpop.f32.mrb[0].mxu0
        %2274 = vmatprep.mubr.f32.mxu0 %v2183
        %2275 = vmatmul.mubr.f32.gmra.mrb[0].mxu0 %v2080
        %v2276 = vpop.f32.mrb[0].mxu0
        %v2277 = vadd.f32 0.0, %v2276
        %v2278 = vpop.f32.mrb[0].mxu0
        %2279 = vmatprep.mubr.f32.mxu0 %v2186
        %2280 = vmatmul.mubr.f32.gmra.mrb[0].mxu0 %v2082
        %v2281 = vpop.f32.mrb[0].mxu0
        %v2282 = vadd.f32 0.0, %v2281
        %v2283 = vpop.f32.mrb[0].mxu0
        %2284 = vmatprep.mubr.f32.mxu0 %v2189
        %2285 = vmatmul.mubr.f32.gmra.mrb[0].mxu0 %v2084
        %v2286 = vpop.f32.mrb[0].mxu0
        %v2287 = vadd.f32 0.0, %v2286
        %v2288 = vpop.f32.mrb[0].mxu0
        %2289 = vmatprep.mubr.f32.mxu0 %v2192
        %2290 = vmatmul.mubr.f32.gmra.mrb[0].mxu0 %v2086
        %v2291 = vpop.f32.mrb[0].mxu0
        %v2292 = vadd.f32 0.0, %v2291
        %v2293 = vpop.f32.mrb[0].mxu0
        %2294 = vmatprep.mubr.f32.mxu0 %v2195
        %2295 = vmatmul.mubr.f32.gmra.mrb[0].mxu0 %v2088
        %v2296 = vpop.f32.mrb[0].mxu0
        %v2297 = vadd.f32 0.0, %v2296
        %v2298 = vpop.f32.mrb[0].mxu0
        %2299 = vmatprep.mubr.f32.mxu0 %v2198
        %2300 = vmatmul.mubr.f32.gmra.mrb[0].mxu0 %v2090
        %v2301 = vpop.f32.mrb[0].mxu0
        %v2302 = vadd.f32 0.0, %v2301
        %v2303 = vpop.f32.mrb[0].mxu0
        %2304 = vdwg.mxu0
        %v2305 = vadd.f32 %v2067, %v2267
        %v2306 = vadd.f32 %v2068, %v2272
        %v2307 = vadd.f32 %v2069, %v2277
        %v2308 = vadd.f32 %v2070, %v2282
        %v2309 = vadd.f32 %v2071, %v2287
        %v2310 = vadd.f32 %v2072, %v2292
        %v2311 = vadd.f32 %v2073, %v2297
        %v2312 = vadd.f32 %v2074, %v2302
        %v2313 = vld [vmem:[%s5] sm:$0xff]
        %v2314 = vld [vmem:[%s5 + $0x8] sm:$0xff]
        %v2315 = vld [vmem:[%s5 + $0x10] sm:$0xff]
        %v2316 = vld [vmem:[%s5 + $0x18] sm:$0xff]
        %v2317 = vld [vmem:[%s5 + $0x20] sm:$0xff]
        %v2318 = vld [vmem:[%s5 + $0x28] sm:$0xff]
        %v2319 = vld [vmem:[%s5 + $0x30] sm:$0xff]
        %v2320 = vld [vmem:[%s5 + $0x38] sm:$0xff]
        %2322 = vset.pattern.permute.xlu0 0
        %2323 = vperm.xlu0 %2322, %v2313
        %v2324 = vpop.permute.xlu0 %2323
        %2327 = vset.pattern.permute.xlu0 0
        %2328 = vperm.xlu0 %2327, %v2314
        %v2329 = vpop.permute.xlu0 %2328
        %2332 = vset.pattern.permute.xlu0 0
        %2333 = vperm.xlu0 %2332, %v2315
        %v2334 = vpop.permute.xlu0 %2333
        %2337 = vset.pattern.permute.xlu0 0
        %2338 = vperm.xlu0 %2337, %v2316
        %v2339 = vpop.permute.xlu0 %2338
        %2342 = vset.pattern.permute.xlu0 0
        %2343 = vperm.xlu0 %2342, %v2317
        %v2344 = vpop.permute.xlu0 %2343
        %2347 = vset.pattern.permute.xlu0 0
        %2348 = vperm.xlu0 %2347, %v2318
        %v2349 = vpop.permute.xlu0 %2348
        %2352 = vset.pattern.permute.xlu0 0
        %2353 = vperm.xlu0 %2352, %v2319
        %v2354 = vpop.permute.xlu0 %2353
        %2357 = vset.pattern.permute.xlu0 0
        %2358 = vperm.xlu0 %2357, %v2320
        %v2359 = vpop.permute.xlu0 %2358
        %v2361 = vadd.f32 %v2305, %v2324
        %v2362 = vadd.f32 %v2306, %v2329
        %v2363 = vadd.f32 %v2307, %v2334
        %v2364 = vadd.f32 %v2308, %v2339
        %v2365 = vadd.f32 %v2309, %v2344
        %v2366 = vadd.f32 %v2310, %v2349
        %v2367 = vadd.f32 %v2311, %v2354
        %v2368 = vadd.f32 %v2312, %v2359
        %v2369 = vmax.f32 %v2361, 0.0
        %v2370 = vmax.f32 %v2362, 0.0
        %v2371 = vmax.f32 %v2363, 0.0
        %v2372 = vmax.f32 %v2364, 0.0
        %v2373 = vmax.f32 %v2365, 0.0
        %v2374 = vmax.f32 %v2366, 0.0
        %v2375 = vmax.f32 %v2367, 0.0
        %v2376 = vmax.f32 %v2368, 0.0
        %v2377 = vld [vmem:[%s9] sm:$0xff]
        %vm2378 = vcmask 64512
        %v2380 = vsel %vm2378, %v2369, 0
        %v2383 = vsel %vm2378, %v2370, 0
        %v2386 = vsel %vm2378, %v2371, 0
        %v2389 = vsel %vm2378, %v2372, 0
        %v2392 = vsel %vm2378, %v2373, 0
        %v2395 = vsel %vm2378, %v2374, 0
        %v2398 = vsel %vm2378, %v2375, 0
        %v2401 = vsel %vm2378, %v2376, 0
        %2403 = vmatprep.subr.mxu0 0.0
        %2404 = vmatpush1.msra.mxu0 %v2377
        %2405 = vmatprep.subr.mxu0 0.0
        %2406 = vmatpush1.msra.mxu0 0.0
        %2407 = vmatprep.subr.mxu0 0.0
        %2408 = vmatpush1.msra.mxu0 0.0
        %2409 = vmatprep.subr.mxu0 0.0
        %2410 = vmatpush1.msra.mxu0 0.0
        %2411 = vmatprep.subr.mxu0 0.0
        %2412 = vmatpush1.msra.mxu0 0.0
        %2413 = vmatprep.subr.mxu0 0.0
        %2414 = vmatpush1.msra.mxu0 0.0
        %2415 = vmatprep.subr.mxu0 0.0
        %2416 = vmatpush1.msra.mxu0 0.0
        %2417 = vmatprep.subr.mxu0 0.0
        %2418 = vmatpush1.msra.mxu0 0.0
        %2419 = vmatprep.subr.mxu0 0.0
        %2420 = vmatpush1.msra.mxu0 0.0
        %2421 = vmatprep.subr.mxu0 0.0
        %2422 = vmatpush1.msra.mxu0 0.0
        %2423 = vmatprep.subr.mxu0 0.0
        %2424 = vmatpush1.msra.mxu0 0.0
        %2425 = vmatprep.subr.mxu0 0.0
        %2426 = vmatpush1.msra.mxu0 0.0
        %2427 = vmatprep.subr.mxu0 0.0
        %2428 = vmatpush1.msra.mxu0 0.0
        %2429 = vmatprep.subr.mxu0 0.0
        %2430 = vmatpush1.msra.mxu0 0.0
        %2431 = vmatprep.subr.mxu0 0.0
        %2432 = vmatpush1.msra.mxu0 0.0
        %2433 = vmatprep.subr.mxu0 0.0
        %2434 = vmatpush1.msra.mxu0 0.0
        %2435 = vmatprep.subr.mxu0 0.0
        %2436 = vmatpush1.msra.mxu0 0.0
        %2437 = vmatprep.subr.mxu0 0.0
        %2438 = vmatpush1.msra.mxu0 0.0
        %2439 = vmatprep.subr.mxu0 0.0
        %2440 = vmatpush1.msra.mxu0 0.0
        %2441 = vmatprep.subr.mxu0 0.0
        %2442 = vmatpush1.msra.mxu0 0.0
        %2443 = vmatprep.subr.mxu0 0.0
        %2444 = vmatpush1.msra.mxu0 0.0
        %2445 = vmatprep.subr.mxu0 0.0
        %2446 = vmatpush1.msra.mxu0 0.0
        %2447 = vmatprep.subr.mxu0 0.0
        %2448 = vmatpush1.msra.mxu0 0.0
        %2449 = vmatprep.subr.mxu0 0.0
        %2450 = vmatpush1.msra.mxu0 0.0
        %2451 = vmatprep.subr.mxu0 0.0
        %2452 = vmatpush1.msra.mxu0 0.0
        %2453 = vmatprep.subr.mxu0 0.0
        %2454 = vmatpush1.msra.mxu0 0.0
        %2455 = vmatprep.subr.mxu0 0.0
        %2456 = vmatpush1.msra.mxu0 0.0
        %2457 = vmatprep.subr.mxu0 0.0
        %2458 = vmatpush1.msra.mxu0 0.0
        %2459 = vmatprep.subr.mxu0 0.0
        %2460 = vmatpush1.msra.mxu0 0.0
        %2461 = vmatprep.subr.mxu0 0.0
        %2462 = vmatpush1.msra.mxu0 0.0
        %2463 = vmatprep.subr.mxu0 0.0
        %2464 = vmatpush1.msra.mxu0 0.0
        %2465 = vmatprep.subr.mxu0 0.0
        %2466 = vmatpush1.msra.mxu0 0.0
        %2467 = vmatprep.mubr.f32.mxu0 0.0
        %2468 = vmatmul.mubr.f32.gmra.mrb[0].mxu0 %v2380
        %v2469 = vpop.f32.mrb[0].mxu0
        %v2470 = vadd.f32 0.0, %v2469
        %v2471 = vpop.f32.mrb[0].mxu0
        %2472 = vmatprep.mubr.f32.mxu0 0.0
        %2473 = vmatmul.mubr.f32.gmra.mrb[0].mxu0 %v2383
        %v2474 = vpop.f32.mrb[0].mxu0
        %v2475 = vadd.f32 0.0, %v2474
        %v2476 = vpop.f32.mrb[0].mxu0
        %2477 = vmatprep.mubr.f32.mxu0 0.0
        %2478 = vmatmul.mubr.f32.gmra.mrb[0].mxu0 %v2386
        %v2479 = vpop.f32.mrb[0].mxu0
        %v2480 = vadd.f32 0.0, %v2479
        %v2481 = vpop.f32.mrb[0].mxu0
        %2482 = vmatprep.mubr.f32.mxu0 0.0
        %2483 = vmatmul.mubr.f32.gmra.mrb[0].mxu0 %v2389
        %v2484 = vpop.f32.mrb[0].mxu0
        %v2485 = vadd.f32 0.0, %v2484
        %v2486 = vpop.f32.mrb[0].mxu0
        %2487 = vmatprep.mubr.f32.mxu0 0.0
        %2488 = vmatmul.mubr.f32.gmra.mrb[0].mxu0 %v2392
        %v2489 = vpop.f32.mrb[0].mxu0
        %v2490 = vadd.f32 0.0, %v2489
        %v2491 = vpop.f32.mrb[0].mxu0
        %2492 = vmatprep.mubr.f32.mxu0 0.0
        %2493 = vmatmul.mubr.f32.gmra.mrb[0].mxu0 %v2395
        %v2494 = vpop.f32.mrb[0].mxu0
        %v2495 = vadd.f32 0.0, %v2494
        %v2496 = vpop.f32.mrb[0].mxu0
        %2497 = vmatprep.mubr.f32.mxu0 0.0
        %2498 = vmatmul.mubr.f32.gmra.mrb[0].mxu0 %v2398
        %v2499 = vpop.f32.mrb[0].mxu0
        %v2500 = vadd.f32 0.0, %v2499
        %v2501 = vpop.f32.mrb[0].mxu0
        %2502 = vmatprep.mubr.f32.mxu0 0.0
        %2503 = vmatmul.mubr.f32.gmra.mrb[0].mxu0 %v2401
        %v2504 = vpop.f32.mrb[0].mxu0
        %v2505 = vadd.f32 0.0, %v2504
        %v2506 = vpop.f32.mrb[0].mxu0
        %2507 = vdwg.mxu0
        %vm2508 = vcmask 179200
        %2509 = vst.msk [vmem:[#allocation3] sm:$0xff] %vm2508, 0.0
        %2510 = vst.msk [vmem:[#allocation3 + $0x8] sm:$0xff] %vm2508, 0.0
        %2511 = vst.msk [vmem:[#allocation3 + $0x10] sm:$0xff] %vm2508, 0.0
        %2512 = vst.msk [vmem:[#allocation3 + $0x18] sm:$0xff] %vm2508, 0.0
        %2513 = vst.msk [vmem:[#allocation3 + $0x20] sm:$0xff] %vm2508, 0.0
        %2514 = vst.msk [vmem:[#allocation3 + $0x28] sm:$0xff] %vm2508, 0.0
        %2515 = vst.msk [vmem:[#allocation3 + $0x30] sm:$0xff] %vm2508, 0.0
        %2516 = vst.msk [vmem:[#allocation3 + $0x38] sm:$0xff] %vm2508, 0.0
        %2517 = vst.msk [vmem:[#allocation3 + $0x40] sm:$0xff] %vm2508, 0.0
        %2518 = vst.msk [vmem:[#allocation3 + $0x48] sm:$0xff] %vm2508, 0.0
        %2519 = vst.msk [vmem:[#allocation3 + $0x50] sm:$0xff] %vm2508, 0.0
        %2520 = vst.msk [vmem:[#allocation3 + $0x58] sm:$0xff] %vm2508, 0.0
        %2521 = vst.msk [vmem:[#allocation3 + $0x60] sm:$0xff] %vm2508, 0.0
        %2522 = vst.msk [vmem:[#allocation3 + $0x68] sm:$0xff] %vm2508, 0.0
        %2523 = vst.msk [vmem:[#allocation3 + $0x70] sm:$0xff] %vm2508, 0.0
        %2524 = vst.msk [vmem:[#allocation3 + $0x78] sm:$0xff] %vm2508, 0.0
        %2525 = vst.msk [vmem:[#allocation3 + $0x80] sm:$0xff] %vm2508, 0.0
        %2526 = vst.msk [vmem:[#allocation3 + $0x88] sm:$0xff] %vm2508, 0.0
        %2527 = vst.msk [vmem:[#allocation3 + $0x90] sm:$0xff] %vm2508, 0.0
        %2528 = vst.msk [vmem:[#allocation3 + $0x98] sm:$0xff] %vm2508, 0.0
        %2529 = vst.msk [vmem:[#allocation3 + $0xa0] sm:$0xff] %vm2508, 0.0
        %2530 = vst.msk [vmem:[#allocation3 + $0xa8] sm:$0xff] %vm2508, 0.0
        %v2531 = vld [vmem:[%s12] sm:$0xff]
        %v2532 = vld [vmem:[%s12 + $0x8] sm:$0xff]
        %v2534 = vsel %vm2378, %v2531, 0
        %v2537 = vsel %vm2378, %v2532, 0
        %2539 = vmatprep.subr.mxu0 0.0
        %2540 = vmatpush1.msra.mxu0 %v2470
        %2541 = vmatprep.subr.mxu0 0.0
        %2542 = vmatpush1.msra.mxu0 0.0
        %2543 = vmatprep.subr.mxu0 0.0
        %2544 = vmatpush1.msra.mxu0 0.0
        %2545 = vmatprep.subr.mxu0 0.0
        %2546 = vmatpush1.msra.mxu0 0.0
        %2547 = vmatprep.subr.mxu0 0.0
        %2548 = vmatpush1.msra.mxu0 0.0
        %2549 = vmatprep.subr.mxu0 0.0
        %2550 = vmatpush1.msra.mxu0 0.0
        %2551 = vmatprep.subr.mxu0 0.0
        %2552 = vmatpush1.msra.mxu0 0.0
        %2553 = vmatprep.subr.mxu0 0.0
        %2554 = vmatpush1.msra.mxu0 0.0
        %2555 = vmatprep.subr.mxu0 0.0
        %2556 = vmatpush1.msra.mxu0 0.0
        %2557 = vmatprep.subr.mxu0 0.0
        %2558 = vmatpush1.msra.mxu0 0.0
        %2559 = vmatprep.subr.mxu0 0.0
        %2560 = vmatpush1.msra.mxu0 0.0
        %2561 = vmatprep.subr.mxu0 0.0
        %2562 = vmatpush1.msra.mxu0 0.0
        %2563 = vmatprep.subr.mxu0 0.0
        %2564 = vmatpush1.msra.mxu0 0.0
        %2565 = vmatprep.subr.mxu0 0.0
        %2566 = vmatpush1.msra.mxu0 0.0
        %2567 = vmatprep.subr.mxu0 0.0
        %2568 = vmatpush1.msra.mxu0 0.0
        %2569 = vmatprep.subr.mxu0 0.0
        %2570 = vmatpush1.msra.mxu0 0.0
        %2571 = vmatprep.subr.mxu0 0.0
        %2572 = vmatpush1.msra.mxu0 0.0
        %2573 = vmatprep.subr.mxu0 0.0
        %2574 = vmatpush1.msra.mxu0 0.0
        %2575 = vmatprep.subr.mxu0 0.0
        %2576 = vmatpush1.msra.mxu0 0.0
        %2577 = vmatprep.subr.mxu0 0.0
        %2578 = vmatpush1.msra.mxu0 0.0
        %2579 = vmatprep.subr.mxu0 0.0
        %2580 = vmatpush1.msra.mxu0 0.0
        %2581 = vmatprep.subr.mxu0 0.0
        %2582 = vmatpush1.msra.mxu0 0.0
        %2583 = vmatprep.subr.mxu0 0.0
        %2584 = vmatpush1.msra.mxu0 0.0
        %2585 = vmatprep.subr.mxu0 0.0
        %2586 = vmatpush1.msra.mxu0 0.0
        %2587 = vmatprep.subr.mxu0 0.0
        %2588 = vmatpush1.msra.mxu0 0.0
        %2589 = vmatprep.subr.mxu0 0.0
        %2590 = vmatpush1.msra.mxu0 0.0
        %2591 = vmatprep.subr.mxu0 0.0
        %2592 = vmatpush1.msra.mxu0 0.0
        %2593 = vmatprep.subr.mxu0 0.0
        %2594 = vmatpush1.msra.mxu0 0.0
        %2595 = vmatprep.subr.mxu0 0.0
        %2596 = vmatpush1.msra.mxu0 0.0
        %2597 = vmatprep.subr.mxu0 0.0
        %2598 = vmatpush1.msra.mxu0 0.0
        %2599 = vmatprep.subr.mxu0 0.0
        %2600 = vmatpush1.msra.mxu0 0.0
        %2601 = vmatprep.subr.mxu0 0.0
        %2602 = vmatpush1.msra.mxu0 0.0
        %2603 = vmatprep.mubr.f32.mxu0 0.0
        %2604 = vmatmul.mubr.f32.gmra.mrb[0].mxu0 %v2534
        %v2605 = vpop.f32.mrb[0].mxu0
        %v2606 = vadd.f32 0.0, %v2605
        %v2607 = vpop.f32.mrb[0].mxu0
        %2608 = vmatprep.mubr.f32.mxu0 0.0
        %2609 = vmatmul.mubr.f32.gmra.mrb[0].mxu0 %v2537
        %v2610 = vpop.f32.mrb[0].mxu0
        %v2611 = vadd.f32 0.0, %v2610
        %v2612 = vpop.f32.mrb[0].mxu0
        %2613 = vdwg.mxu0
        %2616 = vrot.lane.b32.xlu0 %v2606, 3
        %v2617 = vpop.permute.xlu0 %2616
        %2618 = vrot.lane.b32.xlu0 %v2611, 3
        %v2619 = vpop.permute.xlu0 %2618
        %vm2622 = vcmask 154648
        %2623 = vst.msk [vmem:[#allocation3 + $0x3] sm:$0xff] %vm2622, %v2617
        %2624 = vst.msk [vmem:[#allocation3 + $0xb] sm:$0xff] %vm2622, %v2619
        %2625 = vmatprep.subr.mxu0 0.0
        %2626 = vmatpush1.msra.mxu0 %v2475
        %2627 = vmatprep.subr.mxu0 0.0
        %2628 = vmatpush1.msra.mxu0 0.0
        %2629 = vmatprep.subr.mxu0 0.0
        %2630 = vmatpush1.msra.mxu0 0.0
        %2631 = vmatprep.subr.mxu0 0.0
        %2632 = vmatpush1.msra.mxu0 0.0
        %2633 = vmatprep.subr.mxu0 0.0
        %2634 = vmatpush1.msra.mxu0 0.0
        %2635 = vmatprep.subr.mxu0 0.0
        %2636 = vmatpush1.msra.mxu0 0.0
        %2637 = vmatprep.subr.mxu0 0.0
        %2638 = vmatpush1.msra.mxu0 0.0
        %2639 = vmatprep.subr.mxu0 0.0
        %2640 = vmatpush1.msra.mxu0 0.0
        %2641 = vmatprep.subr.mxu0 0.0
        %2642 = vmatpush1.msra.mxu0 0.0
        %2643 = vmatprep.subr.mxu0 0.0
        %2644 = vmatpush1.msra.mxu0 0.0
        %2645 = vmatprep.subr.mxu0 0.0
        %2646 = vmatpush1.msra.mxu0 0.0
        %2647 = vmatprep.subr.mxu0 0.0
        %2648 = vmatpush1.msra.mxu0 0.0
        %2649 = vmatprep.subr.mxu0 0.0
        %2650 = vmatpush1.msra.mxu0 0.0
        %2651 = vmatprep.subr.mxu0 0.0
        %2652 = vmatpush1.msra.mxu0 0.0
        %2653 = vmatprep.subr.mxu0 0.0
        %2654 = vmatpush1.msra.mxu0 0.0
        %2655 = vmatprep.subr.mxu0 0.0
        %2656 = vmatpush1.msra.mxu0 0.0
        %2657 = vmatprep.subr.mxu0 0.0
        %2658 = vmatpush1.msra.mxu0 0.0
        %2659 = vmatprep.subr.mxu0 0.0
        %2660 = vmatpush1.msra.mxu0 0.0
        %2661 = vmatprep.subr.mxu0 0.0
        %2662 = vmatpush1.msra.mxu0 0.0
        %2663 = vmatprep.subr.mxu0 0.0
        %2664 = vmatpush1.msra.mxu0 0.0
        %2665 = vmatprep.subr.mxu0 0.0
        %2666 = vmatpush1.msra.mxu0 0.0
        %2667 = vmatprep.subr.mxu0 0.0
        %2668 = vmatpush1.msra.mxu0 0.0
        %2669 = vmatprep.subr.mxu0 0.0
        %2670 = vmatpush1.msra.mxu0 0.0
        %2671 = vmatprep.subr.mxu0 0.0
        %2672 = vmatpush1.msra.mxu0 0.0
        %2673 = vmatprep.subr.mxu0 0.0
        %2674 = vmatpush1.msra.mxu0 0.0
        %2675 = vmatprep.subr.mxu0 0.0
        %2676 = vmatpush1.msra.mxu0 0.0
        %2677 = vmatprep.subr.mxu0 0.0
        %2678 = vmatpush1.msra.mxu0 0.0
        %2679 = vmatprep.subr.mxu0 0.0
        %2680 = vmatpush1.msra.mxu0 0.0
        %2681 = vmatprep.subr.mxu0 0.0
        %2682 = vmatpush1.msra.mxu0 0.0
        %2683 = vmatprep.subr.mxu0 0.0
        %2684 = vmatpush1.msra.mxu0 0.0
        %2685 = vmatprep.subr.mxu0 0.0
        %2686 = vmatpush1.msra.mxu0 0.0
        %2687 = vmatprep.subr.mxu0 0.0
        %2688 = vmatpush1.msra.mxu0 0.0
        %2689 = vmatprep.mubr.f32.mxu0 0.0
        %2690 = vmatmul.mubr.f32.gmra.mrb[0].mxu0 %v2534
        %v2691 = vpop.f32.mrb[0].mxu0
        %v2692 = vadd.f32 0.0, %v2691
        %v2693 = vpop.f32.mrb[0].mxu0
        %2694 = vmatprep.mubr.f32.mxu0 0.0
        %2695 = vmatmul.mubr.f32.gmra.mrb[0].mxu0 %v2537
        %v2696 = vpop.f32.mrb[0].mxu0
        %v2697 = vadd.f32 0.0, %v2696
        %v2698 = vpop.f32.mrb[0].mxu0
        %2699 = vdwg.mxu0
        %2702 = vrot.lane.b32.xlu0 %v2692, 3
        %v2703 = vpop.permute.xlu0 %2702
        %2704 = vrot.lane.b32.xlu0 %v2697, 3
        %v2705 = vpop.permute.xlu0 %2704
        %2708 = vst.msk [vmem:[#allocation3 + $0x19] sm:$0xff] %vm2622, %v2703
        %2709 = vst.msk [vmem:[#allocation3 + $0x21] sm:$0xff] %vm2622, %v2705
        %2710 = vmatprep.subr.mxu0 0.0
        %2711 = vmatpush1.msra.mxu0 %v2480
        %2712 = vmatprep.subr.mxu0 0.0
        %2713 = vmatpush1.msra.mxu0 0.0
        %2714 = vmatprep.subr.mxu0 0.0
        %2715 = vmatpush1.msra.mxu0 0.0
        %2716 = vmatprep.subr.mxu0 0.0
        %2717 = vmatpush1.msra.mxu0 0.0
        %2718 = vmatprep.subr.mxu0 0.0
        %2719 = vmatpush1.msra.mxu0 0.0
        %2720 = vmatprep.subr.mxu0 0.0
        %2721 = vmatpush1.msra.mxu0 0.0
        %2722 = vmatprep.subr.mxu0 0.0
        %2723 = vmatpush1.msra.mxu0 0.0
        %2724 = vmatprep.subr.mxu0 0.0
        %2725 = vmatpush1.msra.mxu0 0.0
        %2726 = vmatprep.subr.mxu0 0.0
        %2727 = vmatpush1.msra.mxu0 0.0
        %2728 = vmatprep.subr.mxu0 0.0
        %2729 = vmatpush1.msra.mxu0 0.0
        %2730 = vmatprep.subr.mxu0 0.0
        %2731 = vmatpush1.msra.mxu0 0.0
        %2732 = vmatprep.subr.mxu0 0.0
        %2733 = vmatpush1.msra.mxu0 0.0
        %2734 = vmatprep.subr.mxu0 0.0
        %2735 = vmatpush1.msra.mxu0 0.0
        %2736 = vmatprep.subr.mxu0 0.0
        %2737 = vmatpush1.msra.mxu0 0.0
        %2738 = vmatprep.subr.mxu0 0.0
        %2739 = vmatpush1.msra.mxu0 0.0
        %2740 = vmatprep.subr.mxu0 0.0
        %2741 = vmatpush1.msra.mxu0 0.0
        %2742 = vmatprep.subr.mxu0 0.0
        %2743 = vmatpush1.msra.mxu0 0.0
        %2744 = vmatprep.subr.mxu0 0.0
        %2745 = vmatpush1.msra.mxu0 0.0
        %2746 = vmatprep.subr.mxu0 0.0
        %2747 = vmatpush1.msra.mxu0 0.0
        %2748 = vmatprep.subr.mxu0 0.0
        %2749 = vmatpush1.msra.mxu0 0.0
        %2750 = vmatprep.subr.mxu0 0.0
        %2751 = vmatpush1.msra.mxu0 0.0
        %2752 = vmatprep.subr.mxu0 0.0
        %2753 = vmatpush1.msra.mxu0 0.0
        %2754 = vmatprep.subr.mxu0 0.0
        %2755 = vmatpush1.msra.mxu0 0.0
        %2756 = vmatprep.subr.mxu0 0.0
        %2757 = vmatpush1.msra.mxu0 0.0
        %2758 = vmatprep.subr.mxu0 0.0
        %2759 = vmatpush1.msra.mxu0 0.0
        %2760 = vmatprep.subr.mxu0 0.0
        %2761 = vmatpush1.msra.mxu0 0.0
        %2762 = vmatprep.subr.mxu0 0.0
        %2763 = vmatpush1.msra.mxu0 0.0
        %2764 = vmatprep.subr.mxu0 0.0
        %2765 = vmatpush1.msra.mxu0 0.0
        %2766 = vmatprep.subr.mxu0 0.0
        %2767 = vmatpush1.msra.mxu0 0.0
        %2768 = vmatprep.subr.mxu0 0.0
        %2769 = vmatpush1.msra.mxu0 0.0
        %2770 = vmatprep.subr.mxu0 0.0
        %2771 = vmatpush1.msra.mxu0 0.0
        %2772 = vmatprep.subr.mxu0 0.0
        %2773 = vmatpush1.msra.mxu0 0.0
        %2774 = vmatprep.mubr.f32.mxu0 0.0
        %2775 = vmatmul.mubr.f32.gmra.mrb[0].mxu0 %v2534
        %v2776 = vpop.f32.mrb[0].mxu0
        %v2777 = vadd.f32 0.0, %v2776
        %v2778 = vpop.f32.mrb[0].mxu0
        %2779 = vmatprep.mubr.f32.mxu0 0.0
        %2780 = vmatmul.mubr.f32.gmra.mrb[0].mxu0 %v2537
        %v2781 = vpop.f32.mrb[0].mxu0
        %v2782 = vadd.f32 0.0, %v2781
        %v2783 = vpop.f32.mrb[0].mxu0
        %2784 = vdwg.mxu0
        %2787 = vrot.lane.b32.xlu0 %v2777, 3
        %v2788 = vpop.permute.xlu0 %2787
        %2789 = vrot.lane.b32.xlu0 %v2782, 3
        %v2790 = vpop.permute.xlu0 %2789
        %2793 = vst.msk [vmem:[#allocation3 + $0x2f] sm:$0xff] %vm2622, %v2788
        %2794 = vst.msk [vmem:[#allocation3 + $0x37] sm:$0xff] %vm2622, %v2790
        %2795 = vmatprep.subr.mxu0 0.0
        %2796 = vmatpush1.msra.mxu0 %v2485
        %2797 = vmatprep.subr.mxu0 0.0
        %2798 = vmatpush1.msra.mxu0 0.0
        %2799 = vmatprep.subr.mxu0 0.0
        %2800 = vmatpush1.msra.mxu0 0.0
        %2801 = vmatprep.subr.mxu0 0.0
        %2802 = vmatpush1.msra.mxu0 0.0
        %2803 = vmatprep.subr.mxu0 0.0
        %2804 = vmatpush1.msra.mxu0 0.0
        %2805 = vmatprep.subr.mxu0 0.0
        %2806 = vmatpush1.msra.mxu0 0.0
        %2807 = vmatprep.subr.mxu0 0.0
        %2808 = vmatpush1.msra.mxu0 0.0
        %2809 = vmatprep.subr.mxu0 0.0
        %2810 = vmatpush1.msra.mxu0 0.0
        %2811 = vmatprep.subr.mxu0 0.0
        %2812 = vmatpush1.msra.mxu0 0.0
        %2813 = vmatprep.subr.mxu0 0.0
        %2814 = vmatpush1.msra.mxu0 0.0
        %2815 = vmatprep.subr.mxu0 0.0
        %2816 = vmatpush1.msra.mxu0 0.0
        %2817 = vmatprep.subr.mxu0 0.0
        %2818 = vmatpush1.msra.mxu0 0.0
        %2819 = vmatprep.subr.mxu0 0.0
        %2820 = vmatpush1.msra.mxu0 0.0
        %2821 = vmatprep.subr.mxu0 0.0
        %2822 = vmatpush1.msra.mxu0 0.0
        %2823 = vmatprep.subr.mxu0 0.0
        %2824 = vmatpush1.msra.mxu0 0.0
        %2825 = vmatprep.subr.mxu0 0.0
        %2826 = vmatpush1.msra.mxu0 0.0
        %2827 = vmatprep.subr.mxu0 0.0
        %2828 = vmatpush1.msra.mxu0 0.0
        %2829 = vmatprep.subr.mxu0 0.0
        %2830 = vmatpush1.msra.mxu0 0.0
        %2831 = vmatprep.subr.mxu0 0.0
        %2832 = vmatpush1.msra.mxu0 0.0
        %2833 = vmatprep.subr.mxu0 0.0
        %2834 = vmatpush1.msra.mxu0 0.0
        %2835 = vmatprep.subr.mxu0 0.0
        %2836 = vmatpush1.msra.mxu0 0.0
        %2837 = vmatprep.subr.mxu0 0.0
        %2838 = vmatpush1.msra.mxu0 0.0
        %2839 = vmatprep.subr.mxu0 0.0
        %2840 = vmatpush1.msra.mxu0 0.0
        %2841 = vmatprep.subr.mxu0 0.0
        %2842 = vmatpush1.msra.mxu0 0.0
        %2843 = vmatprep.subr.mxu0 0.0
        %2844 = vmatpush1.msra.mxu0 0.0
        %2845 = vmatprep.subr.mxu0 0.0
        %2846 = vmatpush1.msra.mxu0 0.0
        %2847 = vmatprep.subr.mxu0 0.0
        %2848 = vmatpush1.msra.mxu0 0.0
        %2849 = vmatprep.subr.mxu0 0.0
        %2850 = vmatpush1.msra.mxu0 0.0
        %2851 = vmatprep.subr.mxu0 0.0
        %2852 = vmatpush1.msra.mxu0 0.0
        %2853 = vmatprep.subr.mxu0 0.0
        %2854 = vmatpush1.msra.mxu0 0.0
        %2855 = vmatprep.subr.mxu0 0.0
        %2856 = vmatpush1.msra.mxu0 0.0
        %2857 = vmatprep.subr.mxu0 0.0
        %2858 = vmatpush1.msra.mxu0 0.0
        %2859 = vmatprep.mubr.f32.mxu0 0.0
        %2860 = vmatmul.mubr.f32.gmra.mrb[0].mxu0 %v2534
        %v2861 = vpop.f32.mrb[0].mxu0
        %v2862 = vadd.f32 0.0, %v2861
        %v2863 = vpop.f32.mrb[0].mxu0
        %2864 = vmatprep.mubr.f32.mxu0 0.0
        %2865 = vmatmul.mubr.f32.gmra.mrb[0].mxu0 %v2537
        %v2866 = vpop.f32.mrb[0].mxu0
        %v2867 = vadd.f32 0.0, %v2866
        %v2868 = vpop.f32.mrb[0].mxu0
        %2869 = vdwg.mxu0
        %2872 = vrot.lane.b32.xlu0 %v2862, 3
        %v2873 = vpop.permute.xlu0 %2872
        %2874 = vrot.lane.b32.xlu0 %v2867, 3
        %v2875 = vpop.permute.xlu0 %2874
        %2878 = vst.msk [vmem:[#allocation3 + $0x45] sm:$0xff] %vm2622, %v2873
        %2879 = vst.msk [vmem:[#allocation3 + $0x4d] sm:$0xff] %vm2622, %v2875
        %2880 = vmatprep.subr.mxu0 0.0
        %2881 = vmatpush1.msra.mxu0 %v2490
        %2882 = vmatprep.subr.mxu0 0.0
        %2883 = vmatpush1.msra.mxu0 0.0
        %2884 = vmatprep.subr.mxu0 0.0
        %2885 = vmatpush1.msra.mxu0 0.0
        %2886 = vmatprep.subr.mxu0 0.0
        %2887 = vmatpush1.msra.mxu0 0.0
        %2888 = vmatprep.subr.mxu0 0.0
        %2889 = vmatpush1.msra.mxu0 0.0
        %2890 = vmatprep.subr.mxu0 0.0
        %2891 = vmatpush1.msra.mxu0 0.0
        %2892 = vmatprep.subr.mxu0 0.0
        %2893 = vmatpush1.msra.mxu0 0.0
        %2894 = vmatprep.subr.mxu0 0.0
        %2895 = vmatpush1.msra.mxu0 0.0
        %2896 = vmatprep.subr.mxu0 0.0
        %2897 = vmatpush1.msra.mxu0 0.0
        %2898 = vmatprep.subr.mxu0 0.0
        %2899 = vmatpush1.msra.mxu0 0.0
        %2900 = vmatprep.subr.mxu0 0.0
        %2901 = vmatpush1.msra.mxu0 0.0
        %2902 = vmatprep.subr.mxu0 0.0
        %2903 = vmatpush1.msra.mxu0 0.0
        %2904 = vmatprep.subr.mxu0 0.0
        %2905 = vmatpush1.msra.mxu0 0.0
        %2906 = vmatprep.subr.mxu0 0.0
        %2907 = vmatpush1.msra.mxu0 0.0
        %2908 = vmatprep.subr.mxu0 0.0
        %2909 = vmatpush1.msra.mxu0 0.0
        %2910 = vmatprep.subr.mxu0 0.0
        %2911 = vmatpush1.msra.mxu0 0.0
        %2912 = vmatprep.subr.mxu0 0.0
        %2913 = vmatpush1.msra.mxu0 0.0
        %2914 = vmatprep.subr.mxu0 0.0
        %2915 = vmatpush1.msra.mxu0 0.0
        %2916 = vmatprep.subr.mxu0 0.0
        %2917 = vmatpush1.msra.mxu0 0.0
        %2918 = vmatprep.subr.mxu0 0.0
        %2919 = vmatpush1.msra.mxu0 0.0
        %2920 = vmatprep.subr.mxu0 0.0
        %2921 = vmatpush1.msra.mxu0 0.0
        %2922 = vmatprep.subr.mxu0 0.0
        %2923 = vmatpush1.msra.mxu0 0.0
        %2924 = vmatprep.subr.mxu0 0.0
        %2925 = vmatpush1.msra.mxu0 0.0
        %2926 = vmatprep.subr.mxu0 0.0
        %2927 = vmatpush1.msra.mxu0 0.0
        %2928 = vmatprep.subr.mxu0 0.0
        %2929 = vmatpush1.msra.mxu0 0.0
        %2930 = vmatprep.subr.mxu0 0.0
        %2931 = vmatpush1.msra.mxu0 0.0
        %2932 = vmatprep.subr.mxu0 0.0
        %2933 = vmatpush1.msra.mxu0 0.0
        %2934 = vmatprep.subr.mxu0 0.0
        %2935 = vmatpush1.msra.mxu0 0.0
        %2936 = vmatprep.subr.mxu0 0.0
        %2937 = vmatpush1.msra.mxu0 0.0
        %2938 = vmatprep.subr.mxu0 0.0
        %2939 = vmatpush1.msra.mxu0 0.0
        %2940 = vmatprep.subr.mxu0 0.0
        %2941 = vmatpush1.msra.mxu0 0.0
        %2942 = vmatprep.subr.mxu0 0.0
        %2943 = vmatpush1.msra.mxu0 0.0
        %2944 = vmatprep.mubr.f32.mxu0 0.0
        %2945 = vmatmul.mubr.f32.gmra.mrb[0].mxu0 %v2534
        %v2946 = vpop.f32.mrb[0].mxu0
        %v2947 = vadd.f32 0.0, %v2946
        %v2948 = vpop.f32.mrb[0].mxu0
        %2949 = vmatprep.mubr.f32.mxu0 0.0
        %2950 = vmatmul.mubr.f32.gmra.mrb[0].mxu0 %v2537
        %v2951 = vpop.f32.mrb[0].mxu0
        %v2952 = vadd.f32 0.0, %v2951
        %v2953 = vpop.f32.mrb[0].mxu0
        %2954 = vdwg.mxu0
        %2957 = vrot.lane.b32.xlu0 %v2947, 3
        %v2958 = vpop.permute.xlu0 %2957
        %2959 = vrot.lane.b32.xlu0 %v2952, 3
        %v2960 = vpop.permute.xlu0 %2959
        %2963 = vst.msk [vmem:[#allocation3 + $0x5b] sm:$0xff] %vm2622, %v2958
        %2964 = vst.msk [vmem:[#allocation3 + $0x63] sm:$0xff] %vm2622, %v2960
        %2965 = vmatprep.subr.mxu0 0.0
        %2966 = vmatpush1.msra.mxu0 %v2495
        %2967 = vmatprep.subr.mxu0 0.0
        %2968 = vmatpush1.msra.mxu0 0.0
        %2969 = vmatprep.subr.mxu0 0.0
        %2970 = vmatpush1.msra.mxu0 0.0
        %2971 = vmatprep.subr.mxu0 0.0
        %2972 = vmatpush1.msra.mxu0 0.0
        %2973 = vmatprep.subr.mxu0 0.0
        %2974 = vmatpush1.msra.mxu0 0.0
        %2975 = vmatprep.subr.mxu0 0.0
        %2976 = vmatpush1.msra.mxu0 0.0
        %2977 = vmatprep.subr.mxu0 0.0
        %2978 = vmatpush1.msra.mxu0 0.0
        %2979 = vmatprep.subr.mxu0 0.0
        %2980 = vmatpush1.msra.mxu0 0.0
        %2981 = vmatprep.subr.mxu0 0.0
        %2982 = vmatpush1.msra.mxu0 0.0
        %2983 = vmatprep.subr.mxu0 0.0
        %2984 = vmatpush1.msra.mxu0 0.0
        %2985 = vmatprep.subr.mxu0 0.0
        %2986 = vmatpush1.msra.mxu0 0.0
        %2987 = vmatprep.subr.mxu0 0.0
        %2988 = vmatpush1.msra.mxu0 0.0
        %2989 = vmatprep.subr.mxu0 0.0
        %2990 = vmatpush1.msra.mxu0 0.0
        %2991 = vmatprep.subr.mxu0 0.0
        %2992 = vmatpush1.msra.mxu0 0.0
        %2993 = vmatprep.subr.mxu0 0.0
        %2994 = vmatpush1.msra.mxu0 0.0
        %2995 = vmatprep.subr.mxu0 0.0
        %2996 = vmatpush1.msra.mxu0 0.0
        %2997 = vmatprep.subr.mxu0 0.0
        %2998 = vmatpush1.msra.mxu0 0.0
        %2999 = vmatprep.subr.mxu0 0.0
        %3000 = vmatpush1.msra.mxu0 0.0
        %3001 = vmatprep.subr.mxu0 0.0
        %3002 = vmatpush1.msra.mxu0 0.0
        %3003 = vmatprep.subr.mxu0 0.0
        %3004 = vmatpush1.msra.mxu0 0.0
        %3005 = vmatprep.subr.mxu0 0.0
        %3006 = vmatpush1.msra.mxu0 0.0
        %3007 = vmatprep.subr.mxu0 0.0
        %3008 = vmatpush1.msra.mxu0 0.0
        %3009 = vmatprep.subr.mxu0 0.0
        %3010 = vmatpush1.msra.mxu0 0.0
        %3011 = vmatprep.subr.mxu0 0.0
        %3012 = vmatpush1.msra.mxu0 0.0
        %3013 = vmatprep.subr.mxu0 0.0
        %3014 = vmatpush1.msra.mxu0 0.0
        %3015 = vmatprep.subr.mxu0 0.0
        %3016 = vmatpush1.msra.mxu0 0.0
        %3017 = vmatprep.subr.mxu0 0.0
        %3018 = vmatpush1.msra.mxu0 0.0
        %3019 = vmatprep.subr.mxu0 0.0
        %3020 = vmatpush1.msra.mxu0 0.0
        %3021 = vmatprep.subr.mxu0 0.0
        %3022 = vmatpush1.msra.mxu0 0.0
        %3023 = vmatprep.subr.mxu0 0.0
        %3024 = vmatpush1.msra.mxu0 0.0
        %3025 = vmatprep.subr.mxu0 0.0
        %3026 = vmatpush1.msra.mxu0 0.0
        %3027 = vmatprep.subr.mxu0 0.0
        %3028 = vmatpush1.msra.mxu0 0.0
        %3029 = vmatprep.mubr.f32.mxu0 0.0
        %3030 = vmatmul.mubr.f32.gmra.mrb[0].mxu0 %v2534
        %v3031 = vpop.f32.mrb[0].mxu0
        %v3032 = vadd.f32 0.0, %v3031
        %v3033 = vpop.f32.mrb[0].mxu0
        %3034 = vmatprep.mubr.f32.mxu0 0.0
        %3035 = vmatmul.mubr.f32.gmra.mrb[0].mxu0 %v2537
        %v3036 = vpop.f32.mrb[0].mxu0
        %v3037 = vadd.f32 0.0, %v3036
        %v3038 = vpop.f32.mrb[0].mxu0
        %3039 = vdwg.mxu0
        %3042 = vrot.lane.b32.xlu0 %v3032, 3
        %v3043 = vpop.permute.xlu0 %3042
        %3044 = vrot.lane.b32.xlu0 %v3037, 3
        %v3045 = vpop.permute.xlu0 %3044
        %3048 = vst.msk [vmem:[#allocation3 + $0x71] sm:$0xff] %vm2622, %v3043
        %3049 = vst.msk [vmem:[#allocation3 + $0x79] sm:$0xff] %vm2622, %v3045
        %3050 = vmatprep.subr.mxu0 0.0
        %3051 = vmatpush1.msra.mxu0 %v2500
        %3052 = vmatprep.subr.mxu0 0.0
        %3053 = vmatpush1.msra.mxu0 0.0
        %3054 = vmatprep.subr.mxu0 0.0
        %3055 = vmatpush1.msra.mxu0 0.0
        %3056 = vmatprep.subr.mxu0 0.0
        %3057 = vmatpush1.msra.mxu0 0.0
        %3058 = vmatprep.subr.mxu0 0.0
        %3059 = vmatpush1.msra.mxu0 0.0
        %3060 = vmatprep.subr.mxu0 0.0
        %3061 = vmatpush1.msra.mxu0 0.0
        %3062 = vmatprep.subr.mxu0 0.0
        %3063 = vmatpush1.msra.mxu0 0.0
        %3064 = vmatprep.subr.mxu0 0.0
        %3065 = vmatpush1.msra.mxu0 0.0
        %3066 = vmatprep.subr.mxu0 0.0
        %3067 = vmatpush1.msra.mxu0 0.0
        %3068 = vmatprep.subr.mxu0 0.0
        %3069 = vmatpush1.msra.mxu0 0.0
        %3070 = vmatprep.subr.mxu0 0.0
        %3071 = vmatpush1.msra.mxu0 0.0
        %3072 = vmatprep.subr.mxu0 0.0
        %3073 = vmatpush1.msra.mxu0 0.0
        %3074 = vmatprep.subr.mxu0 0.0
        %3075 = vmatpush1.msra.mxu0 0.0
        %3076 = vmatprep.subr.mxu0 0.0
        %3077 = vmatpush1.msra.mxu0 0.0
        %3078 = vmatprep.subr.mxu0 0.0
        %3079 = vmatpush1.msra.mxu0 0.0
        %3080 = vmatprep.subr.mxu0 0.0
        %3081 = vmatpush1.msra.mxu0 0.0
        %3082 = vmatprep.subr.mxu0 0.0
        %3083 = vmatpush1.msra.mxu0 0.0
        %3084 = vmatprep.subr.mxu0 0.0
        %3085 = vmatpush1.msra.mxu0 0.0
        %3086 = vmatprep.subr.mxu0 0.0
        %3087 = vmatpush1.msra.mxu0 0.0
        %3088 = vmatprep.subr.mxu0 0.0
        %3089 = vmatpush1.msra.mxu0 0.0
        %3090 = vmatprep.subr.mxu0 0.0
        %3091 = vmatpush1.msra.mxu0 0.0
        %3092 = vmatprep.subr.mxu0 0.0
        %3093 = vmatpush1.msra.mxu0 0.0
        %3094 = vmatprep.subr.mxu0 0.0
        %3095 = vmatpush1.msra.mxu0 0.0
        %3096 = vmatprep.subr.mxu0 0.0
        %3097 = vmatpush1.msra.mxu0 0.0
        %3098 = vmatprep.subr.mxu0 0.0
        %3099 = vmatpush1.msra.mxu0 0.0
        %3100 = vmatprep.subr.mxu0 0.0
        %3101 = vmatpush1.msra.mxu0 0.0
        %3102 = vmatprep.subr.mxu0 0.0
        %3103 = vmatpush1.msra.mxu0 0.0
        %3104 = vmatprep.subr.mxu0 0.0
        %3105 = vmatpush1.msra.mxu0 0.0
        %3106 = vmatprep.subr.mxu0 0.0
        %3107 = vmatpush1.msra.mxu0 0.0
        %3108 = vmatprep.subr.mxu0 0.0
        %3109 = vmatpush1.msra.mxu0 0.0
        %3110 = vmatprep.subr.mxu0 0.0
        %3111 = vmatpush1.msra.mxu0 0.0
        %3112 = vmatprep.subr.mxu0 0.0
        %3113 = vmatpush1.msra.mxu0 0.0
        %3114 = vmatprep.mubr.f32.mxu0 0.0
        %3115 = vmatmul.mubr.f32.gmra.mrb[0].mxu0 %v2534
        %v3116 = vpop.f32.mrb[0].mxu0
        %v3117 = vadd.f32 0.0, %v3116
        %v3118 = vpop.f32.mrb[0].mxu0
        %3119 = vmatprep.mubr.f32.mxu0 0.0
        %3120 = vmatmul.mubr.f32.gmra.mrb[0].mxu0 %v2537
        %v3121 = vpop.f32.mrb[0].mxu0
        %v3122 = vadd.f32 0.0, %v3121
        %v3123 = vpop.f32.mrb[0].mxu0
        %3124 = vdwg.mxu0
        %3127 = vrot.lane.b32.xlu0 %v3117, 3
        %v3128 = vpop.permute.xlu0 %3127
        %3129 = vrot.lane.b32.xlu0 %v3122, 3
        %v3130 = vpop.permute.xlu0 %3129
        %3133 = vst.msk [vmem:[#allocation3 + $0x87] sm:$0xff] %vm2622, %v3128
        %3134 = vst.msk [vmem:[#allocation3 + $0x8f] sm:$0xff] %vm2622, %v3130
        %3135 = vmatprep.subr.mxu0 0.0
        %3136 = vmatpush1.msra.mxu0 %v2505
        %3137 = vmatprep.subr.mxu0 0.0
        %3138 = vmatpush1.msra.mxu0 0.0
        %3139 = vmatprep.subr.mxu0 0.0
        %3140 = vmatpush1.msra.mxu0 0.0
        %3141 = vmatprep.subr.mxu0 0.0
        %3142 = vmatpush1.msra.mxu0 0.0
        %3143 = vmatprep.subr.mxu0 0.0
        %3144 = vmatpush1.msra.mxu0 0.0
        %3145 = vmatprep.subr.mxu0 0.0
        %3146 = vmatpush1.msra.mxu0 0.0
        %3147 = vmatprep.subr.mxu0 0.0
        %3148 = vmatpush1.msra.mxu0 0.0
        %3149 = vmatprep.subr.mxu0 0.0
        %3150 = vmatpush1.msra.mxu0 0.0
        %3151 = vmatprep.subr.mxu0 0.0
        %3152 = vmatpush1.msra.mxu0 0.0
        %3153 = vmatprep.subr.mxu0 0.0
        %3154 = vmatpush1.msra.mxu0 0.0
        %3155 = vmatprep.subr.mxu0 0.0
        %3156 = vmatpush1.msra.mxu0 0.0
        %3157 = vmatprep.subr.mxu0 0.0
        %3158 = vmatpush1.msra.mxu0 0.0
        %3159 = vmatprep.subr.mxu0 0.0
        %3160 = vmatpush1.msra.mxu0 0.0
        %3161 = vmatprep.subr.mxu0 0.0
        %3162 = vmatpush1.msra.mxu0 0.0
        %3163 = vmatprep.subr.mxu0 0.0
        %3164 = vmatpush1.msra.mxu0 0.0
        %3165 = vmatprep.subr.mxu0 0.0
        %3166 = vmatpush1.msra.mxu0 0.0
        %3167 = vmatprep.subr.mxu0 0.0
        %3168 = vmatpush1.msra.mxu0 0.0
        %3169 = vmatprep.subr.mxu0 0.0
        %3170 = vmatpush1.msra.mxu0 0.0
        %3171 = vmatprep.subr.mxu0 0.0
        %3172 = vmatpush1.msra.mxu0 0.0
        %3173 = vmatprep.subr.mxu0 0.0
        %3174 = vmatpush1.msra.mxu0 0.0
        %3175 = vmatprep.subr.mxu0 0.0
        %3176 = vmatpush1.msra.mxu0 0.0
        %3177 = vmatprep.subr.mxu0 0.0
        %3178 = vmatpush1.msra.mxu0 0.0
        %3179 = vmatprep.subr.mxu0 0.0
        %3180 = vmatpush1.msra.mxu0 0.0
        %3181 = vmatprep.subr.mxu0 0.0
        %3182 = vmatpush1.msra.mxu0 0.0
        %3183 = vmatprep.subr.mxu0 0.0
        %3184 = vmatpush1.msra.mxu0 0.0
        %3185 = vmatprep.subr.mxu0 0.0
        %3186 = vmatpush1.msra.mxu0 0.0
        %3187 = vmatprep.subr.mxu0 0.0
        %3188 = vmatpush1.msra.mxu0 0.0
        %3189 = vmatprep.subr.mxu0 0.0
        %3190 = vmatpush1.msra.mxu0 0.0
        %3191 = vmatprep.subr.mxu0 0.0
        %3192 = vmatpush1.msra.mxu0 0.0
        %3193 = vmatprep.subr.mxu0 0.0
        %3194 = vmatpush1.msra.mxu0 0.0
        %3195 = vmatprep.subr.mxu0 0.0
        %3196 = vmatpush1.msra.mxu0 0.0
        %3197 = vmatprep.subr.mxu0 0.0
        %3198 = vmatpush1.msra.mxu0 0.0
        %3199 = vmatprep.mubr.f32.mxu0 0.0
        %3200 = vmatmul.mubr.f32.gmra.mrb[0].mxu0 %v2534
        %v3201 = vpop.f32.mrb[0].mxu0
        %v3202 = vadd.f32 0.0, %v3201
        %v3203 = vpop.f32.mrb[0].mxu0
        %3204 = vmatprep.mubr.f32.mxu0 0.0
        %3205 = vmatmul.mubr.f32.gmra.mrb[0].mxu0 %v2537
        %v3206 = vpop.f32.mrb[0].mxu0
        %v3207 = vadd.f32 0.0, %v3206
        %v3208 = vpop.f32.mrb[0].mxu0
        %3209 = vdwg.mxu0
        %3212 = vrot.lane.b32.xlu0 %v3202, 3
        %v3213 = vpop.permute.xlu0 %3212
        %3214 = vrot.lane.b32.xlu0 %v3207, 3
        %v3215 = vpop.permute.xlu0 %3214
        %3218 = vst.msk [vmem:[#allocation3 + $0x9d] sm:$0xff] %vm2622, %v3213
        %3219 = vst.msk [vmem:[#allocation3 + $0xa5] sm:$0xff] %vm2622, %v3215
        %v3220 = vld [vmem:[#allocation3] sm:$0xff]
        %v3221 = vld [vmem:[#allocation3 + $0x8] sm:$0xff]
        %v3222 = vld [vmem:[#allocation3 + $0x10] sm:$0xff]
        %v3223 = vld [vmem:[#allocation3 + $0x18] sm:$0xff]
        %v3224 = vld [vmem:[#allocation3 + $0x20] sm:$0xff]
        %v3225 = vld [vmem:[#allocation3 + $0x28] sm:$0xff]
        %v3226 = vld [vmem:[#allocation3 + $0x30] sm:$0xff]
        %v3227 = vld [vmem:[#allocation3 + $0x38] sm:$0xff]
        %v3228 = vld [vmem:[#allocation3 + $0x40] sm:$0xff]
        %v3229 = vld [vmem:[#allocation3 + $0x48] sm:$0xff]
        %v3230 = vld [vmem:[#allocation3 + $0x50] sm:$0xff]
        %v3231 = vld [vmem:[#allocation3 + $0x58] sm:$0xff]
        %v3232 = vld [vmem:[#allocation3 + $0x60] sm:$0xff]
        %v3233 = vld [vmem:[#allocation3 + $0x68] sm:$0xff]
        %v3234 = vld [vmem:[#allocation3 + $0x70] sm:$0xff]
        %v3235 = vld [vmem:[#allocation3 + $0x78] sm:$0xff]
        %v3236 = vld [vmem:[#allocation3 + $0x80] sm:$0xff]
        %v3237 = vld [vmem:[#allocation3 + $0x88] sm:$0xff]
        %v3238 = vld [vmem:[#allocation3 + $0x90] sm:$0xff]
        %v3239 = vld [vmem:[#allocation3 + $0x98] sm:$0xff]
        %v3240 = vld [vmem:[#allocation3 + $0xa0] sm:$0xff]
        %v3241 = vld [vmem:[#allocation3 + $0xa8] sm:$0xff]
        %v3242 = vld [vmem:[%s2] sm:$0xff]
        %v3243 = vld [vmem:[%s2 + $0x8] sm:$0xff]
        %v3244 = vld [vmem:[%s2 + $0x10] sm:$0xff]
        %v3245 = vld [vmem:[%s2 + $0x18] sm:$0xff]
        %v3246 = vld [vmem:[%s2 + $0x20] sm:$0xff]
        %v3247 = vld [vmem:[%s2 + $0x28] sm:$0xff]
        %v3248 = vld [vmem:[%s2 + $0x30] sm:$0xff]
        %v3249 = vld [vmem:[%s2 + $0x38] sm:$0xff]
        %v3250 = vld [vmem:[%s2 + $0x40] sm:$0xff]
        %v3251 = vld [vmem:[%s2 + $0x48] sm:$0xff]
        %v3252 = vld [vmem:[%s2 + $0x50] sm:$0xff]
        %v3253 = vld [vmem:[%s2 + $0x58] sm:$0xff]
        %v3254 = vld [vmem:[%s2 + $0x60] sm:$0xff]
        %v3255 = vld [vmem:[%s2 + $0x68] sm:$0xff]
        %v3256 = vld [vmem:[%s2 + $0x70] sm:$0xff]
        %v3257 = vld [vmem:[%s2 + $0x78] sm:$0xff]
        %s3258 = scalar_lea.vmem %s2, 128
        %v3259 = vld [vmem:[%s3258] sm:$0xff]
        %v3260 = vld [vmem:[%s3258 + $0x8] sm:$0xff]
        %v3261 = vld [vmem:[%s3258 + $0x10] sm:$0xff]
        %v3262 = vld [vmem:[%s3258 + $0x18] sm:$0xff]
        %v3263 = vld [vmem:[%s3258 + $0x20] sm:$0xff]
        %v3264 = vld [vmem:[%s3258 + $0x28] sm:$0xff]
        %v3265 = vld [vmem:[%s3258 + $0x30] sm:$0xff]
        %v3266 = vld [vmem:[%s3258 + $0x38] sm:$0xff]
        %v3267 = vld [vmem:[%s3258 + $0x40] sm:$0xff]
        %v3268 = vld [vmem:[%s3258 + $0x48] sm:$0xff]
        %v3269 = vld [vmem:[%s3258 + $0x50] sm:$0xff]
        %v3270 = vld [vmem:[%s3258 + $0x58] sm:$0xff]
        %v3271 = vld [vmem:[%s3258 + $0x60] sm:$0xff]
        %v3272 = vld [vmem:[%s3258 + $0x68] sm:$0xff]
        %v3273 = vld [vmem:[%s3258 + $0x70] sm:$0xff]
        %v3274 = vld [vmem:[%s3258 + $0x78] sm:$0xff]
        %3297 = vrot.lane.b32.xlu0 %v3220, 127
        %v3298 = vpop.permute.xlu0 %3297
        %3299 = vrot.lane.b32.xlu0 %v3221, 127
        %v3300 = vpop.permute.xlu0 %3299
        %3301 = vrot.lane.b32.xlu0 %v3222, 127
        %v3302 = vpop.permute.xlu0 %3301
        %3303 = vrot.lane.b32.xlu0 %v3223, 127
        %v3304 = vpop.permute.xlu0 %3303
        %3305 = vrot.lane.b32.xlu0 %v3224, 127
        %v3306 = vpop.permute.xlu0 %3305
        %3307 = vrot.lane.b32.xlu0 %v3225, 127
        %v3308 = vpop.permute.xlu0 %3307
        %3309 = vrot.lane.b32.xlu0 %v3226, 127
        %v3310 = vpop.permute.xlu0 %3309
        %3311 = vrot.lane.b32.xlu0 %v3227, 127
        %v3312 = vpop.permute.xlu0 %3311
        %3313 = vrot.lane.b32.xlu0 %v3228, 127
        %v3314 = vpop.permute.xlu0 %3313
        %3315 = vrot.lane.b32.xlu0 %v3229, 127
        %v3316 = vpop.permute.xlu0 %3315
        %3317 = vrot.lane.b32.xlu0 %v3230, 127
        %v3318 = vpop.permute.xlu0 %3317
        %3319 = vrot.lane.b32.xlu0 %v3231, 127
        %v3320 = vpop.permute.xlu0 %3319
        %3321 = vrot.lane.b32.xlu0 %v3232, 127
        %v3322 = vpop.permute.xlu0 %3321
        %3323 = vrot.lane.b32.xlu0 %v3233, 127
        %v3324 = vpop.permute.xlu0 %3323
        %3325 = vrot.lane.b32.xlu0 %v3234, 127
        %v3326 = vpop.permute.xlu0 %3325
        %3327 = vrot.lane.b32.xlu0 %v3235, 127
        %v3328 = vpop.permute.xlu0 %3327
        %3329 = vrot.lane.b32.xlu0 %v3236, 127
        %v3330 = vpop.permute.xlu0 %3329
        %3331 = vrot.lane.b32.xlu0 %v3237, 127
        %v3332 = vpop.permute.xlu0 %3331
        %3333 = vrot.lane.b32.xlu0 %v3238, 127
        %v3334 = vpop.permute.xlu0 %3333
        %3335 = vrot.lane.b32.xlu0 %v3239, 127
        %v3336 = vpop.permute.xlu0 %3335
        %3337 = vrot.lane.b32.xlu0 %v3240, 127
        %v3338 = vpop.permute.xlu0 %3337
        %3339 = vrot.lane.b32.xlu0 %v3241, 127
        %v3340 = vpop.permute.xlu0 %3339
        %vm3363 = vcmask 392192
        %v3365 = vsel %vm3363, %v3260, 0
        %v3368 = vsel %vm3363, %v3262, 0
        %v3371 = vsel %vm3363, %v3264, 0
        %v3374 = vsel %vm3363, %v3266, 0
        %v3377 = vsel %vm3363, %v3268, 0
        %v3380 = vsel %vm3363, %v3270, 0
        %v3383 = vsel %vm3363, %v3272, 0
        %v3386 = vsel %vm3363, %v3274, 0
        %3388 = vmatprep.subr.mxu0 0.0
        %3389 = vmatpush1.msra.mxu0 %v3298
        %3390 = vmatprep.subr.mxu0 0.0
        %3391 = vmatpush1.msra.mxu0 %v3300
        %3392 = vmatprep.subr.mxu0 0.0
        %3393 = vmatpush1.msra.mxu0 %v3302
        %3394 = vmatprep.subr.mxu0 0.0
        %3395 = vmatpush1.msra.mxu0 %v3304
        %3396 = vmatprep.subr.mxu0 0.0
        %3397 = vmatpush1.msra.mxu0 %v3306
        %3398 = vmatprep.subr.mxu0 0.0
        %3399 = vmatpush1.msra.mxu0 %v3308
        %3400 = vmatprep.subr.mxu0 0.0
        %3401 = vmatpush1.msra.mxu0 %v3310
        %3402 = vmatprep.subr.mxu0 0.0
        %3403 = vmatpush1.msra.mxu0 %v3312
        %3404 = vmatprep.subr.mxu0 0.0
        %3405 = vmatpush1.msra.mxu0 %v3314
        %3406 = vmatprep.subr.mxu0 0.0
        %3407 = vmatpush1.msra.mxu0 %v3316
        %3408 = vmatprep.subr.mxu0 0.0
        %3409 = vmatpush1.msra.mxu0 %v3318
        %3410 = vmatprep.subr.mxu0 0.0
        %3411 = vmatpush1.msra.mxu0 %v3320
        %3412 = vmatprep.subr.mxu0 0.0
        %3413 = vmatpush1.msra.mxu0 %v3322
        %3414 = vmatprep.subr.mxu0 0.0
        %3415 = vmatpush1.msra.mxu0 %v3324
        %3416 = vmatprep.subr.mxu0 0.0
        %3417 = vmatpush1.msra.mxu0 %v3326
        %3418 = vmatprep.subr.mxu0 0.0
        %3419 = vmatpush1.msra.mxu0 %v3328
        %3420 = vmatprep.subr.mxu0 0.0
        %3421 = vmatpush1.msra.mxu0 %v3330
        %3422 = vmatprep.subr.mxu0 0.0
        %3423 = vmatpush1.msra.mxu0 %v3332
        %3424 = vmatprep.subr.mxu0 0.0
        %3425 = vmatpush1.msra.mxu0 %v3334
        %3426 = vmatprep.subr.mxu0 0.0
        %3427 = vmatpush1.msra.mxu0 %v3336
        %3428 = vmatprep.subr.mxu0 0.0
        %3429 = vmatpush1.msra.mxu0 %v3338
        %3430 = vmatprep.subr.mxu0 0.0
        %3431 = vmatpush1.msra.mxu0 %v3340
        %3432 = vmatprep.subr.mxu0 0.0
        %3433 = vmatpush1.msra.mxu0 0.0
        %3434 = vmatprep.subr.mxu0 0.0
        %3435 = vmatpush1.msra.mxu0 0.0
        %3436 = vmatprep.subr.mxu0 0.0
        %3437 = vmatpush1.msra.mxu0 0.0
        %3438 = vmatprep.subr.mxu0 0.0
        %3439 = vmatpush1.msra.mxu0 0.0
        %3440 = vmatprep.subr.mxu0 0.0
        %3441 = vmatpush1.msra.mxu0 0.0
        %3442 = vmatprep.subr.mxu0 0.0
        %3443 = vmatpush1.msra.mxu0 0.0
        %3444 = vmatprep.subr.mxu0 0.0
        %3445 = vmatpush1.msra.mxu0 0.0
        %3446 = vmatprep.subr.mxu0 0.0
        %3447 = vmatpush1.msra.mxu0 0.0
        %3448 = vmatprep.subr.mxu0 0.0
        %3449 = vmatpush1.msra.mxu0 0.0
        %3450 = vmatprep.subr.mxu0 0.0
        %3451 = vmatpush1.msra.mxu0 0.0
        %3452 = vmatprep.mubr.f32.mxu0 %v3365
        %3453 = vmatmul.mubr.f32.gmra.mrb[0].mxu0 %v3259
        %v3454 = vpop.f32.mrb[0].mxu0
        %v3455 = vadd.f32 0.0, %v3454
        %v3456 = vpop.f32.mrb[0].mxu0
        %3457 = vmatprep.mubr.f32.mxu0 %v3368
        %3458 = vmatmul.mubr.f32.gmra.mrb[0].mxu0 %v3261
        %v3459 = vpop.f32.mrb[0].mxu0
        %v3460 = vadd.f32 0.0, %v3459
        %v3461 = vpop.f32.mrb[0].mxu0
        %3462 = vmatprep.mubr.f32.mxu0 %v3371
        %3463 = vmatmul.mubr.f32.gmra.mrb[0].mxu0 %v3263
        %v3464 = vpop.f32.mrb[0].mxu0
        %v3465 = vadd.f32 0.0, %v3464
        %v3466 = vpop.f32.mrb[0].mxu0
        %3467 = vmatprep.mubr.f32.mxu0 %v3374
        %3468 = vmatmul.mubr.f32.gmra.mrb[0].mxu0 %v3265
        %v3469 = vpop.f32.mrb[0].mxu0
        %v3470 = vadd.f32 0.0, %v3469
        %v3471 = vpop.f32.mrb[0].mxu0
        %3472 = vmatprep.mubr.f32.mxu0 %v3377
        %3473 = vmatmul.mubr.f32.gmra.mrb[0].mxu0 %v3267
        %v3474 = vpop.f32.mrb[0].mxu0
        %v3475 = vadd.f32 0.0, %v3474
        %v3476 = vpop.f32.mrb[0].mxu0
        %3477 = vmatprep.mubr.f32.mxu0 %v3380
        %3478 = vmatmul.mubr.f32.gmra.mrb[0].mxu0 %v3269
        %v3479 = vpop.f32.mrb[0].mxu0
        %v3480 = vadd.f32 0.0, %v3479
        %v3481 = vpop.f32.mrb[0].mxu0
        %3482 = vmatprep.mubr.f32.mxu0 %v3383
        %3483 = vmatmul.mubr.f32.gmra.mrb[0].mxu0 %v3271
        %v3484 = vpop.f32.mrb[0].mxu0
        %v3485 = vadd.f32 0.0, %v3484
        %v3486 = vpop.f32.mrb[0].mxu0
        %3487 = vmatprep.mubr.f32.mxu0 %v3386
        %3488 = vmatmul.mubr.f32.gmra.mrb[0].mxu0 %v3273
        %v3489 = vpop.f32.mrb[0].mxu0
        %v3490 = vadd.f32 0.0, %v3489
        %v3491 = vpop.f32.mrb[0].mxu0
        %3492 = vdwg.mxu0
        %v3494 = vsel %vm3363, %v3243, 0
        %v3497 = vsel %vm3363, %v3245, 0
        %v3500 = vsel %vm3363, %v3247, 0
        %v3503 = vsel %vm3363, %v3249, 0
        %v3506 = vsel %vm3363, %v3251, 0
        %v3509 = vsel %vm3363, %v3253, 0
        %v3512 = vsel %vm3363, %v3255, 0
        %v3515 = vsel %vm3363, %v3257, 0
        %3517 = vmatprep.subr.mxu0 0.0
        %3518 = vmatpush1.msra.mxu0 %v3220
        %3519 = vmatprep.subr.mxu0 0.0
        %3520 = vmatpush1.msra.mxu0 %v3221
        %3521 = vmatprep.subr.mxu0 0.0
        %3522 = vmatpush1.msra.mxu0 %v3222
        %3523 = vmatprep.subr.mxu0 0.0
        %3524 = vmatpush1.msra.mxu0 %v3223
        %3525 = vmatprep.subr.mxu0 0.0
        %3526 = vmatpush1.msra.mxu0 %v3224
        %3527 = vmatprep.subr.mxu0 0.0
        %3528 = vmatpush1.msra.mxu0 %v3225
        %3529 = vmatprep.subr.mxu0 0.0
        %3530 = vmatpush1.msra.mxu0 %v3226
        %3531 = vmatprep.subr.mxu0 0.0
        %3532 = vmatpush1.msra.mxu0 %v3227
        %3533 = vmatprep.subr.mxu0 0.0
        %3534 = vmatpush1.msra.mxu0 %v3228
        %3535 = vmatprep.subr.mxu0 0.0
        %3536 = vmatpush1.msra.mxu0 %v3229
        %3537 = vmatprep.subr.mxu0 0.0
        %3538 = vmatpush1.msra.mxu0 %v3230
        %3539 = vmatprep.subr.mxu0 0.0
        %3540 = vmatpush1.msra.mxu0 %v3231
        %3541 = vmatprep.subr.mxu0 0.0
        %3542 = vmatpush1.msra.mxu0 %v3232
        %3543 = vmatprep.subr.mxu0 0.0
        %3544 = vmatpush1.msra.mxu0 %v3233
        %3545 = vmatprep.subr.mxu0 0.0
        %3546 = vmatpush1.msra.mxu0 %v3234
        %3547 = vmatprep.subr.mxu0 0.0
        %3548 = vmatpush1.msra.mxu0 %v3235
        %3549 = vmatprep.subr.mxu0 0.0
        %3550 = vmatpush1.msra.mxu0 %v3236
        %3551 = vmatprep.subr.mxu0 0.0
        %3552 = vmatpush1.msra.mxu0 %v3237
        %3553 = vmatprep.subr.mxu0 0.0
        %3554 = vmatpush1.msra.mxu0 %v3238
        %3555 = vmatprep.subr.mxu0 0.0
        %3556 = vmatpush1.msra.mxu0 %v3239
        %3557 = vmatprep.subr.mxu0 0.0
        %3558 = vmatpush1.msra.mxu0 %v3240
        %3559 = vmatprep.subr.mxu0 0.0
        %3560 = vmatpush1.msra.mxu0 %v3241
        %3561 = vmatprep.subr.mxu0 0.0
        %3562 = vmatpush1.msra.mxu0 0.0
        %3563 = vmatprep.subr.mxu0 0.0
        %3564 = vmatpush1.msra.mxu0 0.0
        %3565 = vmatprep.subr.mxu0 0.0
        %3566 = vmatpush1.msra.mxu0 0.0
        %3567 = vmatprep.subr.mxu0 0.0
        %3568 = vmatpush1.msra.mxu0 0.0
        %3569 = vmatprep.subr.mxu0 0.0
        %3570 = vmatpush1.msra.mxu0 0.0
        %3571 = vmatprep.subr.mxu0 0.0
        %3572 = vmatpush1.msra.mxu0 0.0
        %3573 = vmatprep.subr.mxu0 0.0
        %3574 = vmatpush1.msra.mxu0 0.0
        %3575 = vmatprep.subr.mxu0 0.0
        %3576 = vmatpush1.msra.mxu0 0.0
        %3577 = vmatprep.subr.mxu0 0.0
        %3578 = vmatpush1.msra.mxu0 0.0
        %3579 = vmatprep.subr.mxu0 0.0
        %3580 = vmatpush1.msra.mxu0 0.0
        %3581 = vmatprep.mubr.f32.mxu0 %v3494
        %3582 = vmatmul.mubr.f32.gmra.mrb[0].mxu0 %v3242
        %v3583 = vpop.f32.mrb[0].mxu0
        %v3584 = vadd.f32 %v3455, %v3583
        %v3585 = vpop.f32.mrb[0].mxu0
        %3586 = vmatprep.mubr.f32.mxu0 %v3497
        %3587 = vmatmul.mubr.f32.gmra.mrb[0].mxu0 %v3244
        %v3588 = vpop.f32.mrb[0].mxu0
        %v3589 = vadd.f32 %v3460, %v3588
        %v3590 = vpop.f32.mrb[0].mxu0
        %3591 = vmatprep.mubr.f32.mxu0 %v3500
        %3592 = vmatmul.mubr.f32.gmra.mrb[0].mxu0 %v3246
        %v3593 = vpop.f32.mrb[0].mxu0
        %v3594 = vadd.f32 %v3465, %v3593
        %v3595 = vpop.f32.mrb[0].mxu0
        %3596 = vmatprep.mubr.f32.mxu0 %v3503
        %3597 = vmatmul.mubr.f32.gmra.mrb[0].mxu0 %v3248
        %v3598 = vpop.f32.mrb[0].mxu0
        %v3599 = vadd.f32 %v3470, %v3598
        %v3600 = vpop.f32.mrb[0].mxu0
        %3601 = vmatprep.mubr.f32.mxu0 %v3506
        %3602 = vmatmul.mubr.f32.gmra.mrb[0].mxu0 %v3250
        %v3603 = vpop.f32.mrb[0].mxu0
        %v3604 = vadd.f32 %v3475, %v3603
        %v3605 = vpop.f32.mrb[0].mxu0
        %3606 = vmatprep.mubr.f32.mxu0 %v3509
        %3607 = vmatmul.mubr.f32.gmra.mrb[0].mxu0 %v3252
        %v3608 = vpop.f32.mrb[0].mxu0
        %v3609 = vadd.f32 %v3480, %v3608
        %v3610 = vpop.f32.mrb[0].mxu0
        %3611 = vmatprep.mubr.f32.mxu0 %v3512
        %3612 = vmatmul.mubr.f32.gmra.mrb[0].mxu0 %v3254
        %v3613 = vpop.f32.mrb[0].mxu0
        %v3614 = vadd.f32 %v3485, %v3613
        %v3615 = vpop.f32.mrb[0].mxu0
        %3616 = vmatprep.mubr.f32.mxu0 %v3515
        %3617 = vmatmul.mubr.f32.gmra.mrb[0].mxu0 %v3256
        %v3618 = vpop.f32.mrb[0].mxu0
        %v3619 = vadd.f32 %v3490, %v3618
        %v3620 = vpop.f32.mrb[0].mxu0
        %3621 = vdwg.mxu0
        %s3622 = scalar_lea.vmem %s2, 256
        %v3623 = vld [vmem:[%s3622] sm:$0xff]
        %v3624 = vld [vmem:[%s3622 + $0x8] sm:$0xff]
        %v3625 = vld [vmem:[%s3622 + $0x10] sm:$0xff]
        %v3626 = vld [vmem:[%s3622 + $0x18] sm:$0xff]
        %v3627 = vld [vmem:[%s3622 + $0x20] sm:$0xff]
        %v3628 = vld [vmem:[%s3622 + $0x28] sm:$0xff]
        %v3629 = vld [vmem:[%s3622 + $0x30] sm:$0xff]
        %v3630 = vld [vmem:[%s3622 + $0x38] sm:$0xff]
        %v3631 = vld [vmem:[%s3622 + $0x40] sm:$0xff]
        %v3632 = vld [vmem:[%s3622 + $0x48] sm:$0xff]
        %v3633 = vld [vmem:[%s3622 + $0x50] sm:$0xff]
        %v3634 = vld [vmem:[%s3622 + $0x58] sm:$0xff]
        %v3635 = vld [vmem:[%s3622 + $0x60] sm:$0xff]
        %v3636 = vld [vmem:[%s3622 + $0x68] sm:$0xff]
        %v3637 = vld [vmem:[%s3622 + $0x70] sm:$0xff]
        %v3638 = vld [vmem:[%s3622 + $0x78] sm:$0xff]
        %3639 = vrot.lane.b32.xlu0 %v3220, 126
        %v3640 = vpop.permute.xlu0 %3639
        %3641 = vrot.lane.b32.xlu0 %v3221, 126
        %v3642 = vpop.permute.xlu0 %3641
        %3643 = vrot.lane.b32.xlu0 %v3222, 126
        %v3644 = vpop.permute.xlu0 %3643
        %3645 = vrot.lane.b32.xlu0 %v3223, 126
        %v3646 = vpop.permute.xlu0 %3645
        %3647 = vrot.lane.b32.xlu0 %v3224, 126
        %v3648 = vpop.permute.xlu0 %3647
        %3649 = vrot.lane.b32.xlu0 %v3225, 126
        %v3650 = vpop.permute.xlu0 %3649
        %3651 = vrot.lane.b32.xlu0 %v3226, 126
        %v3652 = vpop.permute.xlu0 %3651
        %3653 = vrot.lane.b32.xlu0 %v3227, 126
        %v3654 = vpop.permute.xlu0 %3653
        %3655 = vrot.lane.b32.xlu0 %v3228, 126
        %v3656 = vpop.permute.xlu0 %3655
        %3657 = vrot.lane.b32.xlu0 %v3229, 126
        %v3658 = vpop.permute.xlu0 %3657
        %3659 = vrot.lane.b32.xlu0 %v3230, 126
        %v3660 = vpop.permute.xlu0 %3659
        %3661 = vrot.lane.b32.xlu0 %v3231, 126
        %v3662 = vpop.permute.xlu0 %3661
        %3663 = vrot.lane.b32.xlu0 %v3232, 126
        %v3664 = vpop.permute.xlu0 %3663
        %3665 = vrot.lane.b32.xlu0 %v3233, 126
        %v3666 = vpop.permute.xlu0 %3665
        %3667 = vrot.lane.b32.xlu0 %v3234, 126
        %v3668 = vpop.permute.xlu0 %3667
        %3669 = vrot.lane.b32.xlu0 %v3235, 126
        %v3670 = vpop.permute.xlu0 %3669
        %3671 = vrot.lane.b32.xlu0 %v3236, 126
        %v3672 = vpop.permute.xlu0 %3671
        %3673 = vrot.lane.b32.xlu0 %v3237, 126
        %v3674 = vpop.permute.xlu0 %3673
        %3675 = vrot.lane.b32.xlu0 %v3238, 126
        %v3676 = vpop.permute.xlu0 %3675
        %3677 = vrot.lane.b32.xlu0 %v3239, 126
        %v3678 = vpop.permute.xlu0 %3677
        %3679 = vrot.lane.b32.xlu0 %v3240, 126
        %v3680 = vpop.permute.xlu0 %3679
        %3681 = vrot.lane.b32.xlu0 %v3241, 126
        %v3682 = vpop.permute.xlu0 %3681
        %v3706 = vsel %vm3363, %v3624, 0
        %v3709 = vsel %vm3363, %v3626, 0
        %v3712 = vsel %vm3363, %v3628, 0
        %v3715 = vsel %vm3363, %v3630, 0
        %v3718 = vsel %vm3363, %v3632, 0
        %v3721 = vsel %vm3363, %v3634, 0
        %v3724 = vsel %vm3363, %v3636, 0
        %v3727 = vsel %vm3363, %v3638, 0
        %3729 = vmatprep.subr.mxu0 0.0
        %3730 = vmatpush1.msra.mxu0 %v3640
        %3731 = vmatprep.subr.mxu0 0.0
        %3732 = vmatpush1.msra.mxu0 %v3642
        %3733 = vmatprep.subr.mxu0 0.0
        %3734 = vmatpush1.msra.mxu0 %v3644
        %3735 = vmatprep.subr.mxu0 0.0
        %3736 = vmatpush1.msra.mxu0 %v3646
        %3737 = vmatprep.subr.mxu0 0.0
        %3738 = vmatpush1.msra.mxu0 %v3648
        %3739 = vmatprep.subr.mxu0 0.0
        %3740 = vmatpush1.msra.mxu0 %v3650
        %3741 = vmatprep.subr.mxu0 0.0
        %3742 = vmatpush1.msra.mxu0 %v3652
        %3743 = vmatprep.subr.mxu0 0.0
        %3744 = vmatpush1.msra.mxu0 %v3654
        %3745 = vmatprep.subr.mxu0 0.0
        %3746 = vmatpush1.msra.mxu0 %v3656
        %3747 = vmatprep.subr.mxu0 0.0
        %3748 = vmatpush1.msra.mxu0 %v3658
        %3749 = vmatprep.subr.mxu0 0.0
        %3750 = vmatpush1.msra.mxu0 %v3660
        %3751 = vmatprep.subr.mxu0 0.0
        %3752 = vmatpush1.msra.mxu0 %v3662
        %3753 = vmatprep.subr.mxu0 0.0
        %3754 = vmatpush1.msra.mxu0 %v3664
        %3755 = vmatprep.subr.mxu0 0.0
        %3756 = vmatpush1.msra.mxu0 %v3666
        %3757 = vmatprep.subr.mxu0 0.0
        %3758 = vmatpush1.msra.mxu0 %v3668
        %3759 = vmatprep.subr.mxu0 0.0
        %3760 = vmatpush1.msra.mxu0 %v3670
        %3761 = vmatprep.subr.mxu0 0.0
        %3762 = vmatpush1.msra.mxu0 %v3672
        %3763 = vmatprep.subr.mxu0 0.0
        %3764 = vmatpush1.msra.mxu0 %v3674
        %3765 = vmatprep.subr.mxu0 0.0
        %3766 = vmatpush1.msra.mxu0 %v3676
        %3767 = vmatprep.subr.mxu0 0.0
        %3768 = vmatpush1.msra.mxu0 %v3678
        %3769 = vmatprep.subr.mxu0 0.0
        %3770 = vmatpush1.msra.mxu0 %v3680
        %3771 = vmatprep.subr.mxu0 0.0
        %3772 = vmatpush1.msra.mxu0 %v3682
        %3773 = vmatprep.subr.mxu0 0.0
        %3774 = vmatpush1.msra.mxu0 0.0
        %3775 = vmatprep.subr.mxu0 0.0
        %3776 = vmatpush1.msra.mxu0 0.0
        %3777 = vmatprep.subr.mxu0 0.0
        %3778 = vmatpush1.msra.mxu0 0.0
        %3779 = vmatprep.subr.mxu0 0.0
        %3780 = vmatpush1.msra.mxu0 0.0
        %3781 = vmatprep.subr.mxu0 0.0
        %3782 = vmatpush1.msra.mxu0 0.0
        %3783 = vmatprep.subr.mxu0 0.0
        %3784 = vmatpush1.msra.mxu0 0.0
        %3785 = vmatprep.subr.mxu0 0.0
        %3786 = vmatpush1.msra.mxu0 0.0
        %3787 = vmatprep.subr.mxu0 0.0
        %3788 = vmatpush1.msra.mxu0 0.0
        %3789 = vmatprep.subr.mxu0 0.0
        %3790 = vmatpush1.msra.mxu0 0.0
        %3791 = vmatprep.subr.mxu0 0.0
        %3792 = vmatpush1.msra.mxu0 0.0
        %3793 = vmatprep.mubr.f32.mxu0 %v3706
        %3794 = vmatmul.mubr.f32.gmra.mrb[0].mxu0 %v3623
        %v3795 = vpop.f32.mrb[0].mxu0
        %v3796 = vadd.f32 0.0, %v3795
        %v3797 = vpop.f32.mrb[0].mxu0
        %3798 = vmatprep.mubr.f32.mxu0 %v3709
        %3799 = vmatmul.mubr.f32.gmra.mrb[0].mxu0 %v3625
        %v3800 = vpop.f32.mrb[0].mxu0
        %v3801 = vadd.f32 0.0, %v3800
        %v3802 = vpop.f32.mrb[0].mxu0
        %3803 = vmatprep.mubr.f32.mxu0 %v3712
        %3804 = vmatmul.mubr.f32.gmra.mrb[0].mxu0 %v3627
        %v3805 = vpop.f32.mrb[0].mxu0
        %v3806 = vadd.f32 0.0, %v3805
        %v3807 = vpop.f32.mrb[0].mxu0
        %3808 = vmatprep.mubr.f32.mxu0 %v3715
        %3809 = vmatmul.mubr.f32.gmra.mrb[0].mxu0 %v3629
        %v3810 = vpop.f32.mrb[0].mxu0
        %v3811 = vadd.f32 0.0, %v3810
        %v3812 = vpop.f32.mrb[0].mxu0
        %3813 = vmatprep.mubr.f32.mxu0 %v3718
        %3814 = vmatmul.mubr.f32.gmra.mrb[0].mxu0 %v3631
        %v3815 = vpop.f32.mrb[0].mxu0
        %v3816 = vadd.f32 0.0, %v3815
        %v3817 = vpop.f32.mrb[0].mxu0
        %3818 = vmatprep.mubr.f32.mxu0 %v3721
        %3819 = vmatmul.mubr.f32.gmra.mrb[0].mxu0 %v3633
        %v3820 = vpop.f32.mrb[0].mxu0
        %v3821 = vadd.f32 0.0, %v3820
        %v3822 = vpop.f32.mrb[0].mxu0
        %3823 = vmatprep.mubr.f32.mxu0 %v3724
        %3824 = vmatmul.mubr.f32.gmra.mrb[0].mxu0 %v3635
        %v3825 = vpop.f32.mrb[0].mxu0
        %v3826 = vadd.f32 0.0, %v3825
        %v3827 = vpop.f32.mrb[0].mxu0
        %3828 = vmatprep.mubr.f32.mxu0 %v3727
        %3829 = vmatmul.mubr.f32.gmra.mrb[0].mxu0 %v3637
        %v3830 = vpop.f32.mrb[0].mxu0
        %v3831 = vadd.f32 0.0, %v3830
        %v3832 = vpop.f32.mrb[0].mxu0
        %3833 = vdwg.mxu0
        %v3834 = vadd.f32 %v3584, %v3796
        %v3835 = vadd.f32 %v3589, %v3801
        %v3836 = vadd.f32 %v3594, %v3806
        %v3837 = vadd.f32 %v3599, %v3811
        %v3838 = vadd.f32 %v3604, %v3816
        %v3839 = vadd.f32 %v3609, %v3821
        %v3840 = vadd.f32 %v3614, %v3826
        %v3841 = vadd.f32 %v3619, %v3831
        %s3842 = scalar_lea.vmem %s2, 384
        %v3843 = vld [vmem:[%s3842] sm:$0xff]
        %v3844 = vld [vmem:[%s3842 + $0x8] sm:$0xff]
        %v3845 = vld [vmem:[%s3842 + $0x10] sm:$0xff]
        %v3846 = vld [vmem:[%s3842 + $0x18] sm:$0xff]
        %v3847 = vld [vmem:[%s3842 + $0x20] sm:$0xff]
        %v3848 = vld [vmem:[%s3842 + $0x28] sm:$0xff]
        %v3849 = vld [vmem:[%s3842 + $0x30] sm:$0xff]
        %v3850 = vld [vmem:[%s3842 + $0x38] sm:$0xff]
        %v3851 = vld [vmem:[%s3842 + $0x40] sm:$0xff]
        %v3852 = vld [vmem:[%s3842 + $0x48] sm:$0xff]
        %v3853 = vld [vmem:[%s3842 + $0x50] sm:$0xff]
        %v3854 = vld [vmem:[%s3842 + $0x58] sm:$0xff]
        %v3855 = vld [vmem:[%s3842 + $0x60] sm:$0xff]
        %v3856 = vld [vmem:[%s3842 + $0x68] sm:$0xff]
        %v3857 = vld [vmem:[%s3842 + $0x70] sm:$0xff]
        %v3858 = vld [vmem:[%s3842 + $0x78] sm:$0xff]
        %3859 = vrot.lane.b32.xlu0 %v3220, 125
        %v3860 = vpop.permute.xlu0 %3859
        %3861 = vrot.lane.b32.xlu0 %v3221, 125
        %v3862 = vpop.permute.xlu0 %3861
        %3863 = vrot.lane.b32.xlu0 %v3222, 125
        %v3864 = vpop.permute.xlu0 %3863
        %3865 = vrot.lane.b32.xlu0 %v3223, 125
        %v3866 = vpop.permute.xlu0 %3865
        %3867 = vrot.lane.b32.xlu0 %v3224, 125
        %v3868 = vpop.permute.xlu0 %3867
        %3869 = vrot.lane.b32.xlu0 %v3225, 125
        %v3870 = vpop.permute.xlu0 %3869
        %3871 = vrot.lane.b32.xlu0 %v3226, 125
        %v3872 = vpop.permute.xlu0 %3871
        %3873 = vrot.lane.b32.xlu0 %v3227, 125
        %v3874 = vpop.permute.xlu0 %3873
        %3875 = vrot.lane.b32.xlu0 %v3228, 125
        %v3876 = vpop.permute.xlu0 %3875
        %3877 = vrot.lane.b32.xlu0 %v3229, 125
        %v3878 = vpop.permute.xlu0 %3877
        %3879 = vrot.lane.b32.xlu0 %v3230, 125
        %v3880 = vpop.permute.xlu0 %3879
        %3881 = vrot.lane.b32.xlu0 %v3231, 125
        %v3882 = vpop.permute.xlu0 %3881
        %3883 = vrot.lane.b32.xlu0 %v3232, 125
        %v3884 = vpop.permute.xlu0 %3883
        %3885 = vrot.lane.b32.xlu0 %v3233, 125
        %v3886 = vpop.permute.xlu0 %3885
        %3887 = vrot.lane.b32.xlu0 %v3234, 125
        %v3888 = vpop.permute.xlu0 %3887
        %3889 = vrot.lane.b32.xlu0 %v3235, 125
        %v3890 = vpop.permute.xlu0 %3889
        %3891 = vrot.lane.b32.xlu0 %v3236, 125
        %v3892 = vpop.permute.xlu0 %3891
        %3893 = vrot.lane.b32.xlu0 %v3237, 125
        %v3894 = vpop.permute.xlu0 %3893
        %3895 = vrot.lane.b32.xlu0 %v3238, 125
        %v3896 = vpop.permute.xlu0 %3895
        %3897 = vrot.lane.b32.xlu0 %v3239, 125
        %v3898 = vpop.permute.xlu0 %3897
        %3899 = vrot.lane.b32.xlu0 %v3240, 125
        %v3900 = vpop.permute.xlu0 %3899
        %3901 = vrot.lane.b32.xlu0 %v3241, 125
        %v3902 = vpop.permute.xlu0 %3901
        %v3926 = vsel %vm3363, %v3844, 0
        %v3929 = vsel %vm3363, %v3846, 0
        %v3932 = vsel %vm3363, %v3848, 0
        %v3935 = vsel %vm3363, %v3850, 0
        %v3938 = vsel %vm3363, %v3852, 0
        %v3941 = vsel %vm3363, %v3854, 0
        %v3944 = vsel %vm3363, %v3856, 0
        %v3947 = vsel %vm3363, %v3858, 0
        %3949 = vmatprep.subr.mxu0 0.0
        %3950 = vmatpush1.msra.mxu0 %v3860
        %3951 = vmatprep.subr.mxu0 0.0
        %3952 = vmatpush1.msra.mxu0 %v3862
        %3953 = vmatprep.subr.mxu0 0.0
        %3954 = vmatpush1.msra.mxu0 %v3864
        %3955 = vmatprep.subr.mxu0 0.0
        %3956 = vmatpush1.msra.mxu0 %v3866
        %3957 = vmatprep.subr.mxu0 0.0
        %3958 = vmatpush1.msra.mxu0 %v3868
        %3959 = vmatprep.subr.mxu0 0.0
        %3960 = vmatpush1.msra.mxu0 %v3870
        %3961 = vmatprep.subr.mxu0 0.0
        %3962 = vmatpush1.msra.mxu0 %v3872
        %3963 = vmatprep.subr.mxu0 0.0
        %3964 = vmatpush1.msra.mxu0 %v3874
        %3965 = vmatprep.subr.mxu0 0.0
        %3966 = vmatpush1.msra.mxu0 %v3876
        %3967 = vmatprep.subr.mxu0 0.0
        %3968 = vmatpush1.msra.mxu0 %v3878
        %3969 = vmatprep.subr.mxu0 0.0
        %3970 = vmatpush1.msra.mxu0 %v3880
        %3971 = vmatprep.subr.mxu0 0.0
        %3972 = vmatpush1.msra.mxu0 %v3882
        %3973 = vmatprep.subr.mxu0 0.0
        %3974 = vmatpush1.msra.mxu0 %v3884
        %3975 = vmatprep.subr.mxu0 0.0
        %3976 = vmatpush1.msra.mxu0 %v3886
        %3977 = vmatprep.subr.mxu0 0.0
        %3978 = vmatpush1.msra.mxu0 %v3888
        %3979 = vmatprep.subr.mxu0 0.0
        %3980 = vmatpush1.msra.mxu0 %v3890
        %3981 = vmatprep.subr.mxu0 0.0
        %3982 = vmatpush1.msra.mxu0 %v3892
        %3983 = vmatprep.subr.mxu0 0.0
        %3984 = vmatpush1.msra.mxu0 %v3894
        %3985 = vmatprep.subr.mxu0 0.0
        %3986 = vmatpush1.msra.mxu0 %v3896
        %3987 = vmatprep.subr.mxu0 0.0
        %3988 = vmatpush1.msra.mxu0 %v3898
        %3989 = vmatprep.subr.mxu0 0.0
        %3990 = vmatpush1.msra.mxu0 %v3900
        %3991 = vmatprep.subr.mxu0 0.0
        %3992 = vmatpush1.msra.mxu0 %v3902
        %3993 = vmatprep.subr.mxu0 0.0
        %3994 = vmatpush1.msra.mxu0 0.0
        %3995 = vmatprep.subr.mxu0 0.0
        %3996 = vmatpush1.msra.mxu0 0.0
        %3997 = vmatprep.subr.mxu0 0.0
        %3998 = vmatpush1.msra.mxu0 0.0
        %3999 = vmatprep.subr.mxu0 0.0
        %4000 = vmatpush1.msra.mxu0 0.0
        %4001 = vmatprep.subr.mxu0 0.0
        %4002 = vmatpush1.msra.mxu0 0.0
        %4003 = vmatprep.subr.mxu0 0.0
        %4004 = vmatpush1.msra.mxu0 0.0
        %4005 = vmatprep.subr.mxu0 0.0
        %4006 = vmatpush1.msra.mxu0 0.0
        %4007 = vmatprep.subr.mxu0 0.0
        %4008 = vmatpush1.msra.mxu0 0.0
        %4009 = vmatprep.subr.mxu0 0.0
        %4010 = vmatpush1.msra.mxu0 0.0
        %4011 = vmatprep.subr.mxu0 0.0
        %4012 = vmatpush1.msra.mxu0 0.0
        %4013 = vmatprep.mubr.f32.mxu0 %v3926
        %4014 = vmatmul.mubr.f32.gmra.mrb[0].mxu0 %v3843
        %v4015 = vpop.f32.mrb[0].mxu0
        %v4016 = vadd.f32 0.0, %v4015
        %v4017 = vpop.f32.mrb[0].mxu0
        %4018 = vmatprep.mubr.f32.mxu0 %v3929
        %4019 = vmatmul.mubr.f32.gmra.mrb[0].mxu0 %v3845
        %v4020 = vpop.f32.mrb[0].mxu0
        %v4021 = vadd.f32 0.0, %v4020
        %v4022 = vpop.f32.mrb[0].mxu0
        %4023 = vmatprep.mubr.f32.mxu0 %v3932
        %4024 = vmatmul.mubr.f32.gmra.mrb[0].mxu0 %v3847
        %v4025 = vpop.f32.mrb[0].mxu0
        %v4026 = vadd.f32 0.0, %v4025
        %v4027 = vpop.f32.mrb[0].mxu0
        %4028 = vmatprep.mubr.f32.mxu0 %v3935
        %4029 = vmatmul.mubr.f32.gmra.mrb[0].mxu0 %v3849
        %v4030 = vpop.f32.mrb[0].mxu0
        %v4031 = vadd.f32 0.0, %v4030
        %v4032 = vpop.f32.mrb[0].mxu0
        %4033 = vmatprep.mubr.f32.mxu0 %v3938
        %4034 = vmatmul.mubr.f32.gmra.mrb[0].mxu0 %v3851
        %v4035 = vpop.f32.mrb[0].mxu0
        %v4036 = vadd.f32 0.0, %v4035
        %v4037 = vpop.f32.mrb[0].mxu0
        %4038 = vmatprep.mubr.f32.mxu0 %v3941
        %4039 = vmatmul.mubr.f32.gmra.mrb[0].mxu0 %v3853
        %v4040 = vpop.f32.mrb[0].mxu0
        %v4041 = vadd.f32 0.0, %v4040
        %v4042 = vpop.f32.mrb[0].mxu0
        %4043 = vmatprep.mubr.f32.mxu0 %v3944
        %4044 = vmatmul.mubr.f32.gmra.mrb[0].mxu0 %v3855
        %v4045 = vpop.f32.mrb[0].mxu0
        %v4046 = vadd.f32 0.0, %v4045
        %v4047 = vpop.f32.mrb[0].mxu0
        %4048 = vmatprep.mubr.f32.mxu0 %v3947
        %4049 = vmatmul.mubr.f32.gmra.mrb[0].mxu0 %v3857
        %v4050 = vpop.f32.mrb[0].mxu0
        %v4051 = vadd.f32 0.0, %v4050
        %v4052 = vpop.f32.mrb[0].mxu0
        %4053 = vdwg.mxu0
        %v4054 = vadd.f32 %v3834, %v4016
        %v4055 = vadd.f32 %v3835, %v4021
        %v4056 = vadd.f32 %v3836, %v4026
        %v4057 = vadd.f32 %v3837, %v4031
        %v4058 = vadd.f32 %v3838, %v4036
        %v4059 = vadd.f32 %v3839, %v4041
        %v4060 = vadd.f32 %v3840, %v4046
        %v4061 = vadd.f32 %v3841, %v4051
        %s4062 = scalar_lea.vmem %s2, 512
        %v4063 = vld [vmem:[%s4062] sm:$0xff]
        %v4064 = vld [vmem:[%s4062 + $0x8] sm:$0xff]
        %v4065 = vld [vmem:[%s4062 + $0x10] sm:$0xff]
        %v4066 = vld [vmem:[%s4062 + $0x18] sm:$0xff]
        %v4067 = vld [vmem:[%s4062 + $0x20] sm:$0xff]
        %v4068 = vld [vmem:[%s4062 + $0x28] sm:$0xff]
        %v4069 = vld [vmem:[%s4062 + $0x30] sm:$0xff]
        %v4070 = vld [vmem:[%s4062 + $0x38] sm:$0xff]
        %v4071 = vld [vmem:[%s4062 + $0x40] sm:$0xff]
        %v4072 = vld [vmem:[%s4062 + $0x48] sm:$0xff]
        %v4073 = vld [vmem:[%s4062 + $0x50] sm:$0xff]
        %v4074 = vld [vmem:[%s4062 + $0x58] sm:$0xff]
        %v4075 = vld [vmem:[%s4062 + $0x60] sm:$0xff]
        %v4076 = vld [vmem:[%s4062 + $0x68] sm:$0xff]
        %v4077 = vld [vmem:[%s4062 + $0x70] sm:$0xff]
        %v4078 = vld [vmem:[%s4062 + $0x78] sm:$0xff]
        %4079 = vrot.lane.b32.xlu0 %v3220, 124
        %v4080 = vpop.permute.xlu0 %4079
        %4081 = vrot.lane.b32.xlu0 %v3221, 124
        %v4082 = vpop.permute.xlu0 %4081
        %4083 = vrot.lane.b32.xlu0 %v3222, 124
        %v4084 = vpop.permute.xlu0 %4083
        %4085 = vrot.lane.b32.xlu0 %v3223, 124
        %v4086 = vpop.permute.xlu0 %4085
        %4087 = vrot.lane.b32.xlu0 %v3224, 124
        %v4088 = vpop.permute.xlu0 %4087
        %4089 = vrot.lane.b32.xlu0 %v3225, 124
        %v4090 = vpop.permute.xlu0 %4089
        %4091 = vrot.lane.b32.xlu0 %v3226, 124
        %v4092 = vpop.permute.xlu0 %4091
        %4093 = vrot.lane.b32.xlu0 %v3227, 124
        %v4094 = vpop.permute.xlu0 %4093
        %4095 = vrot.lane.b32.xlu0 %v3228, 124
        %v4096 = vpop.permute.xlu0 %4095
        %4097 = vrot.lane.b32.xlu0 %v3229, 124
        %v4098 = vpop.permute.xlu0 %4097
        %4099 = vrot.lane.b32.xlu0 %v3230, 124
        %v4100 = vpop.permute.xlu0 %4099
        %4101 = vrot.lane.b32.xlu0 %v3231, 124
        %v4102 = vpop.permute.xlu0 %4101
        %4103 = vrot.lane.b32.xlu0 %v3232, 124
        %v4104 = vpop.permute.xlu0 %4103
        %4105 = vrot.lane.b32.xlu0 %v3233, 124
        %v4106 = vpop.permute.xlu0 %4105
        %4107 = vrot.lane.b32.xlu0 %v3234, 124
        %v4108 = vpop.permute.xlu0 %4107
        %4109 = vrot.lane.b32.xlu0 %v3235, 124
        %v4110 = vpop.permute.xlu0 %4109
        %4111 = vrot.lane.b32.xlu0 %v3236, 124
        %v4112 = vpop.permute.xlu0 %4111
        %4113 = vrot.lane.b32.xlu0 %v3237, 124
        %v4114 = vpop.permute.xlu0 %4113
        %4115 = vrot.lane.b32.xlu0 %v3238, 124
        %v4116 = vpop.permute.xlu0 %4115
        %4117 = vrot.lane.b32.xlu0 %v3239, 124
        %v4118 = vpop.permute.xlu0 %4117
        %4119 = vrot.lane.b32.xlu0 %v3240, 124
        %v4120 = vpop.permute.xlu0 %4119
        %4121 = vrot.lane.b32.xlu0 %v3241, 124
        %v4122 = vpop.permute.xlu0 %4121
        %v4146 = vsel %vm3363, %v4064, 0
        %v4149 = vsel %vm3363, %v4066, 0
        %v4152 = vsel %vm3363, %v4068, 0
        %v4155 = vsel %vm3363, %v4070, 0
        %v4158 = vsel %vm3363, %v4072, 0
        %v4161 = vsel %vm3363, %v4074, 0
        %v4164 = vsel %vm3363, %v4076, 0
        %v4167 = vsel %vm3363, %v4078, 0
        %4169 = vmatprep.subr.mxu0 0.0
        %4170 = vmatpush1.msra.mxu0 %v4080
        %4171 = vmatprep.subr.mxu0 0.0
        %4172 = vmatpush1.msra.mxu0 %v4082
        %4173 = vmatprep.subr.mxu0 0.0
        %4174 = vmatpush1.msra.mxu0 %v4084
        %4175 = vmatprep.subr.mxu0 0.0
        %4176 = vmatpush1.msra.mxu0 %v4086
        %4177 = vmatprep.subr.mxu0 0.0
        %4178 = vmatpush1.msra.mxu0 %v4088
        %4179 = vmatprep.subr.mxu0 0.0
        %4180 = vmatpush1.msra.mxu0 %v4090
        %4181 = vmatprep.subr.mxu0 0.0
        %4182 = vmatpush1.msra.mxu0 %v4092
        %4183 = vmatprep.subr.mxu0 0.0
        %4184 = vmatpush1.msra.mxu0 %v4094
        %4185 = vmatprep.subr.mxu0 0.0
        %4186 = vmatpush1.msra.mxu0 %v4096
        %4187 = vmatprep.subr.mxu0 0.0
        %4188 = vmatpush1.msra.mxu0 %v4098
        %4189 = vmatprep.subr.mxu0 0.0
        %4190 = vmatpush1.msra.mxu0 %v4100
        %4191 = vmatprep.subr.mxu0 0.0
        %4192 = vmatpush1.msra.mxu0 %v4102
        %4193 = vmatprep.subr.mxu0 0.0
        %4194 = vmatpush1.msra.mxu0 %v4104
        %4195 = vmatprep.subr.mxu0 0.0
        %4196 = vmatpush1.msra.mxu0 %v4106
        %4197 = vmatprep.subr.mxu0 0.0
        %4198 = vmatpush1.msra.mxu0 %v4108
        %4199 = vmatprep.subr.mxu0 0.0
        %4200 = vmatpush1.msra.mxu0 %v4110
        %4201 = vmatprep.subr.mxu0 0.0
        %4202 = vmatpush1.msra.mxu0 %v4112
        %4203 = vmatprep.subr.mxu0 0.0
        %4204 = vmatpush1.msra.mxu0 %v4114
        %4205 = vmatprep.subr.mxu0 0.0
        %4206 = vmatpush1.msra.mxu0 %v4116
        %4207 = vmatprep.subr.mxu0 0.0
        %4208 = vmatpush1.msra.mxu0 %v4118
        %4209 = vmatprep.subr.mxu0 0.0
        %4210 = vmatpush1.msra.mxu0 %v4120
        %4211 = vmatprep.subr.mxu0 0.0
        %4212 = vmatpush1.msra.mxu0 %v4122
        %4213 = vmatprep.subr.mxu0 0.0
        %4214 = vmatpush1.msra.mxu0 0.0
        %4215 = vmatprep.subr.mxu0 0.0
        %4216 = vmatpush1.msra.mxu0 0.0
        %4217 = vmatprep.subr.mxu0 0.0
        %4218 = vmatpush1.msra.mxu0 0.0
        %4219 = vmatprep.subr.mxu0 0.0
        %4220 = vmatpush1.msra.mxu0 0.0
        %4221 = vmatprep.subr.mxu0 0.0
        %4222 = vmatpush1.msra.mxu0 0.0
        %4223 = vmatprep.subr.mxu0 0.0
        %4224 = vmatpush1.msra.mxu0 0.0
        %4225 = vmatprep.subr.mxu0 0.0
        %4226 = vmatpush1.msra.mxu0 0.0
        %4227 = vmatprep.subr.mxu0 0.0
        %4228 = vmatpush1.msra.mxu0 0.0
        %4229 = vmatprep.subr.mxu0 0.0
        %4230 = vmatpush1.msra.mxu0 0.0
        %4231 = vmatprep.subr.mxu0 0.0
        %4232 = vmatpush1.msra.mxu0 0.0
        %4233 = vmatprep.mubr.f32.mxu0 %v4146
        %4234 = vmatmul.mubr.f32.gmra.mrb[0].mxu0 %v4063
        %v4235 = vpop.f32.mrb[0].mxu0
        %v4236 = vadd.f32 0.0, %v4235
        %v4237 = vpop.f32.mrb[0].mxu0
        %4238 = vmatprep.mubr.f32.mxu0 %v4149
        %4239 = vmatmul.mubr.f32.gmra.mrb[0].mxu0 %v4065
        %v4240 = vpop.f32.mrb[0].mxu0
        %v4241 = vadd.f32 0.0, %v4240
        %v4242 = vpop.f32.mrb[0].mxu0
        %4243 = vmatprep.mubr.f32.mxu0 %v4152
        %4244 = vmatmul.mubr.f32.gmra.mrb[0].mxu0 %v4067
        %v4245 = vpop.f32.mrb[0].mxu0
        %v4246 = vadd.f32 0.0, %v4245
        %v4247 = vpop.f32.mrb[0].mxu0
        %4248 = vmatprep.mubr.f32.mxu0 %v4155
        %4249 = vmatmul.mubr.f32.gmra.mrb[0].mxu0 %v4069
        %v4250 = vpop.f32.mrb[0].mxu0
        %v4251 = vadd.f32 0.0, %v4250
        %v4252 = vpop.f32.mrb[0].mxu0
        %4253 = vmatprep.mubr.f32.mxu0 %v4158
        %4254 = vmatmul.mubr.f32.gmra.mrb[0].mxu0 %v4071
        %v4255 = vpop.f32.mrb[0].mxu0
        %v4256 = vadd.f32 0.0, %v4255
        %v4257 = vpop.f32.mrb[0].mxu0
        %4258 = vmatprep.mubr.f32.mxu0 %v4161
        %4259 = vmatmul.mubr.f32.gmra.mrb[0].mxu0 %v4073
        %v4260 = vpop.f32.mrb[0].mxu0
        %v4261 = vadd.f32 0.0, %v4260
        %v4262 = vpop.f32.mrb[0].mxu0
        %4263 = vmatprep.mubr.f32.mxu0 %v4164
        %4264 = vmatmul.mubr.f32.gmra.mrb[0].mxu0 %v4075
        %v4265 = vpop.f32.mrb[0].mxu0
        %v4266 = vadd.f32 0.0, %v4265
        %v4267 = vpop.f32.mrb[0].mxu0
        %4268 = vmatprep.mubr.f32.mxu0 %v4167
        %4269 = vmatmul.mubr.f32.gmra.mrb[0].mxu0 %v4077
        %v4270 = vpop.f32.mrb[0].mxu0
        %v4271 = vadd.f32 0.0, %v4270
        %v4272 = vpop.f32.mrb[0].mxu0
        %4273 = vdwg.mxu0
        %v4274 = vadd.f32 %v4054, %v4236
        %v4275 = vadd.f32 %v4055, %v4241
        %v4276 = vadd.f32 %v4056, %v4246
        %v4277 = vadd.f32 %v4057, %v4251
        %v4278 = vadd.f32 %v4058, %v4256
        %v4279 = vadd.f32 %v4059, %v4261
        %v4280 = vadd.f32 %v4060, %v4266
        %v4281 = vadd.f32 %v4061, %v4271
        %s4282 = scalar_lea.vmem %s2, 640
        %v4283 = vld [vmem:[%s4282] sm:$0xff]
        %v4284 = vld [vmem:[%s4282 + $0x8] sm:$0xff]
        %v4285 = vld [vmem:[%s4282 + $0x10] sm:$0xff]
        %v4286 = vld [vmem:[%s4282 + $0x18] sm:$0xff]
        %v4287 = vld [vmem:[%s4282 + $0x20] sm:$0xff]
        %v4288 = vld [vmem:[%s4282 + $0x28] sm:$0xff]
        %v4289 = vld [vmem:[%s4282 + $0x30] sm:$0xff]
        %v4290 = vld [vmem:[%s4282 + $0x38] sm:$0xff]
        %v4291 = vld [vmem:[%s4282 + $0x40] sm:$0xff]
        %v4292 = vld [vmem:[%s4282 + $0x48] sm:$0xff]
        %v4293 = vld [vmem:[%s4282 + $0x50] sm:$0xff]
        %v4294 = vld [vmem:[%s4282 + $0x58] sm:$0xff]
        %v4295 = vld [vmem:[%s4282 + $0x60] sm:$0xff]
        %v4296 = vld [vmem:[%s4282 + $0x68] sm:$0xff]
        %v4297 = vld [vmem:[%s4282 + $0x70] sm:$0xff]
        %v4298 = vld [vmem:[%s4282 + $0x78] sm:$0xff]
        %4299 = vrot.lane.b32.xlu0 %v3220, 123
        %v4300 = vpop.permute.xlu0 %4299
        %4301 = vrot.lane.b32.xlu0 %v3221, 123
        %v4302 = vpop.permute.xlu0 %4301
        %4303 = vrot.lane.b32.xlu0 %v3222, 123
        %v4304 = vpop.permute.xlu0 %4303
        %4305 = vrot.lane.b32.xlu0 %v3223, 123
        %v4306 = vpop.permute.xlu0 %4305
        %4307 = vrot.lane.b32.xlu0 %v3224, 123
        %v4308 = vpop.permute.xlu0 %4307
        %4309 = vrot.lane.b32.xlu0 %v3225, 123
        %v4310 = vpop.permute.xlu0 %4309
        %4311 = vrot.lane.b32.xlu0 %v3226, 123
        %v4312 = vpop.permute.xlu0 %4311
        %4313 = vrot.lane.b32.xlu0 %v3227, 123
        %v4314 = vpop.permute.xlu0 %4313
        %4315 = vrot.lane.b32.xlu0 %v3228, 123
        %v4316 = vpop.permute.xlu0 %4315
        %4317 = vrot.lane.b32.xlu0 %v3229, 123
        %v4318 = vpop.permute.xlu0 %4317
        %4319 = vrot.lane.b32.xlu0 %v3230, 123
        %v4320 = vpop.permute.xlu0 %4319
        %4321 = vrot.lane.b32.xlu0 %v3231, 123
        %v4322 = vpop.permute.xlu0 %4321
        %4323 = vrot.lane.b32.xlu0 %v3232, 123
        %v4324 = vpop.permute.xlu0 %4323
        %4325 = vrot.lane.b32.xlu0 %v3233, 123
        %v4326 = vpop.permute.xlu0 %4325
        %4327 = vrot.lane.b32.xlu0 %v3234, 123
        %v4328 = vpop.permute.xlu0 %4327
        %4329 = vrot.lane.b32.xlu0 %v3235, 123
        %v4330 = vpop.permute.xlu0 %4329
        %4331 = vrot.lane.b32.xlu0 %v3236, 123
        %v4332 = vpop.permute.xlu0 %4331
        %4333 = vrot.lane.b32.xlu0 %v3237, 123
        %v4334 = vpop.permute.xlu0 %4333
        %4335 = vrot.lane.b32.xlu0 %v3238, 123
        %v4336 = vpop.permute.xlu0 %4335
        %4337 = vrot.lane.b32.xlu0 %v3239, 123
        %v4338 = vpop.permute.xlu0 %4337
        %4339 = vrot.lane.b32.xlu0 %v3240, 123
        %v4340 = vpop.permute.xlu0 %4339
        %4341 = vrot.lane.b32.xlu0 %v3241, 123
        %v4342 = vpop.permute.xlu0 %4341
        %v4366 = vsel %vm3363, %v4284, 0
        %v4369 = vsel %vm3363, %v4286, 0
        %v4372 = vsel %vm3363, %v4288, 0
        %v4375 = vsel %vm3363, %v4290, 0
        %v4378 = vsel %vm3363, %v4292, 0
        %v4381 = vsel %vm3363, %v4294, 0
        %v4384 = vsel %vm3363, %v4296, 0
        %v4387 = vsel %vm3363, %v4298, 0
        %4389 = vmatprep.subr.mxu0 0.0
        %4390 = vmatpush1.msra.mxu0 %v4300
        %4391 = vmatprep.subr.mxu0 0.0
        %4392 = vmatpush1.msra.mxu0 %v4302
        %4393 = vmatprep.subr.mxu0 0.0
        %4394 = vmatpush1.msra.mxu0 %v4304
        %4395 = vmatprep.subr.mxu0 0.0
        %4396 = vmatpush1.msra.mxu0 %v4306
        %4397 = vmatprep.subr.mxu0 0.0
        %4398 = vmatpush1.msra.mxu0 %v4308
        %4399 = vmatprep.subr.mxu0 0.0
        %4400 = vmatpush1.msra.mxu0 %v4310
        %4401 = vmatprep.subr.mxu0 0.0
        %4402 = vmatpush1.msra.mxu0 %v4312
        %4403 = vmatprep.subr.mxu0 0.0
        %4404 = vmatpush1.msra.mxu0 %v4314
        %4405 = vmatprep.subr.mxu0 0.0
        %4406 = vmatpush1.msra.mxu0 %v4316
        %4407 = vmatprep.subr.mxu0 0.0
        %4408 = vmatpush1.msra.mxu0 %v4318
        %4409 = vmatprep.subr.mxu0 0.0
        %4410 = vmatpush1.msra.mxu0 %v4320
        %4411 = vmatprep.subr.mxu0 0.0
        %4412 = vmatpush1.msra.mxu0 %v4322
        %4413 = vmatprep.subr.mxu0 0.0
        %4414 = vmatpush1.msra.mxu0 %v4324
        %4415 = vmatprep.subr.mxu0 0.0
        %4416 = vmatpush1.msra.mxu0 %v4326
        %4417 = vmatprep.subr.mxu0 0.0
        %4418 = vmatpush1.msra.mxu0 %v4328
        %4419 = vmatprep.subr.mxu0 0.0
        %4420 = vmatpush1.msra.mxu0 %v4330
        %4421 = vmatprep.subr.mxu0 0.0
        %4422 = vmatpush1.msra.mxu0 %v4332
        %4423 = vmatprep.subr.mxu0 0.0
        %4424 = vmatpush1.msra.mxu0 %v4334
        %4425 = vmatprep.subr.mxu0 0.0
        %4426 = vmatpush1.msra.mxu0 %v4336
        %4427 = vmatprep.subr.mxu0 0.0
        %4428 = vmatpush1.msra.mxu0 %v4338
        %4429 = vmatprep.subr.mxu0 0.0
        %4430 = vmatpush1.msra.mxu0 %v4340
        %4431 = vmatprep.subr.mxu0 0.0
        %4432 = vmatpush1.msra.mxu0 %v4342
        %4433 = vmatprep.subr.mxu0 0.0
        %4434 = vmatpush1.msra.mxu0 0.0
        %4435 = vmatprep.subr.mxu0 0.0
        %4436 = vmatpush1.msra.mxu0 0.0
        %4437 = vmatprep.subr.mxu0 0.0
        %4438 = vmatpush1.msra.mxu0 0.0
        %4439 = vmatprep.subr.mxu0 0.0
        %4440 = vmatpush1.msra.mxu0 0.0
        %4441 = vmatprep.subr.mxu0 0.0
        %4442 = vmatpush1.msra.mxu0 0.0
        %4443 = vmatprep.subr.mxu0 0.0
        %4444 = vmatpush1.msra.mxu0 0.0
        %4445 = vmatprep.subr.mxu0 0.0
        %4446 = vmatpush1.msra.mxu0 0.0
        %4447 = vmatprep.subr.mxu0 0.0
        %4448 = vmatpush1.msra.mxu0 0.0
        %4449 = vmatprep.subr.mxu0 0.0
        %4450 = vmatpush1.msra.mxu0 0.0
        %4451 = vmatprep.subr.mxu0 0.0
        %4452 = vmatpush1.msra.mxu0 0.0
        %4453 = vmatprep.mubr.f32.mxu0 %v4366
        %4454 = vmatmul.mubr.f32.gmra.mrb[0].mxu0 %v4283
        %v4455 = vpop.f32.mrb[0].mxu0
        %v4456 = vadd.f32 0.0, %v4455
        %v4457 = vpop.f32.mrb[0].mxu0
        %4458 = vmatprep.mubr.f32.mxu0 %v4369
        %4459 = vmatmul.mubr.f32.gmra.mrb[0].mxu0 %v4285
        %v4460 = vpop.f32.mrb[0].mxu0
        %v4461 = vadd.f32 0.0, %v4460
        %v4462 = vpop.f32.mrb[0].mxu0
        %4463 = vmatprep.mubr.f32.mxu0 %v4372
        %4464 = vmatmul.mubr.f32.gmra.mrb[0].mxu0 %v4287
        %v4465 = vpop.f32.mrb[0].mxu0
        %v4466 = vadd.f32 0.0, %v4465
        %v4467 = vpop.f32.mrb[0].mxu0
        %4468 = vmatprep.mubr.f32.mxu0 %v4375
        %4469 = vmatmul.mubr.f32.gmra.mrb[0].mxu0 %v4289
        %v4470 = vpop.f32.mrb[0].mxu0
        %v4471 = vadd.f32 0.0, %v4470
        %v4472 = vpop.f32.mrb[0].mxu0
        %4473 = vmatprep.mubr.f32.mxu0 %v4378
        %4474 = vmatmul.mubr.f32.gmra.mrb[0].mxu0 %v4291
        %v4475 = vpop.f32.mrb[0].mxu0
        %v4476 = vadd.f32 0.0, %v4475
        %v4477 = vpop.f32.mrb[0].mxu0
        %4478 = vmatprep.mubr.f32.mxu0 %v4381
        %4479 = vmatmul.mubr.f32.gmra.mrb[0].mxu0 %v4293
        %v4480 = vpop.f32.mrb[0].mxu0
        %v4481 = vadd.f32 0.0, %v4480
        %v4482 = vpop.f32.mrb[0].mxu0
        %4483 = vmatprep.mubr.f32.mxu0 %v4384
        %4484 = vmatmul.mubr.f32.gmra.mrb[0].mxu0 %v4295
        %v4485 = vpop.f32.mrb[0].mxu0
        %v4486 = vadd.f32 0.0, %v4485
        %v4487 = vpop.f32.mrb[0].mxu0
        %4488 = vmatprep.mubr.f32.mxu0 %v4387
        %4489 = vmatmul.mubr.f32.gmra.mrb[0].mxu0 %v4297
        %v4490 = vpop.f32.mrb[0].mxu0
        %v4491 = vadd.f32 0.0, %v4490
        %v4492 = vpop.f32.mrb[0].mxu0
        %4493 = vdwg.mxu0
        %v4494 = vadd.f32 %v4274, %v4456
        %v4495 = vadd.f32 %v4275, %v4461
        %v4496 = vadd.f32 %v4276, %v4466
        %v4497 = vadd.f32 %v4277, %v4471
        %v4498 = vadd.f32 %v4278, %v4476
        %v4499 = vadd.f32 %v4279, %v4481
        %v4500 = vadd.f32 %v4280, %v4486
        %v4501 = vadd.f32 %v4281, %v4491
        %s4502 = scalar_lea.vmem %s2, 768
        %v4503 = vld [vmem:[%s4502] sm:$0xff]
        %v4504 = vld [vmem:[%s4502 + $0x8] sm:$0xff]
        %v4505 = vld [vmem:[%s4502 + $0x10] sm:$0xff]
        %v4506 = vld [vmem:[%s4502 + $0x18] sm:$0xff]
        %v4507 = vld [vmem:[%s4502 + $0x20] sm:$0xff]
        %v4508 = vld [vmem:[%s4502 + $0x28] sm:$0xff]
        %v4509 = vld [vmem:[%s4502 + $0x30] sm:$0xff]
        %v4510 = vld [vmem:[%s4502 + $0x38] sm:$0xff]
        %v4511 = vld [vmem:[%s4502 + $0x40] sm:$0xff]
        %v4512 = vld [vmem:[%s4502 + $0x48] sm:$0xff]
        %v4513 = vld [vmem:[%s4502 + $0x50] sm:$0xff]
        %v4514 = vld [vmem:[%s4502 + $0x58] sm:$0xff]
        %v4515 = vld [vmem:[%s4502 + $0x60] sm:$0xff]
        %v4516 = vld [vmem:[%s4502 + $0x68] sm:$0xff]
        %v4517 = vld [vmem:[%s4502 + $0x70] sm:$0xff]
        %v4518 = vld [vmem:[%s4502 + $0x78] sm:$0xff]
        %4519 = vrot.lane.b32.xlu0 %v3220, 122
        %v4520 = vpop.permute.xlu0 %4519
        %4521 = vrot.lane.b32.xlu0 %v3221, 122
        %v4522 = vpop.permute.xlu0 %4521
        %4523 = vrot.lane.b32.xlu0 %v3222, 122
        %v4524 = vpop.permute.xlu0 %4523
        %4525 = vrot.lane.b32.xlu0 %v3223, 122
        %v4526 = vpop.permute.xlu0 %4525
        %4527 = vrot.lane.b32.xlu0 %v3224, 122
        %v4528 = vpop.permute.xlu0 %4527
        %4529 = vrot.lane.b32.xlu0 %v3225, 122
        %v4530 = vpop.permute.xlu0 %4529
        %4531 = vrot.lane.b32.xlu0 %v3226, 122
        %v4532 = vpop.permute.xlu0 %4531
        %4533 = vrot.lane.b32.xlu0 %v3227, 122
        %v4534 = vpop.permute.xlu0 %4533
        %4535 = vrot.lane.b32.xlu0 %v3228, 122
        %v4536 = vpop.permute.xlu0 %4535
        %4537 = vrot.lane.b32.xlu0 %v3229, 122
        %v4538 = vpop.permute.xlu0 %4537
        %4539 = vrot.lane.b32.xlu0 %v3230, 122
        %v4540 = vpop.permute.xlu0 %4539
        %4541 = vrot.lane.b32.xlu0 %v3231, 122
        %v4542 = vpop.permute.xlu0 %4541
        %4543 = vrot.lane.b32.xlu0 %v3232, 122
        %v4544 = vpop.permute.xlu0 %4543
        %4545 = vrot.lane.b32.xlu0 %v3233, 122
        %v4546 = vpop.permute.xlu0 %4545
        %4547 = vrot.lane.b32.xlu0 %v3234, 122
        %v4548 = vpop.permute.xlu0 %4547
        %4549 = vrot.lane.b32.xlu0 %v3235, 122
        %v4550 = vpop.permute.xlu0 %4549
        %4551 = vrot.lane.b32.xlu0 %v3236, 122
        %v4552 = vpop.permute.xlu0 %4551
        %4553 = vrot.lane.b32.xlu0 %v3237, 122
        %v4554 = vpop.permute.xlu0 %4553
        %4555 = vrot.lane.b32.xlu0 %v3238, 122
        %v4556 = vpop.permute.xlu0 %4555
        %4557 = vrot.lane.b32.xlu0 %v3239, 122
        %v4558 = vpop.permute.xlu0 %4557
        %4559 = vrot.lane.b32.xlu0 %v3240, 122
        %v4560 = vpop.permute.xlu0 %4559
        %4561 = vrot.lane.b32.xlu0 %v3241, 122
        %v4562 = vpop.permute.xlu0 %4561
        %v4586 = vsel %vm3363, %v4504, 0
        %v4589 = vsel %vm3363, %v4506, 0
        %v4592 = vsel %vm3363, %v4508, 0
        %v4595 = vsel %vm3363, %v4510, 0
        %v4598 = vsel %vm3363, %v4512, 0
        %v4601 = vsel %vm3363, %v4514, 0
        %v4604 = vsel %vm3363, %v4516, 0
        %v4607 = vsel %vm3363, %v4518, 0
        %4609 = vmatprep.subr.mxu0 0.0
        %4610 = vmatpush1.msra.mxu0 %v4520
        %4611 = vmatprep.subr.mxu0 0.0
        %4612 = vmatpush1.msra.mxu0 %v4522
        %4613 = vmatprep.subr.mxu0 0.0
        %4614 = vmatpush1.msra.mxu0 %v4524
        %4615 = vmatprep.subr.mxu0 0.0
        %4616 = vmatpush1.msra.mxu0 %v4526
        %4617 = vmatprep.subr.mxu0 0.0
        %4618 = vmatpush1.msra.mxu0 %v4528
        %4619 = vmatprep.subr.mxu0 0.0
        %4620 = vmatpush1.msra.mxu0 %v4530
        %4621 = vmatprep.subr.mxu0 0.0
        %4622 = vmatpush1.msra.mxu0 %v4532
        %4623 = vmatprep.subr.mxu0 0.0
        %4624 = vmatpush1.msra.mxu0 %v4534
        %4625 = vmatprep.subr.mxu0 0.0
        %4626 = vmatpush1.msra.mxu0 %v4536
        %4627 = vmatprep.subr.mxu0 0.0
        %4628 = vmatpush1.msra.mxu0 %v4538
        %4629 = vmatprep.subr.mxu0 0.0
        %4630 = vmatpush1.msra.mxu0 %v4540
        %4631 = vmatprep.subr.mxu0 0.0
        %4632 = vmatpush1.msra.mxu0 %v4542
        %4633 = vmatprep.subr.mxu0 0.0
        %4634 = vmatpush1.msra.mxu0 %v4544
        %4635 = vmatprep.subr.mxu0 0.0
        %4636 = vmatpush1.msra.mxu0 %v4546
        %4637 = vmatprep.subr.mxu0 0.0
        %4638 = vmatpush1.msra.mxu0 %v4548
        %4639 = vmatprep.subr.mxu0 0.0
        %4640 = vmatpush1.msra.mxu0 %v4550
        %4641 = vmatprep.subr.mxu0 0.0
        %4642 = vmatpush1.msra.mxu0 %v4552
        %4643 = vmatprep.subr.mxu0 0.0
        %4644 = vmatpush1.msra.mxu0 %v4554
        %4645 = vmatprep.subr.mxu0 0.0
        %4646 = vmatpush1.msra.mxu0 %v4556
        %4647 = vmatprep.subr.mxu0 0.0
        %4648 = vmatpush1.msra.mxu0 %v4558
        %4649 = vmatprep.subr.mxu0 0.0
        %4650 = vmatpush1.msra.mxu0 %v4560
        %4651 = vmatprep.subr.mxu0 0.0
        %4652 = vmatpush1.msra.mxu0 %v4562
        %4653 = vmatprep.subr.mxu0 0.0
        %4654 = vmatpush1.msra.mxu0 0.0
        %4655 = vmatprep.subr.mxu0 0.0
        %4656 = vmatpush1.msra.mxu0 0.0
        %4657 = vmatprep.subr.mxu0 0.0
        %4658 = vmatpush1.msra.mxu0 0.0
        %4659 = vmatprep.subr.mxu0 0.0
        %4660 = vmatpush1.msra.mxu0 0.0
        %4661 = vmatprep.subr.mxu0 0.0
        %4662 = vmatpush1.msra.mxu0 0.0
        %4663 = vmatprep.subr.mxu0 0.0
        %4664 = vmatpush1.msra.mxu0 0.0
        %4665 = vmatprep.subr.mxu0 0.0
        %4666 = vmatpush1.msra.mxu0 0.0
        %4667 = vmatprep.subr.mxu0 0.0
        %4668 = vmatpush1.msra.mxu0 0.0
        %4669 = vmatprep.subr.mxu0 0.0
        %4670 = vmatpush1.msra.mxu0 0.0
        %4671 = vmatprep.subr.mxu0 0.0
        %4672 = vmatpush1.msra.mxu0 0.0
        %4673 = vmatprep.mubr.f32.mxu0 %v4586
        %4674 = vmatmul.mubr.f32.gmra.mrb[0].mxu0 %v4503
        %v4675 = vpop.f32.mrb[0].mxu0
        %v4676 = vadd.f32 0.0, %v4675
        %v4677 = vpop.f32.mrb[0].mxu0
        %4678 = vmatprep.mubr.f32.mxu0 %v4589
        %4679 = vmatmul.mubr.f32.gmra.mrb[0].mxu0 %v4505
        %v4680 = vpop.f32.mrb[0].mxu0
        %v4681 = vadd.f32 0.0, %v4680
        %v4682 = vpop.f32.mrb[0].mxu0
        %4683 = vmatprep.mubr.f32.mxu0 %v4592
        %4684 = vmatmul.mubr.f32.gmra.mrb[0].mxu0 %v4507
        %v4685 = vpop.f32.mrb[0].mxu0
        %v4686 = vadd.f32 0.0, %v4685
        %v4687 = vpop.f32.mrb[0].mxu0
        %4688 = vmatprep.mubr.f32.mxu0 %v4595
        %4689 = vmatmul.mubr.f32.gmra.mrb[0].mxu0 %v4509
        %v4690 = vpop.f32.mrb[0].mxu0
        %v4691 = vadd.f32 0.0, %v4690
        %v4692 = vpop.f32.mrb[0].mxu0
        %4693 = vmatprep.mubr.f32.mxu0 %v4598
        %4694 = vmatmul.mubr.f32.gmra.mrb[0].mxu0 %v4511
        %v4695 = vpop.f32.mrb[0].mxu0
        %v4696 = vadd.f32 0.0, %v4695
        %v4697 = vpop.f32.mrb[0].mxu0
        %4698 = vmatprep.mubr.f32.mxu0 %v4601
        %4699 = vmatmul.mubr.f32.gmra.mrb[0].mxu0 %v4513
        %v4700 = vpop.f32.mrb[0].mxu0
        %v4701 = vadd.f32 0.0, %v4700
        %v4702 = vpop.f32.mrb[0].mxu0
        %4703 = vmatprep.mubr.f32.mxu0 %v4604
        %4704 = vmatmul.mubr.f32.gmra.mrb[0].mxu0 %v4515
        %v4705 = vpop.f32.mrb[0].mxu0
        %v4706 = vadd.f32 0.0, %v4705
        %v4707 = vpop.f32.mrb[0].mxu0
        %4708 = vmatprep.mubr.f32.mxu0 %v4607
        %4709 = vmatmul.mubr.f32.gmra.mrb[0].mxu0 %v4517
        %v4710 = vpop.f32.mrb[0].mxu0
        %v4711 = vadd.f32 0.0, %v4710
        %v4712 = vpop.f32.mrb[0].mxu0
        %4713 = vdwg.mxu0
        %v4714 = vadd.f32 %v4494, %v4676
        %v4715 = vadd.f32 %v4495, %v4681
        %v4716 = vadd.f32 %v4496, %v4686
        %v4717 = vadd.f32 %v4497, %v4691
        %v4718 = vadd.f32 %v4498, %v4696
        %v4719 = vadd.f32 %v4499, %v4701
        %v4720 = vadd.f32 %v4500, %v4706
        %v4721 = vadd.f32 %v4501, %v4711
        %v4722 = vld [vmem:[%s6] sm:$0xff]
        %v4723 = vld [vmem:[%s6 + $0x8] sm:$0xff]
        %v4724 = vld [vmem:[%s6 + $0x10] sm:$0xff]
        %v4725 = vld [vmem:[%s6 + $0x18] sm:$0xff]
        %v4726 = vld [vmem:[%s6 + $0x20] sm:$0xff]
        %v4727 = vld [vmem:[%s6 + $0x28] sm:$0xff]
        %v4728 = vld [vmem:[%s6 + $0x30] sm:$0xff]
        %v4729 = vld [vmem:[%s6 + $0x38] sm:$0xff]
        %4731 = vset.pattern.permute.xlu0 0
        %4732 = vperm.xlu0 %4731, %v4722
        %v4733 = vpop.permute.xlu0 %4732
        %4736 = vset.pattern.permute.xlu0 0
        %4737 = vperm.xlu0 %4736, %v4723
        %v4738 = vpop.permute.xlu0 %4737
        %4741 = vset.pattern.permute.xlu0 0
        %4742 = vperm.xlu0 %4741, %v4724
        %v4743 = vpop.permute.xlu0 %4742
        %4746 = vset.pattern.permute.xlu0 0
        %4747 = vperm.xlu0 %4746, %v4725
        %v4748 = vpop.permute.xlu0 %4747
        %4751 = vset.pattern.permute.xlu0 0
        %4752 = vperm.xlu0 %4751, %v4726
        %v4753 = vpop.permute.xlu0 %4752
        %4756 = vset.pattern.permute.xlu0 0
        %4757 = vperm.xlu0 %4756, %v4727
        %v4758 = vpop.permute.xlu0 %4757
        %4761 = vset.pattern.permute.xlu0 0
        %4762 = vperm.xlu0 %4761, %v4728
        %v4763 = vpop.permute.xlu0 %4762
        %4766 = vset.pattern.permute.xlu0 0
        %4767 = vperm.xlu0 %4766, %v4729
        %v4768 = vpop.permute.xlu0 %4767
        %v4770 = vadd.f32 %v4714, %v4733
        %v4771 = vadd.f32 %v4715, %v4738
        %v4772 = vadd.f32 %v4716, %v4743
        %v4773 = vadd.f32 %v4717, %v4748
        %v4774 = vadd.f32 %v4718, %v4753
        %v4775 = vadd.f32 %v4719, %v4758
        %v4776 = vadd.f32 %v4720, %v4763
        %v4777 = vadd.f32 %v4721, %v4768
        %v4778 = vmax.f32 %v4770, 0.0
        %v4779 = vmax.f32 %v4771, 0.0
        %v4780 = vmax.f32 %v4772, 0.0
        %v4781 = vmax.f32 %v4773, 0.0
        %v4782 = vmax.f32 %v4774, 0.0
        %v4783 = vmax.f32 %v4775, 0.0
        %v4784 = vmax.f32 %v4776, 0.0
        %v4785 = vmax.f32 %v4777, 0.0
        %v4786 = vld [vmem:[%s10] sm:$0xff]
        %v4787 = vld [vmem:[%s10 + $0x8] sm:$0xff]
        %vm4788 = vcmask 130048
        %v4790 = vsel %vm4788, %v4778, 0
        %v4793 = vsel %vm4788, %v4779, 0
        %v4796 = vsel %vm4788, %v4780, 0
        %v4799 = vsel %vm4788, %v4781, 0
        %v4802 = vsel %vm4788, %v4782, 0
        %v4805 = vsel %vm4788, %v4783, 0
        %v4808 = vsel %vm4788, %v4784, 0
        %v4811 = vsel %vm4788, %v4785, 0
        %4813 = vmatprep.subr.mxu0 0.0
        %4814 = vmatpush1.msra.mxu0 %v4786
        %4815 = vmatprep.subr.mxu0 0.0
        %4816 = vmatpush1.msra.mxu0 %v4787
        %4817 = vmatprep.subr.mxu0 0.0
        %4818 = vmatpush1.msra.mxu0 0.0
        %4819 = vmatprep.subr.mxu0 0.0
        %4820 = vmatpush1.msra.mxu0 0.0
        %4821 = vmatprep.subr.mxu0 0.0
        %4822 = vmatpush1.msra.mxu0 0.0
        %4823 = vmatprep.subr.mxu0 0.0
        %4824 = vmatpush1.msra.mxu0 0.0
        %4825 = vmatprep.subr.mxu0 0.0
        %4826 = vmatpush1.msra.mxu0 0.0
        %4827 = vmatprep.subr.mxu0 0.0
        %4828 = vmatpush1.msra.mxu0 0.0
        %4829 = vmatprep.subr.mxu0 0.0
        %4830 = vmatpush1.msra.mxu0 0.0
        %4831 = vmatprep.subr.mxu0 0.0
        %4832 = vmatpush1.msra.mxu0 0.0
        %4833 = vmatprep.subr.mxu0 0.0
        %4834 = vmatpush1.msra.mxu0 0.0
        %4835 = vmatprep.subr.mxu0 0.0
        %4836 = vmatpush1.msra.mxu0 0.0
        %4837 = vmatprep.subr.mxu0 0.0
        %4838 = vmatpush1.msra.mxu0 0.0
        %4839 = vmatprep.subr.mxu0 0.0
        %4840 = vmatpush1.msra.mxu0 0.0
        %4841 = vmatprep.subr.mxu0 0.0
        %4842 = vmatpush1.msra.mxu0 0.0
        %4843 = vmatprep.subr.mxu0 0.0
        %4844 = vmatpush1.msra.mxu0 0.0
        %4845 = vmatprep.subr.mxu0 0.0
        %4846 = vmatpush1.msra.mxu0 0.0
        %4847 = vmatprep.subr.mxu0 0.0
        %4848 = vmatpush1.msra.mxu0 0.0
        %4849 = vmatprep.subr.mxu0 0.0
        %4850 = vmatpush1.msra.mxu0 0.0
        %4851 = vmatprep.subr.mxu0 0.0
        %4852 = vmatpush1.msra.mxu0 0.0
        %4853 = vmatprep.subr.mxu0 0.0
        %4854 = vmatpush1.msra.mxu0 0.0
        %4855 = vmatprep.subr.mxu0 0.0
        %4856 = vmatpush1.msra.mxu0 0.0
        %4857 = vmatprep.subr.mxu0 0.0
        %4858 = vmatpush1.msra.mxu0 0.0
        %4859 = vmatprep.subr.mxu0 0.0
        %4860 = vmatpush1.msra.mxu0 0.0
        %4861 = vmatprep.subr.mxu0 0.0
        %4862 = vmatpush1.msra.mxu0 0.0
        %4863 = vmatprep.subr.mxu0 0.0
        %4864 = vmatpush1.msra.mxu0 0.0
        %4865 = vmatprep.subr.mxu0 0.0
        %4866 = vmatpush1.msra.mxu0 0.0
        %4867 = vmatprep.subr.mxu0 0.0
        %4868 = vmatpush1.msra.mxu0 0.0
        %4869 = vmatprep.subr.mxu0 0.0
        %4870 = vmatpush1.msra.mxu0 0.0
        %4871 = vmatprep.subr.mxu0 0.0
        %4872 = vmatpush1.msra.mxu0 0.0
        %4873 = vmatprep.subr.mxu0 0.0
        %4874 = vmatpush1.msra.mxu0 0.0
        %4875 = vmatprep.subr.mxu0 0.0
        %4876 = vmatpush1.msra.mxu0 0.0
        %4877 = vmatprep.mubr.f32.mxu0 0.0
        %4878 = vmatmul.mubr.f32.gmra.mrb[0].mxu0 %v4790
        %v4879 = vpop.f32.mrb[0].mxu0
        %v4880 = vadd.f32 0.0, %v4879
        %v4881 = vpop.f32.mrb[0].mxu0
        %4882 = vmatprep.mubr.f32.mxu0 0.0
        %4883 = vmatmul.mubr.f32.gmra.mrb[0].mxu0 %v4793
        %v4884 = vpop.f32.mrb[0].mxu0
        %v4885 = vadd.f32 0.0, %v4884
        %v4886 = vpop.f32.mrb[0].mxu0
        %4887 = vmatprep.mubr.f32.mxu0 0.0
        %4888 = vmatmul.mubr.f32.gmra.mrb[0].mxu0 %v4796
        %v4889 = vpop.f32.mrb[0].mxu0
        %v4890 = vadd.f32 0.0, %v4889
        %v4891 = vpop.f32.mrb[0].mxu0
        %4892 = vmatprep.mubr.f32.mxu0 0.0
        %4893 = vmatmul.mubr.f32.gmra.mrb[0].mxu0 %v4799
        %v4894 = vpop.f32.mrb[0].mxu0
        %v4895 = vadd.f32 0.0, %v4894
        %v4896 = vpop.f32.mrb[0].mxu0
        %4897 = vmatprep.mubr.f32.mxu0 0.0
        %4898 = vmatmul.mubr.f32.gmra.mrb[0].mxu0 %v4802
        %v4899 = vpop.f32.mrb[0].mxu0
        %v4900 = vadd.f32 0.0, %v4899
        %v4901 = vpop.f32.mrb[0].mxu0
        %4902 = vmatprep.mubr.f32.mxu0 0.0
        %4903 = vmatmul.mubr.f32.gmra.mrb[0].mxu0 %v4805
        %v4904 = vpop.f32.mrb[0].mxu0
        %v4905 = vadd.f32 0.0, %v4904
        %v4906 = vpop.f32.mrb[0].mxu0
        %4907 = vmatprep.mubr.f32.mxu0 0.0
        %4908 = vmatmul.mubr.f32.gmra.mrb[0].mxu0 %v4808
        %v4909 = vpop.f32.mrb[0].mxu0
        %v4910 = vadd.f32 0.0, %v4909
        %v4911 = vpop.f32.mrb[0].mxu0
        %4912 = vmatprep.mubr.f32.mxu0 0.0
        %4913 = vmatmul.mubr.f32.gmra.mrb[0].mxu0 %v4811
        %v4914 = vpop.f32.mrb[0].mxu0
        %v4915 = vadd.f32 0.0, %v4914
        %v4916 = vpop.f32.mrb[0].mxu0
        %4917 = vdwg.mxu0
        %vm4918 = vcmask 310272
        %4919 = vst.msk [vmem:[#allocation4] sm:$0xff] %vm4918, 0.0
        %4920 = vst.msk [vmem:[#allocation4 + $0x8] sm:$0xff] %vm4918, 0.0
        %4921 = vst.msk [vmem:[#allocation4 + $0x10] sm:$0xff] %vm4918, 0.0
        %4922 = vst.msk [vmem:[#allocation4 + $0x18] sm:$0xff] %vm4918, 0.0
        %4923 = vst.msk [vmem:[#allocation4 + $0x20] sm:$0xff] %vm4918, 0.0
        %4924 = vst.msk [vmem:[#allocation4 + $0x28] sm:$0xff] %vm4918, 0.0
        %4925 = vst.msk [vmem:[#allocation4 + $0x30] sm:$0xff] %vm4918, 0.0
        %4926 = vst.msk [vmem:[#allocation4 + $0x38] sm:$0xff] %vm4918, 0.0
        %4927 = vst.msk [vmem:[#allocation4 + $0x40] sm:$0xff] %vm4918, 0.0
        %4928 = vst.msk [vmem:[#allocation4 + $0x48] sm:$0xff] %vm4918, 0.0
        %4929 = vst.msk [vmem:[#allocation4 + $0x50] sm:$0xff] %vm4918, 0.0
        %4930 = vst.msk [vmem:[#allocation4 + $0x58] sm:$0xff] %vm4918, 0.0
        %4931 = vst.msk [vmem:[#allocation4 + $0x60] sm:$0xff] %vm4918, 0.0
        %4932 = vst.msk [vmem:[#allocation4 + $0x68] sm:$0xff] %vm4918, 0.0
        %4933 = vst.msk [vmem:[#allocation4 + $0x70] sm:$0xff] %vm4918, 0.0
        %4934 = vst.msk [vmem:[#allocation4 + $0x78] sm:$0xff] %vm4918, 0.0
        %4935 = vst.msk [vmem:[#allocation4 + $0x80] sm:$0xff] %vm4918, 0.0
        %4936 = vst.msk [vmem:[#allocation4 + $0x88] sm:$0xff] %vm4918, 0.0
        %4937 = vst.msk [vmem:[#allocation4 + $0x90] sm:$0xff] %vm4918, 0.0
        %v4938 = vld [vmem:[%s13] sm:$0xff]
        %v4939 = vld [vmem:[%s13 + $0x8] sm:$0xff]
        %v4940 = vld [vmem:[%s13 + $0x10] sm:$0xff]
        %v4941 = vld [vmem:[%s13 + $0x18] sm:$0xff]
        %v4943 = vsel %vm4788, %v4938, 0
        %v4946 = vsel %vm4788, %v4939, 0
        %v4949 = vsel %vm4788, %v4940, 0
        %v4952 = vsel %vm4788, %v4941, 0
        %4954 = vmatprep.subr.mxu0 0.0
        %4955 = vmatpush1.msra.mxu0 %v4880
        %4956 = vmatprep.subr.mxu0 0.0
        %4957 = vmatpush1.msra.mxu0 %v4885
        %4958 = vmatprep.subr.mxu0 0.0
        %4959 = vmatpush1.msra.mxu0 0.0
        %4960 = vmatprep.subr.mxu0 0.0
        %4961 = vmatpush1.msra.mxu0 0.0
        %4962 = vmatprep.subr.mxu0 0.0
        %4963 = vmatpush1.msra.mxu0 0.0
        %4964 = vmatprep.subr.mxu0 0.0
        %4965 = vmatpush1.msra.mxu0 0.0
        %4966 = vmatprep.subr.mxu0 0.0
        %4967 = vmatpush1.msra.mxu0 0.0
        %4968 = vmatprep.subr.mxu0 0.0
        %4969 = vmatpush1.msra.mxu0 0.0
        %4970 = vmatprep.subr.mxu0 0.0
        %4971 = vmatpush1.msra.mxu0 0.0
        %4972 = vmatprep.subr.mxu0 0.0
        %4973 = vmatpush1.msra.mxu0 0.0
        %4974 = vmatprep.subr.mxu0 0.0
        %4975 = vmatpush1.msra.mxu0 0.0
        %4976 = vmatprep.subr.mxu0 0.0
        %4977 = vmatpush1.msra.mxu0 0.0
        %4978 = vmatprep.subr.mxu0 0.0
        %4979 = vmatpush1.msra.mxu0 0.0
        %4980 = vmatprep.subr.mxu0 0.0
        %4981 = vmatpush1.msra.mxu0 0.0
        %4982 = vmatprep.subr.mxu0 0.0
        %4983 = vmatpush1.msra.mxu0 0.0
        %4984 = vmatprep.subr.mxu0 0.0
        %4985 = vmatpush1.msra.mxu0 0.0
        %4986 = vmatprep.subr.mxu0 0.0
        %4987 = vmatpush1.msra.mxu0 0.0
        %4988 = vmatprep.subr.mxu0 0.0
        %4989 = vmatpush1.msra.mxu0 0.0
        %4990 = vmatprep.subr.mxu0 0.0
        %4991 = vmatpush1.msra.mxu0 0.0
        %4992 = vmatprep.subr.mxu0 0.0
        %4993 = vmatpush1.msra.mxu0 0.0
        %4994 = vmatprep.subr.mxu0 0.0
        %4995 = vmatpush1.msra.mxu0 0.0
        %4996 = vmatprep.subr.mxu0 0.0
        %4997 = vmatpush1.msra.mxu0 0.0
        %4998 = vmatprep.subr.mxu0 0.0
        %4999 = vmatpush1.msra.mxu0 0.0
        %5000 = vmatprep.subr.mxu0 0.0
        %5001 = vmatpush1.msra.mxu0 0.0
        %5002 = vmatprep.subr.mxu0 0.0
        %5003 = vmatpush1.msra.mxu0 0.0
        %5004 = vmatprep.subr.mxu0 0.0
        %5005 = vmatpush1.msra.mxu0 0.0
        %5006 = vmatprep.subr.mxu0 0.0
        %5007 = vmatpush1.msra.mxu0 0.0
        %5008 = vmatprep.subr.mxu0 0.0
        %5009 = vmatpush1.msra.mxu0 0.0
        %5010 = vmatprep.subr.mxu0 0.0
        %5011 = vmatpush1.msra.mxu0 0.0
        %5012 = vmatprep.subr.mxu0 0.0
        %5013 = vmatpush1.msra.mxu0 0.0
        %5014 = vmatprep.subr.mxu0 0.0
        %5015 = vmatpush1.msra.mxu0 0.0
        %5016 = vmatprep.subr.mxu0 0.0
        %5017 = vmatpush1.msra.mxu0 0.0
        %5018 = vmatprep.mubr.f32.mxu0 0.0
        %5019 = vmatmul.mubr.f32.gmra.mrb[0].mxu0 %v4943
        %v5020 = vpop.f32.mrb[0].mxu0
        %v5021 = vadd.f32 0.0, %v5020
        %v5022 = vpop.f32.mrb[0].mxu0
        %5023 = vmatprep.mubr.f32.mxu0 0.0
        %5024 = vmatmul.mubr.f32.gmra.mrb[0].mxu0 %v4946
        %v5025 = vpop.f32.mrb[0].mxu0
        %v5026 = vadd.f32 0.0, %v5025
        %v5027 = vpop.f32.mrb[0].mxu0
        %5028 = vmatprep.mubr.f32.mxu0 0.0
        %5029 = vmatmul.mubr.f32.gmra.mrb[0].mxu0 %v4949
        %v5030 = vpop.f32.mrb[0].mxu0
        %v5031 = vadd.f32 0.0, %v5030
        %v5032 = vpop.f32.mrb[0].mxu0
        %5033 = vmatprep.mubr.f32.mxu0 0.0
        %5034 = vmatmul.mubr.f32.gmra.mrb[0].mxu0 %v4952
        %v5035 = vpop.f32.mrb[0].mxu0
        %v5036 = vadd.f32 0.0, %v5035
        %v5037 = vpop.f32.mrb[0].mxu0
        %5038 = vdwg.mxu0
        %5043 = vrot.lane.b32.xlu0 %v5021, 3
        %v5044 = vpop.permute.xlu0 %5043
        %5045 = vrot.lane.b32.xlu0 %v5026, 3
        %v5046 = vpop.permute.xlu0 %5045
        %5047 = vrot.lane.b32.xlu0 %v5031, 3
        %v5048 = vpop.permute.xlu0 %5047
        %5049 = vrot.lane.b32.xlu0 %v5036, 3
        %v5050 = vpop.permute.xlu0 %5049
        %vm5055 = vcmask 285720
        %5056 = vst.msk [vmem:[#allocation4 + $0x3] sm:$0xff] %vm5055, %v5044
        %5057 = vst.msk [vmem:[#allocation4 + $0xb] sm:$0xff] %vm5055, %v5046
        %5058 = vst.msk [vmem:[#allocation4 + $0x13] sm:$0xff] %vm5055, %v5048
        %5059 = vst.msk [vmem:[#allocation4 + $0x1b] sm:$0xff] %vm5055, %v5050
        %5060 = vmatprep.subr.mxu0 0.0
        %5061 = vmatpush1.msra.mxu0 %v4890
        %5062 = vmatprep.subr.mxu0 0.0
        %5063 = vmatpush1.msra.mxu0 %v4895
        %5064 = vmatprep.subr.mxu0 0.0
        %5065 = vmatpush1.msra.mxu0 0.0
        %5066 = vmatprep.subr.mxu0 0.0
        %5067 = vmatpush1.msra.mxu0 0.0
        %5068 = vmatprep.subr.mxu0 0.0
        %5069 = vmatpush1.msra.mxu0 0.0
        %5070 = vmatprep.subr.mxu0 0.0
        %5071 = vmatpush1.msra.mxu0 0.0
        %5072 = vmatprep.subr.mxu0 0.0
        %5073 = vmatpush1.msra.mxu0 0.0
        %5074 = vmatprep.subr.mxu0 0.0
        %5075 = vmatpush1.msra.mxu0 0.0
        %5076 = vmatprep.subr.mxu0 0.0
        %5077 = vmatpush1.msra.mxu0 0.0
        %5078 = vmatprep.subr.mxu0 0.0
        %5079 = vmatpush1.msra.mxu0 0.0
        %5080 = vmatprep.subr.mxu0 0.0
        %5081 = vmatpush1.msra.mxu0 0.0
        %5082 = vmatprep.subr.mxu0 0.0
        %5083 = vmatpush1.msra.mxu0 0.0
        %5084 = vmatprep.subr.mxu0 0.0
        %5085 = vmatpush1.msra.mxu0 0.0
        %5086 = vmatprep.subr.mxu0 0.0
        %5087 = vmatpush1.msra.mxu0 0.0
        %5088 = vmatprep.subr.mxu0 0.0
        %5089 = vmatpush1.msra.mxu0 0.0
        %5090 = vmatprep.subr.mxu0 0.0
        %5091 = vmatpush1.msra.mxu0 0.0
        %5092 = vmatprep.subr.mxu0 0.0
        %5093 = vmatpush1.msra.mxu0 0.0
        %5094 = vmatprep.subr.mxu0 0.0
        %5095 = vmatpush1.msra.mxu0 0.0
        %5096 = vmatprep.subr.mxu0 0.0
        %5097 = vmatpush1.msra.mxu0 0.0
        %5098 = vmatprep.subr.mxu0 0.0
        %5099 = vmatpush1.msra.mxu0 0.0
        %5100 = vmatprep.subr.mxu0 0.0
        %5101 = vmatpush1.msra.mxu0 0.0
        %5102 = vmatprep.subr.mxu0 0.0
        %5103 = vmatpush1.msra.mxu0 0.0
        %5104 = vmatprep.subr.mxu0 0.0
        %5105 = vmatpush1.msra.mxu0 0.0
        %5106 = vmatprep.subr.mxu0 0.0
        %5107 = vmatpush1.msra.mxu0 0.0
        %5108 = vmatprep.subr.mxu0 0.0
        %5109 = vmatpush1.msra.mxu0 0.0
        %5110 = vmatprep.subr.mxu0 0.0
        %5111 = vmatpush1.msra.mxu0 0.0
        %5112 = vmatprep.subr.mxu0 0.0
        %5113 = vmatpush1.msra.mxu0 0.0
        %5114 = vmatprep.subr.mxu0 0.0
        %5115 = vmatpush1.msra.mxu0 0.0
        %5116 = vmatprep.subr.mxu0 0.0
        %5117 = vmatpush1.msra.mxu0 0.0
        %5118 = vmatprep.subr.mxu0 0.0
        %5119 = vmatpush1.msra.mxu0 0.0
        %5120 = vmatprep.subr.mxu0 0.0
        %5121 = vmatpush1.msra.mxu0 0.0
        %5122 = vmatprep.subr.mxu0 0.0
        %5123 = vmatpush1.msra.mxu0 0.0
        %5124 = vmatprep.mubr.f32.mxu0 0.0
        %5125 = vmatmul.mubr.f32.gmra.mrb[0].mxu0 %v4943
        %v5126 = vpop.f32.mrb[0].mxu0
        %v5127 = vadd.f32 0.0, %v5126
        %v5128 = vpop.f32.mrb[0].mxu0
        %5129 = vmatprep.mubr.f32.mxu0 0.0
        %5130 = vmatmul.mubr.f32.gmra.mrb[0].mxu0 %v4946
        %v5131 = vpop.f32.mrb[0].mxu0
        %v5132 = vadd.f32 0.0, %v5131
        %v5133 = vpop.f32.mrb[0].mxu0
        %5134 = vmatprep.mubr.f32.mxu0 0.0
        %5135 = vmatmul.mubr.f32.gmra.mrb[0].mxu0 %v4949
        %v5136 = vpop.f32.mrb[0].mxu0
        %v5137 = vadd.f32 0.0, %v5136
        %v5138 = vpop.f32.mrb[0].mxu0
        %5139 = vmatprep.mubr.f32.mxu0 0.0
        %5140 = vmatmul.mubr.f32.gmra.mrb[0].mxu0 %v4952
        %v5141 = vpop.f32.mrb[0].mxu0
        %v5142 = vadd.f32 0.0, %v5141
        %v5143 = vpop.f32.mrb[0].mxu0
        %5144 = vdwg.mxu0
        %5149 = vrot.lane.b32.xlu0 %v5127, 3
        %v5150 = vpop.permute.xlu0 %5149
        %5151 = vrot.lane.b32.xlu0 %v5132, 3
        %v5152 = vpop.permute.xlu0 %5151
        %5153 = vrot.lane.b32.xlu0 %v5137, 3
        %v5154 = vpop.permute.xlu0 %5153
        %5155 = vrot.lane.b32.xlu0 %v5142, 3
        %v5156 = vpop.permute.xlu0 %5155
        %5161 = vst.msk [vmem:[#allocation4 + $0x29] sm:$0xff] %vm5055, %v5150
        %5162 = vst.msk [vmem:[#allocation4 + $0x31] sm:$0xff] %vm5055, %v5152
        %5163 = vst.msk [vmem:[#allocation4 + $0x39] sm:$0xff] %vm5055, %v5154
        %5164 = vst.msk [vmem:[#allocation4 + $0x41] sm:$0xff] %vm5055, %v5156
        %5165 = vmatprep.subr.mxu0 0.0
        %5166 = vmatpush1.msra.mxu0 %v4900
        %5167 = vmatprep.subr.mxu0 0.0
        %5168 = vmatpush1.msra.mxu0 %v4905
        %5169 = vmatprep.subr.mxu0 0.0
        %5170 = vmatpush1.msra.mxu0 0.0
        %5171 = vmatprep.subr.mxu0 0.0
        %5172 = vmatpush1.msra.mxu0 0.0
        %5173 = vmatprep.subr.mxu0 0.0
        %5174 = vmatpush1.msra.mxu0 0.0
        %5175 = vmatprep.subr.mxu0 0.0
        %5176 = vmatpush1.msra.mxu0 0.0
        %5177 = vmatprep.subr.mxu0 0.0
        %5178 = vmatpush1.msra.mxu0 0.0
        %5179 = vmatprep.subr.mxu0 0.0
        %5180 = vmatpush1.msra.mxu0 0.0
        %5181 = vmatprep.subr.mxu0 0.0
        %5182 = vmatpush1.msra.mxu0 0.0
        %5183 = vmatprep.subr.mxu0 0.0
        %5184 = vmatpush1.msra.mxu0 0.0
        %5185 = vmatprep.subr.mxu0 0.0
        %5186 = vmatpush1.msra.mxu0 0.0
        %5187 = vmatprep.subr.mxu0 0.0
        %5188 = vmatpush1.msra.mxu0 0.0
        %5189 = vmatprep.subr.mxu0 0.0
        %5190 = vmatpush1.msra.mxu0 0.0
        %5191 = vmatprep.subr.mxu0 0.0
        %5192 = vmatpush1.msra.mxu0 0.0
        %5193 = vmatprep.subr.mxu0 0.0
        %5194 = vmatpush1.msra.mxu0 0.0
        %5195 = vmatprep.subr.mxu0 0.0
        %5196 = vmatpush1.msra.mxu0 0.0
        %5197 = vmatprep.subr.mxu0 0.0
        %5198 = vmatpush1.msra.mxu0 0.0
        %5199 = vmatprep.subr.mxu0 0.0
        %5200 = vmatpush1.msra.mxu0 0.0
        %5201 = vmatprep.subr.mxu0 0.0
        %5202 = vmatpush1.msra.mxu0 0.0
        %5203 = vmatprep.subr.mxu0 0.0
        %5204 = vmatpush1.msra.mxu0 0.0
        %5205 = vmatprep.subr.mxu0 0.0
        %5206 = vmatpush1.msra.mxu0 0.0
        %5207 = vmatprep.subr.mxu0 0.0
        %5208 = vmatpush1.msra.mxu0 0.0
        %5209 = vmatprep.subr.mxu0 0.0
        %5210 = vmatpush1.msra.mxu0 0.0
        %5211 = vmatprep.subr.mxu0 0.0
        %5212 = vmatpush1.msra.mxu0 0.0
        %5213 = vmatprep.subr.mxu0 0.0
        %5214 = vmatpush1.msra.mxu0 0.0
        %5215 = vmatprep.subr.mxu0 0.0
        %5216 = vmatpush1.msra.mxu0 0.0
        %5217 = vmatprep.subr.mxu0 0.0
        %5218 = vmatpush1.msra.mxu0 0.0
        %5219 = vmatprep.subr.mxu0 0.0
        %5220 = vmatpush1.msra.mxu0 0.0
        %5221 = vmatprep.subr.mxu0 0.0
        %5222 = vmatpush1.msra.mxu0 0.0
        %5223 = vmatprep.subr.mxu0 0.0
        %5224 = vmatpush1.msra.mxu0 0.0
        %5225 = vmatprep.subr.mxu0 0.0
        %5226 = vmatpush1.msra.mxu0 0.0
        %5227 = vmatprep.subr.mxu0 0.0
        %5228 = vmatpush1.msra.mxu0 0.0
        %5229 = vmatprep.mubr.f32.mxu0 0.0
        %5230 = vmatmul.mubr.f32.gmra.mrb[0].mxu0 %v4943
        %v5231 = vpop.f32.mrb[0].mxu0
        %v5232 = vadd.f32 0.0, %v5231
        %v5233 = vpop.f32.mrb[0].mxu0
        %5234 = vmatprep.mubr.f32.mxu0 0.0
        %5235 = vmatmul.mubr.f32.gmra.mrb[0].mxu0 %v4946
        %v5236 = vpop.f32.mrb[0].mxu0
        %v5237 = vadd.f32 0.0, %v5236
        %v5238 = vpop.f32.mrb[0].mxu0
        %5239 = vmatprep.mubr.f32.mxu0 0.0
        %5240 = vmatmul.mubr.f32.gmra.mrb[0].mxu0 %v4949
        %v5241 = vpop.f32.mrb[0].mxu0
        %v5242 = vadd.f32 0.0, %v5241
        %v5243 = vpop.f32.mrb[0].mxu0
        %5244 = vmatprep.mubr.f32.mxu0 0.0
        %5245 = vmatmul.mubr.f32.gmra.mrb[0].mxu0 %v4952
        %v5246 = vpop.f32.mrb[0].mxu0
        %v5247 = vadd.f32 0.0, %v5246
        %v5248 = vpop.f32.mrb[0].mxu0
        %5249 = vdwg.mxu0
        %5254 = vrot.lane.b32.xlu0 %v5232, 3
        %v5255 = vpop.permute.xlu0 %5254
        %5256 = vrot.lane.b32.xlu0 %v5237, 3
        %v5257 = vpop.permute.xlu0 %5256
        %5258 = vrot.lane.b32.xlu0 %v5242, 3
        %v5259 = vpop.permute.xlu0 %5258
        %5260 = vrot.lane.b32.xlu0 %v5247, 3
        %v5261 = vpop.permute.xlu0 %5260
        %5266 = vst.msk [vmem:[#allocation4 + $0x4f] sm:$0xff] %vm5055, %v5255
        %5267 = vst.msk [vmem:[#allocation4 + $0x57] sm:$0xff] %vm5055, %v5257
        %5268 = vst.msk [vmem:[#allocation4 + $0x5f] sm:$0xff] %vm5055, %v5259
        %5269 = vst.msk [vmem:[#allocation4 + $0x67] sm:$0xff] %vm5055, %v5261
        %5270 = vmatprep.subr.mxu0 0.0
        %5271 = vmatpush1.msra.mxu0 %v4910
        %5272 = vmatprep.subr.mxu0 0.0
        %5273 = vmatpush1.msra.mxu0 %v4915
        %5274 = vmatprep.subr.mxu0 0.0
        %5275 = vmatpush1.msra.mxu0 0.0
        %5276 = vmatprep.subr.mxu0 0.0
        %5277 = vmatpush1.msra.mxu0 0.0
        %5278 = vmatprep.subr.mxu0 0.0
        %5279 = vmatpush1.msra.mxu0 0.0
        %5280 = vmatprep.subr.mxu0 0.0
        %5281 = vmatpush1.msra.mxu0 0.0
        %5282 = vmatprep.subr.mxu0 0.0
        %5283 = vmatpush1.msra.mxu0 0.0
        %5284 = vmatprep.subr.mxu0 0.0
        %5285 = vmatpush1.msra.mxu0 0.0
        %5286 = vmatprep.subr.mxu0 0.0
        %5287 = vmatpush1.msra.mxu0 0.0
        %5288 = vmatprep.subr.mxu0 0.0
        %5289 = vmatpush1.msra.mxu0 0.0
        %5290 = vmatprep.subr.mxu0 0.0
        %5291 = vmatpush1.msra.mxu0 0.0
        %5292 = vmatprep.subr.mxu0 0.0
        %5293 = vmatpush1.msra.mxu0 0.0
        %5294 = vmatprep.subr.mxu0 0.0
        %5295 = vmatpush1.msra.mxu0 0.0
        %5296 = vmatprep.subr.mxu0 0.0
        %5297 = vmatpush1.msra.mxu0 0.0
        %5298 = vmatprep.subr.mxu0 0.0
        %5299 = vmatpush1.msra.mxu0 0.0
        %5300 = vmatprep.subr.mxu0 0.0
        %5301 = vmatpush1.msra.mxu0 0.0
        %5302 = vmatprep.subr.mxu0 0.0
        %5303 = vmatpush1.msra.mxu0 0.0
        %5304 = vmatprep.subr.mxu0 0.0
        %5305 = vmatpush1.msra.mxu0 0.0
        %5306 = vmatprep.subr.mxu0 0.0
        %5307 = vmatpush1.msra.mxu0 0.0
        %5308 = vmatprep.subr.mxu0 0.0
        %5309 = vmatpush1.msra.mxu0 0.0
        %5310 = vmatprep.subr.mxu0 0.0
        %5311 = vmatpush1.msra.mxu0 0.0
        %5312 = vmatprep.subr.mxu0 0.0
        %5313 = vmatpush1.msra.mxu0 0.0
        %5314 = vmatprep.subr.mxu0 0.0
        %5315 = vmatpush1.msra.mxu0 0.0
        %5316 = vmatprep.subr.mxu0 0.0
        %5317 = vmatpush1.msra.mxu0 0.0
        %5318 = vmatprep.subr.mxu0 0.0
        %5319 = vmatpush1.msra.mxu0 0.0
        %5320 = vmatprep.subr.mxu0 0.0
        %5321 = vmatpush1.msra.mxu0 0.0
        %5322 = vmatprep.subr.mxu0 0.0
        %5323 = vmatpush1.msra.mxu0 0.0
        %5324 = vmatprep.subr.mxu0 0.0
        %5325 = vmatpush1.msra.mxu0 0.0
        %5326 = vmatprep.subr.mxu0 0.0
        %5327 = vmatpush1.msra.mxu0 0.0
        %5328 = vmatprep.subr.mxu0 0.0
        %5329 = vmatpush1.msra.mxu0 0.0
        %5330 = vmatprep.subr.mxu0 0.0
        %5331 = vmatpush1.msra.mxu0 0.0
        %5332 = vmatprep.subr.mxu0 0.0
        %5333 = vmatpush1.msra.mxu0 0.0
        %5334 = vmatprep.mubr.f32.mxu0 0.0
        %5335 = vmatmul.mubr.f32.gmra.mrb[0].mxu0 %v4943
        %v5336 = vpop.f32.mrb[0].mxu0
        %v5337 = vadd.f32 0.0, %v5336
        %v5338 = vpop.f32.mrb[0].mxu0
        %5339 = vmatprep.mubr.f32.mxu0 0.0
        %5340 = vmatmul.mubr.f32.gmra.mrb[0].mxu0 %v4946
        %v5341 = vpop.f32.mrb[0].mxu0
        %v5342 = vadd.f32 0.0, %v5341
        %v5343 = vpop.f32.mrb[0].mxu0
        %5344 = vmatprep.mubr.f32.mxu0 0.0
        %5345 = vmatmul.mubr.f32.gmra.mrb[0].mxu0 %v4949
        %v5346 = vpop.f32.mrb[0].mxu0
        %v5347 = vadd.f32 0.0, %v5346
        %v5348 = vpop.f32.mrb[0].mxu0
        %5349 = vmatprep.mubr.f32.mxu0 0.0
        %5350 = vmatmul.mubr.f32.gmra.mrb[0].mxu0 %v4952
        %v5351 = vpop.f32.mrb[0].mxu0
        %v5352 = vadd.f32 0.0, %v5351
        %v5353 = vpop.f32.mrb[0].mxu0
        %5354 = vdwg.mxu0
        %5359 = vrot.lane.b32.xlu0 %v5337, 3
        %v5360 = vpop.permute.xlu0 %5359
        %5361 = vrot.lane.b32.xlu0 %v5342, 3
        %v5362 = vpop.permute.xlu0 %5361
        %5363 = vrot.lane.b32.xlu0 %v5347, 3
        %v5364 = vpop.permute.xlu0 %5363
        %5365 = vrot.lane.b32.xlu0 %v5352, 3
        %v5366 = vpop.permute.xlu0 %5365
        %5371 = vst.msk [vmem:[#allocation4 + $0x75] sm:$0xff] %vm5055, %v5360
        %5372 = vst.msk [vmem:[#allocation4 + $0x7d] sm:$0xff] %vm5055, %v5362
        %5373 = vst.msk [vmem:[#allocation4 + $0x85] sm:$0xff] %vm5055, %v5364
        %5374 = vst.msk [vmem:[#allocation4 + $0x8d] sm:$0xff] %vm5055, %v5366
        %v5375 = vld [vmem:[#allocation4] sm:$0xff]
        %v5376 = vld [vmem:[#allocation4 + $0x8] sm:$0xff]
        %v5377 = vld [vmem:[#allocation4 + $0x10] sm:$0xff]
        %v5378 = vld [vmem:[#allocation4 + $0x18] sm:$0xff]
        %v5379 = vld [vmem:[#allocation4 + $0x20] sm:$0xff]
        %v5380 = vld [vmem:[#allocation4 + $0x28] sm:$0xff]
        %v5381 = vld [vmem:[#allocation4 + $0x30] sm:$0xff]
        %v5382 = vld [vmem:[#allocation4 + $0x38] sm:$0xff]
        %v5383 = vld [vmem:[#allocation4 + $0x40] sm:$0xff]
        %v5384 = vld [vmem:[#allocation4 + $0x48] sm:$0xff]
        %v5385 = vld [vmem:[#allocation4 + $0x50] sm:$0xff]
        %v5386 = vld [vmem:[#allocation4 + $0x58] sm:$0xff]
        %v5387 = vld [vmem:[#allocation4 + $0x60] sm:$0xff]
        %v5388 = vld [vmem:[#allocation4 + $0x68] sm:$0xff]
        %v5389 = vld [vmem:[#allocation4 + $0x70] sm:$0xff]
        %v5390 = vld [vmem:[#allocation4 + $0x78] sm:$0xff]
        %v5391 = vld [vmem:[#allocation4 + $0x80] sm:$0xff]
        %v5392 = vld [vmem:[#allocation4 + $0x88] sm:$0xff]
        %v5393 = vld [vmem:[#allocation4 + $0x90] sm:$0xff]
        %v5394 = vld [vmem:[%s3] sm:$0xff]
        %v5395 = vld [vmem:[%s3 + $0x8] sm:$0xff]
        %v5396 = vld [vmem:[%s3 + $0x10] sm:$0xff]
        %v5397 = vld [vmem:[%s3 + $0x18] sm:$0xff]
        %v5398 = vld [vmem:[%s3 + $0x20] sm:$0xff]
        %v5399 = vld [vmem:[%s3 + $0x28] sm:$0xff]
        %v5400 = vld [vmem:[%s3 + $0x30] sm:$0xff]
        %v5401 = vld [vmem:[%s3 + $0x38] sm:$0xff]
        %v5402 = vld [vmem:[%s3 + $0x40] sm:$0xff]
        %v5403 = vld [vmem:[%s3 + $0x48] sm:$0xff]
        %v5404 = vld [vmem:[%s3 + $0x50] sm:$0xff]
        %v5405 = vld [vmem:[%s3 + $0x58] sm:$0xff]
        %v5406 = vld [vmem:[%s3 + $0x60] sm:$0xff]
        %v5407 = vld [vmem:[%s3 + $0x68] sm:$0xff]
        %v5408 = vld [vmem:[%s3 + $0x70] sm:$0xff]
        %v5409 = vld [vmem:[%s3 + $0x78] sm:$0xff]
        %s5410 = scalar_lea.vmem %s3, 128
        %v5411 = vld [vmem:[%s5410] sm:$0xff]
        %v5412 = vld [vmem:[%s5410 + $0x8] sm:$0xff]
        %v5413 = vld [vmem:[%s5410 + $0x10] sm:$0xff]
        %v5414 = vld [vmem:[%s5410 + $0x18] sm:$0xff]
        %v5415 = vld [vmem:[%s5410 + $0x20] sm:$0xff]
        %v5416 = vld [vmem:[%s5410 + $0x28] sm:$0xff]
        %v5417 = vld [vmem:[%s5410 + $0x30] sm:$0xff]
        %v5418 = vld [vmem:[%s5410 + $0x38] sm:$0xff]
        %v5419 = vld [vmem:[%s5410 + $0x40] sm:$0xff]
        %v5420 = vld [vmem:[%s5410 + $0x48] sm:$0xff]
        %v5421 = vld [vmem:[%s5410 + $0x50] sm:$0xff]
        %v5422 = vld [vmem:[%s5410 + $0x58] sm:$0xff]
        %v5423 = vld [vmem:[%s5410 + $0x60] sm:$0xff]
        %v5424 = vld [vmem:[%s5410 + $0x68] sm:$0xff]
        %v5425 = vld [vmem:[%s5410 + $0x70] sm:$0xff]
        %v5426 = vld [vmem:[%s5410 + $0x78] sm:$0xff]
        %5446 = vrot.lane.b32.xlu0 %v5375, 127
        %v5447 = vpop.permute.xlu0 %5446
        %5448 = vrot.lane.b32.xlu0 %v5376, 127
        %v5449 = vpop.permute.xlu0 %5448
        %5450 = vrot.lane.b32.xlu0 %v5377, 127
        %v5451 = vpop.permute.xlu0 %5450
        %5452 = vrot.lane.b32.xlu0 %v5378, 127
        %v5453 = vpop.permute.xlu0 %5452
        %5454 = vrot.lane.b32.xlu0 %v5379, 127
        %v5455 = vpop.permute.xlu0 %5454
        %5456 = vrot.lane.b32.xlu0 %v5380, 127
        %v5457 = vpop.permute.xlu0 %5456
        %5458 = vrot.lane.b32.xlu0 %v5381, 127
        %v5459 = vpop.permute.xlu0 %5458
        %5460 = vrot.lane.b32.xlu0 %v5382, 127
        %v5461 = vpop.permute.xlu0 %5460
        %5462 = vrot.lane.b32.xlu0 %v5383, 127
        %v5463 = vpop.permute.xlu0 %5462
        %5464 = vrot.lane.b32.xlu0 %v5384, 127
        %v5465 = vpop.permute.xlu0 %5464
        %5466 = vrot.lane.b32.xlu0 %v5385, 127
        %v5467 = vpop.permute.xlu0 %5466
        %5468 = vrot.lane.b32.xlu0 %v5386, 127
        %v5469 = vpop.permute.xlu0 %5468
        %5470 = vrot.lane.b32.xlu0 %v5387, 127
        %v5471 = vpop.permute.xlu0 %5470
        %5472 = vrot.lane.b32.xlu0 %v5388, 127
        %v5473 = vpop.permute.xlu0 %5472
        %5474 = vrot.lane.b32.xlu0 %v5389, 127
        %v5475 = vpop.permute.xlu0 %5474
        %5476 = vrot.lane.b32.xlu0 %v5390, 127
        %v5477 = vpop.permute.xlu0 %5476
        %5478 = vrot.lane.b32.xlu0 %v5391, 127
        %v5479 = vpop.permute.xlu0 %5478
        %5480 = vrot.lane.b32.xlu0 %v5392, 127
        %v5481 = vpop.permute.xlu0 %5480
        %5482 = vrot.lane.b32.xlu0 %v5393, 127
        %v5483 = vpop.permute.xlu0 %5482
        %vm5503 = vcmask 195584
        %v5505 = vsel %vm5503, %v5412, 0
        %v5508 = vsel %vm5503, %v5414, 0
        %v5511 = vsel %vm5503, %v5416, 0
        %v5514 = vsel %vm5503, %v5418, 0
        %v5517 = vsel %vm5503, %v5420, 0
        %v5520 = vsel %vm5503, %v5422, 0
        %v5523 = vsel %vm5503, %v5424, 0
        %v5526 = vsel %vm5503, %v5426, 0
        %5528 = vmatprep.subr.mxu0 0.0
        %5529 = vmatpush1.msra.mxu0 %v5447
        %5530 = vmatprep.subr.mxu0 0.0
        %5531 = vmatpush1.msra.mxu0 %v5449
        %5532 = vmatprep.subr.mxu0 0.0
        %5533 = vmatpush1.msra.mxu0 %v5451
        %5534 = vmatprep.subr.mxu0 0.0
        %5535 = vmatpush1.msra.mxu0 %v5453
        %5536 = vmatprep.subr.mxu0 0.0
        %5537 = vmatpush1.msra.mxu0 %v5455
        %5538 = vmatprep.subr.mxu0 0.0
        %5539 = vmatpush1.msra.mxu0 %v5457
        %5540 = vmatprep.subr.mxu0 0.0
        %5541 = vmatpush1.msra.mxu0 %v5459
        %5542 = vmatprep.subr.mxu0 0.0
        %5543 = vmatpush1.msra.mxu0 %v5461
        %5544 = vmatprep.subr.mxu0 0.0
        %5545 = vmatpush1.msra.mxu0 %v5463
        %5546 = vmatprep.subr.mxu0 0.0
        %5547 = vmatpush1.msra.mxu0 %v5465
        %5548 = vmatprep.subr.mxu0 0.0
        %5549 = vmatpush1.msra.mxu0 %v5467
        %5550 = vmatprep.subr.mxu0 0.0
        %5551 = vmatpush1.msra.mxu0 %v5469
        %5552 = vmatprep.subr.mxu0 0.0
        %5553 = vmatpush1.msra.mxu0 %v5471
        %5554 = vmatprep.subr.mxu0 0.0
        %5555 = vmatpush1.msra.mxu0 %v5473
        %5556 = vmatprep.subr.mxu0 0.0
        %5557 = vmatpush1.msra.mxu0 %v5475
        %5558 = vmatprep.subr.mxu0 0.0
        %5559 = vmatpush1.msra.mxu0 %v5477
        %5560 = vmatprep.subr.mxu0 0.0
        %5561 = vmatpush1.msra.mxu0 %v5479
        %5562 = vmatprep.subr.mxu0 0.0
        %5563 = vmatpush1.msra.mxu0 %v5481
        %5564 = vmatprep.subr.mxu0 0.0
        %5565 = vmatpush1.msra.mxu0 %v5483
        %5566 = vmatprep.subr.mxu0 0.0
        %5567 = vmatpush1.msra.mxu0 0.0
        %5568 = vmatprep.subr.mxu0 0.0
        %5569 = vmatpush1.msra.mxu0 0.0
        %5570 = vmatprep.subr.mxu0 0.0
        %5571 = vmatpush1.msra.mxu0 0.0
        %5572 = vmatprep.subr.mxu0 0.0
        %5573 = vmatpush1.msra.mxu0 0.0
        %5574 = vmatprep.subr.mxu0 0.0
        %5575 = vmatpush1.msra.mxu0 0.0
        %5576 = vmatprep.subr.mxu0 0.0
        %5577 = vmatpush1.msra.mxu0 0.0
        %5578 = vmatprep.subr.mxu0 0.0
        %5579 = vmatpush1.msra.mxu0 0.0
        %5580 = vmatprep.subr.mxu0 0.0
        %5581 = vmatpush1.msra.mxu0 0.0
        %5582 = vmatprep.subr.mxu0 0.0
        %5583 = vmatpush1.msra.mxu0 0.0
        %5584 = vmatprep.subr.mxu0 0.0
        %5585 = vmatpush1.msra.mxu0 0.0
        %5586 = vmatprep.subr.mxu0 0.0
        %5587 = vmatpush1.msra.mxu0 0.0
        %5588 = vmatprep.subr.mxu0 0.0
        %5589 = vmatpush1.msra.mxu0 0.0
        %5590 = vmatprep.subr.mxu0 0.0
        %5591 = vmatpush1.msra.mxu0 0.0
        %5592 = vmatprep.mubr.f32.mxu0 %v5505
        %5593 = vmatmul.mubr.f32.gmra.mrb[0].mxu0 %v5411
        %v5594 = vpop.f32.mrb[0].mxu0
        %v5595 = vadd.f32 0.0, %v5594
        %v5596 = vpop.f32.mrb[0].mxu0
        %5597 = vmatprep.mubr.f32.mxu0 %v5508
        %5598 = vmatmul.mubr.f32.gmra.mrb[0].mxu0 %v5413
        %v5599 = vpop.f32.mrb[0].mxu0
        %v5600 = vadd.f32 0.0, %v5599
        %v5601 = vpop.f32.mrb[0].mxu0
        %5602 = vmatprep.mubr.f32.mxu0 %v5511
        %5603 = vmatmul.mubr.f32.gmra.mrb[0].mxu0 %v5415
        %v5604 = vpop.f32.mrb[0].mxu0
        %v5605 = vadd.f32 0.0, %v5604
        %v5606 = vpop.f32.mrb[0].mxu0
        %5607 = vmatprep.mubr.f32.mxu0 %v5514
        %5608 = vmatmul.mubr.f32.gmra.mrb[0].mxu0 %v5417
        %v5609 = vpop.f32.mrb[0].mxu0
        %v5610 = vadd.f32 0.0, %v5609
        %v5611 = vpop.f32.mrb[0].mxu0
        %5612 = vmatprep.mubr.f32.mxu0 %v5517
        %5613 = vmatmul.mubr.f32.gmra.mrb[0].mxu0 %v5419
        %v5614 = vpop.f32.mrb[0].mxu0
        %v5615 = vadd.f32 0.0, %v5614
        %v5616 = vpop.f32.mrb[0].mxu0
        %5617 = vmatprep.mubr.f32.mxu0 %v5520
        %5618 = vmatmul.mubr.f32.gmra.mrb[0].mxu0 %v5421
        %v5619 = vpop.f32.mrb[0].mxu0
        %v5620 = vadd.f32 0.0, %v5619
        %v5621 = vpop.f32.mrb[0].mxu0
        %5622 = vmatprep.mubr.f32.mxu0 %v5523
        %5623 = vmatmul.mubr.f32.gmra.mrb[0].mxu0 %v5423
        %v5624 = vpop.f32.mrb[0].mxu0
        %v5625 = vadd.f32 0.0, %v5624
        %v5626 = vpop.f32.mrb[0].mxu0
        %5627 = vmatprep.mubr.f32.mxu0 %v5526
        %5628 = vmatmul.mubr.f32.gmra.mrb[0].mxu0 %v5425
        %v5629 = vpop.f32.mrb[0].mxu0
        %v5630 = vadd.f32 0.0, %v5629
        %v5631 = vpop.f32.mrb[0].mxu0
        %5632 = vdwg.mxu0
        %v5634 = vsel %vm5503, %v5395, 0
        %v5637 = vsel %vm5503, %v5397, 0
        %v5640 = vsel %vm5503, %v5399, 0
        %v5643 = vsel %vm5503, %v5401, 0
        %v5646 = vsel %vm5503, %v5403, 0
        %v5649 = vsel %vm5503, %v5405, 0
        %v5652 = vsel %vm5503, %v5407, 0
        %v5655 = vsel %vm5503, %v5409, 0
        %5657 = vmatprep.subr.mxu0 0.0
        %5658 = vmatpush1.msra.mxu0 %v5375
        %5659 = vmatprep.subr.mxu0 0.0
        %5660 = vmatpush1.msra.mxu0 %v5376
        %5661 = vmatprep.subr.mxu0 0.0
        %5662 = vmatpush1.msra.mxu0 %v5377
        %5663 = vmatprep.subr.mxu0 0.0
        %5664 = vmatpush1.msra.mxu0 %v5378
        %5665 = vmatprep.subr.mxu0 0.0
        %5666 = vmatpush1.msra.mxu0 %v5379
        %5667 = vmatprep.subr.mxu0 0.0
        %5668 = vmatpush1.msra.mxu0 %v5380
        %5669 = vmatprep.subr.mxu0 0.0
        %5670 = vmatpush1.msra.mxu0 %v5381
        %5671 = vmatprep.subr.mxu0 0.0
        %5672 = vmatpush1.msra.mxu0 %v5382
        %5673 = vmatprep.subr.mxu0 0.0
        %5674 = vmatpush1.msra.mxu0 %v5383
        %5675 = vmatprep.subr.mxu0 0.0
        %5676 = vmatpush1.msra.mxu0 %v5384
        %5677 = vmatprep.subr.mxu0 0.0
        %5678 = vmatpush1.msra.mxu0 %v5385
        %5679 = vmatprep.subr.mxu0 0.0
        %5680 = vmatpush1.msra.mxu0 %v5386
        %5681 = vmatprep.subr.mxu0 0.0
        %5682 = vmatpush1.msra.mxu0 %v5387
        %5683 = vmatprep.subr.mxu0 0.0
        %5684 = vmatpush1.msra.mxu0 %v5388
        %5685 = vmatprep.subr.mxu0 0.0
        %5686 = vmatpush1.msra.mxu0 %v5389
        %5687 = vmatprep.subr.mxu0 0.0
        %5688 = vmatpush1.msra.mxu0 %v5390
        %5689 = vmatprep.subr.mxu0 0.0
        %5690 = vmatpush1.msra.mxu0 %v5391
        %5691 = vmatprep.subr.mxu0 0.0
        %5692 = vmatpush1.msra.mxu0 %v5392
        %5693 = vmatprep.subr.mxu0 0.0
        %5694 = vmatpush1.msra.mxu0 %v5393
        %5695 = vmatprep.subr.mxu0 0.0
        %5696 = vmatpush1.msra.mxu0 0.0
        %5697 = vmatprep.subr.mxu0 0.0
        %5698 = vmatpush1.msra.mxu0 0.0
        %5699 = vmatprep.subr.mxu0 0.0
        %5700 = vmatpush1.msra.mxu0 0.0
        %5701 = vmatprep.subr.mxu0 0.0
        %5702 = vmatpush1.msra.mxu0 0.0
        %5703 = vmatprep.subr.mxu0 0.0
        %5704 = vmatpush1.msra.mxu0 0.0
        %5705 = vmatprep.subr.mxu0 0.0
        %5706 = vmatpush1.msra.mxu0 0.0
        %5707 = vmatprep.subr.mxu0 0.0
        %5708 = vmatpush1.msra.mxu0 0.0
        %5709 = vmatprep.subr.mxu0 0.0
        %5710 = vmatpush1.msra.mxu0 0.0
        %5711 = vmatprep.subr.mxu0 0.0
        %5712 = vmatpush1.msra.mxu0 0.0
        %5713 = vmatprep.subr.mxu0 0.0
        %5714 = vmatpush1.msra.mxu0 0.0
        %5715 = vmatprep.subr.mxu0 0.0
        %5716 = vmatpush1.msra.mxu0 0.0
        %5717 = vmatprep.subr.mxu0 0.0
        %5718 = vmatpush1.msra.mxu0 0.0
        %5719 = vmatprep.subr.mxu0 0.0
        %5720 = vmatpush1.msra.mxu0 0.0
        %5721 = vmatprep.mubr.f32.mxu0 %v5634
        %5722 = vmatmul.mubr.f32.gmra.mrb[0].mxu0 %v5394
        %v5723 = vpop.f32.mrb[0].mxu0
        %v5724 = vadd.f32 %v5595, %v5723
        %v5725 = vpop.f32.mrb[0].mxu0
        %5726 = vmatprep.mubr.f32.mxu0 %v5637
        %5727 = vmatmul.mubr.f32.gmra.mrb[0].mxu0 %v5396
        %v5728 = vpop.f32.mrb[0].mxu0
        %v5729 = vadd.f32 %v5600, %v5728
        %v5730 = vpop.f32.mrb[0].mxu0
        %5731 = vmatprep.mubr.f32.mxu0 %v5640
        %5732 = vmatmul.mubr.f32.gmra.mrb[0].mxu0 %v5398
        %v5733 = vpop.f32.mrb[0].mxu0
        %v5734 = vadd.f32 %v5605, %v5733
        %v5735 = vpop.f32.mrb[0].mxu0
        %5736 = vmatprep.mubr.f32.mxu0 %v5643
        %5737 = vmatmul.mubr.f32.gmra.mrb[0].mxu0 %v5400
        %v5738 = vpop.f32.mrb[0].mxu0
        %v5739 = vadd.f32 %v5610, %v5738
        %v5740 = vpop.f32.mrb[0].mxu0
        %5741 = vmatprep.mubr.f32.mxu0 %v5646
        %5742 = vmatmul.mubr.f32.gmra.mrb[0].mxu0 %v5402
        %v5743 = vpop.f32.mrb[0].mxu0
        %v5744 = vadd.f32 %v5615, %v5743
        %v5745 = vpop.f32.mrb[0].mxu0
        %5746 = vmatprep.mubr.f32.mxu0 %v5649
        %5747 = vmatmul.mubr.f32.gmra.mrb[0].mxu0 %v5404
        %v5748 = vpop.f32.mrb[0].mxu0
        %v5749 = vadd.f32 %v5620, %v5748
        %v5750 = vpop.f32.mrb[0].mxu0
        %5751 = vmatprep.mubr.f32.mxu0 %v5652
        %5752 = vmatmul.mubr.f32.gmra.mrb[0].mxu0 %v5406
        %v5753 = vpop.f32.mrb[0].mxu0
        %v5754 = vadd.f32 %v5625, %v5753
        %v5755 = vpop.f32.mrb[0].mxu0
        %5756 = vmatprep.mubr.f32.mxu0 %v5655
        %5757 = vmatmul.mubr.f32.gmra.mrb[0].mxu0 %v5408
        %v5758 = vpop.f32.mrb[0].mxu0
        %v5759 = vadd.f32 %v5630, %v5758
        %v5760 = vpop.f32.mrb[0].mxu0
        %5761 = vdwg.mxu0
        %s5762 = scalar_lea.vmem %s3, 256
        %v5763 = vld [vmem:[%s5762] sm:$0xff]
        %v5764 = vld [vmem:[%s5762 + $0x8] sm:$0xff]
        %v5765 = vld [vmem:[%s5762 + $0x10] sm:$0xff]
        %v5766 = vld [vmem:[%s5762 + $0x18] sm:$0xff]
        %v5767 = vld [vmem:[%s5762 + $0x20] sm:$0xff]
        %v5768 = vld [vmem:[%s5762 + $0x28] sm:$0xff]
        %v5769 = vld [vmem:[%s5762 + $0x30] sm:$0xff]
        %v5770 = vld [vmem:[%s5762 + $0x38] sm:$0xff]
        %v5771 = vld [vmem:[%s5762 + $0x40] sm:$0xff]
        %v5772 = vld [vmem:[%s5762 + $0x48] sm:$0xff]
        %v5773 = vld [vmem:[%s5762 + $0x50] sm:$0xff]
        %v5774 = vld [vmem:[%s5762 + $0x58] sm:$0xff]
        %v5775 = vld [vmem:[%s5762 + $0x60] sm:$0xff]
        %v5776 = vld [vmem:[%s5762 + $0x68] sm:$0xff]
        %v5777 = vld [vmem:[%s5762 + $0x70] sm:$0xff]
        %v5778 = vld [vmem:[%s5762 + $0x78] sm:$0xff]
        %5779 = vrot.lane.b32.xlu0 %v5375, 126
        %v5780 = vpop.permute.xlu0 %5779
        %5781 = vrot.lane.b32.xlu0 %v5376, 126
        %v5782 = vpop.permute.xlu0 %5781
        %5783 = vrot.lane.b32.xlu0 %v5377, 126
        %v5784 = vpop.permute.xlu0 %5783
        %5785 = vrot.lane.b32.xlu0 %v5378, 126
        %v5786 = vpop.permute.xlu0 %5785
        %5787 = vrot.lane.b32.xlu0 %v5379, 126
        %v5788 = vpop.permute.xlu0 %5787
        %5789 = vrot.lane.b32.xlu0 %v5380, 126
        %v5790 = vpop.permute.xlu0 %5789
        %5791 = vrot.lane.b32.xlu0 %v5381, 126
        %v5792 = vpop.permute.xlu0 %5791
        %5793 = vrot.lane.b32.xlu0 %v5382, 126
        %v5794 = vpop.permute.xlu0 %5793
        %5795 = vrot.lane.b32.xlu0 %v5383, 126
        %v5796 = vpop.permute.xlu0 %5795
        %5797 = vrot.lane.b32.xlu0 %v5384, 126
        %v5798 = vpop.permute.xlu0 %5797
        %5799 = vrot.lane.b32.xlu0 %v5385, 126
        %v5800 = vpop.permute.xlu0 %5799
        %5801 = vrot.lane.b32.xlu0 %v5386, 126
        %v5802 = vpop.permute.xlu0 %5801
        %5803 = vrot.lane.b32.xlu0 %v5387, 126
        %v5804 = vpop.permute.xlu0 %5803
        %5805 = vrot.lane.b32.xlu0 %v5388, 126
        %v5806 = vpop.permute.xlu0 %5805
        %5807 = vrot.lane.b32.xlu0 %v5389, 126
        %v5808 = vpop.permute.xlu0 %5807
        %5809 = vrot.lane.b32.xlu0 %v5390, 126
        %v5810 = vpop.permute.xlu0 %5809
        %5811 = vrot.lane.b32.xlu0 %v5391, 126
        %v5812 = vpop.permute.xlu0 %5811
        %5813 = vrot.lane.b32.xlu0 %v5392, 126
        %v5814 = vpop.permute.xlu0 %5813
        %5815 = vrot.lane.b32.xlu0 %v5393, 126
        %v5816 = vpop.permute.xlu0 %5815
        %v5837 = vsel %vm5503, %v5764, 0
        %v5840 = vsel %vm5503, %v5766, 0
        %v5843 = vsel %vm5503, %v5768, 0
        %v5846 = vsel %vm5503, %v5770, 0
        %v5849 = vsel %vm5503, %v5772, 0
        %v5852 = vsel %vm5503, %v5774, 0
        %v5855 = vsel %vm5503, %v5776, 0
        %v5858 = vsel %vm5503, %v5778, 0
        %5860 = vmatprep.subr.mxu0 0.0
        %5861 = vmatpush1.msra.mxu0 %v5780
        %5862 = vmatprep.subr.mxu0 0.0
        %5863 = vmatpush1.msra.mxu0 %v5782
        %5864 = vmatprep.subr.mxu0 0.0
        %5865 = vmatpush1.msra.mxu0 %v5784
        %5866 = vmatprep.subr.mxu0 0.0
        %5867 = vmatpush1.msra.mxu0 %v5786
        %5868 = vmatprep.subr.mxu0 0.0
        %5869 = vmatpush1.msra.mxu0 %v5788
        %5870 = vmatprep.subr.mxu0 0.0
        %5871 = vmatpush1.msra.mxu0 %v5790
        %5872 = vmatprep.subr.mxu0 0.0
        %5873 = vmatpush1.msra.mxu0 %v5792
        %5874 = vmatprep.subr.mxu0 0.0
        %5875 = vmatpush1.msra.mxu0 %v5794
        %5876 = vmatprep.subr.mxu0 0.0
        %5877 = vmatpush1.msra.mxu0 %v5796
        %5878 = vmatprep.subr.mxu0 0.0
        %5879 = vmatpush1.msra.mxu0 %v5798
        %5880 = vmatprep.subr.mxu0 0.0
        %5881 = vmatpush1.msra.mxu0 %v5800
        %5882 = vmatprep.subr.mxu0 0.0
        %5883 = vmatpush1.msra.mxu0 %v5802
        %5884 = vmatprep.subr.mxu0 0.0
        %5885 = vmatpush1.msra.mxu0 %v5804
        %5886 = vmatprep.subr.mxu0 0.0
        %5887 = vmatpush1.msra.mxu0 %v5806
        %5888 = vmatprep.subr.mxu0 0.0
        %5889 = vmatpush1.msra.mxu0 %v5808
        %5890 = vmatprep.subr.mxu0 0.0
        %5891 = vmatpush1.msra.mxu0 %v5810
        %5892 = vmatprep.subr.mxu0 0.0
        %5893 = vmatpush1.msra.mxu0 %v5812
        %5894 = vmatprep.subr.mxu0 0.0
        %5895 = vmatpush1.msra.mxu0 %v5814
        %5896 = vmatprep.subr.mxu0 0.0
        %5897 = vmatpush1.msra.mxu0 %v5816
        %5898 = vmatprep.subr.mxu0 0.0
        %5899 = vmatpush1.msra.mxu0 0.0
        %5900 = vmatprep.subr.mxu0 0.0
        %5901 = vmatpush1.msra.mxu0 0.0
        %5902 = vmatprep.subr.mxu0 0.0
        %5903 = vmatpush1.msra.mxu0 0.0
        %5904 = vmatprep.subr.mxu0 0.0
        %5905 = vmatpush1.msra.mxu0 0.0
        %5906 = vmatprep.subr.mxu0 0.0
        %5907 = vmatpush1.msra.mxu0 0.0
        %5908 = vmatprep.subr.mxu0 0.0
        %5909 = vmatpush1.msra.mxu0 0.0
        %5910 = vmatprep.subr.mxu0 0.0
        %5911 = vmatpush1.msra.mxu0 0.0
        %5912 = vmatprep.subr.mxu0 0.0
        %5913 = vmatpush1.msra.mxu0 0.0
        %5914 = vmatprep.subr.mxu0 0.0
        %5915 = vmatpush1.msra.mxu0 0.0
        %5916 = vmatprep.subr.mxu0 0.0
        %5917 = vmatpush1.msra.mxu0 0.0
        %5918 = vmatprep.subr.mxu0 0.0
        %5919 = vmatpush1.msra.mxu0 0.0
        %5920 = vmatprep.subr.mxu0 0.0
        %5921 = vmatpush1.msra.mxu0 0.0
        %5922 = vmatprep.subr.mxu0 0.0
        %5923 = vmatpush1.msra.mxu0 0.0
        %5924 = vmatprep.mubr.f32.mxu0 %v5837
        %5925 = vmatmul.mubr.f32.gmra.mrb[0].mxu0 %v5763
        %v5926 = vpop.f32.mrb[0].mxu0
        %v5927 = vadd.f32 0.0, %v5926
        %v5928 = vpop.f32.mrb[0].mxu0
        %5929 = vmatprep.mubr.f32.mxu0 %v5840
        %5930 = vmatmul.mubr.f32.gmra.mrb[0].mxu0 %v5765
        %v5931 = vpop.f32.mrb[0].mxu0
        %v5932 = vadd.f32 0.0, %v5931
        %v5933 = vpop.f32.mrb[0].mxu0
        %5934 = vmatprep.mubr.f32.mxu0 %v5843
        %5935 = vmatmul.mubr.f32.gmra.mrb[0].mxu0 %v5767
        %v5936 = vpop.f32.mrb[0].mxu0
        %v5937 = vadd.f32 0.0, %v5936
        %v5938 = vpop.f32.mrb[0].mxu0
        %5939 = vmatprep.mubr.f32.mxu0 %v5846
        %5940 = vmatmul.mubr.f32.gmra.mrb[0].mxu0 %v5769
        %v5941 = vpop.f32.mrb[0].mxu0
        %v5942 = vadd.f32 0.0, %v5941
        %v5943 = vpop.f32.mrb[0].mxu0
        %5944 = vmatprep.mubr.f32.mxu0 %v5849
        %5945 = vmatmul.mubr.f32.gmra.mrb[0].mxu0 %v5771
        %v5946 = vpop.f32.mrb[0].mxu0
        %v5947 = vadd.f32 0.0, %v5946
        %v5948 = vpop.f32.mrb[0].mxu0
        %5949 = vmatprep.mubr.f32.mxu0 %v5852
        %5950 = vmatmul.mubr.f32.gmra.mrb[0].mxu0 %v5773
        %v5951 = vpop.f32.mrb[0].mxu0
        %v5952 = vadd.f32 0.0, %v5951
        %v5953 = vpop.f32.mrb[0].mxu0
        %5954 = vmatprep.mubr.f32.mxu0 %v5855
        %5955 = vmatmul.mubr.f32.gmra.mrb[0].mxu0 %v5775
        %v5956 = vpop.f32.mrb[0].mxu0
        %v5957 = vadd.f32 0.0, %v5956
        %v5958 = vpop.f32.mrb[0].mxu0
        %5959 = vmatprep.mubr.f32.mxu0 %v5858
        %5960 = vmatmul.mubr.f32.gmra.mrb[0].mxu0 %v5777
        %v5961 = vpop.f32.mrb[0].mxu0
        %v5962 = vadd.f32 0.0, %v5961
        %v5963 = vpop.f32.mrb[0].mxu0
        %5964 = vdwg.mxu0
        %v5965 = vadd.f32 %v5724, %v5927
        %v5966 = vadd.f32 %v5729, %v5932
        %v5967 = vadd.f32 %v5734, %v5937
        %v5968 = vadd.f32 %v5739, %v5942
        %v5969 = vadd.f32 %v5744, %v5947
        %v5970 = vadd.f32 %v5749, %v5952
        %v5971 = vadd.f32 %v5754, %v5957
        %v5972 = vadd.f32 %v5759, %v5962
        %s5973 = scalar_lea.vmem %s3, 384
        %v5974 = vld [vmem:[%s5973] sm:$0xff]
        %v5975 = vld [vmem:[%s5973 + $0x8] sm:$0xff]
        %v5976 = vld [vmem:[%s5973 + $0x10] sm:$0xff]
        %v5977 = vld [vmem:[%s5973 + $0x18] sm:$0xff]
        %v5978 = vld [vmem:[%s5973 + $0x20] sm:$0xff]
        %v5979 = vld [vmem:[%s5973 + $0x28] sm:$0xff]
        %v5980 = vld [vmem:[%s5973 + $0x30] sm:$0xff]
        %v5981 = vld [vmem:[%s5973 + $0x38] sm:$0xff]
        %v5982 = vld [vmem:[%s5973 + $0x40] sm:$0xff]
        %v5983 = vld [vmem:[%s5973 + $0x48] sm:$0xff]
        %v5984 = vld [vmem:[%s5973 + $0x50] sm:$0xff]
        %v5985 = vld [vmem:[%s5973 + $0x58] sm:$0xff]
        %v5986 = vld [vmem:[%s5973 + $0x60] sm:$0xff]
        %v5987 = vld [vmem:[%s5973 + $0x68] sm:$0xff]
        %v5988 = vld [vmem:[%s5973 + $0x70] sm:$0xff]
        %v5989 = vld [vmem:[%s5973 + $0x78] sm:$0xff]
        %5990 = vrot.lane.b32.xlu0 %v5375, 125
        %v5991 = vpop.permute.xlu0 %5990
        %5992 = vrot.lane.b32.xlu0 %v5376, 125
        %v5993 = vpop.permute.xlu0 %5992
        %5994 = vrot.lane.b32.xlu0 %v5377, 125
        %v5995 = vpop.permute.xlu0 %5994
        %5996 = vrot.lane.b32.xlu0 %v5378, 125
        %v5997 = vpop.permute.xlu0 %5996
        %5998 = vrot.lane.b32.xlu0 %v5379, 125
        %v5999 = vpop.permute.xlu0 %5998
        %6000 = vrot.lane.b32.xlu0 %v5380, 125
        %v6001 = vpop.permute.xlu0 %6000
        %6002 = vrot.lane.b32.xlu0 %v5381, 125
        %v6003 = vpop.permute.xlu0 %6002
        %6004 = vrot.lane.b32.xlu0 %v5382, 125
        %v6005 = vpop.permute.xlu0 %6004
        %6006 = vrot.lane.b32.xlu0 %v5383, 125
        %v6007 = vpop.permute.xlu0 %6006
        %6008 = vrot.lane.b32.xlu0 %v5384, 125
        %v6009 = vpop.permute.xlu0 %6008
        %6010 = vrot.lane.b32.xlu0 %v5385, 125
        %v6011 = vpop.permute.xlu0 %6010
        %6012 = vrot.lane.b32.xlu0 %v5386, 125
        %v6013 = vpop.permute.xlu0 %6012
        %6014 = vrot.lane.b32.xlu0 %v5387, 125
        %v6015 = vpop.permute.xlu0 %6014
        %6016 = vrot.lane.b32.xlu0 %v5388, 125
        %v6017 = vpop.permute.xlu0 %6016
        %6018 = vrot.lane.b32.xlu0 %v5389, 125
        %v6019 = vpop.permute.xlu0 %6018
        %6020 = vrot.lane.b32.xlu0 %v5390, 125
        %v6021 = vpop.permute.xlu0 %6020
        %6022 = vrot.lane.b32.xlu0 %v5391, 125
        %v6023 = vpop.permute.xlu0 %6022
        %6024 = vrot.lane.b32.xlu0 %v5392, 125
        %v6025 = vpop.permute.xlu0 %6024
        %6026 = vrot.lane.b32.xlu0 %v5393, 125
        %v6027 = vpop.permute.xlu0 %6026
        %v6048 = vsel %vm5503, %v5975, 0
        %v6051 = vsel %vm5503, %v5977, 0
        %v6054 = vsel %vm5503, %v5979, 0
        %v6057 = vsel %vm5503, %v5981, 0
        %v6060 = vsel %vm5503, %v5983, 0
        %v6063 = vsel %vm5503, %v5985, 0
        %v6066 = vsel %vm5503, %v5987, 0
        %v6069 = vsel %vm5503, %v5989, 0
        %6071 = vmatprep.subr.mxu0 0.0
        %6072 = vmatpush1.msra.mxu0 %v5991
        %6073 = vmatprep.subr.mxu0 0.0
        %6074 = vmatpush1.msra.mxu0 %v5993
        %6075 = vmatprep.subr.mxu0 0.0
        %6076 = vmatpush1.msra.mxu0 %v5995
        %6077 = vmatprep.subr.mxu0 0.0
        %6078 = vmatpush1.msra.mxu0 %v5997
        %6079 = vmatprep.subr.mxu0 0.0
        %6080 = vmatpush1.msra.mxu0 %v5999
        %6081 = vmatprep.subr.mxu0 0.0
        %6082 = vmatpush1.msra.mxu0 %v6001
        %6083 = vmatprep.subr.mxu0 0.0
        %6084 = vmatpush1.msra.mxu0 %v6003
        %6085 = vmatprep.subr.mxu0 0.0
        %6086 = vmatpush1.msra.mxu0 %v6005
        %6087 = vmatprep.subr.mxu0 0.0
        %6088 = vmatpush1.msra.mxu0 %v6007
        %6089 = vmatprep.subr.mxu0 0.0
        %6090 = vmatpush1.msra.mxu0 %v6009
        %6091 = vmatprep.subr.mxu0 0.0
        %6092 = vmatpush1.msra.mxu0 %v6011
        %6093 = vmatprep.subr.mxu0 0.0
        %6094 = vmatpush1.msra.mxu0 %v6013
        %6095 = vmatprep.subr.mxu0 0.0
        %6096 = vmatpush1.msra.mxu0 %v6015
        %6097 = vmatprep.subr.mxu0 0.0
        %6098 = vmatpush1.msra.mxu0 %v6017
        %6099 = vmatprep.subr.mxu0 0.0
        %6100 = vmatpush1.msra.mxu0 %v6019
        %6101 = vmatprep.subr.mxu0 0.0
        %6102 = vmatpush1.msra.mxu0 %v6021
        %6103 = vmatprep.subr.mxu0 0.0
        %6104 = vmatpush1.msra.mxu0 %v6023
        %6105 = vmatprep.subr.mxu0 0.0
        %6106 = vmatpush1.msra.mxu0 %v6025
        %6107 = vmatprep.subr.mxu0 0.0
        %6108 = vmatpush1.msra.mxu0 %v6027
        %6109 = vmatprep.subr.mxu0 0.0
        %6110 = vmatpush1.msra.mxu0 0.0
        %6111 = vmatprep.subr.mxu0 0.0
        %6112 = vmatpush1.msra.mxu0 0.0
        %6113 = vmatprep.subr.mxu0 0.0
        %6114 = vmatpush1.msra.mxu0 0.0
        %6115 = vmatprep.subr.mxu0 0.0
        %6116 = vmatpush1.msra.mxu0 0.0
        %6117 = vmatprep.subr.mxu0 0.0
        %6118 = vmatpush1.msra.mxu0 0.0
        %6119 = vmatprep.subr.mxu0 0.0
        %6120 = vmatpush1.msra.mxu0 0.0
        %6121 = vmatprep.subr.mxu0 0.0
        %6122 = vmatpush1.msra.mxu0 0.0
        %6123 = vmatprep.subr.mxu0 0.0
        %6124 = vmatpush1.msra.mxu0 0.0
        %6125 = vmatprep.subr.mxu0 0.0
        %6126 = vmatpush1.msra.mxu0 0.0
        %6127 = vmatprep.subr.mxu0 0.0
        %6128 = vmatpush1.msra.mxu0 0.0
        %6129 = vmatprep.subr.mxu0 0.0
        %6130 = vmatpush1.msra.mxu0 0.0
        %6131 = vmatprep.subr.mxu0 0.0
        %6132 = vmatpush1.msra.mxu0 0.0
        %6133 = vmatprep.subr.mxu0 0.0
        %6134 = vmatpush1.msra.mxu0 0.0
        %6135 = vmatprep.mubr.f32.mxu0 %v6048
        %6136 = vmatmul.mubr.f32.gmra.mrb[0].mxu0 %v5974
        %v6137 = vpop.f32.mrb[0].mxu0
        %v6138 = vadd.f32 0.0, %v6137
        %v6139 = vpop.f32.mrb[0].mxu0
        %6140 = vmatprep.mubr.f32.mxu0 %v6051
        %6141 = vmatmul.mubr.f32.gmra.mrb[0].mxu0 %v5976
        %v6142 = vpop.f32.mrb[0].mxu0
        %v6143 = vadd.f32 0.0, %v6142
        %v6144 = vpop.f32.mrb[0].mxu0
        %6145 = vmatprep.mubr.f32.mxu0 %v6054
        %6146 = vmatmul.mubr.f32.gmra.mrb[0].mxu0 %v5978
        %v6147 = vpop.f32.mrb[0].mxu0
        %v6148 = vadd.f32 0.0, %v6147
        %v6149 = vpop.f32.mrb[0].mxu0
        %6150 = vmatprep.mubr.f32.mxu0 %v6057
        %6151 = vmatmul.mubr.f32.gmra.mrb[0].mxu0 %v5980
        %v6152 = vpop.f32.mrb[0].mxu0
        %v6153 = vadd.f32 0.0, %v6152
        %v6154 = vpop.f32.mrb[0].mxu0
        %6155 = vmatprep.mubr.f32.mxu0 %v6060
        %6156 = vmatmul.mubr.f32.gmra.mrb[0].mxu0 %v5982
        %v6157 = vpop.f32.mrb[0].mxu0
        %v6158 = vadd.f32 0.0, %v6157
        %v6159 = vpop.f32.mrb[0].mxu0
        %6160 = vmatprep.mubr.f32.mxu0 %v6063
        %6161 = vmatmul.mubr.f32.gmra.mrb[0].mxu0 %v5984
        %v6162 = vpop.f32.mrb[0].mxu0
        %v6163 = vadd.f32 0.0, %v6162
        %v6164 = vpop.f32.mrb[0].mxu0
        %6165 = vmatprep.mubr.f32.mxu0 %v6066
        %6166 = vmatmul.mubr.f32.gmra.mrb[0].mxu0 %v5986
        %v6167 = vpop.f32.mrb[0].mxu0
        %v6168 = vadd.f32 0.0, %v6167
        %v6169 = vpop.f32.mrb[0].mxu0
        %6170 = vmatprep.mubr.f32.mxu0 %v6069
        %6171 = vmatmul.mubr.f32.gmra.mrb[0].mxu0 %v5988
        %v6172 = vpop.f32.mrb[0].mxu0
        %v6173 = vadd.f32 0.0, %v6172
        %v6174 = vpop.f32.mrb[0].mxu0
        %6175 = vdwg.mxu0
        %v6176 = vadd.f32 %v5965, %v6138
        %v6177 = vadd.f32 %v5966, %v6143
        %v6178 = vadd.f32 %v5967, %v6148
        %v6179 = vadd.f32 %v5968, %v6153
        %v6180 = vadd.f32 %v5969, %v6158
        %v6181 = vadd.f32 %v5970, %v6163
        %v6182 = vadd.f32 %v5971, %v6168
        %v6183 = vadd.f32 %v5972, %v6173
        %s6184 = scalar_lea.vmem %s3, 512
        %v6185 = vld [vmem:[%s6184] sm:$0xff]
        %v6186 = vld [vmem:[%s6184 + $0x8] sm:$0xff]
        %v6187 = vld [vmem:[%s6184 + $0x10] sm:$0xff]
        %v6188 = vld [vmem:[%s6184 + $0x18] sm:$0xff]
        %v6189 = vld [vmem:[%s6184 + $0x20] sm:$0xff]
        %v6190 = vld [vmem:[%s6184 + $0x28] sm:$0xff]
        %v6191 = vld [vmem:[%s6184 + $0x30] sm:$0xff]
        %v6192 = vld [vmem:[%s6184 + $0x38] sm:$0xff]
        %v6193 = vld [vmem:[%s6184 + $0x40] sm:$0xff]
        %v6194 = vld [vmem:[%s6184 + $0x48] sm:$0xff]
        %v6195 = vld [vmem:[%s6184 + $0x50] sm:$0xff]
        %v6196 = vld [vmem:[%s6184 + $0x58] sm:$0xff]
        %v6197 = vld [vmem:[%s6184 + $0x60] sm:$0xff]
        %v6198 = vld [vmem:[%s6184 + $0x68] sm:$0xff]
        %v6199 = vld [vmem:[%s6184 + $0x70] sm:$0xff]
        %v6200 = vld [vmem:[%s6184 + $0x78] sm:$0xff]
        %6201 = vrot.lane.b32.xlu0 %v5375, 124
        %v6202 = vpop.permute.xlu0 %6201
        %6203 = vrot.lane.b32.xlu0 %v5376, 124
        %v6204 = vpop.permute.xlu0 %6203
        %6205 = vrot.lane.b32.xlu0 %v5377, 124
        %v6206 = vpop.permute.xlu0 %6205
        %6207 = vrot.lane.b32.xlu0 %v5378, 124
        %v6208 = vpop.permute.xlu0 %6207
        %6209 = vrot.lane.b32.xlu0 %v5379, 124
        %v6210 = vpop.permute.xlu0 %6209
        %6211 = vrot.lane.b32.xlu0 %v5380, 124
        %v6212 = vpop.permute.xlu0 %6211
        %6213 = vrot.lane.b32.xlu0 %v5381, 124
        %v6214 = vpop.permute.xlu0 %6213
        %6215 = vrot.lane.b32.xlu0 %v5382, 124
        %v6216 = vpop.permute.xlu0 %6215
        %6217 = vrot.lane.b32.xlu0 %v5383, 124
        %v6218 = vpop.permute.xlu0 %6217
        %6219 = vrot.lane.b32.xlu0 %v5384, 124
        %v6220 = vpop.permute.xlu0 %6219
        %6221 = vrot.lane.b32.xlu0 %v5385, 124
        %v6222 = vpop.permute.xlu0 %6221
        %6223 = vrot.lane.b32.xlu0 %v5386, 124
        %v6224 = vpop.permute.xlu0 %6223
        %6225 = vrot.lane.b32.xlu0 %v5387, 124
        %v6226 = vpop.permute.xlu0 %6225
        %6227 = vrot.lane.b32.xlu0 %v5388, 124
        %v6228 = vpop.permute.xlu0 %6227
        %6229 = vrot.lane.b32.xlu0 %v5389, 124
        %v6230 = vpop.permute.xlu0 %6229
        %6231 = vrot.lane.b32.xlu0 %v5390, 124
        %v6232 = vpop.permute.xlu0 %6231
        %6233 = vrot.lane.b32.xlu0 %v5391, 124
        %v6234 = vpop.permute.xlu0 %6233
        %6235 = vrot.lane.b32.xlu0 %v5392, 124
        %v6236 = vpop.permute.xlu0 %6235
        %6237 = vrot.lane.b32.xlu0 %v5393, 124
        %v6238 = vpop.permute.xlu0 %6237
        %v6259 = vsel %vm5503, %v6186, 0
        %v6262 = vsel %vm5503, %v6188, 0
        %v6265 = vsel %vm5503, %v6190, 0
        %v6268 = vsel %vm5503, %v6192, 0
        %v6271 = vsel %vm5503, %v6194, 0
        %v6274 = vsel %vm5503, %v6196, 0
        %v6277 = vsel %vm5503, %v6198, 0
        %v6280 = vsel %vm5503, %v6200, 0
        %6282 = vmatprep.subr.mxu0 0.0
        %6283 = vmatpush1.msra.mxu0 %v6202
        %6284 = vmatprep.subr.mxu0 0.0
        %6285 = vmatpush1.msra.mxu0 %v6204
        %6286 = vmatprep.subr.mxu0 0.0
        %6287 = vmatpush1.msra.mxu0 %v6206
        %6288 = vmatprep.subr.mxu0 0.0
        %6289 = vmatpush1.msra.mxu0 %v6208
        %6290 = vmatprep.subr.mxu0 0.0
        %6291 = vmatpush1.msra.mxu0 %v6210
        %6292 = vmatprep.subr.mxu0 0.0
        %6293 = vmatpush1.msra.mxu0 %v6212
        %6294 = vmatprep.subr.mxu0 0.0
        %6295 = vmatpush1.msra.mxu0 %v6214
        %6296 = vmatprep.subr.mxu0 0.0
        %6297 = vmatpush1.msra.mxu0 %v6216
        %6298 = vmatprep.subr.mxu0 0.0
        %6299 = vmatpush1.msra.mxu0 %v6218
        %6300 = vmatprep.subr.mxu0 0.0
        %6301 = vmatpush1.msra.mxu0 %v6220
        %6302 = vmatprep.subr.mxu0 0.0
        %6303 = vmatpush1.msra.mxu0 %v6222
        %6304 = vmatprep.subr.mxu0 0.0
        %6305 = vmatpush1.msra.mxu0 %v6224
        %6306 = vmatprep.subr.mxu0 0.0
        %6307 = vmatpush1.msra.mxu0 %v6226
        %6308 = vmatprep.subr.mxu0 0.0
        %6309 = vmatpush1.msra.mxu0 %v6228
        %6310 = vmatprep.subr.mxu0 0.0
        %6311 = vmatpush1.msra.mxu0 %v6230
        %6312 = vmatprep.subr.mxu0 0.0
        %6313 = vmatpush1.msra.mxu0 %v6232
        %6314 = vmatprep.subr.mxu0 0.0
        %6315 = vmatpush1.msra.mxu0 %v6234
        %6316 = vmatprep.subr.mxu0 0.0
        %6317 = vmatpush1.msra.mxu0 %v6236
        %6318 = vmatprep.subr.mxu0 0.0
        %6319 = vmatpush1.msra.mxu0 %v6238
        %6320 = vmatprep.subr.mxu0 0.0
        %6321 = vmatpush1.msra.mxu0 0.0
        %6322 = vmatprep.subr.mxu0 0.0
        %6323 = vmatpush1.msra.mxu0 0.0
        %6324 = vmatprep.subr.mxu0 0.0
        %6325 = vmatpush1.msra.mxu0 0.0
        %6326 = vmatprep.subr.mxu0 0.0
        %6327 = vmatpush1.msra.mxu0 0.0
        %6328 = vmatprep.subr.mxu0 0.0
        %6329 = vmatpush1.msra.mxu0 0.0
        %6330 = vmatprep.subr.mxu0 0.0
        %6331 = vmatpush1.msra.mxu0 0.0
        %6332 = vmatprep.subr.mxu0 0.0
        %6333 = vmatpush1.msra.mxu0 0.0
        %6334 = vmatprep.subr.mxu0 0.0
        %6335 = vmatpush1.msra.mxu0 0.0
        %6336 = vmatprep.subr.mxu0 0.0
        %6337 = vmatpush1.msra.mxu0 0.0
        %6338 = vmatprep.subr.mxu0 0.0
        %6339 = vmatpush1.msra.mxu0 0.0
        %6340 = vmatprep.subr.mxu0 0.0
        %6341 = vmatpush1.msra.mxu0 0.0
        %6342 = vmatprep.subr.mxu0 0.0
        %6343 = vmatpush1.msra.mxu0 0.0
        %6344 = vmatprep.subr.mxu0 0.0
        %6345 = vmatpush1.msra.mxu0 0.0
        %6346 = vmatprep.mubr.f32.mxu0 %v6259
        %6347 = vmatmul.mubr.f32.gmra.mrb[0].mxu0 %v6185
        %v6348 = vpop.f32.mrb[0].mxu0
        %v6349 = vadd.f32 0.0, %v6348
        %v6350 = vpop.f32.mrb[0].mxu0
        %6351 = vmatprep.mubr.f32.mxu0 %v6262
        %6352 = vmatmul.mubr.f32.gmra.mrb[0].mxu0 %v6187
        %v6353 = vpop.f32.mrb[0].mxu0
        %v6354 = vadd.f32 0.0, %v6353
        %v6355 = vpop.f32.mrb[0].mxu0
        %6356 = vmatprep.mubr.f32.mxu0 %v6265
        %6357 = vmatmul.mubr.f32.gmra.mrb[0].mxu0 %v6189
        %v6358 = vpop.f32.mrb[0].mxu0
        %v6359 = vadd.f32 0.0, %v6358
        %v6360 = vpop.f32.mrb[0].mxu0
        %6361 = vmatprep.mubr.f32.mxu0 %v6268
        %6362 = vmatmul.mubr.f32.gmra.mrb[0].mxu0 %v6191
        %v6363 = vpop.f32.mrb[0].mxu0
        %v6364 = vadd.f32 0.0, %v6363
        %v6365 = vpop.f32.mrb[0].mxu0
        %6366 = vmatprep.mubr.f32.mxu0 %v6271
        %6367 = vmatmul.mubr.f32.gmra.mrb[0].mxu0 %v6193
        %v6368 = vpop.f32.mrb[0].mxu0
        %v6369 = vadd.f32 0.0, %v6368
        %v6370 = vpop.f32.mrb[0].mxu0
        %6371 = vmatprep.mubr.f32.mxu0 %v6274
        %6372 = vmatmul.mubr.f32.gmra.mrb[0].mxu0 %v6195
        %v6373 = vpop.f32.mrb[0].mxu0
        %v6374 = vadd.f32 0.0, %v6373
        %v6375 = vpop.f32.mrb[0].mxu0
        %6376 = vmatprep.mubr.f32.mxu0 %v6277
        %6377 = vmatmul.mubr.f32.gmra.mrb[0].mxu0 %v6197
        %v6378 = vpop.f32.mrb[0].mxu0
        %v6379 = vadd.f32 0.0, %v6378
        %v6380 = vpop.f32.mrb[0].mxu0
        %6381 = vmatprep.mubr.f32.mxu0 %v6280
        %6382 = vmatmul.mubr.f32.gmra.mrb[0].mxu0 %v6199
        %v6383 = vpop.f32.mrb[0].mxu0
        %v6384 = vadd.f32 0.0, %v6383
        %v6385 = vpop.f32.mrb[0].mxu0
        %6386 = vdwg.mxu0
        %v6387 = vadd.f32 %v6176, %v6349
        %v6388 = vadd.f32 %v6177, %v6354
        %v6389 = vadd.f32 %v6178, %v6359
        %v6390 = vadd.f32 %v6179, %v6364
        %v6391 = vadd.f32 %v6180, %v6369
        %v6392 = vadd.f32 %v6181, %v6374
        %v6393 = vadd.f32 %v6182, %v6379
        %v6394 = vadd.f32 %v6183, %v6384
        %s6395 = scalar_lea.vmem %s3, 640
        %v6396 = vld [vmem:[%s6395] sm:$0xff]
        %v6397 = vld [vmem:[%s6395 + $0x8] sm:$0xff]
        %v6398 = vld [vmem:[%s6395 + $0x10] sm:$0xff]
        %v6399 = vld [vmem:[%s6395 + $0x18] sm:$0xff]
        %v6400 = vld [vmem:[%s6395 + $0x20] sm:$0xff]
        %v6401 = vld [vmem:[%s6395 + $0x28] sm:$0xff]
        %v6402 = vld [vmem:[%s6395 + $0x30] sm:$0xff]
        %v6403 = vld [vmem:[%s6395 + $0x38] sm:$0xff]
        %v6404 = vld [vmem:[%s6395 + $0x40] sm:$0xff]
        %v6405 = vld [vmem:[%s6395 + $0x48] sm:$0xff]
        %v6406 = vld [vmem:[%s6395 + $0x50] sm:$0xff]
        %v6407 = vld [vmem:[%s6395 + $0x58] sm:$0xff]
        %v6408 = vld [vmem:[%s6395 + $0x60] sm:$0xff]
        %v6409 = vld [vmem:[%s6395 + $0x68] sm:$0xff]
        %v6410 = vld [vmem:[%s6395 + $0x70] sm:$0xff]
        %v6411 = vld [vmem:[%s6395 + $0x78] sm:$0xff]
        %6412 = vrot.lane.b32.xlu0 %v5375, 123
        %v6413 = vpop.permute.xlu0 %6412
        %6414 = vrot.lane.b32.xlu0 %v5376, 123
        %v6415 = vpop.permute.xlu0 %6414
        %6416 = vrot.lane.b32.xlu0 %v5377, 123
        %v6417 = vpop.permute.xlu0 %6416
        %6418 = vrot.lane.b32.xlu0 %v5378, 123
        %v6419 = vpop.permute.xlu0 %6418
        %6420 = vrot.lane.b32.xlu0 %v5379, 123
        %v6421 = vpop.permute.xlu0 %6420
        %6422 = vrot.lane.b32.xlu0 %v5380, 123
        %v6423 = vpop.permute.xlu0 %6422
        %6424 = vrot.lane.b32.xlu0 %v5381, 123
        %v6425 = vpop.permute.xlu0 %6424
        %6426 = vrot.lane.b32.xlu0 %v5382, 123
        %v6427 = vpop.permute.xlu0 %6426
        %6428 = vrot.lane.b32.xlu0 %v5383, 123
        %v6429 = vpop.permute.xlu0 %6428
        %6430 = vrot.lane.b32.xlu0 %v5384, 123
        %v6431 = vpop.permute.xlu0 %6430
        %6432 = vrot.lane.b32.xlu0 %v5385, 123
        %v6433 = vpop.permute.xlu0 %6432
        %6434 = vrot.lane.b32.xlu0 %v5386, 123
        %v6435 = vpop.permute.xlu0 %6434
        %6436 = vrot.lane.b32.xlu0 %v5387, 123
        %v6437 = vpop.permute.xlu0 %6436
        %6438 = vrot.lane.b32.xlu0 %v5388, 123
        %v6439 = vpop.permute.xlu0 %6438
        %6440 = vrot.lane.b32.xlu0 %v5389, 123
        %v6441 = vpop.permute.xlu0 %6440
        %6442 = vrot.lane.b32.xlu0 %v5390, 123
        %v6443 = vpop.permute.xlu0 %6442
        %6444 = vrot.lane.b32.xlu0 %v5391, 123
        %v6445 = vpop.permute.xlu0 %6444
        %6446 = vrot.lane.b32.xlu0 %v5392, 123
        %v6447 = vpop.permute.xlu0 %6446
        %6448 = vrot.lane.b32.xlu0 %v5393, 123
        %v6449 = vpop.permute.xlu0 %6448
        %v6470 = vsel %vm5503, %v6397, 0
        %v6473 = vsel %vm5503, %v6399, 0
        %v6476 = vsel %vm5503, %v6401, 0
        %v6479 = vsel %vm5503, %v6403, 0
        %v6482 = vsel %vm5503, %v6405, 0
        %v6485 = vsel %vm5503, %v6407, 0
        %v6488 = vsel %vm5503, %v6409, 0
        %v6491 = vsel %vm5503, %v6411, 0
        %6493 = vmatprep.subr.mxu0 0.0
        %6494 = vmatpush1.msra.mxu0 %v6413
        %6495 = vmatprep.subr.mxu0 0.0
        %6496 = vmatpush1.msra.mxu0 %v6415
        %6497 = vmatprep.subr.mxu0 0.0
        %6498 = vmatpush1.msra.mxu0 %v6417
        %6499 = vmatprep.subr.mxu0 0.0
        %6500 = vmatpush1.msra.mxu0 %v6419
        %6501 = vmatprep.subr.mxu0 0.0
        %6502 = vmatpush1.msra.mxu0 %v6421
        %6503 = vmatprep.subr.mxu0 0.0
        %6504 = vmatpush1.msra.mxu0 %v6423
        %6505 = vmatprep.subr.mxu0 0.0
        %6506 = vmatpush1.msra.mxu0 %v6425
        %6507 = vmatprep.subr.mxu0 0.0
        %6508 = vmatpush1.msra.mxu0 %v6427
        %6509 = vmatprep.subr.mxu0 0.0
        %6510 = vmatpush1.msra.mxu0 %v6429
        %6511 = vmatprep.subr.mxu0 0.0
        %6512 = vmatpush1.msra.mxu0 %v6431
        %6513 = vmatprep.subr.mxu0 0.0
        %6514 = vmatpush1.msra.mxu0 %v6433
        %6515 = vmatprep.subr.mxu0 0.0
        %6516 = vmatpush1.msra.mxu0 %v6435
        %6517 = vmatprep.subr.mxu0 0.0
        %6518 = vmatpush1.msra.mxu0 %v6437
        %6519 = vmatprep.subr.mxu0 0.0
        %6520 = vmatpush1.msra.mxu0 %v6439
        %6521 = vmatprep.subr.mxu0 0.0
        %6522 = vmatpush1.msra.mxu0 %v6441
        %6523 = vmatprep.subr.mxu0 0.0
        %6524 = vmatpush1.msra.mxu0 %v6443
        %6525 = vmatprep.subr.mxu0 0.0
        %6526 = vmatpush1.msra.mxu0 %v6445
        %6527 = vmatprep.subr.mxu0 0.0
        %6528 = vmatpush1.msra.mxu0 %v6447
        %6529 = vmatprep.subr.mxu0 0.0
        %6530 = vmatpush1.msra.mxu0 %v6449
        %6531 = vmatprep.subr.mxu0 0.0
        %6532 = vmatpush1.msra.mxu0 0.0
        %6533 = vmatprep.subr.mxu0 0.0
        %6534 = vmatpush1.msra.mxu0 0.0
        %6535 = vmatprep.subr.mxu0 0.0
        %6536 = vmatpush1.msra.mxu0 0.0
        %6537 = vmatprep.subr.mxu0 0.0
        %6538 = vmatpush1.msra.mxu0 0.0
        %6539 = vmatprep.subr.mxu0 0.0
        %6540 = vmatpush1.msra.mxu0 0.0
        %6541 = vmatprep.subr.mxu0 0.0
        %6542 = vmatpush1.msra.mxu0 0.0
        %6543 = vmatprep.subr.mxu0 0.0
        %6544 = vmatpush1.msra.mxu0 0.0
        %6545 = vmatprep.subr.mxu0 0.0
        %6546 = vmatpush1.msra.mxu0 0.0
        %6547 = vmatprep.subr.mxu0 0.0
        %6548 = vmatpush1.msra.mxu0 0.0
        %6549 = vmatprep.subr.mxu0 0.0
        %6550 = vmatpush1.msra.mxu0 0.0
        %6551 = vmatprep.subr.mxu0 0.0
        %6552 = vmatpush1.msra.mxu0 0.0
        %6553 = vmatprep.subr.mxu0 0.0
        %6554 = vmatpush1.msra.mxu0 0.0
        %6555 = vmatprep.subr.mxu0 0.0
        %6556 = vmatpush1.msra.mxu0 0.0
        %6557 = vmatprep.mubr.f32.mxu0 %v6470
        %6558 = vmatmul.mubr.f32.gmra.mrb[0].mxu0 %v6396
        %v6559 = vpop.f32.mrb[0].mxu0
        %v6560 = vadd.f32 0.0, %v6559
        %v6561 = vpop.f32.mrb[0].mxu0
        %6562 = vmatprep.mubr.f32.mxu0 %v6473
        %6563 = vmatmul.mubr.f32.gmra.mrb[0].mxu0 %v6398
        %v6564 = vpop.f32.mrb[0].mxu0
        %v6565 = vadd.f32 0.0, %v6564
        %v6566 = vpop.f32.mrb[0].mxu0
        %6567 = vmatprep.mubr.f32.mxu0 %v6476
        %6568 = vmatmul.mubr.f32.gmra.mrb[0].mxu0 %v6400
        %v6569 = vpop.f32.mrb[0].mxu0
        %v6570 = vadd.f32 0.0, %v6569
        %v6571 = vpop.f32.mrb[0].mxu0
        %6572 = vmatprep.mubr.f32.mxu0 %v6479
        %6573 = vmatmul.mubr.f32.gmra.mrb[0].mxu0 %v6402
        %v6574 = vpop.f32.mrb[0].mxu0
        %v6575 = vadd.f32 0.0, %v6574
        %v6576 = vpop.f32.mrb[0].mxu0
        %6577 = vmatprep.mubr.f32.mxu0 %v6482
        %6578 = vmatmul.mubr.f32.gmra.mrb[0].mxu0 %v6404
        %v6579 = vpop.f32.mrb[0].mxu0
        %v6580 = vadd.f32 0.0, %v6579
        %v6581 = vpop.f32.mrb[0].mxu0
        %6582 = vmatprep.mubr.f32.mxu0 %v6485
        %6583 = vmatmul.mubr.f32.gmra.mrb[0].mxu0 %v6406
        %v6584 = vpop.f32.mrb[0].mxu0
        %v6585 = vadd.f32 0.0, %v6584
        %v6586 = vpop.f32.mrb[0].mxu0
        %6587 = vmatprep.mubr.f32.mxu0 %v6488
        %6588 = vmatmul.mubr.f32.gmra.mrb[0].mxu0 %v6408
        %v6589 = vpop.f32.mrb[0].mxu0
        %v6590 = vadd.f32 0.0, %v6589
        %v6591 = vpop.f32.mrb[0].mxu0
        %6592 = vmatprep.mubr.f32.mxu0 %v6491
        %6593 = vmatmul.mubr.f32.gmra.mrb[0].mxu0 %v6410
        %v6594 = vpop.f32.mrb[0].mxu0
        %v6595 = vadd.f32 0.0, %v6594
        %v6596 = vpop.f32.mrb[0].mxu0
        %6597 = vdwg.mxu0
        %v6598 = vadd.f32 %v6387, %v6560
        %v6599 = vadd.f32 %v6388, %v6565
        %v6600 = vadd.f32 %v6389, %v6570
        %v6601 = vadd.f32 %v6390, %v6575
        %v6602 = vadd.f32 %v6391, %v6580
        %v6603 = vadd.f32 %v6392, %v6585
        %v6604 = vadd.f32 %v6393, %v6590
        %v6605 = vadd.f32 %v6394, %v6595
        %s6606 = scalar_lea.vmem %s3, 768
        %v6607 = vld [vmem:[%s6606] sm:$0xff]
        %v6608 = vld [vmem:[%s6606 + $0x8] sm:$0xff]
        %v6609 = vld [vmem:[%s6606 + $0x10] sm:$0xff]
        %v6610 = vld [vmem:[%s6606 + $0x18] sm:$0xff]
        %v6611 = vld [vmem:[%s6606 + $0x20] sm:$0xff]
        %v6612 = vld [vmem:[%s6606 + $0x28] sm:$0xff]
        %v6613 = vld [vmem:[%s6606 + $0x30] sm:$0xff]
        %v6614 = vld [vmem:[%s6606 + $0x38] sm:$0xff]
        %v6615 = vld [vmem:[%s6606 + $0x40] sm:$0xff]
        %v6616 = vld [vmem:[%s6606 + $0x48] sm:$0xff]
        %v6617 = vld [vmem:[%s6606 + $0x50] sm:$0xff]
        %v6618 = vld [vmem:[%s6606 + $0x58] sm:$0xff]
        %v6619 = vld [vmem:[%s6606 + $0x60] sm:$0xff]
        %v6620 = vld [vmem:[%s6606 + $0x68] sm:$0xff]
        %v6621 = vld [vmem:[%s6606 + $0x70] sm:$0xff]
        %v6622 = vld [vmem:[%s6606 + $0x78] sm:$0xff]
        %6623 = vrot.lane.b32.xlu0 %v5375, 122
        %v6624 = vpop.permute.xlu0 %6623
        %6625 = vrot.lane.b32.xlu0 %v5376, 122
        %v6626 = vpop.permute.xlu0 %6625
        %6627 = vrot.lane.b32.xlu0 %v5377, 122
        %v6628 = vpop.permute.xlu0 %6627
        %6629 = vrot.lane.b32.xlu0 %v5378, 122
        %v6630 = vpop.permute.xlu0 %6629
        %6631 = vrot.lane.b32.xlu0 %v5379, 122
        %v6632 = vpop.permute.xlu0 %6631
        %6633 = vrot.lane.b32.xlu0 %v5380, 122
        %v6634 = vpop.permute.xlu0 %6633
        %6635 = vrot.lane.b32.xlu0 %v5381, 122
        %v6636 = vpop.permute.xlu0 %6635
        %6637 = vrot.lane.b32.xlu0 %v5382, 122
        %v6638 = vpop.permute.xlu0 %6637
        %6639 = vrot.lane.b32.xlu0 %v5383, 122
        %v6640 = vpop.permute.xlu0 %6639
        %6641 = vrot.lane.b32.xlu0 %v5384, 122
        %v6642 = vpop.permute.xlu0 %6641
        %6643 = vrot.lane.b32.xlu0 %v5385, 122
        %v6644 = vpop.permute.xlu0 %6643
        %6645 = vrot.lane.b32.xlu0 %v5386, 122
        %v6646 = vpop.permute.xlu0 %6645
        %6647 = vrot.lane.b32.xlu0 %v5387, 122
        %v6648 = vpop.permute.xlu0 %6647
        %6649 = vrot.lane.b32.xlu0 %v5388, 122
        %v6650 = vpop.permute.xlu0 %6649
        %6651 = vrot.lane.b32.xlu0 %v5389, 122
        %v6652 = vpop.permute.xlu0 %6651
        %6653 = vrot.lane.b32.xlu0 %v5390, 122
        %v6654 = vpop.permute.xlu0 %6653
        %6655 = vrot.lane.b32.xlu0 %v5391, 122
        %v6656 = vpop.permute.xlu0 %6655
        %6657 = vrot.lane.b32.xlu0 %v5392, 122
        %v6658 = vpop.permute.xlu0 %6657
        %6659 = vrot.lane.b32.xlu0 %v5393, 122
        %v6660 = vpop.permute.xlu0 %6659
        %v6681 = vsel %vm5503, %v6608, 0
        %v6684 = vsel %vm5503, %v6610, 0
        %v6687 = vsel %vm5503, %v6612, 0
        %v6690 = vsel %vm5503, %v6614, 0
        %v6693 = vsel %vm5503, %v6616, 0
        %v6696 = vsel %vm5503, %v6618, 0
        %v6699 = vsel %vm5503, %v6620, 0
        %v6702 = vsel %vm5503, %v6622, 0
        %6704 = vmatprep.subr.mxu0 0.0
        %6705 = vmatpush1.msra.mxu0 %v6624
        %6706 = vmatprep.subr.mxu0 0.0
        %6707 = vmatpush1.msra.mxu0 %v6626
        %6708 = vmatprep.subr.mxu0 0.0
        %6709 = vmatpush1.msra.mxu0 %v6628
        %6710 = vmatprep.subr.mxu0 0.0
        %6711 = vmatpush1.msra.mxu0 %v6630
        %6712 = vmatprep.subr.mxu0 0.0
        %6713 = vmatpush1.msra.mxu0 %v6632
        %6714 = vmatprep.subr.mxu0 0.0
        %6715 = vmatpush1.msra.mxu0 %v6634
        %6716 = vmatprep.subr.mxu0 0.0
        %6717 = vmatpush1.msra.mxu0 %v6636
        %6718 = vmatprep.subr.mxu0 0.0
        %6719 = vmatpush1.msra.mxu0 %v6638
        %6720 = vmatprep.subr.mxu0 0.0
        %6721 = vmatpush1.msra.mxu0 %v6640
        %6722 = vmatprep.subr.mxu0 0.0
        %6723 = vmatpush1.msra.mxu0 %v6642
        %6724 = vmatprep.subr.mxu0 0.0
        %6725 = vmatpush1.msra.mxu0 %v6644
        %6726 = vmatprep.subr.mxu0 0.0
        %6727 = vmatpush1.msra.mxu0 %v6646
        %6728 = vmatprep.subr.mxu0 0.0
        %6729 = vmatpush1.msra.mxu0 %v6648
        %6730 = vmatprep.subr.mxu0 0.0
        %6731 = vmatpush1.msra.mxu0 %v6650
        %6732 = vmatprep.subr.mxu0 0.0
        %6733 = vmatpush1.msra.mxu0 %v6652
        %6734 = vmatprep.subr.mxu0 0.0
        %6735 = vmatpush1.msra.mxu0 %v6654
        %6736 = vmatprep.subr.mxu0 0.0
        %6737 = vmatpush1.msra.mxu0 %v6656
        %6738 = vmatprep.subr.mxu0 0.0
        %6739 = vmatpush1.msra.mxu0 %v6658
        %6740 = vmatprep.subr.mxu0 0.0
        %6741 = vmatpush1.msra.mxu0 %v6660
        %6742 = vmatprep.subr.mxu0 0.0
        %6743 = vmatpush1.msra.mxu0 0.0
        %6744 = vmatprep.subr.mxu0 0.0
        %6745 = vmatpush1.msra.mxu0 0.0
        %6746 = vmatprep.subr.mxu0 0.0
        %6747 = vmatpush1.msra.mxu0 0.0
        %6748 = vmatprep.subr.mxu0 0.0
        %6749 = vmatpush1.msra.mxu0 0.0
        %6750 = vmatprep.subr.mxu0 0.0
        %6751 = vmatpush1.msra.mxu0 0.0
        %6752 = vmatprep.subr.mxu0 0.0
        %6753 = vmatpush1.msra.mxu0 0.0
        %6754 = vmatprep.subr.mxu0 0.0
        %6755 = vmatpush1.msra.mxu0 0.0
        %6756 = vmatprep.subr.mxu0 0.0
        %6757 = vmatpush1.msra.mxu0 0.0
        %6758 = vmatprep.subr.mxu0 0.0
        %6759 = vmatpush1.msra.mxu0 0.0
        %6760 = vmatprep.subr.mxu0 0.0
        %6761 = vmatpush1.msra.mxu0 0.0
        %6762 = vmatprep.subr.mxu0 0.0
        %6763 = vmatpush1.msra.mxu0 0.0
        %6764 = vmatprep.subr.mxu0 0.0
        %6765 = vmatpush1.msra.mxu0 0.0
        %6766 = vmatprep.subr.mxu0 0.0
        %6767 = vmatpush1.msra.mxu0 0.0
        %6768 = vmatprep.mubr.f32.mxu0 %v6681
        %6769 = vmatmul.mubr.f32.gmra.mrb[0].mxu0 %v6607
        %v6770 = vpop.f32.mrb[0].mxu0
        %v6771 = vadd.f32 0.0, %v6770
        %v6772 = vpop.f32.mrb[0].mxu0
        %6773 = vmatprep.mubr.f32.mxu0 %v6684
        %6774 = vmatmul.mubr.f32.gmra.mrb[0].mxu0 %v6609
        %v6775 = vpop.f32.mrb[0].mxu0
        %v6776 = vadd.f32 0.0, %v6775
        %v6777 = vpop.f32.mrb[0].mxu0
        %6778 = vmatprep.mubr.f32.mxu0 %v6687
        %6779 = vmatmul.mubr.f32.gmra.mrb[0].mxu0 %v6611
        %v6780 = vpop.f32.mrb[0].mxu0
        %v6781 = vadd.f32 0.0, %v6780
        %v6782 = vpop.f32.mrb[0].mxu0
        %6783 = vmatprep.mubr.f32.mxu0 %v6690
        %6784 = vmatmul.mubr.f32.gmra.mrb[0].mxu0 %v6613
        %v6785 = vpop.f32.mrb[0].mxu0
        %v6786 = vadd.f32 0.0, %v6785
        %v6787 = vpop.f32.mrb[0].mxu0
        %6788 = vmatprep.mubr.f32.mxu0 %v6693
        %6789 = vmatmul.mubr.f32.gmra.mrb[0].mxu0 %v6615
        %v6790 = vpop.f32.mrb[0].mxu0
        %v6791 = vadd.f32 0.0, %v6790
        %v6792 = vpop.f32.mrb[0].mxu0
        %6793 = vmatprep.mubr.f32.mxu0 %v6696
        %6794 = vmatmul.mubr.f32.gmra.mrb[0].mxu0 %v6617
        %v6795 = vpop.f32.mrb[0].mxu0
        %v6796 = vadd.f32 0.0, %v6795
        %v6797 = vpop.f32.mrb[0].mxu0
        %6798 = vmatprep.mubr.f32.mxu0 %v6699
        %6799 = vmatmul.mubr.f32.gmra.mrb[0].mxu0 %v6619
        %v6800 = vpop.f32.mrb[0].mxu0
        %v6801 = vadd.f32 0.0, %v6800
        %v6802 = vpop.f32.mrb[0].mxu0
        %6803 = vmatprep.mubr.f32.mxu0 %v6702
        %6804 = vmatmul.mubr.f32.gmra.mrb[0].mxu0 %v6621
        %v6805 = vpop.f32.mrb[0].mxu0
        %v6806 = vadd.f32 0.0, %v6805
        %v6807 = vpop.f32.mrb[0].mxu0
        %6808 = vdwg.mxu0
        %v6809 = vadd.f32 %v6598, %v6771
        %v6810 = vadd.f32 %v6599, %v6776
        %v6811 = vadd.f32 %v6600, %v6781
        %v6812 = vadd.f32 %v6601, %v6786
        %v6813 = vadd.f32 %v6602, %v6791
        %v6814 = vadd.f32 %v6603, %v6796
        %v6815 = vadd.f32 %v6604, %v6801
        %v6816 = vadd.f32 %v6605, %v6806
        %v6817 = vld [vmem:[%s7] sm:$0xff]
        %v6818 = vld [vmem:[%s7 + $0x8] sm:$0xff]
        %v6819 = vld [vmem:[%s7 + $0x10] sm:$0xff]
        %v6820 = vld [vmem:[%s7 + $0x18] sm:$0xff]
        %v6821 = vld [vmem:[%s7 + $0x20] sm:$0xff]
        %v6822 = vld [vmem:[%s7 + $0x28] sm:$0xff]
        %v6823 = vld [vmem:[%s7 + $0x30] sm:$0xff]
        %v6824 = vld [vmem:[%s7 + $0x38] sm:$0xff]
        %6826 = vset.pattern.permute.xlu0 0
        %6827 = vperm.xlu0 %6826, %v6817
        %v6828 = vpop.permute.xlu0 %6827
        %6831 = vset.pattern.permute.xlu0 0
        %6832 = vperm.xlu0 %6831, %v6818
        %v6833 = vpop.permute.xlu0 %6832
        %6836 = vset.pattern.permute.xlu0 0
        %6837 = vperm.xlu0 %6836, %v6819
        %v6838 = vpop.permute.xlu0 %6837
        %6841 = vset.pattern.permute.xlu0 0
        %6842 = vperm.xlu0 %6841, %v6820
        %v6843 = vpop.permute.xlu0 %6842
        %6846 = vset.pattern.permute.xlu0 0
        %6847 = vperm.xlu0 %6846, %v6821
        %v6848 = vpop.permute.xlu0 %6847
        %6851 = vset.pattern.permute.xlu0 0
        %6852 = vperm.xlu0 %6851, %v6822
        %v6853 = vpop.permute.xlu0 %6852
        %6856 = vset.pattern.permute.xlu0 0
        %6857 = vperm.xlu0 %6856, %v6823
        %v6858 = vpop.permute.xlu0 %6857
        %6861 = vset.pattern.permute.xlu0 0
        %6862 = vperm.xlu0 %6861, %v6824
        %v6863 = vpop.permute.xlu0 %6862
        %v6865 = vadd.f32 %v6809, %v6828
        %v6866 = vadd.f32 %v6810, %v6833
        %v6867 = vadd.f32 %v6811, %v6838
        %v6868 = vadd.f32 %v6812, %v6843
        %v6869 = vadd.f32 %v6813, %v6848
        %v6870 = vadd.f32 %v6814, %v6853
        %v6871 = vadd.f32 %v6815, %v6858
        %v6872 = vadd.f32 %v6816, %v6863
        %v6873 = vmax.f32 %v6865, 0.0
        %v6874 = vmax.f32 %v6866, 0.0
        %v6875 = vmax.f32 %v6867, 0.0
        %v6876 = vmax.f32 %v6868, 0.0
        %v6877 = vmax.f32 %v6869, 0.0
        %v6878 = vmax.f32 %v6870, 0.0
        %v6879 = vmax.f32 %v6871, 0.0
        %v6880 = vmax.f32 %v6872, 0.0
        %v6881 = vld [vmem:[%s11] sm:$0xff]
        %v6882 = vld [vmem:[%s11 + $0x8] sm:$0xff]
        %v6883 = vld [vmem:[%s11 + $0x10] sm:$0xff]
        %v6884 = vld [vmem:[%s11 + $0x18] sm:$0xff]
        %vm6885 = vcmask 261120
        %v6887 = vsel %vm6885, %v6873, 0
        %v6890 = vsel %vm6885, %v6874, 0
        %v6893 = vsel %vm6885, %v6875, 0
        %v6896 = vsel %vm6885, %v6876, 0
        %v6899 = vsel %vm6885, %v6877, 0
        %v6902 = vsel %vm6885, %v6878, 0
        %v6905 = vsel %vm6885, %v6879, 0
        %v6908 = vsel %vm6885, %v6880, 0
        %6910 = vmatprep.subr.mxu0 0.0
        %6911 = vmatpush1.msra.mxu0 %v6881
        %6912 = vmatprep.subr.mxu0 0.0
        %6913 = vmatpush1.msra.mxu0 %v6882
        %6914 = vmatprep.subr.mxu0 0.0
        %6915 = vmatpush1.msra.mxu0 %v6883
        %6916 = vmatprep.subr.mxu0 0.0
        %6917 = vmatpush1.msra.mxu0 %v6884
        %6918 = vmatprep.subr.mxu0 0.0
        %6919 = vmatpush1.msra.mxu0 0.0
        %6920 = vmatprep.subr.mxu0 0.0
        %6921 = vmatpush1.msra.mxu0 0.0
        %6922 = vmatprep.subr.mxu0 0.0
        %6923 = vmatpush1.msra.mxu0 0.0
        %6924 = vmatprep.subr.mxu0 0.0
        %6925 = vmatpush1.msra.mxu0 0.0
        %6926 = vmatprep.subr.mxu0 0.0
        %6927 = vmatpush1.msra.mxu0 0.0
        %6928 = vmatprep.subr.mxu0 0.0
        %6929 = vmatpush1.msra.mxu0 0.0
        %6930 = vmatprep.subr.mxu0 0.0
        %6931 = vmatpush1.msra.mxu0 0.0
        %6932 = vmatprep.subr.mxu0 0.0
        %6933 = vmatpush1.msra.mxu0 0.0
        %6934 = vmatprep.subr.mxu0 0.0
        %6935 = vmatpush1.msra.mxu0 0.0
        %6936 = vmatprep.subr.mxu0 0.0
        %6937 = vmatpush1.msra.mxu0 0.0
        %6938 = vmatprep.subr.mxu0 0.0
        %6939 = vmatpush1.msra.mxu0 0.0
        %6940 = vmatprep.subr.mxu0 0.0
        %6941 = vmatpush1.msra.mxu0 0.0
        %6942 = vmatprep.subr.mxu0 0.0
        %6943 = vmatpush1.msra.mxu0 0.0
        %6944 = vmatprep.subr.mxu0 0.0
        %6945 = vmatpush1.msra.mxu0 0.0
        %6946 = vmatprep.subr.mxu0 0.0
        %6947 = vmatpush1.msra.mxu0 0.0
        %6948 = vmatprep.subr.mxu0 0.0
        %6949 = vmatpush1.msra.mxu0 0.0
        %6950 = vmatprep.subr.mxu0 0.0
        %6951 = vmatpush1.msra.mxu0 0.0
        %6952 = vmatprep.subr.mxu0 0.0
        %6953 = vmatpush1.msra.mxu0 0.0
        %6954 = vmatprep.subr.mxu0 0.0
        %6955 = vmatpush1.msra.mxu0 0.0
        %6956 = vmatprep.subr.mxu0 0.0
        %6957 = vmatpush1.msra.mxu0 0.0
        %6958 = vmatprep.subr.mxu0 0.0
        %6959 = vmatpush1.msra.mxu0 0.0
        %6960 = vmatprep.subr.mxu0 0.0
        %6961 = vmatpush1.msra.mxu0 0.0
        %6962 = vmatprep.subr.mxu0 0.0
        %6963 = vmatpush1.msra.mxu0 0.0
        %6964 = vmatprep.subr.mxu0 0.0
        %6965 = vmatpush1.msra.mxu0 0.0
        %6966 = vmatprep.subr.mxu0 0.0
        %6967 = vmatpush1.msra.mxu0 0.0
        %6968 = vmatprep.subr.mxu0 0.0
        %6969 = vmatpush1.msra.mxu0 0.0
        %6970 = vmatprep.subr.mxu0 0.0
        %6971 = vmatpush1.msra.mxu0 0.0
        %6972 = vmatprep.subr.mxu0 0.0
        %6973 = vmatpush1.msra.mxu0 0.0
        %6974 = vmatprep.mubr.f32.mxu0 0.0
        %6975 = vmatmul.mubr.f32.gmra.mrb[0].mxu0 %v6887
        %v6976 = vpop.f32.mrb[0].mxu0
        %v6977 = vadd.f32 0.0, %v6976
        %v6978 = vpop.f32.mrb[0].mxu0
        %6979 = vmatprep.mubr.f32.mxu0 0.0
        %6980 = vmatmul.mubr.f32.gmra.mrb[0].mxu0 %v6890
        %v6981 = vpop.f32.mrb[0].mxu0
        %v6982 = vadd.f32 0.0, %v6981
        %v6983 = vpop.f32.mrb[0].mxu0
        %6984 = vmatprep.mubr.f32.mxu0 0.0
        %6985 = vmatmul.mubr.f32.gmra.mrb[0].mxu0 %v6893
        %v6986 = vpop.f32.mrb[0].mxu0
        %v6987 = vadd.f32 0.0, %v6986
        %v6988 = vpop.f32.mrb[0].mxu0
        %6989 = vmatprep.mubr.f32.mxu0 0.0
        %6990 = vmatmul.mubr.f32.gmra.mrb[0].mxu0 %v6896
        %v6991 = vpop.f32.mrb[0].mxu0
        %v6992 = vadd.f32 0.0, %v6991
        %v6993 = vpop.f32.mrb[0].mxu0
        %6994 = vmatprep.mubr.f32.mxu0 0.0
        %6995 = vmatmul.mubr.f32.gmra.mrb[0].mxu0 %v6899
        %v6996 = vpop.f32.mrb[0].mxu0
        %v6997 = vadd.f32 0.0, %v6996
        %v6998 = vpop.f32.mrb[0].mxu0
        %6999 = vmatprep.mubr.f32.mxu0 0.0
        %7000 = vmatmul.mubr.f32.gmra.mrb[0].mxu0 %v6902
        %v7001 = vpop.f32.mrb[0].mxu0
        %v7002 = vadd.f32 0.0, %v7001
        %v7003 = vpop.f32.mrb[0].mxu0
        %7004 = vmatprep.mubr.f32.mxu0 0.0
        %7005 = vmatmul.mubr.f32.gmra.mrb[0].mxu0 %v6905
        %v7006 = vpop.f32.mrb[0].mxu0
        %v7007 = vadd.f32 0.0, %v7006
        %v7008 = vpop.f32.mrb[0].mxu0
        %7009 = vmatprep.mubr.f32.mxu0 0.0
        %7010 = vmatmul.mubr.f32.gmra.mrb[0].mxu0 %v6908
        %v7011 = vpop.f32.mrb[0].mxu0
        %v7012 = vadd.f32 0.0, %v7011
        %v7013 = vpop.f32.mrb[0].mxu0
        %7014 = vdwg.mxu0
        %vm7015 = vcmask 572416
        %7016 = vst.msk [vmem:[#allocation5] sm:$0xff] %vm7015, 0.0
        %7017 = vst.msk [vmem:[#allocation5 + $0x8] sm:$0xff] %vm7015, 0.0
        %7018 = vst.msk [vmem:[#allocation5 + $0x10] sm:$0xff] %vm7015, 0.0
        %7019 = vst.msk [vmem:[#allocation5 + $0x18] sm:$0xff] %vm7015, 0.0
        %7020 = vst.msk [vmem:[#allocation5 + $0x20] sm:$0xff] %vm7015, 0.0
        %7021 = vst.msk [vmem:[#allocation5 + $0x28] sm:$0xff] %vm7015, 0.0
        %7022 = vst.msk [vmem:[#allocation5 + $0x30] sm:$0xff] %vm7015, 0.0
        %7023 = vst.msk [vmem:[#allocation5 + $0x38] sm:$0xff] %vm7015, 0.0
        %7024 = vst.msk [vmem:[#allocation5 + $0x40] sm:$0xff] %vm7015, 0.0
        %7025 = vst.msk [vmem:[#allocation5 + $0x48] sm:$0xff] %vm7015, 0.0
        %7026 = vst.msk [vmem:[#allocation5 + $0x50] sm:$0xff] %vm7015, 0.0
        %7027 = vst.msk [vmem:[#allocation5 + $0x58] sm:$0xff] %vm7015, 0.0
        %7028 = vst.msk [vmem:[#allocation5 + $0x60] sm:$0xff] %vm7015, 0.0
        %7029 = vst.msk [vmem:[#allocation5 + $0x68] sm:$0xff] %vm7015, 0.0
        %7030 = vst.msk [vmem:[#allocation5 + $0x70] sm:$0xff] %vm7015, 0.0
        %7031 = vst.msk [vmem:[#allocation5 + $0x78] sm:$0xff] %vm7015, 0.0
        %7032 = vst.msk [vmem:[#allocation5 + $0x80] sm:$0xff] %vm7015, 0.0
        %vm7033 = vcmask 568320
        %7034 = vst.msk [vmem:[#allocation5 + $0x88] sm:$0xf] %vm7033, 0.0
        %v7035 = vld [vmem:[%s14] sm:$0xff]
        %v7036 = vld [vmem:[%s14 + $0x8] sm:$0xff]
        %v7037 = vld [vmem:[%s14 + $0x10] sm:$0xff]
        %v7038 = vld [vmem:[%s14 + $0x18] sm:$0xff]
        %v7039 = vld [vmem:[%s14 + $0x20] sm:$0xff]
        %v7040 = vld [vmem:[%s14 + $0x28] sm:$0xff]
        %v7041 = vld [vmem:[%s14 + $0x30] sm:$0xff]
        %v7042 = vld [vmem:[%s14 + $0x38] sm:$0xff]
        %v7044 = vsel %vm6885, %v7035, 0
        %v7047 = vsel %vm6885, %v7036, 0
        %v7050 = vsel %vm6885, %v7037, 0
        %v7053 = vsel %vm6885, %v7038, 0
        %v7056 = vsel %vm6885, %v7039, 0
        %v7059 = vsel %vm6885, %v7040, 0
        %v7062 = vsel %vm6885, %v7041, 0
        %v7065 = vsel %vm6885, %v7042, 0
        %7067 = vmatprep.subr.mxu0 0.0
        %7068 = vmatpush1.msra.mxu0 %v6977
        %7069 = vmatprep.subr.mxu0 0.0
        %7070 = vmatpush1.msra.mxu0 %v6982
        %7071 = vmatprep.subr.mxu0 0.0
        %7072 = vmatpush1.msra.mxu0 %v6987
        %7073 = vmatprep.subr.mxu0 0.0
        %7074 = vmatpush1.msra.mxu0 %v6992
        %7075 = vmatprep.subr.mxu0 0.0
        %7076 = vmatpush1.msra.mxu0 0.0
        %7077 = vmatprep.subr.mxu0 0.0
        %7078 = vmatpush1.msra.mxu0 0.0
        %7079 = vmatprep.subr.mxu0 0.0
        %7080 = vmatpush1.msra.mxu0 0.0
        %7081 = vmatprep.subr.mxu0 0.0
        %7082 = vmatpush1.msra.mxu0 0.0
        %7083 = vmatprep.subr.mxu0 0.0
        %7084 = vmatpush1.msra.mxu0 0.0
        %7085 = vmatprep.subr.mxu0 0.0
        %7086 = vmatpush1.msra.mxu0 0.0
        %7087 = vmatprep.subr.mxu0 0.0
        %7088 = vmatpush1.msra.mxu0 0.0
        %7089 = vmatprep.subr.mxu0 0.0
        %7090 = vmatpush1.msra.mxu0 0.0
        %7091 = vmatprep.subr.mxu0 0.0
        %7092 = vmatpush1.msra.mxu0 0.0
        %7093 = vmatprep.subr.mxu0 0.0
        %7094 = vmatpush1.msra.mxu0 0.0
        %7095 = vmatprep.subr.mxu0 0.0
        %7096 = vmatpush1.msra.mxu0 0.0
        %7097 = vmatprep.subr.mxu0 0.0
        %7098 = vmatpush1.msra.mxu0 0.0
        %7099 = vmatprep.subr.mxu0 0.0
        %7100 = vmatpush1.msra.mxu0 0.0
        %7101 = vmatprep.subr.mxu0 0.0
        %7102 = vmatpush1.msra.mxu0 0.0
        %7103 = vmatprep.subr.mxu0 0.0
        %7104 = vmatpush1.msra.mxu0 0.0
        %7105 = vmatprep.subr.mxu0 0.0
        %7106 = vmatpush1.msra.mxu0 0.0
        %7107 = vmatprep.subr.mxu0 0.0
        %7108 = vmatpush1.msra.mxu0 0.0
        %7109 = vmatprep.subr.mxu0 0.0
        %7110 = vmatpush1.msra.mxu0 0.0
        %7111 = vmatprep.subr.mxu0 0.0
        %7112 = vmatpush1.msra.mxu0 0.0
        %7113 = vmatprep.subr.mxu0 0.0
        %7114 = vmatpush1.msra.mxu0 0.0
        %7115 = vmatprep.subr.mxu0 0.0
        %7116 = vmatpush1.msra.mxu0 0.0
        %7117 = vmatprep.subr.mxu0 0.0
        %7118 = vmatpush1.msra.mxu0 0.0
        %7119 = vmatprep.subr.mxu0 0.0
        %7120 = vmatpush1.msra.mxu0 0.0
        %7121 = vmatprep.subr.mxu0 0.0
        %7122 = vmatpush1.msra.mxu0 0.0
        %7123 = vmatprep.subr.mxu0 0.0
        %7124 = vmatpush1.msra.mxu0 0.0
        %7125 = vmatprep.subr.mxu0 0.0
        %7126 = vmatpush1.msra.mxu0 0.0
        %7127 = vmatprep.subr.mxu0 0.0
        %7128 = vmatpush1.msra.mxu0 0.0
        %7129 = vmatprep.subr.mxu0 0.0
        %7130 = vmatpush1.msra.mxu0 0.0
        %7131 = vmatprep.mubr.f32.mxu0 0.0
        %7132 = vmatmul.mubr.f32.gmra.mrb[0].mxu0 %v7044
        %v7133 = vpop.f32.mrb[0].mxu0
        %v7134 = vadd.f32 0.0, %v7133
        %v7135 = vpop.f32.mrb[0].mxu0
        %7136 = vmatprep.mubr.f32.mxu0 0.0
        %7137 = vmatmul.mubr.f32.gmra.mrb[0].mxu0 %v7047
        %v7138 = vpop.f32.mrb[0].mxu0
        %v7139 = vadd.f32 0.0, %v7138
        %v7140 = vpop.f32.mrb[0].mxu0
        %7141 = vmatprep.mubr.f32.mxu0 0.0
        %7142 = vmatmul.mubr.f32.gmra.mrb[0].mxu0 %v7050
        %v7143 = vpop.f32.mrb[0].mxu0
        %v7144 = vadd.f32 0.0, %v7143
        %v7145 = vpop.f32.mrb[0].mxu0
        %7146 = vmatprep.mubr.f32.mxu0 0.0
        %7147 = vmatmul.mubr.f32.gmra.mrb[0].mxu0 %v7053
        %v7148 = vpop.f32.mrb[0].mxu0
        %v7149 = vadd.f32 0.0, %v7148
        %v7150 = vpop.f32.mrb[0].mxu0
        %7151 = vmatprep.mubr.f32.mxu0 0.0
        %7152 = vmatmul.mubr.f32.gmra.mrb[0].mxu0 %v7056
        %v7153 = vpop.f32.mrb[0].mxu0
        %v7154 = vadd.f32 0.0, %v7153
        %v7155 = vpop.f32.mrb[0].mxu0
        %7156 = vmatprep.mubr.f32.mxu0 0.0
        %7157 = vmatmul.mubr.f32.gmra.mrb[0].mxu0 %v7059
        %v7158 = vpop.f32.mrb[0].mxu0
        %v7159 = vadd.f32 0.0, %v7158
        %v7160 = vpop.f32.mrb[0].mxu0
        %7161 = vmatprep.mubr.f32.mxu0 0.0
        %7162 = vmatmul.mubr.f32.gmra.mrb[0].mxu0 %v7062
        %v7163 = vpop.f32.mrb[0].mxu0
        %v7164 = vadd.f32 0.0, %v7163
        %v7165 = vpop.f32.mrb[0].mxu0
        %7166 = vmatprep.mubr.f32.mxu0 0.0
        %7167 = vmatmul.mubr.f32.gmra.mrb[0].mxu0 %v7065
        %v7168 = vpop.f32.mrb[0].mxu0
        %v7169 = vadd.f32 0.0, %v7168
        %v7170 = vpop.f32.mrb[0].mxu0
        %7171 = vdwg.mxu0
        %7180 = vrot.lane.b32.xlu0 %v7134, 3
        %v7181 = vpop.permute.xlu0 %7180
        %7182 = vrot.lane.b32.xlu0 %v7139, 3
        %v7183 = vpop.permute.xlu0 %7182
        %7184 = vrot.lane.b32.xlu0 %v7144, 3
        %v7185 = vpop.permute.xlu0 %7184
        %7186 = vrot.lane.b32.xlu0 %v7149, 3
        %v7187 = vpop.permute.xlu0 %7186
        %7188 = vrot.lane.b32.xlu0 %v7154, 3
        %v7189 = vpop.permute.xlu0 %7188
        %7190 = vrot.lane.b32.xlu0 %v7159, 3
        %v7191 = vpop.permute.xlu0 %7190
        %7192 = vrot.lane.b32.xlu0 %v7164, 3
        %v7193 = vpop.permute.xlu0 %7192
        %7194 = vrot.lane.b32.xlu0 %v7169, 3
        %v7195 = vpop.permute.xlu0 %7194
        %vm7204 = vcmask 547864
        %7205 = vst.msk [vmem:[#allocation5 + $0x3] sm:$0xff] %vm7204, %v7181
        %7206 = vst.msk [vmem:[#allocation5 + $0xb] sm:$0xff] %vm7204, %v7183
        %7207 = vst.msk [vmem:[#allocation5 + $0x13] sm:$0xff] %vm7204, %v7185
        %7208 = vst.msk [vmem:[#allocation5 + $0x1b] sm:$0xff] %vm7204, %v7187
        %7209 = vst.msk [vmem:[#allocation5 + $0x23] sm:$0xff] %vm7204, %v7189
        %7210 = vst.msk [vmem:[#allocation5 + $0x2b] sm:$0xff] %vm7204, %v7191
        %7211 = vst.msk [vmem:[#allocation5 + $0x33] sm:$0xff] %vm7204, %v7193
        %7212 = vst.msk [vmem:[#allocation5 + $0x3b] sm:$0xff] %vm7204, %v7195
        %7213 = vmatprep.subr.mxu0 0.0
        %7214 = vmatpush1.msra.mxu0 %v6997
        %7215 = vmatprep.subr.mxu0 0.0
        %7216 = vmatpush1.msra.mxu0 %v7002
        %7217 = vmatprep.subr.mxu0 0.0
        %7218 = vmatpush1.msra.mxu0 %v7007
        %7219 = vmatprep.subr.mxu0 0.0
        %7220 = vmatpush1.msra.mxu0 %v7012
        %7221 = vmatprep.subr.mxu0 0.0
        %7222 = vmatpush1.msra.mxu0 0.0
        %7223 = vmatprep.subr.mxu0 0.0
        %7224 = vmatpush1.msra.mxu0 0.0
        %7225 = vmatprep.subr.mxu0 0.0
        %7226 = vmatpush1.msra.mxu0 0.0
        %7227 = vmatprep.subr.mxu0 0.0
        %7228 = vmatpush1.msra.mxu0 0.0
        %7229 = vmatprep.subr.mxu0 0.0
        %7230 = vmatpush1.msra.mxu0 0.0
        %7231 = vmatprep.subr.mxu0 0.0
        %7232 = vmatpush1.msra.mxu0 0.0
        %7233 = vmatprep.subr.mxu0 0.0
        %7234 = vmatpush1.msra.mxu0 0.0
        %7235 = vmatprep.subr.mxu0 0.0
        %7236 = vmatpush1.msra.mxu0 0.0
        %7237 = vmatprep.subr.mxu0 0.0
        %7238 = vmatpush1.msra.mxu0 0.0
        %7239 = vmatprep.subr.mxu0 0.0
        %7240 = vmatpush1.msra.mxu0 0.0
        %7241 = vmatprep.subr.mxu0 0.0
        %7242 = vmatpush1.msra.mxu0 0.0
        %7243 = vmatprep.subr.mxu0 0.0
        %7244 = vmatpush1.msra.mxu0 0.0
        %7245 = vmatprep.subr.mxu0 0.0
        %7246 = vmatpush1.msra.mxu0 0.0
        %7247 = vmatprep.subr.mxu0 0.0
        %7248 = vmatpush1.msra.mxu0 0.0
        %7249 = vmatprep.subr.mxu0 0.0
        %7250 = vmatpush1.msra.mxu0 0.0
        %7251 = vmatprep.subr.mxu0 0.0
        %7252 = vmatpush1.msra.mxu0 0.0
        %7253 = vmatprep.subr.mxu0 0.0
        %7254 = vmatpush1.msra.mxu0 0.0
        %7255 = vmatprep.subr.mxu0 0.0
        %7256 = vmatpush1.msra.mxu0 0.0
        %7257 = vmatprep.subr.mxu0 0.0
        %7258 = vmatpush1.msra.mxu0 0.0
        %7259 = vmatprep.subr.mxu0 0.0
        %7260 = vmatpush1.msra.mxu0 0.0
        %7261 = vmatprep.subr.mxu0 0.0
        %7262 = vmatpush1.msra.mxu0 0.0
        %7263 = vmatprep.subr.mxu0 0.0
        %7264 = vmatpush1.msra.mxu0 0.0
        %7265 = vmatprep.subr.mxu0 0.0
        %7266 = vmatpush1.msra.mxu0 0.0
        %7267 = vmatprep.subr.mxu0 0.0
        %7268 = vmatpush1.msra.mxu0 0.0
        %7269 = vmatprep.subr.mxu0 0.0
        %7270 = vmatpush1.msra.mxu0 0.0
        %7271 = vmatprep.subr.mxu0 0.0
        %7272 = vmatpush1.msra.mxu0 0.0
        %7273 = vmatprep.subr.mxu0 0.0
        %7274 = vmatpush1.msra.mxu0 0.0
        %7275 = vmatprep.subr.mxu0 0.0
        %7276 = vmatpush1.msra.mxu0 0.0
        %7277 = vmatprep.mubr.f32.mxu0 0.0
        %7278 = vmatmul.mubr.f32.gmra.mrb[0].mxu0 %v7044
        %v7279 = vpop.f32.mrb[0].mxu0
        %v7280 = vadd.f32 0.0, %v7279
        %v7281 = vpop.f32.mrb[0].mxu0
        %7282 = vmatprep.mubr.f32.mxu0 0.0
        %7283 = vmatmul.mubr.f32.gmra.mrb[0].mxu0 %v7047
        %v7284 = vpop.f32.mrb[0].mxu0
        %v7285 = vadd.f32 0.0, %v7284
        %v7286 = vpop.f32.mrb[0].mxu0
        %7287 = vmatprep.mubr.f32.mxu0 0.0
        %7288 = vmatmul.mubr.f32.gmra.mrb[0].mxu0 %v7050
        %v7289 = vpop.f32.mrb[0].mxu0
        %v7290 = vadd.f32 0.0, %v7289
        %v7291 = vpop.f32.mrb[0].mxu0
        %7292 = vmatprep.mubr.f32.mxu0 0.0
        %7293 = vmatmul.mubr.f32.gmra.mrb[0].mxu0 %v7053
        %v7294 = vpop.f32.mrb[0].mxu0
        %v7295 = vadd.f32 0.0, %v7294
        %v7296 = vpop.f32.mrb[0].mxu0
        %7297 = vmatprep.mubr.f32.mxu0 0.0
        %7298 = vmatmul.mubr.f32.gmra.mrb[0].mxu0 %v7056
        %v7299 = vpop.f32.mrb[0].mxu0
        %v7300 = vadd.f32 0.0, %v7299
        %v7301 = vpop.f32.mrb[0].mxu0
        %7302 = vmatprep.mubr.f32.mxu0 0.0
        %7303 = vmatmul.mubr.f32.gmra.mrb[0].mxu0 %v7059
        %v7304 = vpop.f32.mrb[0].mxu0
        %v7305 = vadd.f32 0.0, %v7304
        %v7306 = vpop.f32.mrb[0].mxu0
        %7307 = vmatprep.mubr.f32.mxu0 0.0
        %7308 = vmatmul.mubr.f32.gmra.mrb[0].mxu0 %v7062
        %v7309 = vpop.f32.mrb[0].mxu0
        %v7310 = vadd.f32 0.0, %v7309
        %v7311 = vpop.f32.mrb[0].mxu0
        %7312 = vmatprep.mubr.f32.mxu0 0.0
        %7313 = vmatmul.mubr.f32.gmra.mrb[0].mxu0 %v7065
        %v7314 = vpop.f32.mrb[0].mxu0
        %v7315 = vadd.f32 0.0, %v7314
        %v7316 = vpop.f32.mrb[0].mxu0
        %7317 = vdwg.mxu0
        %7326 = vrot.lane.b32.xlu0 %v7280, 3
        %v7327 = vpop.permute.xlu0 %7326
        %7328 = vrot.lane.b32.xlu0 %v7285, 3
        %v7329 = vpop.permute.xlu0 %7328
        %7330 = vrot.lane.b32.xlu0 %v7290, 3
        %v7331 = vpop.permute.xlu0 %7330
        %7332 = vrot.lane.b32.xlu0 %v7295, 3
        %v7333 = vpop.permute.xlu0 %7332
        %7334 = vrot.lane.b32.xlu0 %v7300, 3
        %v7335 = vpop.permute.xlu0 %7334
        %7336 = vrot.lane.b32.xlu0 %v7305, 3
        %v7337 = vpop.permute.xlu0 %7336
        %7338 = vrot.lane.b32.xlu0 %v7310, 3
        %v7339 = vpop.permute.xlu0 %7338
        %7340 = vrot.lane.b32.xlu0 %v7315, 3
        %v7341 = vpop.permute.xlu0 %7340
        %7350 = vst.msk [vmem:[#allocation5 + $0x49] sm:$0xff] %vm7204, %v7327
        %7351 = vst.msk [vmem:[#allocation5 + $0x51] sm:$0xff] %vm7204, %v7329
        %7352 = vst.msk [vmem:[#allocation5 + $0x59] sm:$0xff] %vm7204, %v7331
        %7353 = vst.msk [vmem:[#allocation5 + $0x61] sm:$0xff] %vm7204, %v7333
        %7354 = vst.msk [vmem:[#allocation5 + $0x69] sm:$0xff] %vm7204, %v7335
        %7355 = vst.msk [vmem:[#allocation5 + $0x71] sm:$0xff] %vm7204, %v7337
        %7356 = vst.msk [vmem:[#allocation5 + $0x79] sm:$0xff] %vm7204, %v7339
        %7357 = vst.msk [vmem:[#allocation5 + $0x81] sm:$0xff] %vm7204, %v7341
        %v7358 = vld [vmem:[#allocation5] sm:$0xff]
        %v7359 = vld [vmem:[#allocation5 + $0x8] sm:$0xff]
        %v7360 = vld [vmem:[#allocation5 + $0x10] sm:$0xff]
        %v7361 = vld [vmem:[#allocation5 + $0x18] sm:$0xff]
        %v7362 = vld [vmem:[#allocation5 + $0x20] sm:$0xff]
        %v7363 = vld [vmem:[#allocation5 + $0x28] sm:$0xff]
        %v7364 = vld [vmem:[#allocation5 + $0x30] sm:$0xff]
        %v7365 = vld [vmem:[#allocation5 + $0x38] sm:$0xff]
        %v7366 = vld [vmem:[#allocation5 + $0x40] sm:$0xff]
        %v7367 = vld [vmem:[#allocation5 + $0x48] sm:$0xff]
        %v7368 = vld [vmem:[#allocation5 + $0x50] sm:$0xff]
        %v7369 = vld [vmem:[#allocation5 + $0x58] sm:$0xff]
        %v7370 = vld [vmem:[#allocation5 + $0x60] sm:$0xff]
        %v7371 = vld [vmem:[#allocation5 + $0x68] sm:$0xff]
        %v7372 = vld [vmem:[#allocation5 + $0x70] sm:$0xff]
        %v7373 = vld [vmem:[#allocation5 + $0x78] sm:$0xff]
        %v7374 = vld [vmem:[#allocation5 + $0x80] sm:$0xff]
        %v7375 = vld [vmem:[#allocation5 + $0x88] sm:$0xf]
        %v7376 = vld [vmem:[%s4] sm:$0xff]
        %v7377 = vld [vmem:[%s4 + $0x8] sm:$0xff]
        %v7378 = vld [vmem:[%s4 + $0x10] sm:$0xff]
        %v7379 = vld [vmem:[%s4 + $0x18] sm:$0xff]
        %v7380 = vld [vmem:[%s4 + $0x20] sm:$0xff]
        %v7381 = vld [vmem:[%s4 + $0x28] sm:$0xff]
        %v7382 = vld [vmem:[%s4 + $0x30] sm:$0xff]
        %v7383 = vld [vmem:[%s4 + $0x38] sm:$0xff]
        %v7384 = vld [vmem:[%s4 + $0x40] sm:$0xff]
        %v7385 = vld [vmem:[%s4 + $0x48] sm:$0xff]
        %v7386 = vld [vmem:[%s4 + $0x50] sm:$0xff]
        %v7387 = vld [vmem:[%s4 + $0x58] sm:$0xff]
        %v7388 = vld [vmem:[%s4 + $0x60] sm:$0xff]
        %v7389 = vld [vmem:[%s4 + $0x68] sm:$0xff]
        %v7390 = vld [vmem:[%s4 + $0x70] sm:$0xff]
        %v7391 = vld [vmem:[%s4 + $0x78] sm:$0xff]
        %s7392 = scalar_lea.vmem %s4, 128
        %v7393 = vld [vmem:[%s7392] sm:$0xff]
        %v7394 = vld [vmem:[%s7392 + $0x8] sm:$0xff]
        %v7395 = vld [vmem:[%s7392 + $0x10] sm:$0xff]
        %v7396 = vld [vmem:[%s7392 + $0x18] sm:$0xff]
        %v7397 = vld [vmem:[%s7392 + $0x20] sm:$0xff]
        %v7398 = vld [vmem:[%s7392 + $0x28] sm:$0xff]
        %v7399 = vld [vmem:[%s7392 + $0x30] sm:$0xff]
        %v7400 = vld [vmem:[%s7392 + $0x38] sm:$0xff]
        %v7401 = vld [vmem:[%s7392 + $0x40] sm:$0xff]
        %v7402 = vld [vmem:[%s7392 + $0x48] sm:$0xff]
        %v7403 = vld [vmem:[%s7392 + $0x50] sm:$0xff]
        %v7404 = vld [vmem:[%s7392 + $0x58] sm:$0xff]
        %v7405 = vld [vmem:[%s7392 + $0x60] sm:$0xff]
        %v7406 = vld [vmem:[%s7392 + $0x68] sm:$0xff]
        %v7407 = vld [vmem:[%s7392 + $0x70] sm:$0xff]
        %v7408 = vld [vmem:[%s7392 + $0x78] sm:$0xff]
        %7427 = vrot.lane.b32.xlu0 %v7358, 127
        %v7428 = vpop.permute.xlu0 %7427
        %7429 = vrot.lane.b32.xlu0 %v7359, 127
        %v7430 = vpop.permute.xlu0 %7429
        %7431 = vrot.lane.b32.xlu0 %v7360, 127
        %v7432 = vpop.permute.xlu0 %7431
        %7433 = vrot.lane.b32.xlu0 %v7361, 127
        %v7434 = vpop.permute.xlu0 %7433
        %7435 = vrot.lane.b32.xlu0 %v7362, 127
        %v7436 = vpop.permute.xlu0 %7435
        %7437 = vrot.lane.b32.xlu0 %v7363, 127
        %v7438 = vpop.permute.xlu0 %7437
        %7439 = vrot.lane.b32.xlu0 %v7364, 127
        %v7440 = vpop.permute.xlu0 %7439
        %7441 = vrot.lane.b32.xlu0 %v7365, 127
        %v7442 = vpop.permute.xlu0 %7441
        %7443 = vrot.lane.b32.xlu0 %v7366, 127
        %v7444 = vpop.permute.xlu0 %7443
        %7445 = vrot.lane.b32.xlu0 %v7367, 127
        %v7446 = vpop.permute.xlu0 %7445
        %7447 = vrot.lane.b32.xlu0 %v7368, 127
        %v7448 = vpop.permute.xlu0 %7447
        %7449 = vrot.lane.b32.xlu0 %v7369, 127
        %v7450 = vpop.permute.xlu0 %7449
        %7451 = vrot.lane.b32.xlu0 %v7370, 127
        %v7452 = vpop.permute.xlu0 %7451
        %7453 = vrot.lane.b32.xlu0 %v7371, 127
        %v7454 = vpop.permute.xlu0 %7453
        %7455 = vrot.lane.b32.xlu0 %v7372, 127
        %v7456 = vpop.permute.xlu0 %7455
        %7457 = vrot.lane.b32.xlu0 %v7373, 127
        %v7458 = vpop.permute.xlu0 %7457
        %7459 = vrot.lane.b32.xlu0 %v7374, 127
        %v7460 = vpop.permute.xlu0 %7459
        %7461 = vrot.lane.b32.xlu0 %v7375, 127
        %v7462 = vpop.permute.xlu0 %7461
        %vm7480 = vcmask 97280
        %v7482 = vsel %vm7480, %v7394, 0
        %v7485 = vsel %vm7480, %v7396, 0
        %v7488 = vsel %vm7480, %v7398, 0
        %v7491 = vsel %vm7480, %v7400, 0
        %v7494 = vsel %vm7480, %v7402, 0
        %v7497 = vsel %vm7480, %v7404, 0
        %v7500 = vsel %vm7480, %v7406, 0
        %v7503 = vsel %vm7480, %v7408, 0
        %vm7505 = vcmask 1043456
        %v7506 = vsel %vm7505, %v7462, 0
        %7508 = vmatprep.subr.mxu0 0.0
        %7509 = vmatpush1.msra.mxu0 %v7428
        %7510 = vmatprep.subr.mxu0 0.0
        %7511 = vmatpush1.msra.mxu0 %v7430
        %7512 = vmatprep.subr.mxu0 0.0
        %7513 = vmatpush1.msra.mxu0 %v7432
        %7514 = vmatprep.subr.mxu0 0.0
        %7515 = vmatpush1.msra.mxu0 %v7434
        %7516 = vmatprep.subr.mxu0 0.0
        %7517 = vmatpush1.msra.mxu0 %v7436
        %7518 = vmatprep.subr.mxu0 0.0
        %7519 = vmatpush1.msra.mxu0 %v7438
        %7520 = vmatprep.subr.mxu0 0.0
        %7521 = vmatpush1.msra.mxu0 %v7440
        %7522 = vmatprep.subr.mxu0 0.0
        %7523 = vmatpush1.msra.mxu0 %v7442
        %7524 = vmatprep.subr.mxu0 0.0
        %7525 = vmatpush1.msra.mxu0 %v7444
        %7526 = vmatprep.subr.mxu0 0.0
        %7527 = vmatpush1.msra.mxu0 %v7446
        %7528 = vmatprep.subr.mxu0 0.0
        %7529 = vmatpush1.msra.mxu0 %v7448
        %7530 = vmatprep.subr.mxu0 0.0
        %7531 = vmatpush1.msra.mxu0 %v7450
        %7532 = vmatprep.subr.mxu0 0.0
        %7533 = vmatpush1.msra.mxu0 %v7452
        %7534 = vmatprep.subr.mxu0 0.0
        %7535 = vmatpush1.msra.mxu0 %v7454
        %7536 = vmatprep.subr.mxu0 0.0
        %7537 = vmatpush1.msra.mxu0 %v7456
        %7538 = vmatprep.subr.mxu0 0.0
        %7539 = vmatpush1.msra.mxu0 %v7458
        %7540 = vmatprep.subr.mxu0 0.0
        %7541 = vmatpush1.msra.mxu0 %v7460
        %7542 = vmatprep.subr.mxu0 0.0
        %7543 = vmatpush1.msra.mxu0 %v7506
        %7544 = vmatprep.subr.mxu0 0.0
        %7545 = vmatpush1.msra.mxu0 0.0
        %7546 = vmatprep.subr.mxu0 0.0
        %7547 = vmatpush1.msra.mxu0 0.0
        %7548 = vmatprep.subr.mxu0 0.0
        %7549 = vmatpush1.msra.mxu0 0.0
        %7550 = vmatprep.subr.mxu0 0.0
        %7551 = vmatpush1.msra.mxu0 0.0
        %7552 = vmatprep.subr.mxu0 0.0
        %7553 = vmatpush1.msra.mxu0 0.0
        %7554 = vmatprep.subr.mxu0 0.0
        %7555 = vmatpush1.msra.mxu0 0.0
        %7556 = vmatprep.subr.mxu0 0.0
        %7557 = vmatpush1.msra.mxu0 0.0
        %7558 = vmatprep.subr.mxu0 0.0
        %7559 = vmatpush1.msra.mxu0 0.0
        %7560 = vmatprep.subr.mxu0 0.0
        %7561 = vmatpush1.msra.mxu0 0.0
        %7562 = vmatprep.subr.mxu0 0.0
        %7563 = vmatpush1.msra.mxu0 0.0
        %7564 = vmatprep.subr.mxu0 0.0
        %7565 = vmatpush1.msra.mxu0 0.0
        %7566 = vmatprep.subr.mxu0 0.0
        %7567 = vmatpush1.msra.mxu0 0.0
        %7568 = vmatprep.subr.mxu0 0.0
        %7569 = vmatpush1.msra.mxu0 0.0
        %7570 = vmatprep.subr.mxu0 0.0
        %7571 = vmatpush1.msra.mxu0 0.0
        %7572 = vmatprep.mubr.f32.mxu0 %v7482
        %7573 = vmatmul.mubr.f32.gmra.mrb[0].mxu0 %v7393
        %v7574 = vpop.f32.mrb[0].mxu0
        %v7575 = vadd.f32 0.0, %v7574
        %v7576 = vpop.f32.mrb[0].mxu0
        %7577 = vmatprep.mubr.f32.mxu0 %v7485
        %7578 = vmatmul.mubr.f32.gmra.mrb[0].mxu0 %v7395
        %v7579 = vpop.f32.mrb[0].mxu0
        %v7580 = vadd.f32 0.0, %v7579
        %v7581 = vpop.f32.mrb[0].mxu0
        %7582 = vmatprep.mubr.f32.mxu0 %v7488
        %7583 = vmatmul.mubr.f32.gmra.mrb[0].mxu0 %v7397
        %v7584 = vpop.f32.mrb[0].mxu0
        %v7585 = vadd.f32 0.0, %v7584
        %v7586 = vpop.f32.mrb[0].mxu0
        %7587 = vmatprep.mubr.f32.mxu0 %v7491
        %7588 = vmatmul.mubr.f32.gmra.mrb[0].mxu0 %v7399
        %v7589 = vpop.f32.mrb[0].mxu0
        %v7590 = vadd.f32 0.0, %v7589
        %v7591 = vpop.f32.mrb[0].mxu0
        %7592 = vmatprep.mubr.f32.mxu0 %v7494
        %7593 = vmatmul.mubr.f32.gmra.mrb[0].mxu0 %v7401
        %v7594 = vpop.f32.mrb[0].mxu0
        %v7595 = vadd.f32 0.0, %v7594
        %v7596 = vpop.f32.mrb[0].mxu0
        %7597 = vmatprep.mubr.f32.mxu0 %v7497
        %7598 = vmatmul.mubr.f32.gmra.mrb[0].mxu0 %v7403
        %v7599 = vpop.f32.mrb[0].mxu0
        %v7600 = vadd.f32 0.0, %v7599
        %v7601 = vpop.f32.mrb[0].mxu0
        %7602 = vmatprep.mubr.f32.mxu0 %v7500
        %7603 = vmatmul.mubr.f32.gmra.mrb[0].mxu0 %v7405
        %v7604 = vpop.f32.mrb[0].mxu0
        %v7605 = vadd.f32 0.0, %v7604
        %v7606 = vpop.f32.mrb[0].mxu0
        %7607 = vmatprep.mubr.f32.mxu0 %v7503
        %7608 = vmatmul.mubr.f32.gmra.mrb[0].mxu0 %v7407
        %v7609 = vpop.f32.mrb[0].mxu0
        %v7610 = vadd.f32 0.0, %v7609
        %v7611 = vpop.f32.mrb[0].mxu0
        %7612 = vdwg.mxu0
        %v7614 = vsel %vm7480, %v7377, 0
        %v7617 = vsel %vm7480, %v7379, 0
        %v7620 = vsel %vm7480, %v7381, 0
        %v7623 = vsel %vm7480, %v7383, 0
        %v7626 = vsel %vm7480, %v7385, 0
        %v7629 = vsel %vm7480, %v7387, 0
        %v7632 = vsel %vm7480, %v7389, 0
        %v7635 = vsel %vm7480, %v7391, 0
        %v7637 = vsel %vm7505, %v7375, 0
        %7639 = vmatprep.subr.mxu0 0.0
        %7640 = vmatpush1.msra.mxu0 %v7358
        %7641 = vmatprep.subr.mxu0 0.0
        %7642 = vmatpush1.msra.mxu0 %v7359
        %7643 = vmatprep.subr.mxu0 0.0
        %7644 = vmatpush1.msra.mxu0 %v7360
        %7645 = vmatprep.subr.mxu0 0.0
        %7646 = vmatpush1.msra.mxu0 %v7361
        %7647 = vmatprep.subr.mxu0 0.0
        %7648 = vmatpush1.msra.mxu0 %v7362
        %7649 = vmatprep.subr.mxu0 0.0
        %7650 = vmatpush1.msra.mxu0 %v7363
        %7651 = vmatprep.subr.mxu0 0.0
        %7652 = vmatpush1.msra.mxu0 %v7364
        %7653 = vmatprep.subr.mxu0 0.0
        %7654 = vmatpush1.msra.mxu0 %v7365
        %7655 = vmatprep.subr.mxu0 0.0
        %7656 = vmatpush1.msra.mxu0 %v7366
        %7657 = vmatprep.subr.mxu0 0.0
        %7658 = vmatpush1.msra.mxu0 %v7367
        %7659 = vmatprep.subr.mxu0 0.0
        %7660 = vmatpush1.msra.mxu0 %v7368
        %7661 = vmatprep.subr.mxu0 0.0
        %7662 = vmatpush1.msra.mxu0 %v7369
        %7663 = vmatprep.subr.mxu0 0.0
        %7664 = vmatpush1.msra.mxu0 %v7370
        %7665 = vmatprep.subr.mxu0 0.0
        %7666 = vmatpush1.msra.mxu0 %v7371
        %7667 = vmatprep.subr.mxu0 0.0
        %7668 = vmatpush1.msra.mxu0 %v7372
        %7669 = vmatprep.subr.mxu0 0.0
        %7670 = vmatpush1.msra.mxu0 %v7373
        %7671 = vmatprep.subr.mxu0 0.0
        %7672 = vmatpush1.msra.mxu0 %v7374
        %7673 = vmatprep.subr.mxu0 0.0
        %7674 = vmatpush1.msra.mxu0 %v7637
        %7675 = vmatprep.subr.mxu0 0.0
        %7676 = vmatpush1.msra.mxu0 0.0
        %7677 = vmatprep.subr.mxu0 0.0
        %7678 = vmatpush1.msra.mxu0 0.0
        %7679 = vmatprep.subr.mxu0 0.0
        %7680 = vmatpush1.msra.mxu0 0.0
        %7681 = vmatprep.subr.mxu0 0.0
        %7682 = vmatpush1.msra.mxu0 0.0
        %7683 = vmatprep.subr.mxu0 0.0
        %7684 = vmatpush1.msra.mxu0 0.0
        %7685 = vmatprep.subr.mxu0 0.0
        %7686 = vmatpush1.msra.mxu0 0.0
        %7687 = vmatprep.subr.mxu0 0.0
        %7688 = vmatpush1.msra.mxu0 0.0
        %7689 = vmatprep.subr.mxu0 0.0
        %7690 = vmatpush1.msra.mxu0 0.0
        %7691 = vmatprep.subr.mxu0 0.0
        %7692 = vmatpush1.msra.mxu0 0.0
        %7693 = vmatprep.subr.mxu0 0.0
        %7694 = vmatpush1.msra.mxu0 0.0
        %7695 = vmatprep.subr.mxu0 0.0
        %7696 = vmatpush1.msra.mxu0 0.0
        %7697 = vmatprep.subr.mxu0 0.0
        %7698 = vmatpush1.msra.mxu0 0.0
        %7699 = vmatprep.subr.mxu0 0.0
        %7700 = vmatpush1.msra.mxu0 0.0
        %7701 = vmatprep.subr.mxu0 0.0
        %7702 = vmatpush1.msra.mxu0 0.0
        %7703 = vmatprep.mubr.f32.mxu0 %v7614
        %7704 = vmatmul.mubr.f32.gmra.mrb[0].mxu0 %v7376
        %v7705 = vpop.f32.mrb[0].mxu0
        %v7706 = vadd.f32 %v7575, %v7705
        %v7707 = vpop.f32.mrb[0].mxu0
        %7708 = vmatprep.mubr.f32.mxu0 %v7617
        %7709 = vmatmul.mubr.f32.gmra.mrb[0].mxu0 %v7378
        %v7710 = vpop.f32.mrb[0].mxu0
        %v7711 = vadd.f32 %v7580, %v7710
        %v7712 = vpop.f32.mrb[0].mxu0
        %7713 = vmatprep.mubr.f32.mxu0 %v7620
        %7714 = vmatmul.mubr.f32.gmra.mrb[0].mxu0 %v7380
        %v7715 = vpop.f32.mrb[0].mxu0
        %v7716 = vadd.f32 %v7585, %v7715
        %v7717 = vpop.f32.mrb[0].mxu0
        %7718 = vmatprep.mubr.f32.mxu0 %v7623
        %7719 = vmatmul.mubr.f32.gmra.mrb[0].mxu0 %v7382
        %v7720 = vpop.f32.mrb[0].mxu0
        %v7721 = vadd.f32 %v7590, %v7720
        %v7722 = vpop.f32.mrb[0].mxu0
        %7723 = vmatprep.mubr.f32.mxu0 %v7626
        %7724 = vmatmul.mubr.f32.gmra.mrb[0].mxu0 %v7384
        %v7725 = vpop.f32.mrb[0].mxu0
        %v7726 = vadd.f32 %v7595, %v7725
        %v7727 = vpop.f32.mrb[0].mxu0
        %7728 = vmatprep.mubr.f32.mxu0 %v7629
        %7729 = vmatmul.mubr.f32.gmra.mrb[0].mxu0 %v7386
        %v7730 = vpop.f32.mrb[0].mxu0
        %v7731 = vadd.f32 %v7600, %v7730
        %v7732 = vpop.f32.mrb[0].mxu0
        %7733 = vmatprep.mubr.f32.mxu0 %v7632
        %7734 = vmatmul.mubr.f32.gmra.mrb[0].mxu0 %v7388
        %v7735 = vpop.f32.mrb[0].mxu0
        %v7736 = vadd.f32 %v7605, %v7735
        %v7737 = vpop.f32.mrb[0].mxu0
        %7738 = vmatprep.mubr.f32.mxu0 %v7635
        %7739 = vmatmul.mubr.f32.gmra.mrb[0].mxu0 %v7390
        %v7740 = vpop.f32.mrb[0].mxu0
        %v7741 = vadd.f32 %v7610, %v7740
        %v7742 = vpop.f32.mrb[0].mxu0
        %7743 = vdwg.mxu0
        %s7744 = scalar_lea.vmem %s4, 256
        %v7745 = vld [vmem:[%s7744] sm:$0xff]
        %v7746 = vld [vmem:[%s7744 + $0x8] sm:$0xff]
        %v7747 = vld [vmem:[%s7744 + $0x10] sm:$0xff]
        %v7748 = vld [vmem:[%s7744 + $0x18] sm:$0xff]
        %v7749 = vld [vmem:[%s7744 + $0x20] sm:$0xff]
        %v7750 = vld [vmem:[%s7744 + $0x28] sm:$0xff]
        %v7751 = vld [vmem:[%s7744 + $0x30] sm:$0xff]
        %v7752 = vld [vmem:[%s7744 + $0x38] sm:$0xff]
        %v7753 = vld [vmem:[%s7744 + $0x40] sm:$0xff]
        %v7754 = vld [vmem:[%s7744 + $0x48] sm:$0xff]
        %v7755 = vld [vmem:[%s7744 + $0x50] sm:$0xff]
        %v7756 = vld [vmem:[%s7744 + $0x58] sm:$0xff]
        %v7757 = vld [vmem:[%s7744 + $0x60] sm:$0xff]
        %v7758 = vld [vmem:[%s7744 + $0x68] sm:$0xff]
        %v7759 = vld [vmem:[%s7744 + $0x70] sm:$0xff]
        %v7760 = vld [vmem:[%s7744 + $0x78] sm:$0xff]
        %7761 = vrot.lane.b32.xlu0 %v7358, 126
        %v7762 = vpop.permute.xlu0 %7761
        %7763 = vrot.lane.b32.xlu0 %v7359, 126
        %v7764 = vpop.permute.xlu0 %7763
        %7765 = vrot.lane.b32.xlu0 %v7360, 126
        %v7766 = vpop.permute.xlu0 %7765
        %7767 = vrot.lane.b32.xlu0 %v7361, 126
        %v7768 = vpop.permute.xlu0 %7767
        %7769 = vrot.lane.b32.xlu0 %v7362, 126
        %v7770 = vpop.permute.xlu0 %7769
        %7771 = vrot.lane.b32.xlu0 %v7363, 126
        %v7772 = vpop.permute.xlu0 %7771
        %7773 = vrot.lane.b32.xlu0 %v7364, 126
        %v7774 = vpop.permute.xlu0 %7773
        %7775 = vrot.lane.b32.xlu0 %v7365, 126
        %v7776 = vpop.permute.xlu0 %7775
        %7777 = vrot.lane.b32.xlu0 %v7366, 126
        %v7778 = vpop.permute.xlu0 %7777
        %7779 = vrot.lane.b32.xlu0 %v7367, 126
        %v7780 = vpop.permute.xlu0 %7779
        %7781 = vrot.lane.b32.xlu0 %v7368, 126
        %v7782 = vpop.permute.xlu0 %7781
        %7783 = vrot.lane.b32.xlu0 %v7369, 126
        %v7784 = vpop.permute.xlu0 %7783
        %7785 = vrot.lane.b32.xlu0 %v7370, 126
        %v7786 = vpop.permute.xlu0 %7785
        %7787 = vrot.lane.b32.xlu0 %v7371, 126
        %v7788 = vpop.permute.xlu0 %7787
        %7789 = vrot.lane.b32.xlu0 %v7372, 126
        %v7790 = vpop.permute.xlu0 %7789
        %7791 = vrot.lane.b32.xlu0 %v7373, 126
        %v7792 = vpop.permute.xlu0 %7791
        %7793 = vrot.lane.b32.xlu0 %v7374, 126
        %v7794 = vpop.permute.xlu0 %7793
        %7795 = vrot.lane.b32.xlu0 %v7375, 126
        %v7796 = vpop.permute.xlu0 %7795
        %v7815 = vsel %vm7480, %v7746, 0
        %v7818 = vsel %vm7480, %v7748, 0
        %v7821 = vsel %vm7480, %v7750, 0
        %v7824 = vsel %vm7480, %v7752, 0
        %v7827 = vsel %vm7480, %v7754, 0
        %v7830 = vsel %vm7480, %v7756, 0
        %v7833 = vsel %vm7480, %v7758, 0
        %v7836 = vsel %vm7480, %v7760, 0
        %v7838 = vsel %vm7505, %v7796, 0
        %7840 = vmatprep.subr.mxu0 0.0
        %7841 = vmatpush1.msra.mxu0 %v7762
        %7842 = vmatprep.subr.mxu0 0.0
        %7843 = vmatpush1.msra.mxu0 %v7764
        %7844 = vmatprep.subr.mxu0 0.0
        %7845 = vmatpush1.msra.mxu0 %v7766
        %7846 = vmatprep.subr.mxu0 0.0
        %7847 = vmatpush1.msra.mxu0 %v7768
        %7848 = vmatprep.subr.mxu0 0.0
        %7849 = vmatpush1.msra.mxu0 %v7770
        %7850 = vmatprep.subr.mxu0 0.0
        %7851 = vmatpush1.msra.mxu0 %v7772
        %7852 = vmatprep.subr.mxu0 0.0
        %7853 = vmatpush1.msra.mxu0 %v7774
        %7854 = vmatprep.subr.mxu0 0.0
        %7855 = vmatpush1.msra.mxu0 %v7776
        %7856 = vmatprep.subr.mxu0 0.0
        %7857 = vmatpush1.msra.mxu0 %v7778
        %7858 = vmatprep.subr.mxu0 0.0
        %7859 = vmatpush1.msra.mxu0 %v7780
        %7860 = vmatprep.subr.mxu0 0.0
        %7861 = vmatpush1.msra.mxu0 %v7782
        %7862 = vmatprep.subr.mxu0 0.0
        %7863 = vmatpush1.msra.mxu0 %v7784
        %7864 = vmatprep.subr.mxu0 0.0
        %7865 = vmatpush1.msra.mxu0 %v7786
        %7866 = vmatprep.subr.mxu0 0.0
        %7867 = vmatpush1.msra.mxu0 %v7788
        %7868 = vmatprep.subr.mxu0 0.0
        %7869 = vmatpush1.msra.mxu0 %v7790
        %7870 = vmatprep.subr.mxu0 0.0
        %7871 = vmatpush1.msra.mxu0 %v7792
        %7872 = vmatprep.subr.mxu0 0.0
        %7873 = vmatpush1.msra.mxu0 %v7794
        %7874 = vmatprep.subr.mxu0 0.0
        %7875 = vmatpush1.msra.mxu0 %v7838
        %7876 = vmatprep.subr.mxu0 0.0
        %7877 = vmatpush1.msra.mxu0 0.0
        %7878 = vmatprep.subr.mxu0 0.0
        %7879 = vmatpush1.msra.mxu0 0.0
        %7880 = vmatprep.subr.mxu0 0.0
        %7881 = vmatpush1.msra.mxu0 0.0
        %7882 = vmatprep.subr.mxu0 0.0
        %7883 = vmatpush1.msra.mxu0 0.0
        %7884 = vmatprep.subr.mxu0 0.0
        %7885 = vmatpush1.msra.mxu0 0.0
        %7886 = vmatprep.subr.mxu0 0.0
        %7887 = vmatpush1.msra.mxu0 0.0
        %7888 = vmatprep.subr.mxu0 0.0
        %7889 = vmatpush1.msra.mxu0 0.0
        %7890 = vmatprep.subr.mxu0 0.0
        %7891 = vmatpush1.msra.mxu0 0.0
        %7892 = vmatprep.subr.mxu0 0.0
        %7893 = vmatpush1.msra.mxu0 0.0
        %7894 = vmatprep.subr.mxu0 0.0
        %7895 = vmatpush1.msra.mxu0 0.0
        %7896 = vmatprep.subr.mxu0 0.0
        %7897 = vmatpush1.msra.mxu0 0.0
        %7898 = vmatprep.subr.mxu0 0.0
        %7899 = vmatpush1.msra.mxu0 0.0
        %7900 = vmatprep.subr.mxu0 0.0
        %7901 = vmatpush1.msra.mxu0 0.0
        %7902 = vmatprep.subr.mxu0 0.0
        %7903 = vmatpush1.msra.mxu0 0.0
        %7904 = vmatprep.mubr.f32.mxu0 %v7815
        %7905 = vmatmul.mubr.f32.gmra.mrb[0].mxu0 %v7745
        %v7906 = vpop.f32.mrb[0].mxu0
        %v7907 = vadd.f32 0.0, %v7906
        %v7908 = vpop.f32.mrb[0].mxu0
        %7909 = vmatprep.mubr.f32.mxu0 %v7818
        %7910 = vmatmul.mubr.f32.gmra.mrb[0].mxu0 %v7747
        %v7911 = vpop.f32.mrb[0].mxu0
        %v7912 = vadd.f32 0.0, %v7911
        %v7913 = vpop.f32.mrb[0].mxu0
        %7914 = vmatprep.mubr.f32.mxu0 %v7821
        %7915 = vmatmul.mubr.f32.gmra.mrb[0].mxu0 %v7749
        %v7916 = vpop.f32.mrb[0].mxu0
        %v7917 = vadd.f32 0.0, %v7916
        %v7918 = vpop.f32.mrb[0].mxu0
        %7919 = vmatprep.mubr.f32.mxu0 %v7824
        %7920 = vmatmul.mubr.f32.gmra.mrb[0].mxu0 %v7751
        %v7921 = vpop.f32.mrb[0].mxu0
        %v7922 = vadd.f32 0.0, %v7921
        %v7923 = vpop.f32.mrb[0].mxu0
        %7924 = vmatprep.mubr.f32.mxu0 %v7827
        %7925 = vmatmul.mubr.f32.gmra.mrb[0].mxu0 %v7753
        %v7926 = vpop.f32.mrb[0].mxu0
        %v7927 = vadd.f32 0.0, %v7926
        %v7928 = vpop.f32.mrb[0].mxu0
        %7929 = vmatprep.mubr.f32.mxu0 %v7830
        %7930 = vmatmul.mubr.f32.gmra.mrb[0].mxu0 %v7755
        %v7931 = vpop.f32.mrb[0].mxu0
        %v7932 = vadd.f32 0.0, %v7931
        %v7933 = vpop.f32.mrb[0].mxu0
        %7934 = vmatprep.mubr.f32.mxu0 %v7833
        %7935 = vmatmul.mubr.f32.gmra.mrb[0].mxu0 %v7757
        %v7936 = vpop.f32.mrb[0].mxu0
        %v7937 = vadd.f32 0.0, %v7936
        %v7938 = vpop.f32.mrb[0].mxu0
        %7939 = vmatprep.mubr.f32.mxu0 %v7836
        %7940 = vmatmul.mubr.f32.gmra.mrb[0].mxu0 %v7759
        %v7941 = vpop.f32.mrb[0].mxu0
        %v7942 = vadd.f32 0.0, %v7941
        %v7943 = vpop.f32.mrb[0].mxu0
        %7944 = vdwg.mxu0
        %v7945 = vadd.f32 %v7706, %v7907
        %v7946 = vadd.f32 %v7711, %v7912
        %v7947 = vadd.f32 %v7716, %v7917
        %v7948 = vadd.f32 %v7721, %v7922
        %v7949 = vadd.f32 %v7726, %v7927
        %v7950 = vadd.f32 %v7731, %v7932
        %v7951 = vadd.f32 %v7736, %v7937
        %v7952 = vadd.f32 %v7741, %v7942
        %s7953 = scalar_lea.vmem %s4, 384
        %v7954 = vld [vmem:[%s7953] sm:$0xff]
        %v7955 = vld [vmem:[%s7953 + $0x8] sm:$0xff]
        %v7956 = vld [vmem:[%s7953 + $0x10] sm:$0xff]
        %v7957 = vld [vmem:[%s7953 + $0x18] sm:$0xff]
        %v7958 = vld [vmem:[%s7953 + $0x20] sm:$0xff]
        %v7959 = vld [vmem:[%s7953 + $0x28] sm:$0xff]
        %v7960 = vld [vmem:[%s7953 + $0x30] sm:$0xff]
        %v7961 = vld [vmem:[%s7953 + $0x38] sm:$0xff]
        %v7962 = vld [vmem:[%s7953 + $0x40] sm:$0xff]
        %v7963 = vld [vmem:[%s7953 + $0x48] sm:$0xff]
        %v7964 = vld [vmem:[%s7953 + $0x50] sm:$0xff]
        %v7965 = vld [vmem:[%s7953 + $0x58] sm:$0xff]
        %v7966 = vld [vmem:[%s7953 + $0x60] sm:$0xff]
        %v7967 = vld [vmem:[%s7953 + $0x68] sm:$0xff]
        %v7968 = vld [vmem:[%s7953 + $0x70] sm:$0xff]
        %v7969 = vld [vmem:[%s7953 + $0x78] sm:$0xff]
        %7970 = vrot.lane.b32.xlu0 %v7358, 125
        %v7971 = vpop.permute.xlu0 %7970
        %7972 = vrot.lane.b32.xlu0 %v7359, 125
        %v7973 = vpop.permute.xlu0 %7972
        %7974 = vrot.lane.b32.xlu0 %v7360, 125
        %v7975 = vpop.permute.xlu0 %7974
        %7976 = vrot.lane.b32.xlu0 %v7361, 125
        %v7977 = vpop.permute.xlu0 %7976
        %7978 = vrot.lane.b32.xlu0 %v7362, 125
        %v7979 = vpop.permute.xlu0 %7978
        %7980 = vrot.lane.b32.xlu0 %v7363, 125
        %v7981 = vpop.permute.xlu0 %7980
        %7982 = vrot.lane.b32.xlu0 %v7364, 125
        %v7983 = vpop.permute.xlu0 %7982
        %7984 = vrot.lane.b32.xlu0 %v7365, 125
        %v7985 = vpop.permute.xlu0 %7984
        %7986 = vrot.lane.b32.xlu0 %v7366, 125
        %v7987 = vpop.permute.xlu0 %7986
        %7988 = vrot.lane.b32.xlu0 %v7367, 125
        %v7989 = vpop.permute.xlu0 %7988
        %7990 = vrot.lane.b32.xlu0 %v7368, 125
        %v7991 = vpop.permute.xlu0 %7990
        %7992 = vrot.lane.b32.xlu0 %v7369, 125
        %v7993 = vpop.permute.xlu0 %7992
        %7994 = vrot.lane.b32.xlu0 %v7370, 125
        %v7995 = vpop.permute.xlu0 %7994
        %7996 = vrot.lane.b32.xlu0 %v7371, 125
        %v7997 = vpop.permute.xlu0 %7996
        %7998 = vrot.lane.b32.xlu0 %v7372, 125
        %v7999 = vpop.permute.xlu0 %7998
        %8000 = vrot.lane.b32.xlu0 %v7373, 125
        %v8001 = vpop.permute.xlu0 %8000
        %8002 = vrot.lane.b32.xlu0 %v7374, 125
        %v8003 = vpop.permute.xlu0 %8002
        %8004 = vrot.lane.b32.xlu0 %v7375, 125
        %v8005 = vpop.permute.xlu0 %8004
        %v8024 = vsel %vm7480, %v7955, 0
        %v8027 = vsel %vm7480, %v7957, 0
        %v8030 = vsel %vm7480, %v7959, 0
        %v8033 = vsel %vm7480, %v7961, 0
        %v8036 = vsel %vm7480, %v7963, 0
        %v8039 = vsel %vm7480, %v7965, 0
        %v8042 = vsel %vm7480, %v7967, 0
        %v8045 = vsel %vm7480, %v7969, 0
        %v8047 = vsel %vm7505, %v8005, 0
        %8049 = vmatprep.subr.mxu0 0.0
        %8050 = vmatpush1.msra.mxu0 %v7971
        %8051 = vmatprep.subr.mxu0 0.0
        %8052 = vmatpush1.msra.mxu0 %v7973
        %8053 = vmatprep.subr.mxu0 0.0
        %8054 = vmatpush1.msra.mxu0 %v7975
        %8055 = vmatprep.subr.mxu0 0.0
        %8056 = vmatpush1.msra.mxu0 %v7977
        %8057 = vmatprep.subr.mxu0 0.0
        %8058 = vmatpush1.msra.mxu0 %v7979
        %8059 = vmatprep.subr.mxu0 0.0
        %8060 = vmatpush1.msra.mxu0 %v7981
        %8061 = vmatprep.subr.mxu0 0.0
        %8062 = vmatpush1.msra.mxu0 %v7983
        %8063 = vmatprep.subr.mxu0 0.0
        %8064 = vmatpush1.msra.mxu0 %v7985
        %8065 = vmatprep.subr.mxu0 0.0
        %8066 = vmatpush1.msra.mxu0 %v7987
        %8067 = vmatprep.subr.mxu0 0.0
        %8068 = vmatpush1.msra.mxu0 %v7989
        %8069 = vmatprep.subr.mxu0 0.0
        %8070 = vmatpush1.msra.mxu0 %v7991
        %8071 = vmatprep.subr.mxu0 0.0
        %8072 = vmatpush1.msra.mxu0 %v7993
        %8073 = vmatprep.subr.mxu0 0.0
        %8074 = vmatpush1.msra.mxu0 %v7995
        %8075 = vmatprep.subr.mxu0 0.0
        %8076 = vmatpush1.msra.mxu0 %v7997
        %8077 = vmatprep.subr.mxu0 0.0
        %8078 = vmatpush1.msra.mxu0 %v7999
        %8079 = vmatprep.subr.mxu0 0.0
        %8080 = vmatpush1.msra.mxu0 %v8001
        %8081 = vmatprep.subr.mxu0 0.0
        %8082 = vmatpush1.msra.mxu0 %v8003
        %8083 = vmatprep.subr.mxu0 0.0
        %8084 = vmatpush1.msra.mxu0 %v8047
        %8085 = vmatprep.subr.mxu0 0.0
        %8086 = vmatpush1.msra.mxu0 0.0
        %8087 = vmatprep.subr.mxu0 0.0
        %8088 = vmatpush1.msra.mxu0 0.0
        %8089 = vmatprep.subr.mxu0 0.0
        %8090 = vmatpush1.msra.mxu0 0.0
        %8091 = vmatprep.subr.mxu0 0.0
        %8092 = vmatpush1.msra.mxu0 0.0
        %8093 = vmatprep.subr.mxu0 0.0
        %8094 = vmatpush1.msra.mxu0 0.0
        %8095 = vmatprep.subr.mxu0 0.0
        %8096 = vmatpush1.msra.mxu0 0.0
        %8097 = vmatprep.subr.mxu0 0.0
        %8098 = vmatpush1.msra.mxu0 0.0
        %8099 = vmatprep.subr.mxu0 0.0
        %8100 = vmatpush1.msra.mxu0 0.0
        %8101 = vmatprep.subr.mxu0 0.0
        %8102 = vmatpush1.msra.mxu0 0.0
        %8103 = vmatprep.subr.mxu0 0.0
        %8104 = vmatpush1.msra.mxu0 0.0
        %8105 = vmatprep.subr.mxu0 0.0
        %8106 = vmatpush1.msra.mxu0 0.0
        %8107 = vmatprep.subr.mxu0 0.0
        %8108 = vmatpush1.msra.mxu0 0.0
        %8109 = vmatprep.subr.mxu0 0.0
        %8110 = vmatpush1.msra.mxu0 0.0
        %8111 = vmatprep.subr.mxu0 0.0
        %8112 = vmatpush1.msra.mxu0 0.0
        %8113 = vmatprep.mubr.f32.mxu0 %v8024
        %8114 = vmatmul.mubr.f32.gmra.mrb[0].mxu0 %v7954
        %v8115 = vpop.f32.mrb[0].mxu0
        %v8116 = vadd.f32 0.0, %v8115
        %v8117 = vpop.f32.mrb[0].mxu0
        %8118 = vmatprep.mubr.f32.mxu0 %v8027
        %8119 = vmatmul.mubr.f32.gmra.mrb[0].mxu0 %v7956
        %v8120 = vpop.f32.mrb[0].mxu0
        %v8121 = vadd.f32 0.0, %v8120
        %v8122 = vpop.f32.mrb[0].mxu0
        %8123 = vmatprep.mubr.f32.mxu0 %v8030
        %8124 = vmatmul.mubr.f32.gmra.mrb[0].mxu0 %v7958
        %v8125 = vpop.f32.mrb[0].mxu0
        %v8126 = vadd.f32 0.0, %v8125
        %v8127 = vpop.f32.mrb[0].mxu0
        %8128 = vmatprep.mubr.f32.mxu0 %v8033
        %8129 = vmatmul.mubr.f32.gmra.mrb[0].mxu0 %v7960
        %v8130 = vpop.f32.mrb[0].mxu0
        %v8131 = vadd.f32 0.0, %v8130
        %v8132 = vpop.f32.mrb[0].mxu0
        %8133 = vmatprep.mubr.f32.mxu0 %v8036
        %8134 = vmatmul.mubr.f32.gmra.mrb[0].mxu0 %v7962
        %v8135 = vpop.f32.mrb[0].mxu0
        %v8136 = vadd.f32 0.0, %v8135
        %v8137 = vpop.f32.mrb[0].mxu0
        %8138 = vmatprep.mubr.f32.mxu0 %v8039
        %8139 = vmatmul.mubr.f32.gmra.mrb[0].mxu0 %v7964
        %v8140 = vpop.f32.mrb[0].mxu0
        %v8141 = vadd.f32 0.0, %v8140
        %v8142 = vpop.f32.mrb[0].mxu0
        %8143 = vmatprep.mubr.f32.mxu0 %v8042
        %8144 = vmatmul.mubr.f32.gmra.mrb[0].mxu0 %v7966
        %v8145 = vpop.f32.mrb[0].mxu0
        %v8146 = vadd.f32 0.0, %v8145
        %v8147 = vpop.f32.mrb[0].mxu0
        %8148 = vmatprep.mubr.f32.mxu0 %v8045
        %8149 = vmatmul.mubr.f32.gmra.mrb[0].mxu0 %v7968
        %v8150 = vpop.f32.mrb[0].mxu0
        %v8151 = vadd.f32 0.0, %v8150
        %v8152 = vpop.f32.mrb[0].mxu0
        %8153 = vdwg.mxu0
        %v8154 = vadd.f32 %v7945, %v8116
        %v8155 = vadd.f32 %v7946, %v8121
        %v8156 = vadd.f32 %v7947, %v8126
        %v8157 = vadd.f32 %v7948, %v8131
        %v8158 = vadd.f32 %v7949, %v8136
        %v8159 = vadd.f32 %v7950, %v8141
        %v8160 = vadd.f32 %v7951, %v8146
        %v8161 = vadd.f32 %v7952, %v8151
        %s8162 = scalar_lea.vmem %s4, 512
        %v8163 = vld [vmem:[%s8162] sm:$0xff]
        %v8164 = vld [vmem:[%s8162 + $0x8] sm:$0xff]
        %v8165 = vld [vmem:[%s8162 + $0x10] sm:$0xff]
        %v8166 = vld [vmem:[%s8162 + $0x18] sm:$0xff]
        %v8167 = vld [vmem:[%s8162 + $0x20] sm:$0xff]
        %v8168 = vld [vmem:[%s8162 + $0x28] sm:$0xff]
        %v8169 = vld [vmem:[%s8162 + $0x30] sm:$0xff]
        %v8170 = vld [vmem:[%s8162 + $0x38] sm:$0xff]
        %v8171 = vld [vmem:[%s8162 + $0x40] sm:$0xff]
        %v8172 = vld [vmem:[%s8162 + $0x48] sm:$0xff]
        %v8173 = vld [vmem:[%s8162 + $0x50] sm:$0xff]
        %v8174 = vld [vmem:[%s8162 + $0x58] sm:$0xff]
        %v8175 = vld [vmem:[%s8162 + $0x60] sm:$0xff]
        %v8176 = vld [vmem:[%s8162 + $0x68] sm:$0xff]
        %v8177 = vld [vmem:[%s8162 + $0x70] sm:$0xff]
        %v8178 = vld [vmem:[%s8162 + $0x78] sm:$0xff]
        %8179 = vrot.lane.b32.xlu0 %v7358, 124
        %v8180 = vpop.permute.xlu0 %8179
        %8181 = vrot.lane.b32.xlu0 %v7359, 124
        %v8182 = vpop.permute.xlu0 %8181
        %8183 = vrot.lane.b32.xlu0 %v7360, 124
        %v8184 = vpop.permute.xlu0 %8183
        %8185 = vrot.lane.b32.xlu0 %v7361, 124
        %v8186 = vpop.permute.xlu0 %8185
        %8187 = vrot.lane.b32.xlu0 %v7362, 124
        %v8188 = vpop.permute.xlu0 %8187
        %8189 = vrot.lane.b32.xlu0 %v7363, 124
        %v8190 = vpop.permute.xlu0 %8189
        %8191 = vrot.lane.b32.xlu0 %v7364, 124
        %v8192 = vpop.permute.xlu0 %8191
        %8193 = vrot.lane.b32.xlu0 %v7365, 124
        %v8194 = vpop.permute.xlu0 %8193
        %8195 = vrot.lane.b32.xlu0 %v7366, 124
        %v8196 = vpop.permute.xlu0 %8195
        %8197 = vrot.lane.b32.xlu0 %v7367, 124
        %v8198 = vpop.permute.xlu0 %8197
        %8199 = vrot.lane.b32.xlu0 %v7368, 124
        %v8200 = vpop.permute.xlu0 %8199
        %8201 = vrot.lane.b32.xlu0 %v7369, 124
        %v8202 = vpop.permute.xlu0 %8201
        %8203 = vrot.lane.b32.xlu0 %v7370, 124
        %v8204 = vpop.permute.xlu0 %8203
        %8205 = vrot.lane.b32.xlu0 %v7371, 124
        %v8206 = vpop.permute.xlu0 %8205
        %8207 = vrot.lane.b32.xlu0 %v7372, 124
        %v8208 = vpop.permute.xlu0 %8207
        %8209 = vrot.lane.b32.xlu0 %v7373, 124
        %v8210 = vpop.permute.xlu0 %8209
        %8211 = vrot.lane.b32.xlu0 %v7374, 124
        %v8212 = vpop.permute.xlu0 %8211
        %8213 = vrot.lane.b32.xlu0 %v7375, 124
        %v8214 = vpop.permute.xlu0 %8213
        %v8233 = vsel %vm7480, %v8164, 0
        %v8236 = vsel %vm7480, %v8166, 0
        %v8239 = vsel %vm7480, %v8168, 0
        %v8242 = vsel %vm7480, %v8170, 0
        %v8245 = vsel %vm7480, %v8172, 0
        %v8248 = vsel %vm7480, %v8174, 0
        %v8251 = vsel %vm7480, %v8176, 0
        %v8254 = vsel %vm7480, %v8178, 0
        %v8256 = vsel %vm7505, %v8214, 0
        %8258 = vmatprep.subr.mxu0 0.0
        %8259 = vmatpush1.msra.mxu0 %v8180
        %8260 = vmatprep.subr.mxu0 0.0
        %8261 = vmatpush1.msra.mxu0 %v8182
        %8262 = vmatprep.subr.mxu0 0.0
        %8263 = vmatpush1.msra.mxu0 %v8184
        %8264 = vmatprep.subr.mxu0 0.0
        %8265 = vmatpush1.msra.mxu0 %v8186
        %8266 = vmatprep.subr.mxu0 0.0
        %8267 = vmatpush1.msra.mxu0 %v8188
        %8268 = vmatprep.subr.mxu0 0.0
        %8269 = vmatpush1.msra.mxu0 %v8190
        %8270 = vmatprep.subr.mxu0 0.0
        %8271 = vmatpush1.msra.mxu0 %v8192
        %8272 = vmatprep.subr.mxu0 0.0
        %8273 = vmatpush1.msra.mxu0 %v8194
        %8274 = vmatprep.subr.mxu0 0.0
        %8275 = vmatpush1.msra.mxu0 %v8196
        %8276 = vmatprep.subr.mxu0 0.0
        %8277 = vmatpush1.msra.mxu0 %v8198
        %8278 = vmatprep.subr.mxu0 0.0
        %8279 = vmatpush1.msra.mxu0 %v8200
        %8280 = vmatprep.subr.mxu0 0.0
        %8281 = vmatpush1.msra.mxu0 %v8202
        %8282 = vmatprep.subr.mxu0 0.0
        %8283 = vmatpush1.msra.mxu0 %v8204
        %8284 = vmatprep.subr.mxu0 0.0
        %8285 = vmatpush1.msra.mxu0 %v8206
        %8286 = vmatprep.subr.mxu0 0.0
        %8287 = vmatpush1.msra.mxu0 %v8208
        %8288 = vmatprep.subr.mxu0 0.0
        %8289 = vmatpush1.msra.mxu0 %v8210
        %8290 = vmatprep.subr.mxu0 0.0
        %8291 = vmatpush1.msra.mxu0 %v8212
        %8292 = vmatprep.subr.mxu0 0.0
        %8293 = vmatpush1.msra.mxu0 %v8256
        %8294 = vmatprep.subr.mxu0 0.0
        %8295 = vmatpush1.msra.mxu0 0.0
        %8296 = vmatprep.subr.mxu0 0.0
        %8297 = vmatpush1.msra.mxu0 0.0
        %8298 = vmatprep.subr.mxu0 0.0
        %8299 = vmatpush1.msra.mxu0 0.0
        %8300 = vmatprep.subr.mxu0 0.0
        %8301 = vmatpush1.msra.mxu0 0.0
        %8302 = vmatprep.subr.mxu0 0.0
        %8303 = vmatpush1.msra.mxu0 0.0
        %8304 = vmatprep.subr.mxu0 0.0
        %8305 = vmatpush1.msra.mxu0 0.0
        %8306 = vmatprep.subr.mxu0 0.0
        %8307 = vmatpush1.msra.mxu0 0.0
        %8308 = vmatprep.subr.mxu0 0.0
        %8309 = vmatpush1.msra.mxu0 0.0
        %8310 = vmatprep.subr.mxu0 0.0
        %8311 = vmatpush1.msra.mxu0 0.0
        %8312 = vmatprep.subr.mxu0 0.0
        %8313 = vmatpush1.msra.mxu0 0.0
        %8314 = vmatprep.subr.mxu0 0.0
        %8315 = vmatpush1.msra.mxu0 0.0
        %8316 = vmatprep.subr.mxu0 0.0
        %8317 = vmatpush1.msra.mxu0 0.0
        %8318 = vmatprep.subr.mxu0 0.0
        %8319 = vmatpush1.msra.mxu0 0.0
        %8320 = vmatprep.subr.mxu0 0.0
        %8321 = vmatpush1.msra.mxu0 0.0
        %8322 = vmatprep.mubr.f32.mxu0 %v8233
        %8323 = vmatmul.mubr.f32.gmra.mrb[0].mxu0 %v8163
        %v8324 = vpop.f32.mrb[0].mxu0
        %v8325 = vadd.f32 0.0, %v8324
        %v8326 = vpop.f32.mrb[0].mxu0
        %8327 = vmatprep.mubr.f32.mxu0 %v8236
        %8328 = vmatmul.mubr.f32.gmra.mrb[0].mxu0 %v8165
        %v8329 = vpop.f32.mrb[0].mxu0
        %v8330 = vadd.f32 0.0, %v8329
        %v8331 = vpop.f32.mrb[0].mxu0
        %8332 = vmatprep.mubr.f32.mxu0 %v8239
        %8333 = vmatmul.mubr.f32.gmra.mrb[0].mxu0 %v8167
        %v8334 = vpop.f32.mrb[0].mxu0
        %v8335 = vadd.f32 0.0, %v8334
        %v8336 = vpop.f32.mrb[0].mxu0
        %8337 = vmatprep.mubr.f32.mxu0 %v8242
        %8338 = vmatmul.mubr.f32.gmra.mrb[0].mxu0 %v8169
        %v8339 = vpop.f32.mrb[0].mxu0
        %v8340 = vadd.f32 0.0, %v8339
        %v8341 = vpop.f32.mrb[0].mxu0
        %8342 = vmatprep.mubr.f32.mxu0 %v8245
        %8343 = vmatmul.mubr.f32.gmra.mrb[0].mxu0 %v8171
        %v8344 = vpop.f32.mrb[0].mxu0
        %v8345 = vadd.f32 0.0, %v8344
        %v8346 = vpop.f32.mrb[0].mxu0
        %8347 = vmatprep.mubr.f32.mxu0 %v8248
        %8348 = vmatmul.mubr.f32.gmra.mrb[0].mxu0 %v8173
        %v8349 = vpop.f32.mrb[0].mxu0
        %v8350 = vadd.f32 0.0, %v8349
        %v8351 = vpop.f32.mrb[0].mxu0
        %8352 = vmatprep.mubr.f32.mxu0 %v8251
        %8353 = vmatmul.mubr.f32.gmra.mrb[0].mxu0 %v8175
        %v8354 = vpop.f32.mrb[0].mxu0
        %v8355 = vadd.f32 0.0, %v8354
        %v8356 = vpop.f32.mrb[0].mxu0
        %8357 = vmatprep.mubr.f32.mxu0 %v8254
        %8358 = vmatmul.mubr.f32.gmra.mrb[0].mxu0 %v8177
        %v8359 = vpop.f32.mrb[0].mxu0
        %v8360 = vadd.f32 0.0, %v8359
        %v8361 = vpop.f32.mrb[0].mxu0
        %8362 = vdwg.mxu0
        %v8363 = vadd.f32 %v8154, %v8325
        %v8364 = vadd.f32 %v8155, %v8330
        %v8365 = vadd.f32 %v8156, %v8335
        %v8366 = vadd.f32 %v8157, %v8340
        %v8367 = vadd.f32 %v8158, %v8345
        %v8368 = vadd.f32 %v8159, %v8350
        %v8369 = vadd.f32 %v8160, %v8355
        %v8370 = vadd.f32 %v8161, %v8360
        %s8371 = scalar_lea.vmem %s4, 640
        %v8372 = vld [vmem:[%s8371] sm:$0xff]
        %v8373 = vld [vmem:[%s8371 + $0x8] sm:$0xff]
        %v8374 = vld [vmem:[%s8371 + $0x10] sm:$0xff]
        %v8375 = vld [vmem:[%s8371 + $0x18] sm:$0xff]
        %v8376 = vld [vmem:[%s8371 + $0x20] sm:$0xff]
        %v8377 = vld [vmem:[%s8371 + $0x28] sm:$0xff]
        %v8378 = vld [vmem:[%s8371 + $0x30] sm:$0xff]
        %v8379 = vld [vmem:[%s8371 + $0x38] sm:$0xff]
        %v8380 = vld [vmem:[%s8371 + $0x40] sm:$0xff]
        %v8381 = vld [vmem:[%s8371 + $0x48] sm:$0xff]
        %v8382 = vld [vmem:[%s8371 + $0x50] sm:$0xff]
        %v8383 = vld [vmem:[%s8371 + $0x58] sm:$0xff]
        %v8384 = vld [vmem:[%s8371 + $0x60] sm:$0xff]
        %v8385 = vld [vmem:[%s8371 + $0x68] sm:$0xff]
        %v8386 = vld [vmem:[%s8371 + $0x70] sm:$0xff]
        %v8387 = vld [vmem:[%s8371 + $0x78] sm:$0xff]
        %8388 = vrot.lane.b32.xlu0 %v7358, 123
        %v8389 = vpop.permute.xlu0 %8388
        %8390 = vrot.lane.b32.xlu0 %v7359, 123
        %v8391 = vpop.permute.xlu0 %8390
        %8392 = vrot.lane.b32.xlu0 %v7360, 123
        %v8393 = vpop.permute.xlu0 %8392
        %8394 = vrot.lane.b32.xlu0 %v7361, 123
        %v8395 = vpop.permute.xlu0 %8394
        %8396 = vrot.lane.b32.xlu0 %v7362, 123
        %v8397 = vpop.permute.xlu0 %8396
        %8398 = vrot.lane.b32.xlu0 %v7363, 123
        %v8399 = vpop.permute.xlu0 %8398
        %8400 = vrot.lane.b32.xlu0 %v7364, 123
        %v8401 = vpop.permute.xlu0 %8400
        %8402 = vrot.lane.b32.xlu0 %v7365, 123
        %v8403 = vpop.permute.xlu0 %8402
        %8404 = vrot.lane.b32.xlu0 %v7366, 123
        %v8405 = vpop.permute.xlu0 %8404
        %8406 = vrot.lane.b32.xlu0 %v7367, 123
        %v8407 = vpop.permute.xlu0 %8406
        %8408 = vrot.lane.b32.xlu0 %v7368, 123
        %v8409 = vpop.permute.xlu0 %8408
        %8410 = vrot.lane.b32.xlu0 %v7369, 123
        %v8411 = vpop.permute.xlu0 %8410
        %8412 = vrot.lane.b32.xlu0 %v7370, 123
        %v8413 = vpop.permute.xlu0 %8412
        %8414 = vrot.lane.b32.xlu0 %v7371, 123
        %v8415 = vpop.permute.xlu0 %8414
        %8416 = vrot.lane.b32.xlu0 %v7372, 123
        %v8417 = vpop.permute.xlu0 %8416
        %8418 = vrot.lane.b32.xlu0 %v7373, 123
        %v8419 = vpop.permute.xlu0 %8418
        %8420 = vrot.lane.b32.xlu0 %v7374, 123
        %v8421 = vpop.permute.xlu0 %8420
        %8422 = vrot.lane.b32.xlu0 %v7375, 123
        %v8423 = vpop.permute.xlu0 %8422
        %v8442 = vsel %vm7480, %v8373, 0
        %v8445 = vsel %vm7480, %v8375, 0
        %v8448 = vsel %vm7480, %v8377, 0
        %v8451 = vsel %vm7480, %v8379, 0
        %v8454 = vsel %vm7480, %v8381, 0
        %v8457 = vsel %vm7480, %v8383, 0
        %v8460 = vsel %vm7480, %v8385, 0
        %v8463 = vsel %vm7480, %v8387, 0
        %v8465 = vsel %vm7505, %v8423, 0
        %8467 = vmatprep.subr.mxu0 0.0
        %8468 = vmatpush1.msra.mxu0 %v8389
        %8469 = vmatprep.subr.mxu0 0.0
        %8470 = vmatpush1.msra.mxu0 %v8391
        %8471 = vmatprep.subr.mxu0 0.0
        %8472 = vmatpush1.msra.mxu0 %v8393
        %8473 = vmatprep.subr.mxu0 0.0
        %8474 = vmatpush1.msra.mxu0 %v8395
        %8475 = vmatprep.subr.mxu0 0.0
        %8476 = vmatpush1.msra.mxu0 %v8397
        %8477 = vmatprep.subr.mxu0 0.0
        %8478 = vmatpush1.msra.mxu0 %v8399
        %8479 = vmatprep.subr.mxu0 0.0
        %8480 = vmatpush1.msra.mxu0 %v8401
        %8481 = vmatprep.subr.mxu0 0.0
        %8482 = vmatpush1.msra.mxu0 %v8403
        %8483 = vmatprep.subr.mxu0 0.0
        %8484 = vmatpush1.msra.mxu0 %v8405
        %8485 = vmatprep.subr.mxu0 0.0
        %8486 = vmatpush1.msra.mxu0 %v8407
        %8487 = vmatprep.subr.mxu0 0.0
        %8488 = vmatpush1.msra.mxu0 %v8409
        %8489 = vmatprep.subr.mxu0 0.0
        %8490 = vmatpush1.msra.mxu0 %v8411
        %8491 = vmatprep.subr.mxu0 0.0
        %8492 = vmatpush1.msra.mxu0 %v8413
        %8493 = vmatprep.subr.mxu0 0.0
        %8494 = vmatpush1.msra.mxu0 %v8415
        %8495 = vmatprep.subr.mxu0 0.0
        %8496 = vmatpush1.msra.mxu0 %v8417
        %8497 = vmatprep.subr.mxu0 0.0
        %8498 = vmatpush1.msra.mxu0 %v8419
        %8499 = vmatprep.subr.mxu0 0.0
        %8500 = vmatpush1.msra.mxu0 %v8421
        %8501 = vmatprep.subr.mxu0 0.0
        %8502 = vmatpush1.msra.mxu0 %v8465
        %8503 = vmatprep.subr.mxu0 0.0
        %8504 = vmatpush1.msra.mxu0 0.0
        %8505 = vmatprep.subr.mxu0 0.0
        %8506 = vmatpush1.msra.mxu0 0.0
        %8507 = vmatprep.subr.mxu0 0.0
        %8508 = vmatpush1.msra.mxu0 0.0
        %8509 = vmatprep.subr.mxu0 0.0
        %8510 = vmatpush1.msra.mxu0 0.0
        %8511 = vmatprep.subr.mxu0 0.0
        %8512 = vmatpush1.msra.mxu0 0.0
        %8513 = vmatprep.subr.mxu0 0.0
        %8514 = vmatpush1.msra.mxu0 0.0
        %8515 = vmatprep.subr.mxu0 0.0
        %8516 = vmatpush1.msra.mxu0 0.0
        %8517 = vmatprep.subr.mxu0 0.0
        %8518 = vmatpush1.msra.mxu0 0.0
        %8519 = vmatprep.subr.mxu0 0.0
        %8520 = vmatpush1.msra.mxu0 0.0
        %8521 = vmatprep.subr.mxu0 0.0
        %8522 = vmatpush1.msra.mxu0 0.0
        %8523 = vmatprep.subr.mxu0 0.0
        %8524 = vmatpush1.msra.mxu0 0.0
        %8525 = vmatprep.subr.mxu0 0.0
        %8526 = vmatpush1.msra.mxu0 0.0
        %8527 = vmatprep.subr.mxu0 0.0
        %8528 = vmatpush1.msra.mxu0 0.0
        %8529 = vmatprep.subr.mxu0 0.0
        %8530 = vmatpush1.msra.mxu0 0.0
        %8531 = vmatprep.mubr.f32.mxu0 %v8442
        %8532 = vmatmul.mubr.f32.gmra.mrb[0].mxu0 %v8372
        %v8533 = vpop.f32.mrb[0].mxu0
        %v8534 = vadd.f32 0.0, %v8533
        %v8535 = vpop.f32.mrb[0].mxu0
        %8536 = vmatprep.mubr.f32.mxu0 %v8445
        %8537 = vmatmul.mubr.f32.gmra.mrb[0].mxu0 %v8374
        %v8538 = vpop.f32.mrb[0].mxu0
        %v8539 = vadd.f32 0.0, %v8538
        %v8540 = vpop.f32.mrb[0].mxu0
        %8541 = vmatprep.mubr.f32.mxu0 %v8448
        %8542 = vmatmul.mubr.f32.gmra.mrb[0].mxu0 %v8376
        %v8543 = vpop.f32.mrb[0].mxu0
        %v8544 = vadd.f32 0.0, %v8543
        %v8545 = vpop.f32.mrb[0].mxu0
        %8546 = vmatprep.mubr.f32.mxu0 %v8451
        %8547 = vmatmul.mubr.f32.gmra.mrb[0].mxu0 %v8378
        %v8548 = vpop.f32.mrb[0].mxu0
        %v8549 = vadd.f32 0.0, %v8548
        %v8550 = vpop.f32.mrb[0].mxu0
        %8551 = vmatprep.mubr.f32.mxu0 %v8454
        %8552 = vmatmul.mubr.f32.gmra.mrb[0].mxu0 %v8380
        %v8553 = vpop.f32.mrb[0].mxu0
        %v8554 = vadd.f32 0.0, %v8553
        %v8555 = vpop.f32.mrb[0].mxu0
        %8556 = vmatprep.mubr.f32.mxu0 %v8457
        %8557 = vmatmul.mubr.f32.gmra.mrb[0].mxu0 %v8382
        %v8558 = vpop.f32.mrb[0].mxu0
        %v8559 = vadd.f32 0.0, %v8558
        %v8560 = vpop.f32.mrb[0].mxu0
        %8561 = vmatprep.mubr.f32.mxu0 %v8460
        %8562 = vmatmul.mubr.f32.gmra.mrb[0].mxu0 %v8384
        %v8563 = vpop.f32.mrb[0].mxu0
        %v8564 = vadd.f32 0.0, %v8563
        %v8565 = vpop.f32.mrb[0].mxu0
        %8566 = vmatprep.mubr.f32.mxu0 %v8463
        %8567 = vmatmul.mubr.f32.gmra.mrb[0].mxu0 %v8386
        %v8568 = vpop.f32.mrb[0].mxu0
        %v8569 = vadd.f32 0.0, %v8568
        %v8570 = vpop.f32.mrb[0].mxu0
        %8571 = vdwg.mxu0
        %v8572 = vadd.f32 %v8363, %v8534
        %v8573 = vadd.f32 %v8364, %v8539
        %v8574 = vadd.f32 %v8365, %v8544
        %v8575 = vadd.f32 %v8366, %v8549
        %v8576 = vadd.f32 %v8367, %v8554
        %v8577 = vadd.f32 %v8368, %v8559
        %v8578 = vadd.f32 %v8369, %v8564
        %v8579 = vadd.f32 %v8370, %v8569
        %s8580 = scalar_lea.vmem %s4, 768
        %v8581 = vld [vmem:[%s8580] sm:$0xff]
        %v8582 = vld [vmem:[%s8580 + $0x8] sm:$0xff]
        %v8583 = vld [vmem:[%s8580 + $0x10] sm:$0xff]
        %v8584 = vld [vmem:[%s8580 + $0x18] sm:$0xff]
        %v8585 = vld [vmem:[%s8580 + $0x20] sm:$0xff]
        %v8586 = vld [vmem:[%s8580 + $0x28] sm:$0xff]
        %v8587 = vld [vmem:[%s8580 + $0x30] sm:$0xff]
        %v8588 = vld [vmem:[%s8580 + $0x38] sm:$0xff]
        %v8589 = vld [vmem:[%s8580 + $0x40] sm:$0xff]
        %v8590 = vld [vmem:[%s8580 + $0x48] sm:$0xff]
        %v8591 = vld [vmem:[%s8580 + $0x50] sm:$0xff]
        %v8592 = vld [vmem:[%s8580 + $0x58] sm:$0xff]
        %v8593 = vld [vmem:[%s8580 + $0x60] sm:$0xff]
        %v8594 = vld [vmem:[%s8580 + $0x68] sm:$0xff]
        %v8595 = vld [vmem:[%s8580 + $0x70] sm:$0xff]
        %v8596 = vld [vmem:[%s8580 + $0x78] sm:$0xff]
        %8597 = vrot.lane.b32.xlu0 %v7358, 122
        %v8598 = vpop.permute.xlu0 %8597
        %8599 = vrot.lane.b32.xlu0 %v7359, 122
        %v8600 = vpop.permute.xlu0 %8599
        %8601 = vrot.lane.b32.xlu0 %v7360, 122
        %v8602 = vpop.permute.xlu0 %8601
        %8603 = vrot.lane.b32.xlu0 %v7361, 122
        %v8604 = vpop.permute.xlu0 %8603
        %8605 = vrot.lane.b32.xlu0 %v7362, 122
        %v8606 = vpop.permute.xlu0 %8605
        %8607 = vrot.lane.b32.xlu0 %v7363, 122
        %v8608 = vpop.permute.xlu0 %8607
        %8609 = vrot.lane.b32.xlu0 %v7364, 122
        %v8610 = vpop.permute.xlu0 %8609
        %8611 = vrot.lane.b32.xlu0 %v7365, 122
        %v8612 = vpop.permute.xlu0 %8611
        %8613 = vrot.lane.b32.xlu0 %v7366, 122
        %v8614 = vpop.permute.xlu0 %8613
        %8615 = vrot.lane.b32.xlu0 %v7367, 122
        %v8616 = vpop.permute.xlu0 %8615
        %8617 = vrot.lane.b32.xlu0 %v7368, 122
        %v8618 = vpop.permute.xlu0 %8617
        %8619 = vrot.lane.b32.xlu0 %v7369, 122
        %v8620 = vpop.permute.xlu0 %8619
        %8621 = vrot.lane.b32.xlu0 %v7370, 122
        %v8622 = vpop.permute.xlu0 %8621
        %8623 = vrot.lane.b32.xlu0 %v7371, 122
        %v8624 = vpop.permute.xlu0 %8623
        %8625 = vrot.lane.b32.xlu0 %v7372, 122
        %v8626 = vpop.permute.xlu0 %8625
        %8627 = vrot.lane.b32.xlu0 %v7373, 122
        %v8628 = vpop.permute.xlu0 %8627
        %8629 = vrot.lane.b32.xlu0 %v7374, 122
        %v8630 = vpop.permute.xlu0 %8629
        %8631 = vrot.lane.b32.xlu0 %v7375, 122
        %v8632 = vpop.permute.xlu0 %8631
        %v8651 = vsel %vm7480, %v8582, 0
        %v8654 = vsel %vm7480, %v8584, 0
        %v8657 = vsel %vm7480, %v8586, 0
        %v8660 = vsel %vm7480, %v8588, 0
        %v8663 = vsel %vm7480, %v8590, 0
        %v8666 = vsel %vm7480, %v8592, 0
        %v8669 = vsel %vm7480, %v8594, 0
        %v8672 = vsel %vm7480, %v8596, 0
        %v8674 = vsel %vm7505, %v8632, 0
        %8676 = vmatprep.subr.mxu0 0.0
        %8677 = vmatpush1.msra.mxu0 %v8598
        %8678 = vmatprep.subr.mxu0 0.0
        %8679 = vmatpush1.msra.mxu0 %v8600
        %8680 = vmatprep.subr.mxu0 0.0
        %8681 = vmatpush1.msra.mxu0 %v8602
        %8682 = vmatprep.subr.mxu0 0.0
        %8683 = vmatpush1.msra.mxu0 %v8604
        %8684 = vmatprep.subr.mxu0 0.0
        %8685 = vmatpush1.msra.mxu0 %v8606
        %8686 = vmatprep.subr.mxu0 0.0
        %8687 = vmatpush1.msra.mxu0 %v8608
        %8688 = vmatprep.subr.mxu0 0.0
        %8689 = vmatpush1.msra.mxu0 %v8610
        %8690 = vmatprep.subr.mxu0 0.0
        %8691 = vmatpush1.msra.mxu0 %v8612
        %8692 = vmatprep.subr.mxu0 0.0
        %8693 = vmatpush1.msra.mxu0 %v8614
        %8694 = vmatprep.subr.mxu0 0.0
        %8695 = vmatpush1.msra.mxu0 %v8616
        %8696 = vmatprep.subr.mxu0 0.0
        %8697 = vmatpush1.msra.mxu0 %v8618
        %8698 = vmatprep.subr.mxu0 0.0
        %8699 = vmatpush1.msra.mxu0 %v8620
        %8700 = vmatprep.subr.mxu0 0.0
        %8701 = vmatpush1.msra.mxu0 %v8622
        %8702 = vmatprep.subr.mxu0 0.0
        %8703 = vmatpush1.msra.mxu0 %v8624
        %8704 = vmatprep.subr.mxu0 0.0
        %8705 = vmatpush1.msra.mxu0 %v8626
        %8706 = vmatprep.subr.mxu0 0.0
        %8707 = vmatpush1.msra.mxu0 %v8628
        %8708 = vmatprep.subr.mxu0 0.0
        %8709 = vmatpush1.msra.mxu0 %v8630
        %8710 = vmatprep.subr.mxu0 0.0
        %8711 = vmatpush1.msra.mxu0 %v8674
        %8712 = vmatprep.subr.mxu0 0.0
        %8713 = vmatpush1.msra.mxu0 0.0
        %8714 = vmatprep.subr.mxu0 0.0
        %8715 = vmatpush1.msra.mxu0 0.0
        %8716 = vmatprep.subr.mxu0 0.0
        %8717 = vmatpush1.msra.mxu0 0.0
        %8718 = vmatprep.subr.mxu0 0.0
        %8719 = vmatpush1.msra.mxu0 0.0
        %8720 = vmatprep.subr.mxu0 0.0
        %8721 = vmatpush1.msra.mxu0 0.0
        %8722 = vmatprep.subr.mxu0 0.0
        %8723 = vmatpush1.msra.mxu0 0.0
        %8724 = vmatprep.subr.mxu0 0.0
        %8725 = vmatpush1.msra.mxu0 0.0
        %8726 = vmatprep.subr.mxu0 0.0
        %8727 = vmatpush1.msra.mxu0 0.0
        %8728 = vmatprep.subr.mxu0 0.0
        %8729 = vmatpush1.msra.mxu0 0.0
        %8730 = vmatprep.subr.mxu0 0.0
        %8731 = vmatpush1.msra.mxu0 0.0
        %8732 = vmatprep.subr.mxu0 0.0
        %8733 = vmatpush1.msra.mxu0 0.0
        %8734 = vmatprep.subr.mxu0 0.0
        %8735 = vmatpush1.msra.mxu0 0.0
        %8736 = vmatprep.subr.mxu0 0.0
        %8737 = vmatpush1.msra.mxu0 0.0
        %8738 = vmatprep.subr.mxu0 0.0
        %8739 = vmatpush1.msra.mxu0 0.0
        %8740 = vmatprep.mubr.f32.mxu0 %v8651
        %8741 = vmatmul.mubr.f32.gmra.mrb[0].mxu0 %v8581
        %v8742 = vpop.f32.mrb[0].mxu0
        %v8743 = vadd.f32 0.0, %v8742
        %v8744 = vpop.f32.mrb[0].mxu0
        %8745 = vmatprep.mubr.f32.mxu0 %v8654
        %8746 = vmatmul.mubr.f32.gmra.mrb[0].mxu0 %v8583
        %v8747 = vpop.f32.mrb[0].mxu0
        %v8748 = vadd.f32 0.0, %v8747
        %v8749 = vpop.f32.mrb[0].mxu0
        %8750 = vmatprep.mubr.f32.mxu0 %v8657
        %8751 = vmatmul.mubr.f32.gmra.mrb[0].mxu0 %v8585
        %v8752 = vpop.f32.mrb[0].mxu0
        %v8753 = vadd.f32 0.0, %v8752
        %v8754 = vpop.f32.mrb[0].mxu0
        %8755 = vmatprep.mubr.f32.mxu0 %v8660
        %8756 = vmatmul.mubr.f32.gmra.mrb[0].mxu0 %v8587
        %v8757 = vpop.f32.mrb[0].mxu0
        %v8758 = vadd.f32 0.0, %v8757
        %v8759 = vpop.f32.mrb[0].mxu0
        %8760 = vmatprep.mubr.f32.mxu0 %v8663
        %8761 = vmatmul.mubr.f32.gmra.mrb[0].mxu0 %v8589
        %v8762 = vpop.f32.mrb[0].mxu0
        %v8763 = vadd.f32 0.0, %v8762
        %v8764 = vpop.f32.mrb[0].mxu0
        %8765 = vmatprep.mubr.f32.mxu0 %v8666
        %8766 = vmatmul.mubr.f32.gmra.mrb[0].mxu0 %v8591
        %v8767 = vpop.f32.mrb[0].mxu0
        %v8768 = vadd.f32 0.0, %v8767
        %v8769 = vpop.f32.mrb[0].mxu0
        %8770 = vmatprep.mubr.f32.mxu0 %v8669
        %8771 = vmatmul.mubr.f32.gmra.mrb[0].mxu0 %v8593
        %v8772 = vpop.f32.mrb[0].mxu0
        %v8773 = vadd.f32 0.0, %v8772
        %v8774 = vpop.f32.mrb[0].mxu0
        %8775 = vmatprep.mubr.f32.mxu0 %v8672
        %8776 = vmatmul.mubr.f32.gmra.mrb[0].mxu0 %v8595
        %v8777 = vpop.f32.mrb[0].mxu0
        %v8778 = vadd.f32 0.0, %v8777
        %v8779 = vpop.f32.mrb[0].mxu0
        %8780 = vdwg.mxu0
        %v8781 = vadd.f32 %v8572, %v8743
        %v8782 = vadd.f32 %v8573, %v8748
        %v8783 = vadd.f32 %v8574, %v8753
        %v8784 = vadd.f32 %v8575, %v8758
        %v8785 = vadd.f32 %v8576, %v8763
        %v8786 = vadd.f32 %v8577, %v8768
        %v8787 = vadd.f32 %v8578, %v8773
        %v8788 = vadd.f32 %v8579, %v8778
        %v8789 = vld [vmem:[%s8] sm:$0xff]
        %v8790 = vld [vmem:[%s8 + $0x8] sm:$0xff]
        %v8791 = vld [vmem:[%s8 + $0x10] sm:$0xff]
        %v8792 = vld [vmem:[%s8 + $0x18] sm:$0xff]
        %v8793 = vld [vmem:[%s8 + $0x20] sm:$0xff]
        %v8794 = vld [vmem:[%s8 + $0x28] sm:$0xff]
        %v8795 = vld [vmem:[%s8 + $0x30] sm:$0xff]
        %v8796 = vld [vmem:[%s8 + $0x38] sm:$0xff]
        %8798 = vset.pattern.permute.xlu0 0
        %8799 = vperm.xlu0 %8798, %v8789
        %v8800 = vpop.permute.xlu0 %8799
        %8803 = vset.pattern.permute.xlu0 0
        %8804 = vperm.xlu0 %8803, %v8790
        %v8805 = vpop.permute.xlu0 %8804
        %8808 = vset.pattern.permute.xlu0 0
        %8809 = vperm.xlu0 %8808, %v8791
        %v8810 = vpop.permute.xlu0 %8809
        %8813 = vset.pattern.permute.xlu0 0
        %8814 = vperm.xlu0 %8813, %v8792
        %v8815 = vpop.permute.xlu0 %8814
        %8818 = vset.pattern.permute.xlu0 0
        %8819 = vperm.xlu0 %8818, %v8793
        %v8820 = vpop.permute.xlu0 %8819
        %8823 = vset.pattern.permute.xlu0 0
        %8824 = vperm.xlu0 %8823, %v8794
        %v8825 = vpop.permute.xlu0 %8824
        %8828 = vset.pattern.permute.xlu0 0
        %8829 = vperm.xlu0 %8828, %v8795
        %v8830 = vpop.permute.xlu0 %8829
        %8833 = vset.pattern.permute.xlu0 0
        %8834 = vperm.xlu0 %8833, %v8796
        %v8835 = vpop.permute.xlu0 %8834
        %v8837 = vadd.f32 %v8781, %v8800
        %v8838 = vadd.f32 %v8782, %v8805
        %v8839 = vadd.f32 %v8783, %v8810
        %v8840 = vadd.f32 %v8784, %v8815
        %v8841 = vadd.f32 %v8785, %v8820
        %v8842 = vadd.f32 %v8786, %v8825
        %v8843 = vadd.f32 %v8787, %v8830
        %v8844 = vadd.f32 %v8788, %v8835
        %vm8845 = vcmask 523264
        %8846 = vst.msk [vmem:[%s541] sm:$0xff] %vm8845, %v8837
        %8847 = vst.msk [vmem:[%s541 + $0x8] sm:$0xff] %vm8845, %v8838
        %8848 = vst.msk [vmem:[%s541 + $0x10] sm:$0xff] %vm8845, %v8839
        %8849 = vst.msk [vmem:[%s541 + $0x18] sm:$0xff] %vm8845, %v8840
        %8850 = vst.msk [vmem:[%s541 + $0x20] sm:$0xff] %vm8845, %v8841
        %8851 = vst.msk [vmem:[%s541 + $0x28] sm:$0xff] %vm8845, %v8842
        %8852 = vst.msk [vmem:[%s541 + $0x30] sm:$0xff] %vm8845, %v8843
        %8853 = vst.msk [vmem:[%s541 + $0x38] sm:$0xff] %vm8845, %v8844
        %v8854 = vsel %vm8845, %v8837, 0.0
        %8855 = vadd.xlane.f32.xlu0 %v8854
        %v8856 = vpop.xlane.xlu0 %8855
        %v8857 = vsel %vm8845, %v8838, 0.0
        %8858 = vadd.xlane.f32.xlu0 %v8857
        %v8859 = vpop.xlane.xlu0 %8858
        %v8860 = vsel %vm8845, %v8839, 0.0
        %8861 = vadd.xlane.f32.xlu0 %v8860
        %v8862 = vpop.xlane.xlu0 %8861
        %v8863 = vsel %vm8845, %v8840, 0.0
        %8864 = vadd.xlane.f32.xlu0 %v8863
        %v8865 = vpop.xlane.xlu0 %8864
        %v8866 = vsel %vm8845, %v8841, 0.0
        %8867 = vadd.xlane.f32.xlu0 %v8866
        %v8868 = vpop.xlane.xlu0 %8867
        %v8869 = vsel %vm8845, %v8842, 0.0
        %8870 = vadd.xlane.f32.xlu0 %v8869
        %v8871 = vpop.xlane.xlu0 %8870
        %v8872 = vsel %vm8845, %v8843, 0.0
        %8873 = vadd.xlane.f32.xlu0 %v8872
        %v8874 = vpop.xlane.xlu0 %8873
        %v8875 = vsel %vm8845, %v8844, 0.0
        %8876 = vadd.xlane.f32.xlu0 %v8875
        %v8877 = vpop.xlane.xlu0 %8876
        %v8878 = vadd.f32 %v8856, %v8859
        %v8879 = vadd.f32 %v8878, %v8862
        %v8880 = vadd.f32 %v8879, %v8865
        %v8881 = vadd.f32 %v8880, %v8868
        %v8882 = vadd.f32 %v8881, %v8871
        %v8883 = vadd.f32 %v8882, %v8874
        %v8884 = vadd.f32 %v8883, %v8877
        %v8885 = vrot.slane %v8884, 4
        %v8886 = vadd.f32 %v8884, %v8885
        %v8887 = vrot.slane %v8886, 2
        %v8888 = vadd.f32 %v8886, %v8887
        %v8889 = vrot.slane %v8888, 1
        %v8890 = vadd.f32 %v8888, %v8889
        %vm8891 = vcmask 0
        %8892 = vst.msk [vmem:[%s564] sm:$0x1] %vm8891, %v8890
        %s8893 = sand.u32 %s375, 1
        %s8894 = scalar_lea.sflag [#allocation7], %s8893
        %s8895 = sand.u32 %s375, 1
        %s8896 = smul.addr %s8895, 64
        %s8897 = scalar_lea.vmem [#allocation6], %s8896
        %p8898 = scmp.lt.s32.totalorder %s35, 1
        %s8899 = scalar_select %p8898, %s35, 1
        %p8900 = scmp.lt.s32.totalorder %s36, 0
        %s8901 = scalar_select %p8900, %s36, 0
        %s8902 = sadd.s32 %s8901, %s8899
        %s8903 = scalar_lea.vmem %s16, %s8902
        // Predicated region
        $region81: #{counting_head_forward.3} parent=79 // pred_check
          %p8904 = pneg %p385
        $region82: #{counting_head_forward.3} parent=79 // pred_check_branch
          %8906 = sbr.rel (%p8904) target = $region84
        $region83: #{counting_head_forward.3} parent=79 // pred_region
          %s8908 = ssub.s32 1024, 1024
          %8909 = vsyncadd %s8894, %s8908
          %s8910 = smul.addr %s36, 8
          %s8911 = smul.addr %s35, 8
          %s8912 = sadd.s32 %s8910, %s8911
          %s8913 = smul.addr %s8912, 128
          %s8914 = scalar_lea.hbm %s15, %s8913
          %s8915 = sshll.u32 %s8897, 4
          %s8916 = int_to_ptr.vmem [resolvable:$true] %s8915
          %8921 = dma.vmem_to_hbm [thread:$0]  %s8916, 1024, %s8914, %s8894, 128, 128, 8
        $region84: #{counting_head_forward.3} parent=79 // pred_fallthru
          _
        // Predicated region
        $region85: #{counting_head_forward.3} parent=79 // pred_check
          %p8922 = pneg %p413
        $region86: #{counting_head_forward.3} parent=79 // pred_check_branch
          %8924 = sbr.rel (%p8922) target = $region88
        $region87: #{counting_head_forward.3} parent=79 // pred_region
          _
        $region88: #{counting_head_forward.3} parent=79 // pred_fallthru
          _
      $region80: #{counting_head_forward.3} parent=5 // pred_fallthru
        _
      %p8925 = scmp.le.s32.totalorder 2, %s26
      // Predicated region
      $region89: #{counting_head_forward.3} parent=5 // pred_check
        %p8926 = pneg %p8925
      $region90: #{counting_head_forward.3} parent=5 // pred_check_branch
        %8928 = sbr.rel (%p8926) target = $region92
      $region91: #{counting_head_forward.3} parent=5 // pred_region
        %s8929 = ssub.s32 %s26, 2
        // Predicated region
        $region93: #{counting_head_forward.3} parent=91 // pred_check
          %p8930 = pneg %p391
        $region94: #{counting_head_forward.3} parent=91 // pred_check_branch
          %8932 = sbr.rel (%p8930) target = $region96
        $region95: #{counting_head_forward.3} parent=91 // pred_region
          %s8933 = sand.u32 %s376, 1
          %s8934 = scalar_lea.sflag [#allocation7], %s8933
          %s8935 = sand.u32 %s376, 1
          %s8936 = smul.addr %s8935, 64
          %s8937 = scalar_lea.vmem [#allocation6], %s8936
          %8938 = dma.done %s8934, 1024
        $region96: #{counting_head_forward.3} parent=91 // pred_fallthru
          _
        // Predicated region
        $region97: #{counting_head_forward.3} parent=91 // pred_check
          %p8939 = pneg %p419
        $region98: #{counting_head_forward.3} parent=91 // pred_check_branch
          %8941 = sbr.rel (%p8939) target = $region100
        $region99: #{counting_head_forward.3} parent=91 // pred_region
          %p8942 = scmp.lt.s32.totalorder %s37, 1
          %s8943 = scalar_select %p8942, %s37, 1
          %p8944 = scmp.lt.s32.totalorder %s38, 0
          %s8945 = scalar_select %p8944, %s38, 0
          %s8946 = sadd.s32 %s8945, %s8943
          %s8947 = scalar_lea.vmem %s16, %s8946
        $region100: #{counting_head_forward.3} parent=91 // pred_fallthru
          _
      $region92: #{counting_head_forward.3} parent=5 // pred_fallthru
        _
    $region6: #{counting_head_forward.3} parent=1 // loop_footer
      %s30 = sadd.s32 1, %s26
    $region7: #{counting_head_forward.3} parent=1 // loop_footer_branch
      %25 = sbr.rel target = $region3
    $region8: #{counting_head_forward.3} parent=1 // loop_exit
      _
    %8948 = vsyncpa [#allocation7], 1
    %s8949 = scalar_lea.sflag [#allocation7], 1
    %8950 = vsyncpa %s8949, 1

</llo_original>
